<compile_context>
chip_gen: v7x
topology: tpu7x:2x2x1
jax: 0.10.0
libtpu: 0.0.40
codegen_flags: <defaults>
</compile_context>

<pallas_src>
import jax
import jax.numpy as jnp
from jax import lax
from jax.experimental import pallas as pl
from jax.experimental.pallas import tpu as pltpu

KERNEL_SIZE = 4
PADDING = 1
STRIDE = 2
LEAKY_SLOPE = 0.2
BN_EPS = 1e-5
LANE = 128


# ----------------------------- small helpers -----------------------------

def _round_up(x, m):
    return (x + m - 1) // m * m


def _pad2d(x, rows, cols, value=0.0):
    r, c = x.shape
    if r == rows and c == cols:
        return x
    return jnp.pad(x, ((0, rows - r), (0, cols - c)), constant_values=value)


def _preferred_tn():
    """256-wide N tiles on v6e/v7x (256-wide MXU); 128 on v5e (and unknown)."""
    try:
        kind = jax.devices()[0].device_kind.lower()
    except Exception:  # pragma: no cover - device query should not fail
        kind = ""
    return 128 if "v5" in kind else 256


# ----------------------------- fused tiled GEMM -----------------------------

def _make_gemm_kernel(act, with_stats, with_affine):
    def kernel(*refs):
        a_ref, b_ref = refs[0], refs[1]
        pos = 2
        if with_affine:
            scale_ref, shift_ref = refs[pos], refs[pos + 1]
            pos += 2
        y_ref = refs[pos]
        stats_ref = refs[pos + 1] if with_stats else None
        acc_ref = refs[-1]

        # program_id / num_programs are read OUTSIDE the pl.when bodies (the
        # cond branches have no interpret-mode lowering for these primitives).
        k_id = pl.program_id(2)
        k_last = pl.num_programs(2) - 1

        @pl.when(k_id == 0)
        def _zero():
            acc_ref[...] = jnp.zeros_like(acc_ref)

        acc_ref[...] += jnp.dot(a_ref[...], b_ref[...],
                                preferred_element_type=jnp.float32)

        @pl.when(k_id == k_last)
        def _finalize():
            y = acc_ref[...]
            if with_stats:
                # Per-channel sum / sum-of-squares of the pre-activation conv
                # output for THIS M tile only (rows 0/1 of an (8, tn) block).
                # Partials are reduced outside the kernel, which keeps the M
                # grid axis "parallel" (megacore).  Zero-padded M/K entries
                # contribute exactly zero (no affine in the stats path).
                s1 = jnp.sum(y, axis=0, keepdims=True)
                s2 = jnp.sum(y * y, axis=0, keepdims=True)
                ncols = s1.shape[1]
                row = lax.broadcasted_iota(jnp.int32, (8, ncols), 0)
                stats_ref[...] = jnp.where(
                    row == 0, jnp.broadcast_to(s1, (8, ncols)),
                    jnp.where(row == 1, jnp.broadcast_to(s2, (8, ncols)), 0.0))
            if with_affine:
                y = y * scale_ref[...] + shift_ref[...]
            if act == "leaky":
                y = jnp.where(y >= 0.0, y, LEAKY_SLOPE * y)
            elif act == "sigmoid":
                y = 1.0 / (1.0 + jnp.exp(-y))
            y_ref[...] = y.astype(y_ref.dtype)

    return kernel


def fused_gemm(a, b, scale=None, shift=None, *, act="none", with_stats=False,
               out_dtype=jnp.bfloat16):
    """y = act((a @ b) [* scale + shift]), tiled K-reduction GEMM on the MXU.

    Returns the lane/row *padded* output buffer plus the logical (m, n) so
    callers can chain padded kernels without strip/re-pad round trips.  With
    `with_stats`, also returns the per-column sum and sum-of-squares of the
    pre-activation result (length n, reduced from per-M-tile partials).
    """
    m, k = a.shape
    k2, n = b.shape
    assert k == k2
    with_affine = (scale is not None) or (shift is not None)
    assert not (with_stats and with_affine), "stats path assumes identity affine"
    if with_affine:
        if scale is None:
            scale = jnp.ones((n,), jnp.float32)
        if shift is None:
            shift = jnp.zeros((n,), jnp.float32)

    tn_pref = _preferred_tn()
    tn = tn_pref if _round_up(n, LANE) >= tn_pref else LANE
    tm = min(256, _round_up(m, 8))
    tk = min(512, _round_up(k, LANE))
    mp = _round_up(m, tm)
    np_ = _round_up(n, tn)
    kp = _round_up(k, tk)
    mt, nt, kt = mp // tm, np_ // tn, kp // tk

    a_p = _pad2d(a.astype(jnp.bfloat16), mp, kp)
    b_p = _pad2d(b.astype(jnp.bfloat16), kp, np_)

    in_arrays = [a_p, b_p]
    in_specs = [pl.BlockSpec((tm, tk), lambda i, j, kk: (i, kk)),
                pl.BlockSpec((tk, tn), lambda i, j, kk: (kk, j))]
    if with_affine:
        in_arrays += [
            _pad2d(scale.reshape(1, n).astype(jnp.float32), 1, np_, value=1.0),
            _pad2d(shift.reshape(1, n).astype(jnp.float32), 1, np_),
        ]
        in_specs += [pl.BlockSpec((1, tn), lambda i, j, kk: (0, j)),
                     pl.BlockSpec((1, tn), lambda i, j, kk: (0, j))]

    y_spec = pl.BlockSpec((tm, tn), lambda i, j, kk: (i, j))
    if with_stats:
        out_shape = (jax.ShapeDtypeStruct((mp, np_), out_dtype),
                     jax.ShapeDtypeStruct((mt * 8, np_), jnp.float32))
        out_specs = (y_spec, pl.BlockSpec((8, tn), lambda i, j, kk: (i, j)))
    else:
        out_shape = jax.ShapeDtypeStruct((mp, np_), out_dtype)
        out_specs = y_spec

    result = pl.pallas_call(
        _make_gemm_kernel(act, with_stats, with_affine),
        out_shape=out_shape,
        grid=(mt, nt, kt),
        in_specs=in_specs,
        out_specs=out_specs,
        scratch_shapes=[pltpu.VMEM((tm, tn), jnp.float32)],
        compiler_params=pltpu.CompilerParams(
            dimension_semantics=("parallel", "parallel", "arbitrary"),
            # Let XLA fuse the cheap cast/pad producers into the operand DMAs.
            allow_input_fusion=[True] * len(in_arrays)),
    )(*in_arrays)

    if with_stats:
        y_pad, stats = result
        stats = stats.reshape(mt, 8, np_)
        s1 = jnp.sum(stats[:, 0, :n], axis=0)
        s2 = jnp.sum(stats[:, 1, :n], axis=0)
        return y_pad, (m, n), s1, s2
    return result, (m, n)


# ----------------------- tiled affine + activation -----------------------

def _make_affine_kernel(act):
    def kernel(x_ref, scale_ref, shift_ref, o_ref):
        y = x_ref[...].astype(jnp.float32) * scale_ref[...] + shift_ref[...]
        if act == "leaky":
            y = jnp.where(y >= 0.0, y, LEAKY_SLOPE * y)
        elif act == "sigmoid":
            y = 1.0 / (1.0 + jnp.exp(-y))
        o_ref[...] = y.astype(o_ref.dtype)
    return kernel


def affine_act(x_pad, scale, shift, act, out_dtype=jnp.bfloat16):
    """y = act(x * scale + shift) on an already lane/row-padded buffer.

    `scale`/`shift` are per logical channel; padded channels get (1, 0) so the
    padded buffer can flow straight through.  Returns the padded result.
    """
    mp, cp = x_pad.shape
    c = scale.shape[0]
    s_p = _pad2d(scale.reshape(1, c).astype(jnp.float32), 1, cp, value=1.0)
    h_p = _pad2d(shift.reshape(1, c).astype(jnp.float32), 1, cp)

    tm_cap = 1024 if cp <= 512 else 512
    tm = 8
    for cand in (tm_cap, 512, 256, 128, 64, 32, 16, 8):
        if cand <= mp and mp % cand == 0:
            tm = cand
            break

    return pl.pallas_call(
        _make_affine_kernel(act),
        out_shape=jax.ShapeDtypeStruct((mp, cp), out_dtype),
        grid=(mp // tm,),
        in_specs=[pl.BlockSpec((tm, cp), lambda i: (i, 0)),
                  pl.BlockSpec((1, cp), lambda i: (0, 0)),
                  pl.BlockSpec((1, cp), lambda i: (0, 0))],
        out_specs=pl.BlockSpec((tm, cp), lambda i: (i, 0)),
        compiler_params=pltpu.CompilerParams(dimension_semantics=("parallel",)),
    )(x_pad, s_p, h_p)


# ----------------------------- conv as patch GEMM -----------------------------

def conv2d_fused(x_nhwc, weight_oihw, stride, pad, *, act="none",
                 with_stats=False, out_dtype=jnp.bfloat16):
    """Conv2d(NHWC x, OIHW weight, bias=False) lowered to a fused patch GEMM."""
    b, h, w, cin = x_nhwc.shape
    cout, cin2, kh, kw = weight_oihw.shape
    assert cin == cin2
    # TODO(synk): form patches inside the GEMM (K grid axis over 4x4 taps /
    # manual DMA) to avoid materializing the (M, cin*kh*kw) bf16 patch tensor
    # in HBM; with stride=2 the shifted windows are not expressible as
    # rectangular BlockSpec blocks, so a single fused XLA gather is used here.
    patches = lax.conv_general_dilated_patches(
        x_nhwc.astype(jnp.bfloat16),
        filter_shape=(kh, kw),
        window_strides=(stride, stride),
        padding=((pad, pad), (pad, pad)),
        dimension_numbers=("NHWC", "HWIO", "NHWC"))
    ho, wo = patches.shape[1], patches.shape[2]
    # Patch features are ordered (cin, kh, kw) row-major (depthwise identity
    # kernel, feature_group_count=cin) -> matches torch weight.reshape(cout, -1).
    a = patches.reshape(b * ho * wo, cin * kh * kw)
    wmat = weight_oihw.reshape(cout, cin * kh * kw).T
    res = fused_gemm(a, wmat, act=act, with_stats=with_stats, out_dtype=out_dtype)
    if with_stats:
        y_pad, _, s1, s2 = res
        return y_pad, (b, ho, wo, cout), (s1, s2)
    y_pad, _ = res
    return y_pad, (b, ho, wo, cout)


# ----------------------------- self attention -----------------------------

def _make_attn_kernel(c8p, cp):
    def kernel(qkv_ref, x_ref, o_ref):
        qkv = qkv_ref[...]
        # Static slices on 128-lane boundaries (q/k padded to c8p, v to cp):
        # no HBM slice copies of the fused qkv tensor.
        q = qkv[:, :, :c8p]
        k = qkv[:, :, c8p:2 * c8p]
        v = qkv[:, :, 2 * c8p:2 * c8p + cp]
        # Contract the channel (last) dims directly -- no transposed copy of k.
        energy = jnp.einsum("bqc,bkc->bqk", q, k,
                            preferred_element_type=jnp.float32)
        energy = energy - jnp.max(energy, axis=-1, keepdims=True)
        p = jnp.exp(energy)
        attn = p / jnp.sum(p, axis=-1, keepdims=True)
        # gamma is folded into v (wv, bv scaled by gamma in the wrapper).
        out = jnp.einsum("bqk,bkc->bqc", attn.astype(v.dtype), v,
                         preferred_element_type=jnp.float32)
        o_ref[...] = (out + x_ref[...].astype(jnp.float32)).astype(o_ref.dtype)
    return kernel


def self_attn(tokens, p):
    """SAGAN Self_Attn on token layout (B, N, C); tokens kept bf16 in HBM."""
    b, n, c = tokens.shape
    c8 = p["wq"].shape[0]
    cp = _round_up(c, LANE)
    c8p = _round_up(c8, LANE)

    # Fold gamma into the value projection: attn @ (gamma*v) == gamma*(attn@v).
    g = p["gamma"].astype(jnp.float32)

    # Fused q/k/v projection: one GEMM, lane-aligned zero-padded segments,
    # biases applied in the GEMM epilogue (shift vector).
    wq = _pad2d(p["wq"].reshape(c8, c).T, c, c8p)
    wk = _pad2d(p["wk"].reshape(c8, c).T, c, c8p)
    wv = _pad2d((g * p["wv"].reshape(c, c)).T, c, cp)
    w_cat = jnp.concatenate([wq, wk, wv], axis=1)          # (C, 2*c8p + cp)
    b_cat = jnp.concatenate([jnp.pad(p["bq"], (0, c8p - c8)),
                             jnp.pad(p["bk"], (0, c8p - c8)),
                             jnp.pad(g * p["bv"], (0, cp - c))])

    qkv_pad, (m_tok, _) = fused_gemm(tokens.reshape(b * n, c), w_cat,
                                     shift=b_cat, act="none",
                                     out_dtype=jnp.bfloat16)
    if qkv_pad.shape[0] != m_tok:
        qkv_pad = qkv_pad[:m_tok]
    w_tot = qkv_pad.shape[1]
    qkv = qkv_pad.reshape(b, n, w_tot)

    x_res = tokens.astype(jnp.bfloat16)
    if cp != c:
        x_res = jnp.pad(x_res, ((0, 0), (0, 0), (0, cp - c)))

    # Batch block: keep the per-block f32 energy/softmax intermediates
    # (~2*bblk*n^2*4 B) inside a conservative VMEM budget, and make the grid
    # >= 2 steps whenever b >= 2 so megacore can split it.
    vmem_budget = 8 * 1024 * 1024
    per_batch = max(1, 2 * n * n * 4)
    bblk = max(1, min(8, b // 2 if b >= 2 else 1, vmem_budget // per_batch))
    bp = _round_up(b, bblk)
    if bp != b:
        padb = ((0, bp - b), (0, 0), (0, 0))
        qkv = jnp.pad(qkv, padb)
        x_res = jnp.pad(x_res, padb)

    # TODO(synk): for very large N (>~2k) tile the KV axis with an online
    # softmax (flash-style) accumulator instead of the full (N, N) energy.
    out = pl.pallas_call(
        _make_attn_kernel(c8p, cp),
        out_shape=jax.ShapeDtypeStruct((bp, n, cp), jnp.bfloat16),
        grid=(bp // bblk,),
        in_specs=[
            pl.BlockSpec((bblk, n, w_tot), lambda i: (i, 0, 0)),
            pl.BlockSpec((bblk, n, cp), lambda i: (i, 0, 0)),
        ],
        out_specs=pl.BlockSpec((bblk, n, cp), lambda i: (i, 0, 0)),
        compiler_params=pltpu.CompilerParams(dimension_semantics=("parallel",)),
    )(qkv, x_res)
    return out[:b, :, :c]


# ----------------------------- model -----------------------------

def spectral_normalize(w, iters=20):
    # TODO(synk): PyTorch SpectralNorm keeps a randomly-initialized persistent
    # `u` buffer and does one power iteration per forward; here we use a
    # converged, deterministic sigma instead.
    wm = w.reshape(w.shape[0], -1)
    u = jnp.ones((wm.shape[0],), jnp.float32) / jnp.sqrt(wm.shape[0])
    for _ in range(iters):
        v = wm.T @ u
        v = v / (jnp.linalg.norm(v) + 1e-12)
        u = wm @ v
        u = u / (jnp.linalg.norm(u) + 1e-12)
    sigma = u @ (wm @ v)
    return w / sigma


def init_params(key, nc, ndf, k):
    keys = iter(jax.random.split(key, 64))

    def nrm(shape, std=0.02):
        return std * jax.random.normal(next(keys), shape, jnp.float32)

    params = {"conv1": nrm((ndf, nc, KERNEL_SIZE, KERNEL_SIZE))}

    dislayers = []
    for i in range(k):
        cin = ndf * (2 ** i)
        cout = ndf * (2 ** (i + 1))
        dislayers.append({
            "w": spectral_normalize(nrm((cout, cin, KERNEL_SIZE, KERNEL_SIZE))),
            "bn_gamma": jnp.ones((cout,), jnp.float32),
            "bn_beta": jnp.zeros((cout,), jnp.float32),
        })
    params["dislayers"] = dislayers

    c = ndf * (2 ** k)
    attn = []
    for _ in range(2):
        attn.append({
            "wq": nrm((c // 8, c, 1, 1)), "bq": jnp.zeros((c // 8,), jnp.float32),
            "wk": nrm((c // 8, c, 1, 1)), "bk": jnp.zeros((c // 8,), jnp.float32),
            "wv": nrm((c, c, 1, 1)),      "bv": jnp.zeros((c,), jnp.float32),
            # nn.Parameter(torch.zeros(1)) -> gamma starts at 0 (identity residual)
            "gamma": jnp.zeros((), jnp.float32),
        })
    params["attn"] = attn
    params["conv_out"] = nrm((1, c, KERNEL_SIZE, KERNEL_SIZE))
    return params


def discriminator_forward(params, x_nchw):
    # channels-last (NHWC) end-to-end; NCHW only at the module boundary.
    x = jnp.transpose(x_nchw, (0, 2, 3, 1)).astype(jnp.float32)

    # Conv2d(nc, ndf, 4, 2, 1, bias=False) + LeakyReLU(0.2) fused in the epilogue.
    y_pad, (b, ho, wo, cout) = conv2d_fused(x, params["conv1"], STRIDE, PADDING,
                                            act="leaky")
    x = y_pad[:b * ho * wo, :cout].reshape(b, ho, wo, cout)

    # k x DisLayerSN_d: SN-conv(4,2,1) -> BatchNorm2d (training-mode batch
    # stats, fused into the GEMM) -> LeakyReLU (fused into the affine pass).
    for lyr in params["dislayers"]:
        y_pad, (b, ho, wo, cout), (s1, s2) = conv2d_fused(
            x, lyr["w"], STRIDE, PADDING, act="none", with_stats=True)
        m = b * ho * wo
        mean = s1 / m
        var = jnp.maximum(s2 / m - mean * mean, 0.0)   # biased var, clamped >= 0
        inv = lyr["bn_gamma"] * lax.rsqrt(var + BN_EPS)
        y_pad = affine_act(y_pad, inv, lyr["bn_beta"] - mean * inv, "leaky")
        x = y_pad[:m, :cout].reshape(b, ho, wo, cout)

    # 2 x Self_Attn(ndf * 2^k) on (B, N, C) tokens (reshape is free in NHWC).
    b, h, w, c = x.shape
    tokens = x.reshape(b, h * w, c)
    for ap in params["attn"]:
        tokens = self_attn(tokens, ap)
    x = tokens.reshape(b, h, w, c)

    # Conv2d(ndf*2^k, 1, 4, stride=1, padding=0, bias=False) + Sigmoid (fused).
    y_pad, (b, ho, wo, _) = conv2d_fused(x, params["conv_out"], 1, 0,
                                         act="sigmoid", out_dtype=jnp.float32)
    y = y_pad[:b * ho * wo, :1].reshape(b, ho, wo, 1)
    return jnp.transpose(y, (0, 3, 1, 2))              # (B, 1, H_out, W_out)


if __name__ == "__main__":
    B, NC, H, W = 2, 3, 16, 16      # small NCHW input
    NDF, K_LAYERS = 16, 1           # ndf=16, k=1 -> attention on 32 channels, 4x4 spatial
    key = jax.random.PRNGKey(0)
    k_x, k_p = jax.random.split(key)
    x = jax.random.normal(k_x, (B, NC, H, W), jnp.float32)
    params = init_params(k_p, NC, NDF, K_LAYERS)

    fwd = jax.jit(discriminator_forward)
    out = jax.block_until_ready(fwd(params, x))
    assert out.shape == (B, 1, 1, 1), out.shape
    assert bool(jnp.all(jnp.isfinite(out)))
    assert bool(jnp.all((out >= 0.0) & (out <= 1.0)))
    print("KERNEL_OK")
</pallas_src>

<mosaic_0001>
module attributes {stable_mosaic.version = 11 : i64} {
  func.func @kernel(%arg0: i32, %arg1: i32, %arg2: i32, %arg3: memref<128x128xbf16, #tpu.memory_space<vmem>>, %arg4: memref<128x128xbf16, #tpu.memory_space<vmem>>, %arg5: memref<128x128xbf16, #tpu.memory_space<vmem>>, %arg6: memref<128x128xf32, #tpu.memory_space<vmem>>) attributes {dimension_semantics = [#tpu.dimension_semantics<parallel>, #tpu.dimension_semantics<parallel>, #tpu.dimension_semantics<arbitrary>], iteration_bounds = array<i64: 1, 1, 1>, scalar_prefetch = 0 : i64, scratch_operands = 1 : i64, tpu.core_type = #tpu.core_type<tc>, window_params = [{transform_indices = @transform_0, window_bounds = array<i64: 128, 128>}, {transform_indices = @transform_1, window_bounds = array<i64: 128, 128>}, {transform_indices = @transform_2, window_bounds = array<i64: 128, 128>}]} {
    %c0_i32 = arith.constant 0 : i32
    %0 = arith.cmpi eq, %arg2, %c0_i32 : i32
    %1 = arith.extui %0 : i1 to i32
    %c0_i32_0 = arith.constant 0 : i32
    %2 = arith.cmpi ne, %1, %c0_i32_0 : i32
    scf.if %2 {
      %cst_10 = arith.constant 0.000000e+00 : f32
      %12 = vector.broadcast %cst_10 : f32 to vector<128x128xf32>
      %c0_11 = arith.constant 0 : index
      %c0_12 = arith.constant 0 : index
      %13 = vector.load %arg6[%c0_11, %c0_12] : memref<128x128xf32, #tpu.memory_space<vmem>>, vector<128x128xf32>
      tpu.vector_store %arg6[%c0_11, %c0_12], %12 {strides = array<i32>} : memref<128x128xf32, #tpu.memory_space<vmem>>, vector<128x128xf32>,
    } else {
    }
    %c0 = arith.constant 0 : index
    %c0_1 = arith.constant 0 : index
    %3 = vector.load %arg6[%c0, %c0_1] : memref<128x128xf32, #tpu.memory_space<vmem>>, vector<128x128xf32>
    %c0_2 = arith.constant 0 : index
    %c0_3 = arith.constant 0 : index
    %4 = vector.load %arg3[%c0_2, %c0_3] : memref<128x128xbf16, #tpu.memory_space<vmem>>, vector<128x128xbf16>
    %c0_4 = arith.constant 0 : index
    %c0_5 = arith.constant 0 : index
    %5 = vector.load %arg4[%c0_4, %c0_5] : memref<128x128xbf16, #tpu.memory_space<vmem>>, vector<128x128xbf16>
    %cst = arith.constant dense<0.000000e+00> : vector<128x128xf32>
    %6 = tpu.matmul %4, %5, %cst {dimension_numbers = #tpu.dot_dimension_numbers<[1], [0], [0], [1], [0, 0, 1, 1], [], []>} : vector<128x128xbf16>, vector<128x128xbf16>, vector<128x128xf32> -> vector<128x128xf32>
    %7 = arith.addf %3, %6 : vector<128x128xf32>
    %c0_6 = arith.constant 0 : index
    %c0_7 = arith.constant 0 : index
    %8 = vector.load %arg6[%c0_6, %c0_7] : memref<128x128xf32, #tpu.memory_space<vmem>>, vector<128x128xf32>
    tpu.vector_store %arg6[%c0_6, %c0_7], %7 {strides = array<i32>} : memref<128x128xf32, #tpu.memory_space<vmem>>, vector<128x128xf32>,
    %c0_i32_8 = arith.constant 0 : i32
    %9 = arith.cmpi eq, %arg2, %c0_i32_8 : i32
    %10 = arith.extui %9 : i1 to i32
    %c0_i32_9 = arith.constant 0 : i32
    %11 = arith.cmpi ne, %10, %c0_i32_9 : i32
    scf.if %11 {
      %c0_10 = arith.constant 0 : index
      %c0_11 = arith.constant 0 : index
      %12 = vector.load %arg6[%c0_10, %c0_11] : memref<128x128xf32, #tpu.memory_space<vmem>>, vector<128x128xf32>
      %cst_12 = arith.constant 0.000000e+00 : f32
      %13 = vector.broadcast %cst_12 : f32 to vector<128x128xf32>
      %14 = arith.cmpf oge, %12, %13 : vector<128x128xf32>
      %cst_13 = arith.constant 2.000000e-01 : f32
      %15 = vector.broadcast %cst_13 : f32 to vector<128x128xf32>
      %16 = arith.mulf %15, %12 : vector<128x128xf32>
      %17 = arith.select %14, %12, %16 : vector<128x128xi1>, vector<128x128xf32>
      %18 = arith.truncf %17 : vector<128x128xf32> to vector<128x128xbf16>
      %c0_14 = arith.constant 0 : index
      %c0_15 = arith.constant 0 : index
      %19 = vector.load %arg5[%c0_14, %c0_15] : memref<128x128xbf16, #tpu.memory_space<vmem>>, vector<128x128xbf16>
      tpu.vector_store %arg5[%c0_14, %c0_15], %18 {strides = array<i32>} : memref<128x128xbf16, #tpu.memory_space<vmem>>, vector<128x128xbf16>,
    } else {
    }
    return
  }
  func.func @transform_0(%arg0: i32, %arg1: i32, %arg2: i32) -> (i32, i32) {
    %c0_i32 = arith.constant 0 : i32
    return %arg0, %arg2 : i32, i32
  }
  func.func @transform_1(%arg0: i32, %arg1: i32, %arg2: i32) -> (i32, i32) {
    %c0_i32 = arith.constant 0 : i32
    return %arg2, %arg1 : i32, i32
  }
  func.func @transform_2(%arg0: i32, %arg1: i32, %arg2: i32) -> (i32, i32) {
    %c0_i32 = arith.constant 0 : i32
    return %arg0, %arg1 : i32, i32
  }
}

module attributes {stable_mosaic.version = 11 : i64} {
  func.func @kernel(%arg0: i32, %arg1: i32, %arg2: i32, %arg3: memref<32x256xbf16, #tpu.memory_space<vmem>>, %arg4: memref<256x128xbf16, #tpu.memory_space<vmem>>, %arg5: memref<32x128xbf16, #tpu.memory_space<vmem>>, %arg6: memref<8x128xf32, #tpu.memory_space<vmem>>, %arg7: memref<32x128xf32, #tpu.memory_space<vmem>>) attributes {dimension_semantics = [#tpu.dimension_semantics<parallel>, #tpu.dimension_semantics<parallel>, #tpu.dimension_semantics<arbitrary>], iteration_bounds = array<i64: 1, 1, 1>, scalar_prefetch = 0 : i64, scratch_operands = 1 : i64, tpu.core_type = #tpu.core_type<tc>, window_params = [{transform_indices = @transform_0, window_bounds = array<i64: 32, 256>}, {transform_indices = @transform_1, window_bounds = array<i64: 256, 128>}, {transform_indices = @transform_2, window_bounds = array<i64: 32, 128>}, {transform_indices = @transform_3, window_bounds = array<i64: 8, 128>}]} {
    %c0_i32 = arith.constant 0 : i32
    %0 = arith.cmpi eq, %arg2, %c0_i32 : i32
    %1 = arith.extui %0 : i1 to i32
    %c0_i32_0 = arith.constant 0 : i32
    %2 = arith.cmpi ne, %1, %c0_i32_0 : i32
    scf.if %2 {
      %cst_10 = arith.constant 0.000000e+00 : f32
      %12 = vector.broadcast %cst_10 : f32 to vector<32x128xf32>
      %c0_11 = arith.constant 0 : index
      %c0_12 = arith.constant 0 : index
      %13 = vector.load %arg7[%c0_11, %c0_12] : memref<32x128xf32, #tpu.memory_space<vmem>>, vector<32x128xf32>
      tpu.vector_store %arg7[%c0_11, %c0_12], %12 {strides = array<i32>} : memref<32x128xf32, #tpu.memory_space<vmem>>, vector<32x128xf32>,
    } else {
    }
    %c0 = arith.constant 0 : index
    %c0_1 = arith.constant 0 : index
    %3 = vector.load %arg7[%c0, %c0_1] : memref<32x128xf32, #tpu.memory_space<vmem>>, vector<32x128xf32>
    %c0_2 = arith.constant 0 : index
    %c0_3 = arith.constant 0 : index
    %4 = vector.load %arg3[%c0_2, %c0_3] : memref<32x256xbf16, #tpu.memory_space<vmem>>, vector<32x256xbf16>
    %c0_4 = arith.constant 0 : index
    %c0_5 = arith.constant 0 : index
    %5 = vector.load %arg4[%c0_4, %c0_5] : memref<256x128xbf16, #tpu.memory_space<vmem>>, vector<256x128xbf16>
    %cst = arith.constant dense<0.000000e+00> : vector<32x128xf32>
    %6 = tpu.matmul %4, %5, %cst {dimension_numbers = #tpu.dot_dimension_numbers<[1], [0], [0], [1], [0, 0, 1, 1], [], []>} : vector<32x256xbf16>, vector<256x128xbf16>, vector<32x128xf32> -> vector<32x128xf32>
    %7 = arith.addf %3, %6 : vector<32x128xf32>
    %c0_6 = arith.constant 0 : index
    %c0_7 = arith.constant 0 : index
    %8 = vector.load %arg7[%c0_6, %c0_7] : memref<32x128xf32, #tpu.memory_space<vmem>>, vector<32x128xf32>
    tpu.vector_store %arg7[%c0_6, %c0_7], %7 {strides = array<i32>} : memref<32x128xf32, #tpu.memory_space<vmem>>, vector<32x128xf32>,
    %c0_i32_8 = arith.constant 0 : i32
    %9 = arith.cmpi eq, %arg2, %c0_i32_8 : i32
    %10 = arith.extui %9 : i1 to i32
    %c0_i32_9 = arith.constant 0 : i32
    %11 = arith.cmpi ne, %10, %c0_i32_9 : i32
    scf.if %11 {
      %c0_10 = arith.constant 0 : index
      %c0_11 = arith.constant 0 : index
      %12 = vector.load %arg7[%c0_10, %c0_11] : memref<32x128xf32, #tpu.memory_space<vmem>>, vector<32x128xf32>
      %cst_12 = arith.constant dense<0.000000e+00> : vector<128xf32>
      %13 = vector.multi_reduction <add>, %12, %cst_12 [0] : vector<32x128xf32> to vector<128xf32>
      %14 = vector.shape_cast %13 : vector<128xf32> to vector<1x128xf32>
      %15 = arith.mulf %12, %12 : vector<32x128xf32>
      %cst_13 = arith.constant dense<0.000000e+00> : vector<128xf32>
      %16 = vector.multi_reduction <add>, %15, %cst_13 [0] : vector<32x128xf32> to vector<128xf32>
      %17 = vector.shape_cast %16 : vector<128xf32> to vector<1x128xf32>
      %18 = tpu.iota {dimensions = array<i32: 0>} : vector<8x128xi32>
      %c0_i32_14 = arith.constant 0 : i32
      %19 = vector.broadcast %c0_i32_14 : i32 to vector<8x128xi32>
      %20 = arith.cmpi eq, %18, %19 : vector<8x128xi32>
      %21 = vector.shape_cast %14 : vector<1x128xf32> to vector<1x128xf32>
      %22 = vector.broadcast %21 : vector<1x128xf32> to vector<8x128xf32>
      %c1_i32 = arith.constant 1 : i32
      %23 = vector.broadcast %c1_i32 : i32 to vector<8x128xi32>
      %24 = arith.cmpi eq, %18, %23 : vector<8x128xi32>
      %25 = vector.shape_cast %17 : vector<1x128xf32> to vector<1x128xf32>
      %26 = vector.broadcast %25 : vector<1x128xf32> to vector<8x128xf32>
      %cst_15 = arith.constant 0.000000e+00 : f32
      %27 = vector.broadcast %cst_15 : f32 to vector<8x128xf32>
      %28 = arith.select %24, %26, %27 : vector<8x128xi1>, vector<8x128xf32>
      %29 = arith.select %20, %22, %28 : vector<8x128xi1>, vector<8x128xf32>
      %c0_16 = arith.constant 0 : index
      %c0_17 = arith.constant 0 : index
      %30 = vector.load %arg6[%c0_16, %c0_17] : memref<8x128xf32, #tpu.memory_space<vmem>>, vector<8x128xf32>
      tpu.vector_store %arg6[%c0_16, %c0_17], %29 {strides = array<i32>} : memref<8x128xf32, #tpu.memory_space<vmem>>, vector<8x128xf32>,
      %31 = arith.truncf %12 : vector<32x128xf32> to vector<32x128xbf16>
      %c0_18 = arith.constant 0 : index
      %c0_19 = arith.constant 0 : index
      %32 = vector.load %arg5[%c0_18, %c0_19] : memref<32x128xbf16, #tpu.memory_space<vmem>>, vector<32x128xbf16>
      tpu.vector_store %arg5[%c0_18, %c0_19], %31 {strides = array<i32>} : memref<32x128xbf16, #tpu.memory_space<vmem>>, vector<32x128xbf16>,
    } else {
    }
    return
  }
  func.func @transform_0(%arg0: i32, %arg1: i32, %arg2: i32) -> (i32, i32) {
    %c0_i32 = arith.constant 0 : i32
    return %arg0, %arg2 : i32, i32
  }
  func.func @transform_1(%arg0: i32, %arg1: i32, %arg2: i32) -> (i32, i32) {
    %c0_i32 = arith.constant 0 : i32
    return %arg2, %arg1 : i32, i32
  }
  func.func @transform_2(%arg0: i32, %arg1: i32, %arg2: i32) -> (i32, i32) {
    %c0_i32 = arith.constant 0 : i32
    return %arg0, %arg1 : i32, i32
  }
  func.func @transform_3(%arg0: i32, %arg1: i32, %arg2: i32) -> (i32, i32) {
    %c0_i32 = arith.constant 0 : i32
    return %arg0, %arg1 : i32, i32
  }
}

module attributes {stable_mosaic.version = 11 : i64} {
  func.func @kernel(%arg0: i32, %arg1: memref<32x128xbf16, #tpu.memory_space<vmem>>, %arg2: memref<1x128xf32, #tpu.memory_space<vmem>>, %arg3: memref<1x128xf32, #tpu.memory_space<vmem>>, %arg4: memref<32x128xbf16, #tpu.memory_space<vmem>>) attributes {dimension_semantics = [#tpu.dimension_semantics<parallel>], iteration_bounds = array<i64: 1>, scalar_prefetch = 0 : i64, scratch_operands = 0 : i64, tpu.core_type = #tpu.core_type<tc>, window_params = [{transform_indices = @transform_0, window_bounds = array<i64: 32, 128>}, {pipeline_mode = #tpu.pipeline_mode<synchronous>, transform_indices = @transform_1, window_bounds = array<i64: 1, 128>}, {pipeline_mode = #tpu.pipeline_mode<synchronous>, transform_indices = @transform_2, window_bounds = array<i64: 1, 128>}, {transform_indices = @transform_3, window_bounds = array<i64: 32, 128>}]} {
    %c0 = arith.constant 0 : index
    %c0_0 = arith.constant 0 : index
    %0 = vector.load %arg1[%c0, %c0_0] : memref<32x128xbf16, #tpu.memory_space<vmem>>, vector<32x128xbf16>
    %1 = arith.extf %0 : vector<32x128xbf16> to vector<32x128xf32>
    %c0_1 = arith.constant 0 : index
    %c0_2 = arith.constant 0 : index
    %2 = vector.load %arg2[%c0_1, %c0_2] : memref<1x128xf32, #tpu.memory_space<vmem>>, vector<1x128xf32>
    %3 = vector.broadcast %2 : vector<1x128xf32> to vector<32x128xf32>
    %4 = arith.mulf %1, %3 : vector<32x128xf32>
    %c0_3 = arith.constant 0 : index
    %c0_4 = arith.constant 0 : index
    %5 = vector.load %arg3[%c0_3, %c0_4] : memref<1x128xf32, #tpu.memory_space<vmem>>, vector<1x128xf32>
    %6 = vector.broadcast %5 : vector<1x128xf32> to vector<32x128xf32>
    %7 = arith.addf %4, %6 : vector<32x128xf32>
    %cst = arith.constant 0.000000e+00 : f32
    %8 = vector.broadcast %cst : f32 to vector<32x128xf32>
    %9 = arith.cmpf oge, %7, %8 : vector<32x128xf32>
    %cst_5 = arith.constant 2.000000e-01 : f32
    %10 = vector.broadcast %cst_5 : f32 to vector<32x128xf32>
    %11 = arith.mulf %10, %7 : vector<32x128xf32>
    %12 = arith.select %9, %7, %11 : vector<32x128xi1>, vector<32x128xf32>
    %13 = arith.truncf %12 : vector<32x128xf32> to vector<32x128xbf16>
    %c0_6 = arith.constant 0 : index
    %c0_7 = arith.constant 0 : index
    %14 = vector.load %arg4[%c0_6, %c0_7] : memref<32x128xbf16, #tpu.memory_space<vmem>>, vector<32x128xbf16>
    tpu.vector_store %arg4[%c0_6, %c0_7], %13 {strides = array<i32>} : memref<32x128xbf16, #tpu.memory_space<vmem>>, vector<32x128xbf16>,
    return
  }
  func.func @transform_0(%arg0: i32) -> (i32, i32) {
    %c0_i32 = arith.constant 0 : i32
    %c0_i32_0 = arith.constant 0 : i32
    return %arg0, %c0_i32 : i32, i32
  }
  func.func @transform_1(%arg0: i32) -> (i32, i32) {
    %c0_i32 = arith.constant 0 : i32
    %c0_i32_0 = arith.constant 0 : i32
    %c0_i32_1 = arith.constant 0 : i32
    return %c0_i32, %c0_i32_0 : i32, i32
  }
  func.func @transform_2(%arg0: i32) -> (i32, i32) {
    %c0_i32 = arith.constant 0 : i32
    %c0_i32_0 = arith.constant 0 : i32
    %c0_i32_1 = arith.constant 0 : i32
    return %c0_i32, %c0_i32_0 : i32, i32
  }
  func.func @transform_3(%arg0: i32) -> (i32, i32) {
    %c0_i32 = arith.constant 0 : i32
    %c0_i32_0 = arith.constant 0 : i32
    return %arg0, %c0_i32 : i32, i32
  }
}

module attributes {stable_mosaic.version = 11 : i64} {
  func.func @kernel(%arg0: i32, %arg1: memref<1x16x512xbf16, #tpu.memory_space<vmem>>, %arg2: memref<1x16x128xbf16, #tpu.memory_space<vmem>>, %arg3: memref<1x16x128xbf16, #tpu.memory_space<vmem>>) attributes {dimension_semantics = [#tpu.dimension_semantics<parallel>], iteration_bounds = array<i64: 2>, scalar_prefetch = 0 : i64, scratch_operands = 0 : i64, tpu.core_type = #tpu.core_type<tc>, window_params = [{transform_indices = @transform_0, window_bounds = array<i64: 1, 16, 512>}, {transform_indices = @transform_1, window_bounds = array<i64: 1, 16, 128>}, {transform_indices = @transform_2, window_bounds = array<i64: 1, 16, 128>}]} {
    %c0 = arith.constant 0 : index
    %c0_0 = arith.constant 0 : index
    %c0_1 = arith.constant 0 : index
    %0 = vector.load %arg1[%c0, %c0_0, %c0_1] : memref<1x16x512xbf16, #tpu.memory_space<vmem>>, vector<1x16x512xbf16>
    %1 = vector.extract_strided_slice %0 {offsets = [0, 0, 0], sizes = [1, 16, 128], strides = [1, 1, 1]} : vector<1x16x512xbf16> to vector<1x16x128xbf16>
    %2 = vector.extract_strided_slice %0 {offsets = [0, 0, 128], sizes = [1, 16, 128], strides = [1, 1, 1]} : vector<1x16x512xbf16> to vector<1x16x128xbf16>
    %3 = vector.extract_strided_slice %0 {offsets = [0, 0, 256], sizes = [1, 16, 128], strides = [1, 1, 1]} : vector<1x16x512xbf16> to vector<1x16x128xbf16>
    "tpu.trace_start"() <{level = 10 : i32, message = "bqc,bkc->bqk"}> : () -> ()
    %cst = arith.constant dense<0.000000e+00> : vector<1x16x16xf32>
    %4 = tpu.matmul %1, %2, %cst {dimension_numbers = #tpu.dot_dimension_numbers<[2], [2], [1], [1], [0, 0, 0, 1, 1, 1], [0], [0]>} : vector<1x16x128xbf16>, vector<1x16x128xbf16>, vector<1x16x16xf32> -> vector<1x16x16xf32>
    "tpu.trace_stop"() : () -> ()
    %cst_2 = arith.constant dense<0xFF800000> : vector<1x16xf32>
    %5 = vector.multi_reduction <maximumf>, %4, %cst_2 [2] : vector<1x16x16xf32> to vector<1x16xf32>
    %6 = vector.shape_cast %5 : vector<1x16xf32> to vector<1x16x1xf32>
    %7 = vector.broadcast %6 : vector<1x16x1xf32> to vector<1x16x16xf32>
    %8 = arith.subf %4, %7 : vector<1x16x16xf32>
    %9 = math.exp %8 : vector<1x16x16xf32>
    %cst_3 = arith.constant dense<0.000000e+00> : vector<1x16xf32>
    %10 = vector.multi_reduction <add>, %9, %cst_3 [2] : vector<1x16x16xf32> to vector<1x16xf32>
    %11 = vector.shape_cast %10 : vector<1x16xf32> to vector<1x16x1xf32>
    %12 = vector.broadcast %11 : vector<1x16x1xf32> to vector<1x16x16xf32>
    %13 = arith.divf %9, %12 : vector<1x16x16xf32>
    %14 = arith.truncf %13 : vector<1x16x16xf32> to vector<1x16x16xbf16>
    "tpu.trace_start"() <{level = 10 : i32, message = "bqk,bkc->bqc"}> : () -> ()
    %cst_4 = arith.constant dense<0.000000e+00> : vector<1x16x128xf32>
    %15 = tpu.matmul %14, %3, %cst_4 {dimension_numbers = #tpu.dot_dimension_numbers<[2], [1], [1], [2], [0, 0, 0, 1, 1, 2], [0], [0]>} : vector<1x16x16xbf16>, vector<1x16x128xbf16>, vector<1x16x128xf32> -> vector<1x16x128xf32>
    "tpu.trace_stop"() : () -> ()
    %c0_5 = arith.constant 0 : index
    %c0_6 = arith.constant 0 : index
    %c0_7 = arith.constant 0 : index
    %16 = vector.load %arg2[%c0_5, %c0_6, %c0_7] : memref<1x16x128xbf16, #tpu.memory_space<vmem>>, vector<1x16x128xbf16>
    %17 = arith.extf %16 : vector<1x16x128xbf16> to vector<1x16x128xf32>
    %18 = arith.addf %15, %17 : vector<1x16x128xf32>
    %19 = arith.truncf %18 : vector<1x16x128xf32> to vector<1x16x128xbf16>
    %c0_8 = arith.constant 0 : index
    %c0_9 = arith.constant 0 : index
    %c0_10 = arith.constant 0 : index
    %20 = vector.load %arg3[%c0_8, %c0_9, %c0_10] : memref<1x16x128xbf16, #tpu.memory_space<vmem>>, vector<1x16x128xbf16>
    tpu.vector_store %arg3[%c0_8, %c0_9, %c0_10], %19 {strides = array<i32>} : memref<1x16x128xbf16, #tpu.memory_space<vmem>>, vector<1x16x128xbf16>,
    return
  }
  func.func @transform_0(%arg0: i32) -> (i32, i32, i32) {
    %c0_i32 = arith.constant 0 : i32
    %c0_i32_0 = arith.constant 0 : i32
    %c0_i32_1 = arith.constant 0 : i32
    return %arg0, %c0_i32, %c0_i32_0 : i32, i32, i32
  }
  func.func @transform_1(%arg0: i32) -> (i32, i32, i32) {
    %c0_i32 = arith.constant 0 : i32
    %c0_i32_0 = arith.constant 0 : i32
    %c0_i32_1 = arith.constant 0 : i32
    return %arg0, %c0_i32, %c0_i32_0 : i32, i32, i32
  }
  func.func @transform_2(%arg0: i32) -> (i32, i32, i32) {
    %c0_i32 = arith.constant 0 : i32
    %c0_i32_0 = arith.constant 0 : i32
    %c0_i32_1 = arith.constant 0 : i32
    return %arg0, %c0_i32, %c0_i32_0 : i32, i32, i32
  }
}

module attributes {stable_mosaic.version = 11 : i64} {
  func.func @kernel(%arg0: i32, %arg1: i32, %arg2: i32, %arg3: memref<32x128xbf16, #tpu.memory_space<vmem>>, %arg4: memref<128x256xbf16, #tpu.memory_space<vmem>>, %arg5: memref<1x256xf32, #tpu.memory_space<vmem>>, %arg6: memref<1x256xf32, #tpu.memory_space<vmem>>, %arg7: memref<32x256xbf16, #tpu.memory_space<vmem>>, %arg8: memref<32x256xf32, #tpu.memory_space<vmem>>) attributes {dimension_semantics = [#tpu.dimension_semantics<parallel>, #tpu.dimension_semantics<parallel>, #tpu.dimension_semantics<arbitrary>], iteration_bounds = array<i64: 1, 2, 1>, scalar_prefetch = 0 : i64, scratch_operands = 1 : i64, tpu.core_type = #tpu.core_type<tc>, window_params = [{transform_indices = @transform_0, window_bounds = array<i64: 32, 128>}, {transform_indices = @transform_1, window_bounds = array<i64: 128, 256>}, {transform_indices = @transform_2, window_bounds = array<i64: 1, 256>}, {transform_indices = @transform_3, window_bounds = array<i64: 1, 256>}, {transform_indices = @transform_4, window_bounds = array<i64: 32, 256>}]} {
    %c0_i32 = arith.constant 0 : i32
    %0 = arith.cmpi eq, %arg2, %c0_i32 : i32
    %1 = arith.extui %0 : i1 to i32
    %c0_i32_0 = arith.constant 0 : i32
    %2 = arith.cmpi ne, %1, %c0_i32_0 : i32
    scf.if %2 {
      %cst_10 = arith.constant 0.000000e+00 : f32
      %12 = vector.broadcast %cst_10 : f32 to vector<32x256xf32>
      %c0_11 = arith.constant 0 : index
      %c0_12 = arith.constant 0 : index
      %13 = vector.load %arg8[%c0_11, %c0_12] : memref<32x256xf32, #tpu.memory_space<vmem>>, vector<32x256xf32>
      tpu.vector_store %arg8[%c0_11, %c0_12], %12 {strides = array<i32>} : memref<32x256xf32, #tpu.memory_space<vmem>>, vector<32x256xf32>,
    } else {
    }
    %c0 = arith.constant 0 : index
    %c0_1 = arith.constant 0 : index
    %3 = vector.load %arg8[%c0, %c0_1] : memref<32x256xf32, #tpu.memory_space<vmem>>, vector<32x256xf32>
    %c0_2 = arith.constant 0 : index
    %c0_3 = arith.constant 0 : index
    %4 = vector.load %arg3[%c0_2, %c0_3] : memref<32x128xbf16, #tpu.memory_space<vmem>>, vector<32x128xbf16>
    %c0_4 = arith.constant 0 : index
    %c0_5 = arith.constant 0 : index
    %5 = vector.load %arg4[%c0_4, %c0_5] : memref<128x256xbf16, #tpu.memory_space<vmem>>, vector<128x256xbf16>
    %cst = arith.constant dense<0.000000e+00> : vector<32x256xf32>
    %6 = tpu.matmul %4, %5, %cst {dimension_numbers = #tpu.dot_dimension_numbers<[1], [0], [0], [1], [0, 0, 1, 1], [], []>} : vector<32x128xbf16>, vector<128x256xbf16>, vector<32x256xf32> -> vector<32x256xf32>
    %7 = arith.addf %3, %6 : vector<32x256xf32>
    %c0_6 = arith.constant 0 : index
    %c0_7 = arith.constant 0 : index
    %8 = vector.load %arg8[%c0_6, %c0_7] : memref<32x256xf32, #tpu.memory_space<vmem>>, vector<32x256xf32>
    tpu.vector_store %arg8[%c0_6, %c0_7], %7 {strides = array<i32>} : memref<32x256xf32, #tpu.memory_space<vmem>>, vector<32x256xf32>,
    %c0_i32_8 = arith.constant 0 : i32
    %9 = arith.cmpi eq, %arg2, %c0_i32_8 : i32
    %10 = arith.extui %9 : i1 to i32
    %c0_i32_9 = arith.constant 0 : i32
    %11 = arith.cmpi ne, %10, %c0_i32_9 : i32
    scf.if %11 {
      %c0_10 = arith.constant 0 : index
      %c0_11 = arith.constant 0 : index
      %12 = vector.load %arg8[%c0_10, %c0_11] : memref<32x256xf32, #tpu.memory_space<vmem>>, vector<32x256xf32>
      %c0_12 = arith.constant 0 : index
      %c0_13 = arith.constant 0 : index
      %13 = vector.load %arg5[%c0_12, %c0_13] : memref<1x256xf32, #tpu.memory_space<vmem>>, vector<1x256xf32>
      %14 = vector.broadcast %13 : vector<1x256xf32> to vector<32x256xf32>
      %15 = arith.mulf %12, %14 : vector<32x256xf32>
      %c0_14 = arith.constant 0 : index
      %c0_15 = arith.constant 0 : index
      %16 = vector.load %arg6[%c0_14, %c0_15] : memref<1x256xf32, #tpu.memory_space<vmem>>, vector<1x256xf32>
      %17 = vector.broadcast %16 : vector<1x256xf32> to vector<32x256xf32>
      %18 = arith.addf %15, %17 : vector<32x256xf32>
      %19 = arith.truncf %18 : vector<32x256xf32> to vector<32x256xbf16>
      %c0_16 = arith.constant 0 : index
      %c0_17 = arith.constant 0 : index
      %20 = vector.load %arg7[%c0_16, %c0_17] : memref<32x256xbf16, #tpu.memory_space<vmem>>, vector<32x256xbf16>
      tpu.vector_store %arg7[%c0_16, %c0_17], %19 {strides = array<i32>} : memref<32x256xbf16, #tpu.memory_space<vmem>>, vector<32x256xbf16>,
    } else {
    }
    return
  }
  func.func @transform_0(%arg0: i32, %arg1: i32, %arg2: i32) -> (i32, i32) {
    %c0_i32 = arith.constant 0 : i32
    return %arg0, %arg2 : i32, i32
  }
  func.func @transform_1(%arg0: i32, %arg1: i32, %arg2: i32) -> (i32, i32) {
    %c0_i32 = arith.constant 0 : i32
    return %arg2, %arg1 : i32, i32
  }
  func.func @transform_2(%arg0: i32, %arg1: i32, %arg2: i32) -> (i32, i32) {
    %c0_i32 = arith.constant 0 : i32
    %c0_i32_0 = arith.constant 0 : i32
    return %c0_i32, %arg1 : i32, i32
  }
  func.func @transform_3(%arg0: i32, %arg1: i32, %arg2: i32) -> (i32, i32) {
    %c0_i32 = arith.constant 0 : i32
    %c0_i32_0 = arith.constant 0 : i32
    return %c0_i32, %arg1 : i32, i32
  }
  func.func @transform_4(%arg0: i32, %arg1: i32, %arg2: i32) -> (i32, i32) {
    %c0_i32 = arith.constant 0 : i32
    return %arg0, %arg1 : i32, i32
  }
}

module attributes {stable_mosaic.version = 11 : i64} {
  func.func @kernel(%arg0: i32, %arg1: i32, %arg2: i32, %arg3: memref<32x128xbf16, #tpu.memory_space<vmem>>, %arg4: memref<128x256xbf16, #tpu.memory_space<vmem>>, %arg5: memref<1x256xf32, #tpu.memory_space<vmem>>, %arg6: memref<1x256xf32, #tpu.memory_space<vmem>>, %arg7: memref<32x256xbf16, #tpu.memory_space<vmem>>, %arg8: memref<32x256xf32, #tpu.memory_space<vmem>>) attributes {dimension_semantics = [#tpu.dimension_semantics<parallel>, #tpu.dimension_semantics<parallel>, #tpu.dimension_semantics<arbitrary>], iteration_bounds = array<i64: 1, 2, 1>, scalar_prefetch = 0 : i64, scratch_operands = 1 : i64, tpu.core_type = #tpu.core_type<tc>, window_params = [{transform_indices = @transform_0, window_bounds = array<i64: 32, 128>}, {transform_indices = @transform_1, window_bounds = array<i64: 128, 256>}, {transform_indices = @transform_2, window_bounds = array<i64: 1, 256>}, {transform_indices = @transform_3, window_bounds = array<i64: 1, 256>}, {transform_indices = @transform_4, window_bounds = array<i64: 32, 256>}]} {
    %c0_i32 = arith.constant 0 : i32
    %0 = arith.cmpi eq, %arg2, %c0_i32 : i32
    %1 = arith.extui %0 : i1 to i32
    %c0_i32_0 = arith.constant 0 : i32
    %2 = arith.cmpi ne, %1, %c0_i32_0 : i32
    scf.if %2 {
      %cst_10 = arith.constant 0.000000e+00 : f32
      %12 = vector.broadcast %cst_10 : f32 to vector<32x256xf32>
      %c0_11 = arith.constant 0 : index
      %c0_12 = arith.constant 0 : index
      %13 = vector.load %arg8[%c0_11, %c0_12] : memref<32x256xf32, #tpu.memory_space<vmem>>, vector<32x256xf32>
      tpu.vector_store %arg8[%c0_11, %c0_12], %12 {strides = array<i32>} : memref<32x256xf32, #tpu.memory_space<vmem>>, vector<32x256xf32>,
    } else {
    }
    %c0 = arith.constant 0 : index
    %c0_1 = arith.constant 0 : index
    %3 = vector.load %arg8[%c0, %c0_1] : memref<32x256xf32, #tpu.memory_space<vmem>>, vector<32x256xf32>
    %c0_2 = arith.constant 0 : index
    %c0_3 = arith.constant 0 : index
    %4 = vector.load %arg3[%c0_2, %c0_3] : memref<32x128xbf16, #tpu.memory_space<vmem>>, vector<32x128xbf16>
    %c0_4 = arith.constant 0 : index
    %c0_5 = arith.constant 0 : index
    %5 = vector.load %arg4[%c0_4, %c0_5] : memref<128x256xbf16, #tpu.memory_space<vmem>>, vector<128x256xbf16>
    %cst = arith.constant dense<0.000000e+00> : vector<32x256xf32>
    %6 = tpu.matmul %4, %5, %cst {dimension_numbers = #tpu.dot_dimension_numbers<[1], [0], [0], [1], [0, 0, 1, 1], [], []>} : vector<32x128xbf16>, vector<128x256xbf16>, vector<32x256xf32> -> vector<32x256xf32>
    %7 = arith.addf %3, %6 : vector<32x256xf32>
    %c0_6 = arith.constant 0 : index
    %c0_7 = arith.constant 0 : index
    %8 = vector.load %arg8[%c0_6, %c0_7] : memref<32x256xf32, #tpu.memory_space<vmem>>, vector<32x256xf32>
    tpu.vector_store %arg8[%c0_6, %c0_7], %7 {strides = array<i32>} : memref<32x256xf32, #tpu.memory_space<vmem>>, vector<32x256xf32>,
    %c0_i32_8 = arith.constant 0 : i32
    %9 = arith.cmpi eq, %arg2, %c0_i32_8 : i32
    %10 = arith.extui %9 : i1 to i32
    %c0_i32_9 = arith.constant 0 : i32
    %11 = arith.cmpi ne, %10, %c0_i32_9 : i32
    scf.if %11 {
      %c0_10 = arith.constant 0 : index
      %c0_11 = arith.constant 0 : index
      %12 = vector.load %arg8[%c0_10, %c0_11] : memref<32x256xf32, #tpu.memory_space<vmem>>, vector<32x256xf32>
      %c0_12 = arith.constant 0 : index
      %c0_13 = arith.constant 0 : index
      %13 = vector.load %arg5[%c0_12, %c0_13] : memref<1x256xf32, #tpu.memory_space<vmem>>, vector<1x256xf32>
      %14 = vector.broadcast %13 : vector<1x256xf32> to vector<32x256xf32>
      %15 = arith.mulf %12, %14 : vector<32x256xf32>
      %c0_14 = arith.constant 0 : index
      %c0_15 = arith.constant 0 : index
      %16 = vector.load %arg6[%c0_14, %c0_15] : memref<1x256xf32, #tpu.memory_space<vmem>>, vector<1x256xf32>
      %17 = vector.broadcast %16 : vector<1x256xf32> to vector<32x256xf32>
      %18 = arith.addf %15, %17 : vector<32x256xf32>
      %19 = arith.truncf %18 : vector<32x256xf32> to vector<32x256xbf16>
      %c0_16 = arith.constant 0 : index
      %c0_17 = arith.constant 0 : index
      %20 = vector.load %arg7[%c0_16, %c0_17] : memref<32x256xbf16, #tpu.memory_space<vmem>>, vector<32x256xbf16>
      tpu.vector_store %arg7[%c0_16, %c0_17], %19 {strides = array<i32>} : memref<32x256xbf16, #tpu.memory_space<vmem>>, vector<32x256xbf16>,
    } else {
    }
    return
  }
  func.func @transform_0(%arg0: i32, %arg1: i32, %arg2: i32) -> (i32, i32) {
    %c0_i32 = arith.constant 0 : i32
    return %arg0, %arg2 : i32, i32
  }
  func.func @transform_1(%arg0: i32, %arg1: i32, %arg2: i32) -> (i32, i32) {
    %c0_i32 = arith.constant 0 : i32
    return %arg2, %arg1 : i32, i32
  }
  func.func @transform_2(%arg0: i32, %arg1: i32, %arg2: i32) -> (i32, i32) {
    %c0_i32 = arith.constant 0 : i32
    %c0_i32_0 = arith.constant 0 : i32
    return %c0_i32, %arg1 : i32, i32
  }
  func.func @transform_3(%arg0: i32, %arg1: i32, %arg2: i32) -> (i32, i32) {
    %c0_i32 = arith.constant 0 : i32
    %c0_i32_0 = arith.constant 0 : i32
    return %c0_i32, %arg1 : i32, i32
  }
  func.func @transform_4(%arg0: i32, %arg1: i32, %arg2: i32) -> (i32, i32) {
    %c0_i32 = arith.constant 0 : i32
    return %arg0, %arg1 : i32, i32
  }
}

module attributes {stable_mosaic.version = 11 : i64} {
  func.func @kernel(%arg0: i32, %arg1: i32, %arg2: i32, %arg3: memref<8x512xbf16, #tpu.memory_space<vmem>>, %arg4: memref<512x128xbf16, #tpu.memory_space<vmem>>, %arg5: memref<8x128xf32, #tpu.memory_space<vmem>>, %arg6: memref<8x128xf32, #tpu.memory_space<vmem>>) attributes {dimension_semantics = [#tpu.dimension_semantics<parallel>, #tpu.dimension_semantics<parallel>, #tpu.dimension_semantics<arbitrary>], iteration_bounds = array<i64: 1, 1, 1>, scalar_prefetch = 0 : i64, scratch_operands = 1 : i64, tpu.core_type = #tpu.core_type<tc>, window_params = [{transform_indices = @transform_0, window_bounds = array<i64: 8, 512>}, {transform_indices = @transform_1, window_bounds = array<i64: 512, 128>}, {transform_indices = @transform_2, window_bounds = array<i64: 8, 128>}]} {
    %c0_i32 = arith.constant 0 : i32
    %0 = arith.cmpi eq, %arg2, %c0_i32 : i32
    %1 = arith.extui %0 : i1 to i32
    %c0_i32_0 = arith.constant 0 : i32
    %2 = arith.cmpi ne, %1, %c0_i32_0 : i32
    scf.if %2 {
      %cst_10 = arith.constant 0.000000e+00 : f32
      %12 = vector.broadcast %cst_10 : f32 to vector<8x128xf32>
      %c0_11 = arith.constant 0 : index
      %c0_12 = arith.constant 0 : index
      %13 = vector.load %arg6[%c0_11, %c0_12] : memref<8x128xf32, #tpu.memory_space<vmem>>, vector<8x128xf32>
      tpu.vector_store %arg6[%c0_11, %c0_12], %12 {strides = array<i32>} : memref<8x128xf32, #tpu.memory_space<vmem>>, vector<8x128xf32>,
    } else {
    }
    %c0 = arith.constant 0 : index
    %c0_1 = arith.constant 0 : index
    %3 = vector.load %arg6[%c0, %c0_1] : memref<8x128xf32, #tpu.memory_space<vmem>>, vector<8x128xf32>
    %c0_2 = arith.constant 0 : index
    %c0_3 = arith.constant 0 : index
    %4 = vector.load %arg3[%c0_2, %c0_3] : memref<8x512xbf16, #tpu.memory_space<vmem>>, vector<8x512xbf16>
    %c0_4 = arith.constant 0 : index
    %c0_5 = arith.constant 0 : index
    %5 = vector.load %arg4[%c0_4, %c0_5] : memref<512x128xbf16, #tpu.memory_space<vmem>>, vector<512x128xbf16>
    %cst = arith.constant dense<0.000000e+00> : vector<8x128xf32>
    %6 = tpu.matmul %4, %5, %cst {dimension_numbers = #tpu.dot_dimension_numbers<[1], [0], [0], [1], [0, 0, 1, 1], [], []>} : vector<8x512xbf16>, vector<512x128xbf16>, vector<8x128xf32> -> vector<8x128xf32>
    %7 = arith.addf %3, %6 : vector<8x128xf32>
    %c0_6 = arith.constant 0 : index
    %c0_7 = arith.constant 0 : index
    %8 = vector.load %arg6[%c0_6, %c0_7] : memref<8x128xf32, #tpu.memory_space<vmem>>, vector<8x128xf32>
    tpu.vector_store %arg6[%c0_6, %c0_7], %7 {strides = array<i32>} : memref<8x128xf32, #tpu.memory_space<vmem>>, vector<8x128xf32>,
    %c0_i32_8 = arith.constant 0 : i32
    %9 = arith.cmpi eq, %arg2, %c0_i32_8 : i32
    %10 = arith.extui %9 : i1 to i32
    %c0_i32_9 = arith.constant 0 : i32
    %11 = arith.cmpi ne, %10, %c0_i32_9 : i32
    scf.if %11 {
      %c0_10 = arith.constant 0 : index
      %c0_11 = arith.constant 0 : index
      %12 = vector.load %arg6[%c0_10, %c0_11] : memref<8x128xf32, #tpu.memory_space<vmem>>, vector<8x128xf32>
      %cst_12 = arith.constant 0.000000e+00 : f32
      %13 = vector.broadcast %cst_12 : f32 to vector<8x128xf32>
      %14 = arith.subf %13, %12 : vector<8x128xf32>
      %15 = math.exp %14 : vector<8x128xf32>
      %cst_13 = arith.constant 1.000000e+00 : f32
      %16 = vector.broadcast %cst_13 : f32 to vector<8x128xf32>
      %17 = arith.addf %16, %15 : vector<8x128xf32>
      %cst_14 = arith.constant 1.000000e+00 : f32
      %18 = vector.broadcast %cst_14 : f32 to vector<8x128xf32>
      %19 = arith.divf %18, %17 : vector<8x128xf32>
      %c0_15 = arith.constant 0 : index
      %c0_16 = arith.constant 0 : index
      %20 = vector.load %arg5[%c0_15, %c0_16] : memref<8x128xf32, #tpu.memory_space<vmem>>, vector<8x128xf32>
      tpu.vector_store %arg5[%c0_15, %c0_16], %19 {strides = array<i32>} : memref<8x128xf32, #tpu.memory_space<vmem>>, vector<8x128xf32>,
    } else {
    }
    return
  }
  func.func @transform_0(%arg0: i32, %arg1: i32, %arg2: i32) -> (i32, i32) {
    %c0_i32 = arith.constant 0 : i32
    return %arg0, %arg2 : i32, i32
  }
  func.func @transform_1(%arg0: i32, %arg1: i32, %arg2: i32) -> (i32, i32) {
    %c0_i32 = arith.constant 0 : i32
    return %arg2, %arg1 : i32, i32
  }
  func.func @transform_2(%arg0: i32, %arg1: i32, %arg2: i32) -> (i32, i32) {
    %c0_i32 = arith.constant 0 : i32
    return %arg0, %arg1 : i32, i32
  }
}

</mosaic_0001>

<llo_original>
// kernel: discriminator_forward.20
$region0: #{discriminator_forward.20}
  #allocation0 [shape = 'u32[]', space=smem, size = 0x4, offset = 0x4, fixed_abs, tag = 'smem constant byte address 0x4 - core index']
  #allocation1 [shape = 'u32[144,128]{1,0:T(1,128)}', space=vmem, size = 0x12000, scoped, tag = 'internal scratch']
  #allocation2 [shape = 'f32[128,128]{1,0:T(8,128)}', space=vmem, size = 0x10000, scoped, tag = 'scratch operand']
  #allocation3 [shape = 'u32[2048]{0}', space=vmem, size = 0x2000, scoped, tag = 'scoped memory for discriminator_forward.20']
  #allocation4 [shape = 'u32[2048]{0}', space=vmem, size = 0x2000, scoped, tag = 'scoped memory for discriminator_forward.20']
  #allocation5 [shape = 'u32[2048]{0}', space=vmem, size = 0x2000, scoped, tag = 'scoped memory for discriminator_forward.20']
  #allocation6 [shape = 'u32[2048]{0}', space=vmem, size = 0x2000, scoped, tag = 'scoped memory for discriminator_forward.20']
  #allocation7 [shape = 'u32[2048]{0}', space=vmem, size = 0x2000, scoped, tag = 'scoped memory for discriminator_forward.20']
  #allocation8 [shape = 'u32[2048]{0}', space=vmem, size = 0x2000, scoped, tag = 'scoped memory for discriminator_forward.20']
  #allocation9 [shape = 'u32[2048]{0}', space=vmem, size = 0x2000, scoped, tag = 'scoped memory for discriminator_forward.20']
  #allocation10 [shape = 'u32[2048]{0}', space=vmem, size = 0x2000, scoped, tag = 'scoped memory for discriminator_forward.20']
  #allocation11 [shape = 'u32[2048]{0}', space=vmem, size = 0x2000, scoped, tag = 'scoped memory for discriminator_forward.20']
  #allocation12 [shape = 'u32[2048]{0}', space=vmem, size = 0x2000, scoped, tag = 'scoped memory for discriminator_forward.20']
  %s0 = inlined_call_operand.vmem [shape: bf16[48,16], index: 0, kind: input, shape index: {}]
  %s1 = inlined_call_operand.<no memory space> [shape: bf16[], index: 1, kind: input, shape index: {}]
  %s2 = inlined_call_operand.vmem [shape: bf16[128,48], index: 2, kind: input, shape index: {}]
  %s3 = inlined_call_operand.vmem [shape: bf16[128,128], index: 3, kind: output, shape index: {}]
  %s4 = sld [smem:[#allocation0]]
  $region26: #{discriminator_forward.20} parent=0
    _
  %s6 = ssub.s32 1, %s4
  %s7 = scalar_select 0, %s6, %s4
  %v8 = vstv %s1
  %v9 = vunpack.i.l.bf16 %v8
  %v11 = vunpack.i.h.bf16 %v8
  %v13 = vstv %s1
  %v14 = vunpack.i.l.bf16 %v13
  %v16 = vunpack.i.h.bf16 %v13
  $region1: #{discriminator_forward.20} parent=0
    #allocation13 [shape = 'u8[32768]{0}', space=vmem, size = 0x8000, dematerialized = true, scoped, tag = 'FusionAdapter Buffer %fusion.27 = bf16[128,128]{1,0:T(8,128)(2,1)} fusion(%param_2.47, %param_1.57), kind=kLoop, calls=%fused_computation.33.clone, metadata={op_name="jit(discriminator_forward)/jit(_pad)/pad" stack_frame_id=22}']
    #allocation14 [shape = 'u8[32768]{0}', space=vmem, size = 0x8000, dematerialized = true, scoped, tag = 'FusionAdapter Buffer %fusion.26 = bf16[128,128]{1,0:T(8,128)(2,1)} fusion(%param_0.70, %param_1.57), kind=kLoop, calls=%fused_computation.32.clone, metadata={op_name="jit(discriminator_forward)/jit(_pad)/pad" stack_frame_id=26}']
    // Predicated region
    $region2: #{discriminator_forward.20} parent=1 // pred_check
      _
    $region3: #{discriminator_forward.20} parent=1 // pred_check_branch
      %19 = sbr.rel (0) target = $region5
    $region4: #{discriminator_forward.20} parent=1 // pred_region
      _
    $region5: #{discriminator_forward.20} parent=1 // pred_fallthru
      _
    // Predicated region
    $region6: #{discriminator_forward.20} parent=1 // pred_check
      _
    $region7: #{discriminator_forward.20} parent=1 // pred_check_branch
      %21 = sbr.rel (0) target = $region9
    $region8: #{discriminator_forward.20} parent=1 // pred_region
      _
    $region9: #{discriminator_forward.20} parent=1 // pred_fallthru
      _
    %s23 = sor.u32 255, 127
    %s24 = sand.u32 %s23, 85
    %s25 = sshrl.u32 %s24, 1
    %s26 = sor.u32 %s24, %s25
    %s27 = sand.u32 51, %s26
    %s28 = sshrl.u32 %s27, 2
    %s29 = sor.u32 %s27, %s28
    %s30 = sand.u32 15, %s29
    %v31 = vld [vmem:[%s2] sm:%s30]
    %v32 = vunpack.c.l.bf16 %v31
    %v33 = vunpack.c.h.bf16 %v31
    %v34 = vlaneseq
    %v35 = vand.u32 %v34, 127
    %vm37 = vcmp.lt.s32.totalorder %v35, 48
    %v38 = vsel %vm37, %v32, %v9
    %v39 = vpack.c.bf16 0.0, %v38
    %41 = vst [vmem:[#allocation13] sm:$0xf] %v39
    %s42 = scalar_lea.vmem %s2, 4
    %s44 = sor.u32 255, 127
    %s45 = sand.u32 %s44, 85
    %s46 = sshrl.u32 %s45, 1
    %s47 = sor.u32 %s45, %s46
    %s48 = sand.u32 51, %s47
    %s49 = sshrl.u32 %s48, 2
    %s50 = sor.u32 %s48, %s49
    %s51 = sand.u32 15, %s50
    %v52 = vld [vmem:[%s42] sm:%s51]
    %v53 = vunpack.c.l.bf16 %v52
    %v54 = vunpack.c.h.bf16 %v52
    %v55 = vlaneseq
    %v56 = vand.u32 %v55, 127
    %vm58 = vcmp.lt.s32.totalorder %v56, 48
    %v59 = vsel %vm58, %v53, %v9
    %s60 = scalar_lea.vmem [#allocation13], 4
    %v61 = vpack.c.bf16 0.0, %v59
    %63 = vst [vmem:[%s60] sm:$0xf] %v61
    %s64 = scalar_lea.vmem %s2, 8
    %s66 = sor.u32 255, 127
    %s67 = sand.u32 %s66, 85
    %s68 = sshrl.u32 %s67, 1
    %s69 = sor.u32 %s67, %s68
    %s70 = sand.u32 51, %s69
    %s71 = sshrl.u32 %s70, 2
    %s72 = sor.u32 %s70, %s71
    %s73 = sand.u32 15, %s72
    %v74 = vld [vmem:[%s64] sm:%s73]
    %v75 = vunpack.c.l.bf16 %v74
    %v76 = vunpack.c.h.bf16 %v74
    %v77 = vlaneseq
    %v78 = vand.u32 %v77, 127
    %vm80 = vcmp.lt.s32.totalorder %v78, 48
    %v81 = vsel %vm80, %v75, %v9
    %s82 = scalar_lea.vmem [#allocation13], 8
    %v83 = vpack.c.bf16 0.0, %v81
    %85 = vst [vmem:[%s82] sm:$0xf] %v83
    %s86 = scalar_lea.vmem %s2, 12
    %s88 = sor.u32 255, 127
    %s89 = sand.u32 %s88, 85
    %s90 = sshrl.u32 %s89, 1
    %s91 = sor.u32 %s89, %s90
    %s92 = sand.u32 51, %s91
    %s93 = sshrl.u32 %s92, 2
    %s94 = sor.u32 %s92, %s93
    %s95 = sand.u32 15, %s94
    %v96 = vld [vmem:[%s86] sm:%s95]
    %v97 = vunpack.c.l.bf16 %v96
    %v98 = vunpack.c.h.bf16 %v96
    %v99 = vlaneseq
    %v100 = vand.u32 %v99, 127
    %vm102 = vcmp.lt.s32.totalorder %v100, 48
    %v103 = vsel %vm102, %v97, %v9
    %s104 = scalar_lea.vmem [#allocation13], 12
    %v105 = vpack.c.bf16 0.0, %v103
    %107 = vst [vmem:[%s104] sm:$0xf] %v105
    %s108 = scalar_lea.vmem %s2, 16
    %s110 = sor.u32 255, 127
    %s111 = sand.u32 %s110, 85
    %s112 = sshrl.u32 %s111, 1
    %s113 = sor.u32 %s111, %s112
    %s114 = sand.u32 51, %s113
    %s115 = sshrl.u32 %s114, 2
    %s116 = sor.u32 %s114, %s115
    %s117 = sand.u32 15, %s116
    %v118 = vld [vmem:[%s108] sm:%s117]
    %v119 = vunpack.c.l.bf16 %v118
    %v120 = vunpack.c.h.bf16 %v118
    %v121 = vlaneseq
    %v122 = vand.u32 %v121, 127
    %vm124 = vcmp.lt.s32.totalorder %v122, 48
    %v125 = vsel %vm124, %v119, %v9
    %s126 = scalar_lea.vmem [#allocation13], 16
    %v127 = vpack.c.bf16 0.0, %v125
    %129 = vst [vmem:[%s126] sm:$0xf] %v127
    %s130 = scalar_lea.vmem %s2, 20
    %s132 = sor.u32 255, 127
    %s133 = sand.u32 %s132, 85
    %s134 = sshrl.u32 %s133, 1
    %s135 = sor.u32 %s133, %s134
    %s136 = sand.u32 51, %s135
    %s137 = sshrl.u32 %s136, 2
    %s138 = sor.u32 %s136, %s137
    %s139 = sand.u32 15, %s138
    %v140 = vld [vmem:[%s130] sm:%s139]
    %v141 = vunpack.c.l.bf16 %v140
    %v142 = vunpack.c.h.bf16 %v140
    %v143 = vlaneseq
    %v144 = vand.u32 %v143, 127
    %vm146 = vcmp.lt.s32.totalorder %v144, 48
    %v147 = vsel %vm146, %v141, %v9
    %s148 = scalar_lea.vmem [#allocation13], 20
    %v149 = vpack.c.bf16 0.0, %v147
    %151 = vst [vmem:[%s148] sm:$0xf] %v149
    %s152 = scalar_lea.vmem %s2, 24
    %s154 = sor.u32 255, 127
    %s155 = sand.u32 %s154, 85
    %s156 = sshrl.u32 %s155, 1
    %s157 = sor.u32 %s155, %s156
    %s158 = sand.u32 51, %s157
    %s159 = sshrl.u32 %s158, 2
    %s160 = sor.u32 %s158, %s159
    %s161 = sand.u32 15, %s160
    %v162 = vld [vmem:[%s152] sm:%s161]
    %v163 = vunpack.c.l.bf16 %v162
    %v164 = vunpack.c.h.bf16 %v162
    %v165 = vlaneseq
    %v166 = vand.u32 %v165, 127
    %vm168 = vcmp.lt.s32.totalorder %v166, 48
    %v169 = vsel %vm168, %v163, %v9
    %s170 = scalar_lea.vmem [#allocation13], 24
    %v171 = vpack.c.bf16 0.0, %v169
    %173 = vst [vmem:[%s170] sm:$0xf] %v171
    %s174 = scalar_lea.vmem %s2, 28
    %s176 = sor.u32 255, 127
    %s177 = sand.u32 %s176, 85
    %s178 = sshrl.u32 %s177, 1
    %s179 = sor.u32 %s177, %s178
    %s180 = sand.u32 51, %s179
    %s181 = sshrl.u32 %s180, 2
    %s182 = sor.u32 %s180, %s181
    %s183 = sand.u32 15, %s182
    %v184 = vld [vmem:[%s174] sm:%s183]
    %v185 = vunpack.c.l.bf16 %v184
    %v186 = vunpack.c.h.bf16 %v184
    %v187 = vlaneseq
    %v188 = vand.u32 %v187, 127
    %vm190 = vcmp.lt.s32.totalorder %v188, 48
    %v191 = vsel %vm190, %v185, %v9
    %s192 = scalar_lea.vmem [#allocation13], 28
    %v193 = vpack.c.bf16 0.0, %v191
    %195 = vst [vmem:[%s192] sm:$0xf] %v193
    %s196 = scalar_lea.vmem %s2, 32
    %s198 = sor.u32 255, 127
    %s199 = sand.u32 %s198, 85
    %s200 = sshrl.u32 %s199, 1
    %s201 = sor.u32 %s199, %s200
    %s202 = sand.u32 51, %s201
    %s203 = sshrl.u32 %s202, 2
    %s204 = sor.u32 %s202, %s203
    %s205 = sand.u32 15, %s204
    %v206 = vld [vmem:[%s196] sm:%s205]
    %v207 = vunpack.c.l.bf16 %v206
    %v208 = vunpack.c.h.bf16 %v206
    %v209 = vlaneseq
    %v210 = vand.u32 %v209, 127
    %vm212 = vcmp.lt.s32.totalorder %v210, 48
    %v213 = vsel %vm212, %v207, %v9
    %s214 = scalar_lea.vmem [#allocation13], 32
    %v215 = vpack.c.bf16 0.0, %v213
    %217 = vst [vmem:[%s214] sm:$0xf] %v215
    %s218 = scalar_lea.vmem %s2, 36
    %s220 = sor.u32 255, 127
    %s221 = sand.u32 %s220, 85
    %s222 = sshrl.u32 %s221, 1
    %s223 = sor.u32 %s221, %s222
    %s224 = sand.u32 51, %s223
    %s225 = sshrl.u32 %s224, 2
    %s226 = sor.u32 %s224, %s225
    %s227 = sand.u32 15, %s226
    %v228 = vld [vmem:[%s218] sm:%s227]
    %v229 = vunpack.c.l.bf16 %v228
    %v230 = vunpack.c.h.bf16 %v228
    %v231 = vlaneseq
    %v232 = vand.u32 %v231, 127
    %vm234 = vcmp.lt.s32.totalorder %v232, 48
    %v235 = vsel %vm234, %v229, %v9
    %s236 = scalar_lea.vmem [#allocation13], 36
    %v237 = vpack.c.bf16 0.0, %v235
    %239 = vst [vmem:[%s236] sm:$0xf] %v237
    %s240 = scalar_lea.vmem %s2, 40
    %s242 = sor.u32 255, 127
    %s243 = sand.u32 %s242, 85
    %s244 = sshrl.u32 %s243, 1
    %s245 = sor.u32 %s243, %s244
    %s246 = sand.u32 51, %s245
    %s247 = sshrl.u32 %s246, 2
    %s248 = sor.u32 %s246, %s247
    %s249 = sand.u32 15, %s248
    %v250 = vld [vmem:[%s240] sm:%s249]
    %v251 = vunpack.c.l.bf16 %v250
    %v252 = vunpack.c.h.bf16 %v250
    %v253 = vlaneseq
    %v254 = vand.u32 %v253, 127
    %vm256 = vcmp.lt.s32.totalorder %v254, 48
    %v257 = vsel %vm256, %v251, %v9
    %s258 = scalar_lea.vmem [#allocation13], 40
    %v259 = vpack.c.bf16 0.0, %v257
    %261 = vst [vmem:[%s258] sm:$0xf] %v259
    %s262 = scalar_lea.vmem %s2, 44
    %s264 = sor.u32 255, 127
    %s265 = sand.u32 %s264, 85
    %s266 = sshrl.u32 %s265, 1
    %s267 = sor.u32 %s265, %s266
    %s268 = sand.u32 51, %s267
    %s269 = sshrl.u32 %s268, 2
    %s270 = sor.u32 %s268, %s269
    %s271 = sand.u32 15, %s270
    %v272 = vld [vmem:[%s262] sm:%s271]
    %v273 = vunpack.c.l.bf16 %v272
    %v274 = vunpack.c.h.bf16 %v272
    %v275 = vlaneseq
    %v276 = vand.u32 %v275, 127
    %vm278 = vcmp.lt.s32.totalorder %v276, 48
    %v279 = vsel %vm278, %v273, %v9
    %s280 = scalar_lea.vmem [#allocation13], 44
    %v281 = vpack.c.bf16 0.0, %v279
    %283 = vst [vmem:[%s280] sm:$0xf] %v281
    %s284 = scalar_lea.vmem %s2, 48
    %s286 = sor.u32 255, 127
    %s287 = sand.u32 %s286, 85
    %s288 = sshrl.u32 %s287, 1
    %s289 = sor.u32 %s287, %s288
    %s290 = sand.u32 51, %s289
    %s291 = sshrl.u32 %s290, 2
    %s292 = sor.u32 %s290, %s291
    %s293 = sand.u32 15, %s292
    %v294 = vld [vmem:[%s284] sm:%s293]
    %v295 = vunpack.c.l.bf16 %v294
    %v296 = vunpack.c.h.bf16 %v294
    %v297 = vlaneseq
    %v298 = vand.u32 %v297, 127
    %vm300 = vcmp.lt.s32.totalorder %v298, 48
    %v301 = vsel %vm300, %v295, %v9
    %s302 = scalar_lea.vmem [#allocation13], 48
    %v303 = vpack.c.bf16 0.0, %v301
    %305 = vst [vmem:[%s302] sm:$0xf] %v303
    %s306 = scalar_lea.vmem %s2, 52
    %s308 = sor.u32 255, 127
    %s309 = sand.u32 %s308, 85
    %s310 = sshrl.u32 %s309, 1
    %s311 = sor.u32 %s309, %s310
    %s312 = sand.u32 51, %s311
    %s313 = sshrl.u32 %s312, 2
    %s314 = sor.u32 %s312, %s313
    %s315 = sand.u32 15, %s314
    %v316 = vld [vmem:[%s306] sm:%s315]
    %v317 = vunpack.c.l.bf16 %v316
    %v318 = vunpack.c.h.bf16 %v316
    %v319 = vlaneseq
    %v320 = vand.u32 %v319, 127
    %vm322 = vcmp.lt.s32.totalorder %v320, 48
    %v323 = vsel %vm322, %v317, %v9
    %s324 = scalar_lea.vmem [#allocation13], 52
    %v325 = vpack.c.bf16 0.0, %v323
    %327 = vst [vmem:[%s324] sm:$0xf] %v325
    %s328 = scalar_lea.vmem %s2, 56
    %s330 = sor.u32 255, 127
    %s331 = sand.u32 %s330, 85
    %s332 = sshrl.u32 %s331, 1
    %s333 = sor.u32 %s331, %s332
    %s334 = sand.u32 51, %s333
    %s335 = sshrl.u32 %s334, 2
    %s336 = sor.u32 %s334, %s335
    %s337 = sand.u32 15, %s336
    %v338 = vld [vmem:[%s328] sm:%s337]
    %v339 = vunpack.c.l.bf16 %v338
    %v340 = vunpack.c.h.bf16 %v338
    %v341 = vlaneseq
    %v342 = vand.u32 %v341, 127
    %vm344 = vcmp.lt.s32.totalorder %v342, 48
    %v345 = vsel %vm344, %v339, %v9
    %s346 = scalar_lea.vmem [#allocation13], 56
    %v347 = vpack.c.bf16 0.0, %v345
    %349 = vst [vmem:[%s346] sm:$0xf] %v347
    %s350 = scalar_lea.vmem %s2, 60
    %s352 = sor.u32 255, 127
    %s353 = sand.u32 %s352, 85
    %s354 = sshrl.u32 %s353, 1
    %s355 = sor.u32 %s353, %s354
    %s356 = sand.u32 51, %s355
    %s357 = sshrl.u32 %s356, 2
    %s358 = sor.u32 %s356, %s357
    %s359 = sand.u32 15, %s358
    %v360 = vld [vmem:[%s350] sm:%s359]
    %v361 = vunpack.c.l.bf16 %v360
    %v362 = vunpack.c.h.bf16 %v360
    %v363 = vlaneseq
    %v364 = vand.u32 %v363, 127
    %vm366 = vcmp.lt.s32.totalorder %v364, 48
    %v367 = vsel %vm366, %v361, %v9
    %s368 = scalar_lea.vmem [#allocation13], 60
    %v369 = vpack.c.bf16 0.0, %v367
    %371 = vst [vmem:[%s368] sm:$0xf] %v369
    %s373 = sor.u32 255, 127
    %s374 = sand.u32 %s373, 85
    %s375 = sshrl.u32 %s374, 1
    %s376 = sor.u32 %s374, %s375
    %s377 = sand.u32 51, %s376
    %s378 = sshrl.u32 %s377, 2
    %s379 = sor.u32 %s377, %s378
    %s380 = sand.u32 15, %s379
    %v381 = vld [vmem:[%s0] sm:%s380]
    %v382 = vunpack.c.l.bf16 %v381
    %v383 = vunpack.c.h.bf16 %v381
    %v384 = vlaneseq
    %v385 = vand.u32 %v384, 127
    %vm387 = vcmp.lt.s32.totalorder %v385, 16
    %v388 = vsel %vm387, %v382, %v14
    %v389 = vpack.c.bf16 0.0, %v388
    %391 = vst [vmem:[#allocation14] sm:$0xf] %v389
    %s392 = scalar_lea.vmem %s0, 4
    %s394 = sor.u32 255, 127
    %s395 = sand.u32 %s394, 85
    %s396 = sshrl.u32 %s395, 1
    %s397 = sor.u32 %s395, %s396
    %s398 = sand.u32 51, %s397
    %s399 = sshrl.u32 %s398, 2
    %s400 = sor.u32 %s398, %s399
    %s401 = sand.u32 15, %s400
    %v402 = vld [vmem:[%s392] sm:%s401]
    %v403 = vunpack.c.l.bf16 %v402
    %v404 = vunpack.c.h.bf16 %v402
    %v405 = vlaneseq
    %v406 = vand.u32 %v405, 127
    %vm408 = vcmp.lt.s32.totalorder %v406, 16
    %v409 = vsel %vm408, %v403, %v14
    %s410 = scalar_lea.vmem [#allocation14], 4
    %v411 = vpack.c.bf16 0.0, %v409
    %413 = vst [vmem:[%s410] sm:$0xf] %v411
    %s414 = scalar_lea.vmem %s0, 8
    %s416 = sor.u32 255, 127
    %s417 = sand.u32 %s416, 85
    %s418 = sshrl.u32 %s417, 1
    %s419 = sor.u32 %s417, %s418
    %s420 = sand.u32 51, %s419
    %s421 = sshrl.u32 %s420, 2
    %s422 = sor.u32 %s420, %s421
    %s423 = sand.u32 15, %s422
    %v424 = vld [vmem:[%s414] sm:%s423]
    %v425 = vunpack.c.l.bf16 %v424
    %v426 = vunpack.c.h.bf16 %v424
    %v427 = vlaneseq
    %v428 = vand.u32 %v427, 127
    %vm430 = vcmp.lt.s32.totalorder %v428, 16
    %v431 = vsel %vm430, %v425, %v14
    %s432 = scalar_lea.vmem [#allocation14], 8
    %v433 = vpack.c.bf16 0.0, %v431
    %435 = vst [vmem:[%s432] sm:$0xf] %v433
    %s436 = scalar_lea.vmem %s0, 12
    %s438 = sor.u32 255, 127
    %s439 = sand.u32 %s438, 85
    %s440 = sshrl.u32 %s439, 1
    %s441 = sor.u32 %s439, %s440
    %s442 = sand.u32 51, %s441
    %s443 = sshrl.u32 %s442, 2
    %s444 = sor.u32 %s442, %s443
    %s445 = sand.u32 15, %s444
    %v446 = vld [vmem:[%s436] sm:%s445]
    %v447 = vunpack.c.l.bf16 %v446
    %v448 = vunpack.c.h.bf16 %v446
    %v449 = vlaneseq
    %v450 = vand.u32 %v449, 127
    %vm452 = vcmp.lt.s32.totalorder %v450, 16
    %v453 = vsel %vm452, %v447, %v14
    %s454 = scalar_lea.vmem [#allocation14], 12
    %v455 = vpack.c.bf16 0.0, %v453
    %457 = vst [vmem:[%s454] sm:$0xf] %v455
    %s458 = scalar_lea.vmem %s0, 16
    %s460 = sor.u32 255, 127
    %s461 = sand.u32 %s460, 85
    %s462 = sshrl.u32 %s461, 1
    %s463 = sor.u32 %s461, %s462
    %s464 = sand.u32 51, %s463
    %s465 = sshrl.u32 %s464, 2
    %s466 = sor.u32 %s464, %s465
    %s467 = sand.u32 15, %s466
    %v468 = vld [vmem:[%s458] sm:%s467]
    %v469 = vunpack.c.l.bf16 %v468
    %v470 = vunpack.c.h.bf16 %v468
    %v471 = vlaneseq
    %v472 = vand.u32 %v471, 127
    %vm474 = vcmp.lt.s32.totalorder %v472, 16
    %v475 = vsel %vm474, %v469, %v14
    %s476 = scalar_lea.vmem [#allocation14], 16
    %v477 = vpack.c.bf16 0.0, %v475
    %479 = vst [vmem:[%s476] sm:$0xf] %v477
    %s480 = scalar_lea.vmem %s0, 20
    %s482 = sor.u32 255, 127
    %s483 = sand.u32 %s482, 85
    %s484 = sshrl.u32 %s483, 1
    %s485 = sor.u32 %s483, %s484
    %s486 = sand.u32 51, %s485
    %s487 = sshrl.u32 %s486, 2
    %s488 = sor.u32 %s486, %s487
    %s489 = sand.u32 15, %s488
    %v490 = vld [vmem:[%s480] sm:%s489]
    %v491 = vunpack.c.l.bf16 %v490
    %v492 = vunpack.c.h.bf16 %v490
    %v493 = vlaneseq
    %v494 = vand.u32 %v493, 127
    %vm496 = vcmp.lt.s32.totalorder %v494, 16
    %v497 = vsel %vm496, %v491, %v14
    %s498 = scalar_lea.vmem [#allocation14], 20
    %v499 = vpack.c.bf16 0.0, %v497
    %501 = vst [vmem:[%s498] sm:$0xf] %v499
    %s502 = scalar_lea.vmem [#allocation14], 24
    %v503 = vpack.c.bf16 0.0, %v14
    %505 = vst [vmem:[%s502] sm:$0xf] %v503
    %s506 = scalar_lea.vmem [#allocation14], 28
    %v507 = vpack.c.bf16 0.0, %v14
    %509 = vst [vmem:[%s506] sm:$0xf] %v507
    %s510 = scalar_lea.vmem [#allocation14], 32
    %v511 = vpack.c.bf16 0.0, %v14
    %513 = vst [vmem:[%s510] sm:$0xf] %v511
    %s514 = scalar_lea.vmem [#allocation14], 36
    %v515 = vpack.c.bf16 0.0, %v14
    %517 = vst [vmem:[%s514] sm:$0xf] %v515
    %s518 = scalar_lea.vmem [#allocation14], 40
    %v519 = vpack.c.bf16 0.0, %v14
    %521 = vst [vmem:[%s518] sm:$0xf] %v519
    %s522 = scalar_lea.vmem [#allocation14], 44
    %v523 = vpack.c.bf16 0.0, %v14
    %525 = vst [vmem:[%s522] sm:$0xf] %v523
    %s526 = scalar_lea.vmem [#allocation14], 48
    %v527 = vpack.c.bf16 0.0, %v14
    %529 = vst [vmem:[%s526] sm:$0xf] %v527
    %s530 = scalar_lea.vmem [#allocation14], 52
    %v531 = vpack.c.bf16 0.0, %v14
    %533 = vst [vmem:[%s530] sm:$0xf] %v531
    %s534 = scalar_lea.vmem [#allocation14], 56
    %v535 = vpack.c.bf16 0.0, %v14
    %537 = vst [vmem:[%s534] sm:$0xf] %v535
    %s538 = scalar_lea.vmem [#allocation14], 60
    %v539 = vpack.c.bf16 0.0, %v14
    %541 = vst [vmem:[%s538] sm:$0xf] %v539
    %p543 = scmp.eq.s32.totalorder 0, 0
    // Predicated region
    $region10: #{discriminator_forward.20} parent=1 // pred_check
      %p544 = pneg %p543
    $region11: #{discriminator_forward.20} parent=1 // pred_check_branch
      %546 = sbr.rel (%p544) target = $region13
    $region12: #{discriminator_forward.20} parent=1 // pred_region
      %547 = vst [vmem:[#allocation2] sm:$0xff] 0.0
      %548 = vst [vmem:[#allocation2 + $0x8] sm:$0xff] 0.0
      %549 = vst [vmem:[#allocation2 + $0x10] sm:$0xff] 0.0
      %550 = vst [vmem:[#allocation2 + $0x18] sm:$0xff] 0.0
      %551 = vst [vmem:[#allocation2 + $0x20] sm:$0xff] 0.0
      %552 = vst [vmem:[#allocation2 + $0x28] sm:$0xff] 0.0
      %553 = vst [vmem:[#allocation2 + $0x30] sm:$0xff] 0.0
      %554 = vst [vmem:[#allocation2 + $0x38] sm:$0xff] 0.0
      %555 = vst [vmem:[#allocation2 + $0x40] sm:$0xff] 0.0
      %556 = vst [vmem:[#allocation2 + $0x48] sm:$0xff] 0.0
      %557 = vst [vmem:[#allocation2 + $0x50] sm:$0xff] 0.0
      %558 = vst [vmem:[#allocation2 + $0x58] sm:$0xff] 0.0
      %559 = vst [vmem:[#allocation2 + $0x60] sm:$0xff] 0.0
      %560 = vst [vmem:[#allocation2 + $0x68] sm:$0xff] 0.0
      %561 = vst [vmem:[#allocation2 + $0x70] sm:$0xff] 0.0
      %562 = vst [vmem:[#allocation2 + $0x78] sm:$0xff] 0.0
    $region13: #{discriminator_forward.20} parent=1 // pred_fallthru
      _
    %v563 = vld [vmem:[#allocation2] sm:$0xff]
    %v564 = vld [vmem:[#allocation2 + $0x8] sm:$0xff]
    %v565 = vld [vmem:[#allocation2 + $0x10] sm:$0xff]
    %v566 = vld [vmem:[#allocation2 + $0x18] sm:$0xff]
    %v567 = vld [vmem:[#allocation2 + $0x20] sm:$0xff]
    %v568 = vld [vmem:[#allocation2 + $0x28] sm:$0xff]
    %v569 = vld [vmem:[#allocation2 + $0x30] sm:$0xff]
    %v570 = vld [vmem:[#allocation2 + $0x38] sm:$0xff]
    %v571 = vld [vmem:[#allocation2 + $0x40] sm:$0xff]
    %v572 = vld [vmem:[#allocation2 + $0x48] sm:$0xff]
    %v573 = vld [vmem:[#allocation2 + $0x50] sm:$0xff]
    %v574 = vld [vmem:[#allocation2 + $0x58] sm:$0xff]
    %v575 = vld [vmem:[#allocation2 + $0x60] sm:$0xff]
    %v576 = vld [vmem:[#allocation2 + $0x68] sm:$0xff]
    %v577 = vld [vmem:[#allocation2 + $0x70] sm:$0xff]
    %v578 = vld [vmem:[#allocation2 + $0x78] sm:$0xff]
    %v579 = vld [vmem:[#allocation13] sm:$0xf]
    %v580 = vld [vmem:[#allocation13 + $0x4] sm:$0xf]
    %v581 = vld [vmem:[#allocation13 + $0x8] sm:$0xf]
    %v582 = vld [vmem:[#allocation13 + $0xc] sm:$0xf]
    %v583 = vld [vmem:[#allocation13 + $0x10] sm:$0xf]
    %v584 = vld [vmem:[#allocation13 + $0x14] sm:$0xf]
    %v585 = vld [vmem:[#allocation13 + $0x18] sm:$0xf]
    %v586 = vld [vmem:[#allocation13 + $0x1c] sm:$0xf]
    %v587 = vld [vmem:[#allocation13 + $0x20] sm:$0xf]
    %v588 = vld [vmem:[#allocation13 + $0x24] sm:$0xf]
    %v589 = vld [vmem:[#allocation13 + $0x28] sm:$0xf]
    %v590 = vld [vmem:[#allocation13 + $0x2c] sm:$0xf]
    %v591 = vld [vmem:[#allocation13 + $0x30] sm:$0xf]
    %v592 = vld [vmem:[#allocation13 + $0x34] sm:$0xf]
    %v593 = vld [vmem:[#allocation13 + $0x38] sm:$0xf]
    %v594 = vld [vmem:[#allocation13 + $0x3c] sm:$0xf]
    %v595 = vld [vmem:[#allocation14] sm:$0xf]
    %v596 = vld [vmem:[#allocation14 + $0x4] sm:$0xf]
    %v597 = vld [vmem:[#allocation14 + $0x8] sm:$0xf]
    %v598 = vld [vmem:[#allocation14 + $0xc] sm:$0xf]
    %v599 = vld [vmem:[#allocation14 + $0x10] sm:$0xf]
    %v600 = vld [vmem:[#allocation14 + $0x14] sm:$0xf]
    %v601 = vld [vmem:[#allocation14 + $0x18] sm:$0xf]
    %v602 = vld [vmem:[#allocation14 + $0x1c] sm:$0xf]
    %v603 = vld [vmem:[#allocation14 + $0x20] sm:$0xf]
    %v604 = vld [vmem:[#allocation14 + $0x24] sm:$0xf]
    %v605 = vld [vmem:[#allocation14 + $0x28] sm:$0xf]
    %v606 = vld [vmem:[#allocation14 + $0x2c] sm:$0xf]
    %v607 = vld [vmem:[#allocation14 + $0x30] sm:$0xf]
    %v608 = vld [vmem:[#allocation14 + $0x34] sm:$0xf]
    %v609 = vld [vmem:[#allocation14 + $0x38] sm:$0xf]
    %v610 = vld [vmem:[#allocation14 + $0x3c] sm:$0xf]
    %v627 = vunpack.c.l.b16 %v579
    %v628 = vunpack.c.l.b16 %v580
    %v629 = vunpack.c.l.b16 %v581
    %v630 = vunpack.c.l.b16 %v582
    %v631 = vunpack.c.l.b16 %v583
    %v632 = vunpack.c.l.b16 %v584
    %v633 = vunpack.c.l.b16 %v585
    %v634 = vunpack.c.l.b16 %v586
    %v635 = vunpack.c.l.b16 %v587
    %v636 = vunpack.c.l.b16 %v588
    %v637 = vunpack.c.l.b16 %v589
    %v638 = vunpack.c.l.b16 %v590
    %v639 = vunpack.c.l.b16 %v591
    %v640 = vunpack.c.l.b16 %v592
    %v641 = vunpack.c.l.b16 %v593
    %v642 = vunpack.c.l.b16 %v594
    %v643 = vpack.c.b16 %v628, %v627
    %v644 = vpack.c.b16 %v630, %v629
    %v645 = vpack.c.b16 %v632, %v631
    %v646 = vpack.c.b16 %v634, %v633
    %v647 = vpack.c.b16 %v636, %v635
    %v648 = vpack.c.b16 %v638, %v637
    %v649 = vpack.c.b16 %v640, %v639
    %v650 = vpack.c.b16 %v642, %v641
    %v675 = vunpack.c.l.b16 %v595
    %v676 = vunpack.c.l.b16 %v596
    %v677 = vunpack.c.l.b16 %v597
    %v678 = vunpack.c.l.b16 %v598
    %v679 = vunpack.c.l.b16 %v599
    %v680 = vunpack.c.l.b16 %v600
    %v681 = vunpack.c.l.b16 %v601
    %v682 = vunpack.c.l.b16 %v602
    %v683 = vunpack.c.l.b16 %v603
    %v684 = vunpack.c.l.b16 %v604
    %v685 = vunpack.c.l.b16 %v605
    %v686 = vunpack.c.l.b16 %v606
    %v687 = vunpack.c.l.b16 %v607
    %v688 = vunpack.c.l.b16 %v608
    %v689 = vunpack.c.l.b16 %v609
    %v690 = vunpack.c.l.b16 %v610
    %v691 = vpack.c.b16 %v676, %v675
    %v692 = vpack.c.b16 %v678, %v677
    %v693 = vpack.c.b16 %v680, %v679
    %v694 = vpack.c.b16 %v682, %v681
    %v695 = vpack.c.b16 %v684, %v683
    %v696 = vpack.c.b16 %v686, %v685
    %v697 = vpack.c.b16 %v688, %v687
    %v698 = vpack.c.b16 %v690, %v689
    %707 = vmatprep.subr.bf16.mxu0 0
    %708 = vmatpush1.bf16.msra.mxu0 %v691
    %709 = vmatprep.subr.bf16.mxu0 0
    %710 = vmatpush1.bf16.msra.mxu0 %v692
    %711 = vmatprep.subr.bf16.mxu0 0
    %712 = vmatpush1.bf16.msra.mxu0 %v693
    %713 = vmatprep.subr.bf16.mxu0 0
    %714 = vmatpush1.bf16.msra.mxu0 %v694
    %715 = vmatprep.subr.bf16.mxu0 0
    %716 = vmatpush1.bf16.msra.mxu0 %v695
    %717 = vmatprep.subr.bf16.mxu0 0
    %718 = vmatpush1.bf16.msra.mxu0 %v696
    %719 = vmatprep.subr.bf16.mxu0 0
    %720 = vmatpush1.bf16.msra.mxu0 %v697
    %721 = vmatprep.subr.bf16.mxu0 0
    %722 = vmatpush1.bf16.msra.mxu0 %v698
    %723 = vmatprep.subr.bf16.mxu0 0
    %724 = vmatpush1.bf16.msra.mxu0 0
    %725 = vmatprep.subr.bf16.mxu0 0
    %726 = vmatpush1.bf16.msra.mxu0 0
    %727 = vmatprep.subr.bf16.mxu0 0
    %728 = vmatpush1.bf16.msra.mxu0 0
    %729 = vmatprep.subr.bf16.mxu0 0
    %730 = vmatpush1.bf16.msra.mxu0 0
    %731 = vmatprep.subr.bf16.mxu0 0
    %732 = vmatpush1.bf16.msra.mxu0 0
    %733 = vmatprep.subr.bf16.mxu0 0
    %734 = vmatpush1.bf16.msra.mxu0 0
    %735 = vmatprep.subr.bf16.mxu0 0
    %736 = vmatpush1.bf16.msra.mxu0 0
    %737 = vmatprep.subr.bf16.mxu0 0
    %738 = vmatpush1.bf16.msra.mxu0 0
    %739 = vmatprep.mubr.bf16.mxu0 0
    %740 = vmatmul.mubr.bf16.gmra.mrb[0].mxu0 %v643
    %v741 = vpop.f32.mrb[0].mxu0
    %v742 = vadd.f32 0.0, %v741
    %v743 = vpop.f32.mrb[0].mxu0
    %v744 = vpop.f32.mrb[0].mxu0
    %v745 = vadd.f32 0.0, %v744
    %v746 = vpop.f32.mrb[0].mxu0
    %747 = vmatprep.mubr.bf16.mxu0 0
    %748 = vmatmul.mubr.bf16.gmra.mrb[0].mxu0 %v644
    %v749 = vpop.f32.mrb[0].mxu0
    %v750 = vadd.f32 0.0, %v749
    %v751 = vpop.f32.mrb[0].mxu0
    %v752 = vpop.f32.mrb[0].mxu0
    %v753 = vadd.f32 0.0, %v752
    %v754 = vpop.f32.mrb[0].mxu0
    %755 = vmatprep.mubr.bf16.mxu0 0
    %756 = vmatmul.mubr.bf16.gmra.mrb[0].mxu0 %v645
    %v757 = vpop.f32.mrb[0].mxu0
    %v758 = vadd.f32 0.0, %v757
    %v759 = vpop.f32.mrb[0].mxu0
    %v760 = vpop.f32.mrb[0].mxu0
    %v761 = vadd.f32 0.0, %v760
    %v762 = vpop.f32.mrb[0].mxu0
    %763 = vmatprep.mubr.bf16.mxu0 0
    %764 = vmatmul.mubr.bf16.gmra.mrb[0].mxu0 %v646
    %v765 = vpop.f32.mrb[0].mxu0
    %v766 = vadd.f32 0.0, %v765
    %v767 = vpop.f32.mrb[0].mxu0
    %v768 = vpop.f32.mrb[0].mxu0
    %v769 = vadd.f32 0.0, %v768
    %v770 = vpop.f32.mrb[0].mxu0
    %771 = vmatprep.mubr.bf16.mxu0 0
    %772 = vmatmul.mubr.bf16.gmra.mrb[0].mxu0 %v647
    %v773 = vpop.f32.mrb[0].mxu0
    %v774 = vadd.f32 0.0, %v773
    %v775 = vpop.f32.mrb[0].mxu0
    %v776 = vpop.f32.mrb[0].mxu0
    %v777 = vadd.f32 0.0, %v776
    %v778 = vpop.f32.mrb[0].mxu0
    %779 = vmatprep.mubr.bf16.mxu0 0
    %780 = vmatmul.mubr.bf16.gmra.mrb[0].mxu0 %v648
    %v781 = vpop.f32.mrb[0].mxu0
    %v782 = vadd.f32 0.0, %v781
    %v783 = vpop.f32.mrb[0].mxu0
    %v784 = vpop.f32.mrb[0].mxu0
    %v785 = vadd.f32 0.0, %v784
    %v786 = vpop.f32.mrb[0].mxu0
    %787 = vmatprep.mubr.bf16.mxu0 0
    %788 = vmatmul.mubr.bf16.gmra.mrb[0].mxu0 %v649
    %v789 = vpop.f32.mrb[0].mxu0
    %v790 = vadd.f32 0.0, %v789
    %v791 = vpop.f32.mrb[0].mxu0
    %v792 = vpop.f32.mrb[0].mxu0
    %v793 = vadd.f32 0.0, %v792
    %v794 = vpop.f32.mrb[0].mxu0
    %795 = vmatprep.mubr.bf16.mxu0 0
    %796 = vmatmul.mubr.bf16.gmra.mrb[0].mxu0 %v650
    %v797 = vpop.f32.mrb[0].mxu0
    %v798 = vadd.f32 0.0, %v797
    %v799 = vpop.f32.mrb[0].mxu0
    %v800 = vpop.f32.mrb[0].mxu0
    %v801 = vadd.f32 0.0, %v800
    %v802 = vpop.f32.mrb[0].mxu0
    %803 = vdwg.mxu0
    %v804 = vadd.f32 %v563, %v742
    %v805 = vadd.f32 %v564, %v745
    %v806 = vadd.f32 %v565, %v750
    %v807 = vadd.f32 %v566, %v753
    %v808 = vadd.f32 %v567, %v758
    %v809 = vadd.f32 %v568, %v761
    %v810 = vadd.f32 %v569, %v766
    %v811 = vadd.f32 %v570, %v769
    %v812 = vadd.f32 %v571, %v774
    %v813 = vadd.f32 %v572, %v777
    %v814 = vadd.f32 %v573, %v782
    %v815 = vadd.f32 %v574, %v785
    %v816 = vadd.f32 %v575, %v790
    %v817 = vadd.f32 %v576, %v793
    %v818 = vadd.f32 %v577, %v798
    %v819 = vadd.f32 %v578, %v801
    %820 = vst [vmem:[#allocation2] sm:$0xff] %v804
    %821 = vst [vmem:[#allocation2 + $0x8] sm:$0xff] %v805
    %822 = vst [vmem:[#allocation2 + $0x10] sm:$0xff] %v806
    %823 = vst [vmem:[#allocation2 + $0x18] sm:$0xff] %v807
    %824 = vst [vmem:[#allocation2 + $0x20] sm:$0xff] %v808
    %825 = vst [vmem:[#allocation2 + $0x28] sm:$0xff] %v809
    %826 = vst [vmem:[#allocation2 + $0x30] sm:$0xff] %v810
    %827 = vst [vmem:[#allocation2 + $0x38] sm:$0xff] %v811
    %828 = vst [vmem:[#allocation2 + $0x40] sm:$0xff] %v812
    %829 = vst [vmem:[#allocation2 + $0x48] sm:$0xff] %v813
    %830 = vst [vmem:[#allocation2 + $0x50] sm:$0xff] %v814
    %831 = vst [vmem:[#allocation2 + $0x58] sm:$0xff] %v815
    %832 = vst [vmem:[#allocation2 + $0x60] sm:$0xff] %v816
    %833 = vst [vmem:[#allocation2 + $0x68] sm:$0xff] %v817
    %834 = vst [vmem:[#allocation2 + $0x70] sm:$0xff] %v818
    %835 = vst [vmem:[#allocation2 + $0x78] sm:$0xff] %v819
    // Predicated region
    $region14: #{discriminator_forward.20} parent=1 // pred_check
      %p836 = pneg %p543
    $region15: #{discriminator_forward.20} parent=1 // pred_check_branch
      %838 = sbr.rel (%p836) target = $region17
    $region16: #{discriminator_forward.20} parent=1 // pred_region
      %v839 = vld [vmem:[#allocation2] sm:$0xff]
      %v840 = vld [vmem:[#allocation2 + $0x8] sm:$0xff]
      %v841 = vld [vmem:[#allocation2 + $0x10] sm:$0xff]
      %v842 = vld [vmem:[#allocation2 + $0x18] sm:$0xff]
      %v843 = vld [vmem:[#allocation2 + $0x20] sm:$0xff]
      %v844 = vld [vmem:[#allocation2 + $0x28] sm:$0xff]
      %v845 = vld [vmem:[#allocation2 + $0x30] sm:$0xff]
      %v846 = vld [vmem:[#allocation2 + $0x38] sm:$0xff]
      %v847 = vld [vmem:[#allocation2 + $0x40] sm:$0xff]
      %v848 = vld [vmem:[#allocation2 + $0x48] sm:$0xff]
      %v849 = vld [vmem:[#allocation2 + $0x50] sm:$0xff]
      %v850 = vld [vmem:[#allocation2 + $0x58] sm:$0xff]
      %v851 = vld [vmem:[#allocation2 + $0x60] sm:$0xff]
      %v852 = vld [vmem:[#allocation2 + $0x68] sm:$0xff]
      %v853 = vld [vmem:[#allocation2 + $0x70] sm:$0xff]
      %v854 = vld [vmem:[#allocation2 + $0x78] sm:$0xff]
      %vm855 = vcmp.ge.f32.partialorder %v839, 0.0
      %vm856 = vcmp.ge.f32.partialorder %v840, 0.0
      %vm857 = vcmp.ge.f32.partialorder %v841, 0.0
      %vm858 = vcmp.ge.f32.partialorder %v842, 0.0
      %vm859 = vcmp.ge.f32.partialorder %v843, 0.0
      %vm860 = vcmp.ge.f32.partialorder %v844, 0.0
      %vm861 = vcmp.ge.f32.partialorder %v845, 0.0
      %vm862 = vcmp.ge.f32.partialorder %v846, 0.0
      %vm863 = vcmp.ge.f32.partialorder %v847, 0.0
      %vm864 = vcmp.ge.f32.partialorder %v848, 0.0
      %vm865 = vcmp.ge.f32.partialorder %v849, 0.0
      %vm866 = vcmp.ge.f32.partialorder %v850, 0.0
      %vm867 = vcmp.ge.f32.partialorder %v851, 0.0
      %vm868 = vcmp.ge.f32.partialorder %v852, 0.0
      %vm869 = vcmp.ge.f32.partialorder %v853, 0.0
      %vm870 = vcmp.ge.f32.partialorder %v854, 0.0
      %v871 = vmul.f32 %v839, 0.2
      %v872 = vmul.f32 %v840, 0.2
      %v873 = vmul.f32 %v841, 0.2
      %v874 = vmul.f32 %v842, 0.2
      %v875 = vmul.f32 %v843, 0.2
      %v876 = vmul.f32 %v844, 0.2
      %v877 = vmul.f32 %v845, 0.2
      %v878 = vmul.f32 %v846, 0.2
      %v879 = vmul.f32 %v847, 0.2
      %v880 = vmul.f32 %v848, 0.2
      %v881 = vmul.f32 %v849, 0.2
      %v882 = vmul.f32 %v850, 0.2
      %v883 = vmul.f32 %v851, 0.2
      %v884 = vmul.f32 %v852, 0.2
      %v885 = vmul.f32 %v853, 0.2
      %v886 = vmul.f32 %v854, 0.2
      %v887 = vsel %vm855, %v839, %v871
      %v888 = vsel %vm856, %v840, %v872
      %v889 = vsel %vm857, %v841, %v873
      %v890 = vsel %vm858, %v842, %v874
      %v891 = vsel %vm859, %v843, %v875
      %v892 = vsel %vm860, %v844, %v876
      %v893 = vsel %vm861, %v845, %v877
      %v894 = vsel %vm862, %v846, %v878
      %v895 = vsel %vm863, %v847, %v879
      %v896 = vsel %vm864, %v848, %v880
      %v897 = vsel %vm865, %v849, %v881
      %v898 = vsel %vm866, %v850, %v882
      %v899 = vsel %vm867, %v851, %v883
      %v900 = vsel %vm868, %v852, %v884
      %v901 = vsel %vm869, %v853, %v885
      %v902 = vsel %vm870, %v854, %v886
      %v903 = vpack.c.bf16 %v888, %v887
      %v904 = vpack.c.bf16 %v890, %v889
      %v905 = vpack.c.bf16 %v892, %v891
      %v906 = vpack.c.bf16 %v894, %v893
      %v907 = vpack.c.bf16 %v896, %v895
      %v908 = vpack.c.bf16 %v898, %v897
      %v909 = vpack.c.bf16 %v900, %v899
      %v910 = vpack.c.bf16 %v902, %v901
      %v919 = vunpack.c.l.b16 %v903
      %v920 = vunpack.c.h.b16 %v903
      %v921 = vunpack.c.l.b16 %v904
      %v922 = vunpack.c.h.b16 %v904
      %v923 = vunpack.c.l.b16 %v905
      %v924 = vunpack.c.h.b16 %v905
      %v925 = vunpack.c.l.b16 %v906
      %v926 = vunpack.c.h.b16 %v906
      %v927 = vunpack.c.l.b16 %v907
      %v928 = vunpack.c.h.b16 %v907
      %v929 = vunpack.c.l.b16 %v908
      %v930 = vunpack.c.h.b16 %v908
      %v931 = vunpack.c.l.b16 %v909
      %v932 = vunpack.c.h.b16 %v909
      %v933 = vunpack.c.l.b16 %v910
      %v934 = vunpack.c.h.b16 %v910
      %v935 = vpack.c.b16 %v919, %v919
      %v936 = vpack.c.b16 %v920, %v920
      %v937 = vpack.c.b16 %v921, %v921
      %v938 = vpack.c.b16 %v922, %v922
      %v939 = vpack.c.b16 %v923, %v923
      %v940 = vpack.c.b16 %v924, %v924
      %v941 = vpack.c.b16 %v925, %v925
      %v942 = vpack.c.b16 %v926, %v926
      %v943 = vpack.c.b16 %v927, %v927
      %v944 = vpack.c.b16 %v928, %v928
      %v945 = vpack.c.b16 %v929, %v929
      %v946 = vpack.c.b16 %v930, %v930
      %v947 = vpack.c.b16 %v931, %v931
      %v948 = vpack.c.b16 %v932, %v932
      %v949 = vpack.c.b16 %v933, %v933
      %v950 = vpack.c.b16 %v934, %v934
      %967 = vst [vmem:[%s3] sm:$0xf] %v935
      %968 = vst [vmem:[%s3 + $0x4] sm:$0xf] %v936
      %969 = vst [vmem:[%s3 + $0x8] sm:$0xf] %v937
      %970 = vst [vmem:[%s3 + $0xc] sm:$0xf] %v938
      %971 = vst [vmem:[%s3 + $0x10] sm:$0xf] %v939
      %972 = vst [vmem:[%s3 + $0x14] sm:$0xf] %v940
      %973 = vst [vmem:[%s3 + $0x18] sm:$0xf] %v941
      %974 = vst [vmem:[%s3 + $0x1c] sm:$0xf] %v942
      %975 = vst [vmem:[%s3 + $0x20] sm:$0xf] %v943
      %976 = vst [vmem:[%s3 + $0x24] sm:$0xf] %v944
      %977 = vst [vmem:[%s3 + $0x28] sm:$0xf] %v945
      %978 = vst [vmem:[%s3 + $0x2c] sm:$0xf] %v946
      %979 = vst [vmem:[%s3 + $0x30] sm:$0xf] %v947
      %980 = vst [vmem:[%s3 + $0x34] sm:$0xf] %v948
      %981 = vst [vmem:[%s3 + $0x38] sm:$0xf] %v949
      %982 = vst [vmem:[%s3 + $0x3c] sm:$0xf] %v950
    $region17: #{discriminator_forward.20} parent=1 // pred_fallthru
      _
    // Predicated region
    $region18: #{discriminator_forward.20} parent=1 // pred_check
      _
    $region19: #{discriminator_forward.20} parent=1 // pred_check_branch
      %984 = sbr.rel (0) target = $region21
    $region20: #{discriminator_forward.20} parent=1 // pred_region
      _
    $region21: #{discriminator_forward.20} parent=1 // pred_fallthru
      _
    // Predicated region
    $region22: #{discriminator_forward.20} parent=1 // pred_check
      _
    $region23: #{discriminator_forward.20} parent=1 // pred_check_branch
      %986 = sbr.rel (0) target = $region25
    $region24: #{discriminator_forward.20} parent=1 // pred_region
      _
    $region25: #{discriminator_forward.20} parent=1 // pred_fallthru
      _

// kernel: discriminator_forward.13
$region0: #{discriminator_forward.13}
  #allocation0 [shape = 'u32[]', space=smem, size = 0x4, offset = 0x4, fixed_abs, tag = 'smem constant byte address 0x4 - core index']
  #allocation1 [shape = 'u32[144,128]{1,0:T(1,128)}', space=vmem, size = 0x12000, scoped, tag = 'internal scratch']
  %s0 = inlined_call_operand.vmem [shape: bf16[32,128], index: 0, kind: input, shape index: {}]
  %s1 = inlined_call_operand.vmem [shape: f32[1,128], index: 1, kind: input, shape index: {}]
  %s2 = inlined_call_operand.vmem [shape: f32[1,128], index: 2, kind: input, shape index: {}]
  %s3 = inlined_call_operand.vmem [shape: bf16[32,128], index: 3, kind: output, shape index: {}]
  %s4 = sld [smem:[#allocation0]]
  $region22: #{discriminator_forward.13} parent=0
    _
  %s6 = ssub.s32 1, %s4
  %s7 = scalar_select 0, %s6, %s4
  // Predicated region
  $region2: #{discriminator_forward.13} parent=0 // pred_check
    _
  $region3: #{discriminator_forward.13} parent=0 // pred_check_branch
    %9 = sbr.rel (0) target = $region5
  $region4: #{discriminator_forward.13} parent=0 // pred_region
    _
  $region5: #{discriminator_forward.13} parent=0 // pred_fallthru
    _
  // Predicated region
  $region6: #{discriminator_forward.13} parent=0 // pred_check
    _
  $region7: #{discriminator_forward.13} parent=0 // pred_check_branch
    %11 = sbr.rel (0) target = $region9
  $region8: #{discriminator_forward.13} parent=0 // pred_region
    _
  $region9: #{discriminator_forward.13} parent=0 // pred_fallthru
    _
  // Predicated region
  $region10: #{discriminator_forward.13} parent=0 // pred_check
    _
  $region11: #{discriminator_forward.13} parent=0 // pred_check_branch
    %13 = sbr.rel (0) target = $region13
  $region12: #{discriminator_forward.13} parent=0 // pred_region
    _
  $region13: #{discriminator_forward.13} parent=0 // pred_fallthru
    _
  %v14 = vld [vmem:[%s0] sm:$0xf]
  %v15 = vld [vmem:[%s0 + $0x4] sm:$0xf]
  %v16 = vld [vmem:[%s0 + $0x8] sm:$0xf]
  %v17 = vld [vmem:[%s0 + $0xc] sm:$0xf]
  %v18 = vunpack.c.l.bf16 %v14
  %v19 = vunpack.c.l.bf16 %v15
  %v20 = vunpack.c.l.bf16 %v16
  %v21 = vunpack.c.l.bf16 %v17
  %v22 = vld [vmem:[%s1] sm:$0x1]
  %v24 = vlaneseq
  %v25 = vshrl.u32 %v24, 7
  %v26 = vsub.s32 0, %v25
  %v27 = vrot.slane %v22, %v26
  %v29 = vmul.f32 %v18, %v27
  %v30 = vmul.f32 %v19, %v27
  %v31 = vmul.f32 %v20, %v27
  %v32 = vmul.f32 %v21, %v27
  %v33 = vld [vmem:[%s2] sm:$0x1]
  %v35 = vlaneseq
  %v36 = vshrl.u32 %v35, 7
  %v37 = vsub.s32 0, %v36
  %v38 = vrot.slane %v33, %v37
  %v40 = vadd.f32 %v29, %v38
  %v41 = vadd.f32 %v30, %v38
  %v42 = vadd.f32 %v31, %v38
  %v43 = vadd.f32 %v32, %v38
  %vm44 = vcmp.ge.f32.partialorder %v40, 0.0
  %vm45 = vcmp.ge.f32.partialorder %v41, 0.0
  %vm46 = vcmp.ge.f32.partialorder %v42, 0.0
  %vm47 = vcmp.ge.f32.partialorder %v43, 0.0
  %v48 = vmul.f32 %v40, 0.2
  %v49 = vmul.f32 %v41, 0.2
  %v50 = vmul.f32 %v42, 0.2
  %v51 = vmul.f32 %v43, 0.2
  %v52 = vsel %vm44, %v40, %v48
  %v53 = vsel %vm45, %v41, %v49
  %v54 = vsel %vm46, %v42, %v50
  %v55 = vsel %vm47, %v43, %v51
  %v56 = vpack.c.bf16 %v53, %v52
  %v57 = vpack.c.bf16 %v55, %v54
  %v60 = vunpack.c.l.b16 %v56
  %v61 = vunpack.c.h.b16 %v56
  %v62 = vunpack.c.l.b16 %v57
  %v63 = vunpack.c.h.b16 %v57
  %v64 = vpack.c.b16 %v60, %v60
  %v65 = vpack.c.b16 %v61, %v61
  %v66 = vpack.c.b16 %v62, %v62
  %v67 = vpack.c.b16 %v63, %v63
  %72 = vst [vmem:[%s3] sm:$0xf] %v64
  %73 = vst [vmem:[%s3 + $0x4] sm:$0xf] %v65
  %74 = vst [vmem:[%s3 + $0x8] sm:$0xf] %v66
  %75 = vst [vmem:[%s3 + $0xc] sm:$0xf] %v67
  // Predicated region
  $region14: #{discriminator_forward.13} parent=0 // pred_check
    _
  $region15: #{discriminator_forward.13} parent=0 // pred_check_branch
    %77 = sbr.rel (0) target = $region17
  $region16: #{discriminator_forward.13} parent=0 // pred_region
    _
  $region17: #{discriminator_forward.13} parent=0 // pred_fallthru
    _
  // Predicated region
  $region18: #{discriminator_forward.13} parent=0 // pred_check
    _
  $region19: #{discriminator_forward.13} parent=0 // pred_check_branch
    %79 = sbr.rel (0) target = $region21
  $region20: #{discriminator_forward.13} parent=0 // pred_region
    _
  $region21: #{discriminator_forward.13} parent=0 // pred_fallthru
    _

// kernel: discriminator_forward.19
$region0: #{discriminator_forward.19}
  #allocation0 [shape = 'u32[]', space=smem, size = 0x4, offset = 0x4, fixed_abs, tag = 'smem constant byte address 0x4 - core index']
  #allocation1 [shape = 'u32[144,128]{1,0:T(1,128)}', space=vmem, size = 0x12000, scoped, tag = 'internal scratch']
  #allocation2 [shape = 'f32[32,128]{1,0:T(8,128)}', space=vmem, size = 0x4000, scoped, tag = 'scratch operand']
  #allocation3 [shape = 'u32[2048]{0}', space=vmem, size = 0x2000, scoped, tag = 'scoped memory for discriminator_forward.19']
  #allocation4 [shape = 'u32[2048]{0}', space=vmem, size = 0x2000, scoped, tag = 'scoped memory for discriminator_forward.19']
  #allocation5 [shape = 'u32[2048]{0}', space=vmem, size = 0x2000, scoped, tag = 'scoped memory for discriminator_forward.19']
  #allocation6 [shape = 'u32[2048]{0}', space=vmem, size = 0x2000, scoped, tag = 'scoped memory for discriminator_forward.19']
  #allocation7 [shape = 'u32[2048]{0}', space=vmem, size = 0x2000, scoped, tag = 'scoped memory for discriminator_forward.19']
  %s0 = inlined_call_operand.vmem [shape: bf16[32,256], index: 0, kind: input, shape index: {}]
  %s1 = inlined_call_operand.vmem [shape: bf16[256,32], index: 1, kind: input, shape index: {}]
  %s2 = inlined_call_operand.<no memory space> [shape: bf16[], index: 2, kind: input, shape index: {}]
  %s3 = inlined_call_operand.vmem [shape: bf16[32,128], index: 3, kind: output, shape index: {0}]
  %s4 = inlined_call_operand.vmem [shape: f32[8,128], index: 4, kind: output, shape index: {1}]
  %5 = xla_tuple %s3, %s4
  %s6 = sld [smem:[#allocation0]]
  $region34: #{discriminator_forward.19} parent=0
    _
  %s8 = ssub.s32 1, %s6
  %s9 = scalar_select 0, %s8, %s6
  %v10 = vstv %s2
  %v11 = vunpack.i.l.bf16 %v10
  %v13 = vunpack.i.h.bf16 %v10
  $region1: #{discriminator_forward.19} parent=0
    #allocation8 [shape = 'u8[65536]{0}', space=vmem, size = 0x10000, dematerialized = true, scoped, tag = 'FusionAdapter Buffer %fusion.17 = bf16[256,128]{1,0:T(8,128)(2,1)} fusion(%param_1.30, %param_2.25), kind=kLoop, calls=%fused_computation.20.clone, metadata={op_name="jit(discriminator_forward)/jit(_pad)/pad" stack_frame_id=37}']
    // Predicated region
    $region2: #{discriminator_forward.19} parent=1 // pred_check
      _
    $region3: #{discriminator_forward.19} parent=1 // pred_check_branch
      %16 = sbr.rel (0) target = $region5
    $region4: #{discriminator_forward.19} parent=1 // pred_region
      _
    $region5: #{discriminator_forward.19} parent=1 // pred_fallthru
      _
    // Predicated region
    $region6: #{discriminator_forward.19} parent=1 // pred_check
      _
    $region7: #{discriminator_forward.19} parent=1 // pred_check_branch
      %18 = sbr.rel (0) target = $region9
    $region8: #{discriminator_forward.19} parent=1 // pred_region
      _
    $region9: #{discriminator_forward.19} parent=1 // pred_fallthru
      _
    %s20 = sor.u32 255, 127
    %s21 = sand.u32 %s20, 85
    %s22 = sshrl.u32 %s21, 1
    %s23 = sor.u32 %s21, %s22
    %s24 = sand.u32 51, %s23
    %s25 = sshrl.u32 %s24, 2
    %s26 = sor.u32 %s24, %s25
    %s27 = sand.u32 15, %s26
    %v28 = vld [vmem:[%s1] sm:%s27]
    %v29 = vunpack.c.l.bf16 %v28
    %v30 = vunpack.c.h.bf16 %v28
    %v31 = vlaneseq
    %v32 = vand.u32 %v31, 127
    %vm34 = vcmp.lt.s32.totalorder %v32, 32
    %v35 = vsel %vm34, %v29, %v11
    %v36 = vpack.c.bf16 0.0, %v35
    %38 = vst [vmem:[#allocation8] sm:$0xf] %v36
    %s39 = scalar_lea.vmem %s1, 4
    %s41 = sor.u32 255, 127
    %s42 = sand.u32 %s41, 85
    %s43 = sshrl.u32 %s42, 1
    %s44 = sor.u32 %s42, %s43
    %s45 = sand.u32 51, %s44
    %s46 = sshrl.u32 %s45, 2
    %s47 = sor.u32 %s45, %s46
    %s48 = sand.u32 15, %s47
    %v49 = vld [vmem:[%s39] sm:%s48]
    %v50 = vunpack.c.l.bf16 %v49
    %v51 = vunpack.c.h.bf16 %v49
    %v52 = vlaneseq
    %v53 = vand.u32 %v52, 127
    %vm55 = vcmp.lt.s32.totalorder %v53, 32
    %v56 = vsel %vm55, %v50, %v11
    %s57 = scalar_lea.vmem [#allocation8], 4
    %v58 = vpack.c.bf16 0.0, %v56
    %60 = vst [vmem:[%s57] sm:$0xf] %v58
    %s61 = scalar_lea.vmem %s1, 8
    %s63 = sor.u32 255, 127
    %s64 = sand.u32 %s63, 85
    %s65 = sshrl.u32 %s64, 1
    %s66 = sor.u32 %s64, %s65
    %s67 = sand.u32 51, %s66
    %s68 = sshrl.u32 %s67, 2
    %s69 = sor.u32 %s67, %s68
    %s70 = sand.u32 15, %s69
    %v71 = vld [vmem:[%s61] sm:%s70]
    %v72 = vunpack.c.l.bf16 %v71
    %v73 = vunpack.c.h.bf16 %v71
    %v74 = vlaneseq
    %v75 = vand.u32 %v74, 127
    %vm77 = vcmp.lt.s32.totalorder %v75, 32
    %v78 = vsel %vm77, %v72, %v11
    %s79 = scalar_lea.vmem [#allocation8], 8
    %v80 = vpack.c.bf16 0.0, %v78
    %82 = vst [vmem:[%s79] sm:$0xf] %v80
    %s83 = scalar_lea.vmem %s1, 12
    %s85 = sor.u32 255, 127
    %s86 = sand.u32 %s85, 85
    %s87 = sshrl.u32 %s86, 1
    %s88 = sor.u32 %s86, %s87
    %s89 = sand.u32 51, %s88
    %s90 = sshrl.u32 %s89, 2
    %s91 = sor.u32 %s89, %s90
    %s92 = sand.u32 15, %s91
    %v93 = vld [vmem:[%s83] sm:%s92]
    %v94 = vunpack.c.l.bf16 %v93
    %v95 = vunpack.c.h.bf16 %v93
    %v96 = vlaneseq
    %v97 = vand.u32 %v96, 127
    %vm99 = vcmp.lt.s32.totalorder %v97, 32
    %v100 = vsel %vm99, %v94, %v11
    %s101 = scalar_lea.vmem [#allocation8], 12
    %v102 = vpack.c.bf16 0.0, %v100
    %104 = vst [vmem:[%s101] sm:$0xf] %v102
    %s105 = scalar_lea.vmem %s1, 16
    %s107 = sor.u32 255, 127
    %s108 = sand.u32 %s107, 85
    %s109 = sshrl.u32 %s108, 1
    %s110 = sor.u32 %s108, %s109
    %s111 = sand.u32 51, %s110
    %s112 = sshrl.u32 %s111, 2
    %s113 = sor.u32 %s111, %s112
    %s114 = sand.u32 15, %s113
    %v115 = vld [vmem:[%s105] sm:%s114]
    %v116 = vunpack.c.l.bf16 %v115
    %v117 = vunpack.c.h.bf16 %v115
    %v118 = vlaneseq
    %v119 = vand.u32 %v118, 127
    %vm121 = vcmp.lt.s32.totalorder %v119, 32
    %v122 = vsel %vm121, %v116, %v11
    %s123 = scalar_lea.vmem [#allocation8], 16
    %v124 = vpack.c.bf16 0.0, %v122
    %126 = vst [vmem:[%s123] sm:$0xf] %v124
    %s127 = scalar_lea.vmem %s1, 20
    %s129 = sor.u32 255, 127
    %s130 = sand.u32 %s129, 85
    %s131 = sshrl.u32 %s130, 1
    %s132 = sor.u32 %s130, %s131
    %s133 = sand.u32 51, %s132
    %s134 = sshrl.u32 %s133, 2
    %s135 = sor.u32 %s133, %s134
    %s136 = sand.u32 15, %s135
    %v137 = vld [vmem:[%s127] sm:%s136]
    %v138 = vunpack.c.l.bf16 %v137
    %v139 = vunpack.c.h.bf16 %v137
    %v140 = vlaneseq
    %v141 = vand.u32 %v140, 127
    %vm143 = vcmp.lt.s32.totalorder %v141, 32
    %v144 = vsel %vm143, %v138, %v11
    %s145 = scalar_lea.vmem [#allocation8], 20
    %v146 = vpack.c.bf16 0.0, %v144
    %148 = vst [vmem:[%s145] sm:$0xf] %v146
    %s149 = scalar_lea.vmem %s1, 24
    %s151 = sor.u32 255, 127
    %s152 = sand.u32 %s151, 85
    %s153 = sshrl.u32 %s152, 1
    %s154 = sor.u32 %s152, %s153
    %s155 = sand.u32 51, %s154
    %s156 = sshrl.u32 %s155, 2
    %s157 = sor.u32 %s155, %s156
    %s158 = sand.u32 15, %s157
    %v159 = vld [vmem:[%s149] sm:%s158]
    %v160 = vunpack.c.l.bf16 %v159
    %v161 = vunpack.c.h.bf16 %v159
    %v162 = vlaneseq
    %v163 = vand.u32 %v162, 127
    %vm165 = vcmp.lt.s32.totalorder %v163, 32
    %v166 = vsel %vm165, %v160, %v11
    %s167 = scalar_lea.vmem [#allocation8], 24
    %v168 = vpack.c.bf16 0.0, %v166
    %170 = vst [vmem:[%s167] sm:$0xf] %v168
    %s171 = scalar_lea.vmem %s1, 28
    %s173 = sor.u32 255, 127
    %s174 = sand.u32 %s173, 85
    %s175 = sshrl.u32 %s174, 1
    %s176 = sor.u32 %s174, %s175
    %s177 = sand.u32 51, %s176
    %s178 = sshrl.u32 %s177, 2
    %s179 = sor.u32 %s177, %s178
    %s180 = sand.u32 15, %s179
    %v181 = vld [vmem:[%s171] sm:%s180]
    %v182 = vunpack.c.l.bf16 %v181
    %v183 = vunpack.c.h.bf16 %v181
    %v184 = vlaneseq
    %v185 = vand.u32 %v184, 127
    %vm187 = vcmp.lt.s32.totalorder %v185, 32
    %v188 = vsel %vm187, %v182, %v11
    %s189 = scalar_lea.vmem [#allocation8], 28
    %v190 = vpack.c.bf16 0.0, %v188
    %192 = vst [vmem:[%s189] sm:$0xf] %v190
    %s193 = scalar_lea.vmem %s1, 32
    %s195 = sor.u32 255, 127
    %s196 = sand.u32 %s195, 85
    %s197 = sshrl.u32 %s196, 1
    %s198 = sor.u32 %s196, %s197
    %s199 = sand.u32 51, %s198
    %s200 = sshrl.u32 %s199, 2
    %s201 = sor.u32 %s199, %s200
    %s202 = sand.u32 15, %s201
    %v203 = vld [vmem:[%s193] sm:%s202]
    %v204 = vunpack.c.l.bf16 %v203
    %v205 = vunpack.c.h.bf16 %v203
    %v206 = vlaneseq
    %v207 = vand.u32 %v206, 127
    %vm209 = vcmp.lt.s32.totalorder %v207, 32
    %v210 = vsel %vm209, %v204, %v11
    %s211 = scalar_lea.vmem [#allocation8], 32
    %v212 = vpack.c.bf16 0.0, %v210
    %214 = vst [vmem:[%s211] sm:$0xf] %v212
    %s215 = scalar_lea.vmem %s1, 36
    %s217 = sor.u32 255, 127
    %s218 = sand.u32 %s217, 85
    %s219 = sshrl.u32 %s218, 1
    %s220 = sor.u32 %s218, %s219
    %s221 = sand.u32 51, %s220
    %s222 = sshrl.u32 %s221, 2
    %s223 = sor.u32 %s221, %s222
    %s224 = sand.u32 15, %s223
    %v225 = vld [vmem:[%s215] sm:%s224]
    %v226 = vunpack.c.l.bf16 %v225
    %v227 = vunpack.c.h.bf16 %v225
    %v228 = vlaneseq
    %v229 = vand.u32 %v228, 127
    %vm231 = vcmp.lt.s32.totalorder %v229, 32
    %v232 = vsel %vm231, %v226, %v11
    %s233 = scalar_lea.vmem [#allocation8], 36
    %v234 = vpack.c.bf16 0.0, %v232
    %236 = vst [vmem:[%s233] sm:$0xf] %v234
    %s237 = scalar_lea.vmem %s1, 40
    %s239 = sor.u32 255, 127
    %s240 = sand.u32 %s239, 85
    %s241 = sshrl.u32 %s240, 1
    %s242 = sor.u32 %s240, %s241
    %s243 = sand.u32 51, %s242
    %s244 = sshrl.u32 %s243, 2
    %s245 = sor.u32 %s243, %s244
    %s246 = sand.u32 15, %s245
    %v247 = vld [vmem:[%s237] sm:%s246]
    %v248 = vunpack.c.l.bf16 %v247
    %v249 = vunpack.c.h.bf16 %v247
    %v250 = vlaneseq
    %v251 = vand.u32 %v250, 127
    %vm253 = vcmp.lt.s32.totalorder %v251, 32
    %v254 = vsel %vm253, %v248, %v11
    %s255 = scalar_lea.vmem [#allocation8], 40
    %v256 = vpack.c.bf16 0.0, %v254
    %258 = vst [vmem:[%s255] sm:$0xf] %v256
    %s259 = scalar_lea.vmem %s1, 44
    %s261 = sor.u32 255, 127
    %s262 = sand.u32 %s261, 85
    %s263 = sshrl.u32 %s262, 1
    %s264 = sor.u32 %s262, %s263
    %s265 = sand.u32 51, %s264
    %s266 = sshrl.u32 %s265, 2
    %s267 = sor.u32 %s265, %s266
    %s268 = sand.u32 15, %s267
    %v269 = vld [vmem:[%s259] sm:%s268]
    %v270 = vunpack.c.l.bf16 %v269
    %v271 = vunpack.c.h.bf16 %v269
    %v272 = vlaneseq
    %v273 = vand.u32 %v272, 127
    %vm275 = vcmp.lt.s32.totalorder %v273, 32
    %v276 = vsel %vm275, %v270, %v11
    %s277 = scalar_lea.vmem [#allocation8], 44
    %v278 = vpack.c.bf16 0.0, %v276
    %280 = vst [vmem:[%s277] sm:$0xf] %v278
    %s281 = scalar_lea.vmem %s1, 48
    %s283 = sor.u32 255, 127
    %s284 = sand.u32 %s283, 85
    %s285 = sshrl.u32 %s284, 1
    %s286 = sor.u32 %s284, %s285
    %s287 = sand.u32 51, %s286
    %s288 = sshrl.u32 %s287, 2
    %s289 = sor.u32 %s287, %s288
    %s290 = sand.u32 15, %s289
    %v291 = vld [vmem:[%s281] sm:%s290]
    %v292 = vunpack.c.l.bf16 %v291
    %v293 = vunpack.c.h.bf16 %v291
    %v294 = vlaneseq
    %v295 = vand.u32 %v294, 127
    %vm297 = vcmp.lt.s32.totalorder %v295, 32
    %v298 = vsel %vm297, %v292, %v11
    %s299 = scalar_lea.vmem [#allocation8], 48
    %v300 = vpack.c.bf16 0.0, %v298
    %302 = vst [vmem:[%s299] sm:$0xf] %v300
    %s303 = scalar_lea.vmem %s1, 52
    %s305 = sor.u32 255, 127
    %s306 = sand.u32 %s305, 85
    %s307 = sshrl.u32 %s306, 1
    %s308 = sor.u32 %s306, %s307
    %s309 = sand.u32 51, %s308
    %s310 = sshrl.u32 %s309, 2
    %s311 = sor.u32 %s309, %s310
    %s312 = sand.u32 15, %s311
    %v313 = vld [vmem:[%s303] sm:%s312]
    %v314 = vunpack.c.l.bf16 %v313
    %v315 = vunpack.c.h.bf16 %v313
    %v316 = vlaneseq
    %v317 = vand.u32 %v316, 127
    %vm319 = vcmp.lt.s32.totalorder %v317, 32
    %v320 = vsel %vm319, %v314, %v11
    %s321 = scalar_lea.vmem [#allocation8], 52
    %v322 = vpack.c.bf16 0.0, %v320
    %324 = vst [vmem:[%s321] sm:$0xf] %v322
    %s325 = scalar_lea.vmem %s1, 56
    %s327 = sor.u32 255, 127
    %s328 = sand.u32 %s327, 85
    %s329 = sshrl.u32 %s328, 1
    %s330 = sor.u32 %s328, %s329
    %s331 = sand.u32 51, %s330
    %s332 = sshrl.u32 %s331, 2
    %s333 = sor.u32 %s331, %s332
    %s334 = sand.u32 15, %s333
    %v335 = vld [vmem:[%s325] sm:%s334]
    %v336 = vunpack.c.l.bf16 %v335
    %v337 = vunpack.c.h.bf16 %v335
    %v338 = vlaneseq
    %v339 = vand.u32 %v338, 127
    %vm341 = vcmp.lt.s32.totalorder %v339, 32
    %v342 = vsel %vm341, %v336, %v11
    %s343 = scalar_lea.vmem [#allocation8], 56
    %v344 = vpack.c.bf16 0.0, %v342
    %346 = vst [vmem:[%s343] sm:$0xf] %v344
    %s347 = scalar_lea.vmem %s1, 60
    %s349 = sor.u32 255, 127
    %s350 = sand.u32 %s349, 85
    %s351 = sshrl.u32 %s350, 1
    %s352 = sor.u32 %s350, %s351
    %s353 = sand.u32 51, %s352
    %s354 = sshrl.u32 %s353, 2
    %s355 = sor.u32 %s353, %s354
    %s356 = sand.u32 15, %s355
    %v357 = vld [vmem:[%s347] sm:%s356]
    %v358 = vunpack.c.l.bf16 %v357
    %v359 = vunpack.c.h.bf16 %v357
    %v360 = vlaneseq
    %v361 = vand.u32 %v360, 127
    %vm363 = vcmp.lt.s32.totalorder %v361, 32
    %v364 = vsel %vm363, %v358, %v11
    %s365 = scalar_lea.vmem [#allocation8], 60
    %v366 = vpack.c.bf16 0.0, %v364
    %368 = vst [vmem:[%s365] sm:$0xf] %v366
    %s369 = scalar_lea.vmem %s1, 64
    %s371 = sor.u32 255, 127
    %s372 = sand.u32 %s371, 85
    %s373 = sshrl.u32 %s372, 1
    %s374 = sor.u32 %s372, %s373
    %s375 = sand.u32 51, %s374
    %s376 = sshrl.u32 %s375, 2
    %s377 = sor.u32 %s375, %s376
    %s378 = sand.u32 15, %s377
    %v379 = vld [vmem:[%s369] sm:%s378]
    %v380 = vunpack.c.l.bf16 %v379
    %v381 = vunpack.c.h.bf16 %v379
    %v382 = vlaneseq
    %v383 = vand.u32 %v382, 127
    %vm385 = vcmp.lt.s32.totalorder %v383, 32
    %v386 = vsel %vm385, %v380, %v11
    %s387 = scalar_lea.vmem [#allocation8], 64
    %v388 = vpack.c.bf16 0.0, %v386
    %390 = vst [vmem:[%s387] sm:$0xf] %v388
    %s391 = scalar_lea.vmem %s1, 68
    %s393 = sor.u32 255, 127
    %s394 = sand.u32 %s393, 85
    %s395 = sshrl.u32 %s394, 1
    %s396 = sor.u32 %s394, %s395
    %s397 = sand.u32 51, %s396
    %s398 = sshrl.u32 %s397, 2
    %s399 = sor.u32 %s397, %s398
    %s400 = sand.u32 15, %s399
    %v401 = vld [vmem:[%s391] sm:%s400]
    %v402 = vunpack.c.l.bf16 %v401
    %v403 = vunpack.c.h.bf16 %v401
    %v404 = vlaneseq
    %v405 = vand.u32 %v404, 127
    %vm407 = vcmp.lt.s32.totalorder %v405, 32
    %v408 = vsel %vm407, %v402, %v11
    %s409 = scalar_lea.vmem [#allocation8], 68
    %v410 = vpack.c.bf16 0.0, %v408
    %412 = vst [vmem:[%s409] sm:$0xf] %v410
    %s413 = scalar_lea.vmem %s1, 72
    %s415 = sor.u32 255, 127
    %s416 = sand.u32 %s415, 85
    %s417 = sshrl.u32 %s416, 1
    %s418 = sor.u32 %s416, %s417
    %s419 = sand.u32 51, %s418
    %s420 = sshrl.u32 %s419, 2
    %s421 = sor.u32 %s419, %s420
    %s422 = sand.u32 15, %s421
    %v423 = vld [vmem:[%s413] sm:%s422]
    %v424 = vunpack.c.l.bf16 %v423
    %v425 = vunpack.c.h.bf16 %v423
    %v426 = vlaneseq
    %v427 = vand.u32 %v426, 127
    %vm429 = vcmp.lt.s32.totalorder %v427, 32
    %v430 = vsel %vm429, %v424, %v11
    %s431 = scalar_lea.vmem [#allocation8], 72
    %v432 = vpack.c.bf16 0.0, %v430
    %434 = vst [vmem:[%s431] sm:$0xf] %v432
    %s435 = scalar_lea.vmem %s1, 76
    %s437 = sor.u32 255, 127
    %s438 = sand.u32 %s437, 85
    %s439 = sshrl.u32 %s438, 1
    %s440 = sor.u32 %s438, %s439
    %s441 = sand.u32 51, %s440
    %s442 = sshrl.u32 %s441, 2
    %s443 = sor.u32 %s441, %s442
    %s444 = sand.u32 15, %s443
    %v445 = vld [vmem:[%s435] sm:%s444]
    %v446 = vunpack.c.l.bf16 %v445
    %v447 = vunpack.c.h.bf16 %v445
    %v448 = vlaneseq
    %v449 = vand.u32 %v448, 127
    %vm451 = vcmp.lt.s32.totalorder %v449, 32
    %v452 = vsel %vm451, %v446, %v11
    %s453 = scalar_lea.vmem [#allocation8], 76
    %v454 = vpack.c.bf16 0.0, %v452
    %456 = vst [vmem:[%s453] sm:$0xf] %v454
    %s457 = scalar_lea.vmem %s1, 80
    %s459 = sor.u32 255, 127
    %s460 = sand.u32 %s459, 85
    %s461 = sshrl.u32 %s460, 1
    %s462 = sor.u32 %s460, %s461
    %s463 = sand.u32 51, %s462
    %s464 = sshrl.u32 %s463, 2
    %s465 = sor.u32 %s463, %s464
    %s466 = sand.u32 15, %s465
    %v467 = vld [vmem:[%s457] sm:%s466]
    %v468 = vunpack.c.l.bf16 %v467
    %v469 = vunpack.c.h.bf16 %v467
    %v470 = vlaneseq
    %v471 = vand.u32 %v470, 127
    %vm473 = vcmp.lt.s32.totalorder %v471, 32
    %v474 = vsel %vm473, %v468, %v11
    %s475 = scalar_lea.vmem [#allocation8], 80
    %v476 = vpack.c.bf16 0.0, %v474
    %478 = vst [vmem:[%s475] sm:$0xf] %v476
    %s479 = scalar_lea.vmem %s1, 84
    %s481 = sor.u32 255, 127
    %s482 = sand.u32 %s481, 85
    %s483 = sshrl.u32 %s482, 1
    %s484 = sor.u32 %s482, %s483
    %s485 = sand.u32 51, %s484
    %s486 = sshrl.u32 %s485, 2
    %s487 = sor.u32 %s485, %s486
    %s488 = sand.u32 15, %s487
    %v489 = vld [vmem:[%s479] sm:%s488]
    %v490 = vunpack.c.l.bf16 %v489
    %v491 = vunpack.c.h.bf16 %v489
    %v492 = vlaneseq
    %v493 = vand.u32 %v492, 127
    %vm495 = vcmp.lt.s32.totalorder %v493, 32
    %v496 = vsel %vm495, %v490, %v11
    %s497 = scalar_lea.vmem [#allocation8], 84
    %v498 = vpack.c.bf16 0.0, %v496
    %500 = vst [vmem:[%s497] sm:$0xf] %v498
    %s501 = scalar_lea.vmem %s1, 88
    %s503 = sor.u32 255, 127
    %s504 = sand.u32 %s503, 85
    %s505 = sshrl.u32 %s504, 1
    %s506 = sor.u32 %s504, %s505
    %s507 = sand.u32 51, %s506
    %s508 = sshrl.u32 %s507, 2
    %s509 = sor.u32 %s507, %s508
    %s510 = sand.u32 15, %s509
    %v511 = vld [vmem:[%s501] sm:%s510]
    %v512 = vunpack.c.l.bf16 %v511
    %v513 = vunpack.c.h.bf16 %v511
    %v514 = vlaneseq
    %v515 = vand.u32 %v514, 127
    %vm517 = vcmp.lt.s32.totalorder %v515, 32
    %v518 = vsel %vm517, %v512, %v11
    %s519 = scalar_lea.vmem [#allocation8], 88
    %v520 = vpack.c.bf16 0.0, %v518
    %522 = vst [vmem:[%s519] sm:$0xf] %v520
    %s523 = scalar_lea.vmem %s1, 92
    %s525 = sor.u32 255, 127
    %s526 = sand.u32 %s525, 85
    %s527 = sshrl.u32 %s526, 1
    %s528 = sor.u32 %s526, %s527
    %s529 = sand.u32 51, %s528
    %s530 = sshrl.u32 %s529, 2
    %s531 = sor.u32 %s529, %s530
    %s532 = sand.u32 15, %s531
    %v533 = vld [vmem:[%s523] sm:%s532]
    %v534 = vunpack.c.l.bf16 %v533
    %v535 = vunpack.c.h.bf16 %v533
    %v536 = vlaneseq
    %v537 = vand.u32 %v536, 127
    %vm539 = vcmp.lt.s32.totalorder %v537, 32
    %v540 = vsel %vm539, %v534, %v11
    %s541 = scalar_lea.vmem [#allocation8], 92
    %v542 = vpack.c.bf16 0.0, %v540
    %544 = vst [vmem:[%s541] sm:$0xf] %v542
    %s545 = scalar_lea.vmem %s1, 96
    %s547 = sor.u32 255, 127
    %s548 = sand.u32 %s547, 85
    %s549 = sshrl.u32 %s548, 1
    %s550 = sor.u32 %s548, %s549
    %s551 = sand.u32 51, %s550
    %s552 = sshrl.u32 %s551, 2
    %s553 = sor.u32 %s551, %s552
    %s554 = sand.u32 15, %s553
    %v555 = vld [vmem:[%s545] sm:%s554]
    %v556 = vunpack.c.l.bf16 %v555
    %v557 = vunpack.c.h.bf16 %v555
    %v558 = vlaneseq
    %v559 = vand.u32 %v558, 127
    %vm561 = vcmp.lt.s32.totalorder %v559, 32
    %v562 = vsel %vm561, %v556, %v11
    %s563 = scalar_lea.vmem [#allocation8], 96
    %v564 = vpack.c.bf16 0.0, %v562
    %566 = vst [vmem:[%s563] sm:$0xf] %v564
    %s567 = scalar_lea.vmem %s1, 100
    %s569 = sor.u32 255, 127
    %s570 = sand.u32 %s569, 85
    %s571 = sshrl.u32 %s570, 1
    %s572 = sor.u32 %s570, %s571
    %s573 = sand.u32 51, %s572
    %s574 = sshrl.u32 %s573, 2
    %s575 = sor.u32 %s573, %s574
    %s576 = sand.u32 15, %s575
    %v577 = vld [vmem:[%s567] sm:%s576]
    %v578 = vunpack.c.l.bf16 %v577
    %v579 = vunpack.c.h.bf16 %v577
    %v580 = vlaneseq
    %v581 = vand.u32 %v580, 127
    %vm583 = vcmp.lt.s32.totalorder %v581, 32
    %v584 = vsel %vm583, %v578, %v11
    %s585 = scalar_lea.vmem [#allocation8], 100
    %v586 = vpack.c.bf16 0.0, %v584
    %588 = vst [vmem:[%s585] sm:$0xf] %v586
    %s589 = scalar_lea.vmem %s1, 104
    %s591 = sor.u32 255, 127
    %s592 = sand.u32 %s591, 85
    %s593 = sshrl.u32 %s592, 1
    %s594 = sor.u32 %s592, %s593
    %s595 = sand.u32 51, %s594
    %s596 = sshrl.u32 %s595, 2
    %s597 = sor.u32 %s595, %s596
    %s598 = sand.u32 15, %s597
    %v599 = vld [vmem:[%s589] sm:%s598]
    %v600 = vunpack.c.l.bf16 %v599
    %v601 = vunpack.c.h.bf16 %v599
    %v602 = vlaneseq
    %v603 = vand.u32 %v602, 127
    %vm605 = vcmp.lt.s32.totalorder %v603, 32
    %v606 = vsel %vm605, %v600, %v11
    %s607 = scalar_lea.vmem [#allocation8], 104
    %v608 = vpack.c.bf16 0.0, %v606
    %610 = vst [vmem:[%s607] sm:$0xf] %v608
    %s611 = scalar_lea.vmem %s1, 108
    %s613 = sor.u32 255, 127
    %s614 = sand.u32 %s613, 85
    %s615 = sshrl.u32 %s614, 1
    %s616 = sor.u32 %s614, %s615
    %s617 = sand.u32 51, %s616
    %s618 = sshrl.u32 %s617, 2
    %s619 = sor.u32 %s617, %s618
    %s620 = sand.u32 15, %s619
    %v621 = vld [vmem:[%s611] sm:%s620]
    %v622 = vunpack.c.l.bf16 %v621
    %v623 = vunpack.c.h.bf16 %v621
    %v624 = vlaneseq
    %v625 = vand.u32 %v624, 127
    %vm627 = vcmp.lt.s32.totalorder %v625, 32
    %v628 = vsel %vm627, %v622, %v11
    %s629 = scalar_lea.vmem [#allocation8], 108
    %v630 = vpack.c.bf16 0.0, %v628
    %632 = vst [vmem:[%s629] sm:$0xf] %v630
    %s633 = scalar_lea.vmem %s1, 112
    %s635 = sor.u32 255, 127
    %s636 = sand.u32 %s635, 85
    %s637 = sshrl.u32 %s636, 1
    %s638 = sor.u32 %s636, %s637
    %s639 = sand.u32 51, %s638
    %s640 = sshrl.u32 %s639, 2
    %s641 = sor.u32 %s639, %s640
    %s642 = sand.u32 15, %s641
    %v643 = vld [vmem:[%s633] sm:%s642]
    %v644 = vunpack.c.l.bf16 %v643
    %v645 = vunpack.c.h.bf16 %v643
    %v646 = vlaneseq
    %v647 = vand.u32 %v646, 127
    %vm649 = vcmp.lt.s32.totalorder %v647, 32
    %v650 = vsel %vm649, %v644, %v11
    %s651 = scalar_lea.vmem [#allocation8], 112
    %v652 = vpack.c.bf16 0.0, %v650
    %654 = vst [vmem:[%s651] sm:$0xf] %v652
    %s655 = scalar_lea.vmem %s1, 116
    %s657 = sor.u32 255, 127
    %s658 = sand.u32 %s657, 85
    %s659 = sshrl.u32 %s658, 1
    %s660 = sor.u32 %s658, %s659
    %s661 = sand.u32 51, %s660
    %s662 = sshrl.u32 %s661, 2
    %s663 = sor.u32 %s661, %s662
    %s664 = sand.u32 15, %s663
    %v665 = vld [vmem:[%s655] sm:%s664]
    %v666 = vunpack.c.l.bf16 %v665
    %v667 = vunpack.c.h.bf16 %v665
    %v668 = vlaneseq
    %v669 = vand.u32 %v668, 127
    %vm671 = vcmp.lt.s32.totalorder %v669, 32
    %v672 = vsel %vm671, %v666, %v11
    %s673 = scalar_lea.vmem [#allocation8], 116
    %v674 = vpack.c.bf16 0.0, %v672
    %676 = vst [vmem:[%s673] sm:$0xf] %v674
    %s677 = scalar_lea.vmem %s1, 120
    %s679 = sor.u32 255, 127
    %s680 = sand.u32 %s679, 85
    %s681 = sshrl.u32 %s680, 1
    %s682 = sor.u32 %s680, %s681
    %s683 = sand.u32 51, %s682
    %s684 = sshrl.u32 %s683, 2
    %s685 = sor.u32 %s683, %s684
    %s686 = sand.u32 15, %s685
    %v687 = vld [vmem:[%s677] sm:%s686]
    %v688 = vunpack.c.l.bf16 %v687
    %v689 = vunpack.c.h.bf16 %v687
    %v690 = vlaneseq
    %v691 = vand.u32 %v690, 127
    %vm693 = vcmp.lt.s32.totalorder %v691, 32
    %v694 = vsel %vm693, %v688, %v11
    %s695 = scalar_lea.vmem [#allocation8], 120
    %v696 = vpack.c.bf16 0.0, %v694
    %698 = vst [vmem:[%s695] sm:$0xf] %v696
    %s699 = scalar_lea.vmem %s1, 124
    %s701 = sor.u32 255, 127
    %s702 = sand.u32 %s701, 85
    %s703 = sshrl.u32 %s702, 1
    %s704 = sor.u32 %s702, %s703
    %s705 = sand.u32 51, %s704
    %s706 = sshrl.u32 %s705, 2
    %s707 = sor.u32 %s705, %s706
    %s708 = sand.u32 15, %s707
    %v709 = vld [vmem:[%s699] sm:%s708]
    %v710 = vunpack.c.l.bf16 %v709
    %v711 = vunpack.c.h.bf16 %v709
    %v712 = vlaneseq
    %v713 = vand.u32 %v712, 127
    %vm715 = vcmp.lt.s32.totalorder %v713, 32
    %v716 = vsel %vm715, %v710, %v11
    %s717 = scalar_lea.vmem [#allocation8], 124
    %v718 = vpack.c.bf16 0.0, %v716
    %720 = vst [vmem:[%s717] sm:$0xf] %v718
    %p722 = scmp.eq.s32.totalorder 0, 0
    // Predicated region
    $region10: #{discriminator_forward.19} parent=1 // pred_check
      %p723 = pneg %p722
    $region11: #{discriminator_forward.19} parent=1 // pred_check_branch
      %725 = sbr.rel (%p723) target = $region13
    $region12: #{discriminator_forward.19} parent=1 // pred_region
      %726 = vst [vmem:[#allocation2] sm:$0xff] 0.0
      %727 = vst [vmem:[#allocation2 + $0x8] sm:$0xff] 0.0
      %728 = vst [vmem:[#allocation2 + $0x10] sm:$0xff] 0.0
      %729 = vst [vmem:[#allocation2 + $0x18] sm:$0xff] 0.0
    $region13: #{discriminator_forward.19} parent=1 // pred_fallthru
      _
    %v730 = vld [vmem:[#allocation2] sm:$0xff]
    %v731 = vld [vmem:[#allocation2 + $0x8] sm:$0xff]
    %v732 = vld [vmem:[#allocation2 + $0x10] sm:$0xff]
    %v733 = vld [vmem:[#allocation2 + $0x18] sm:$0xff]
    %v734 = vld [vmem:[%s0] sm:$0xff]
    %v735 = vld [vmem:[%s0 + $0x8] sm:$0xff]
    %v736 = vld [vmem:[%s0 + $0x10] sm:$0xff]
    %v737 = vld [vmem:[%s0 + $0x18] sm:$0xff]
    %v738 = vld [vmem:[#allocation8] sm:$0xf]
    %v739 = vld [vmem:[#allocation8 + $0x4] sm:$0xf]
    %v740 = vld [vmem:[#allocation8 + $0x8] sm:$0xf]
    %v741 = vld [vmem:[#allocation8 + $0xc] sm:$0xf]
    %v742 = vld [vmem:[#allocation8 + $0x10] sm:$0xf]
    %v743 = vld [vmem:[#allocation8 + $0x14] sm:$0xf]
    %v744 = vld [vmem:[#allocation8 + $0x18] sm:$0xf]
    %v745 = vld [vmem:[#allocation8 + $0x1c] sm:$0xf]
    %v746 = vld [vmem:[#allocation8 + $0x20] sm:$0xf]
    %v747 = vld [vmem:[#allocation8 + $0x24] sm:$0xf]
    %v748 = vld [vmem:[#allocation8 + $0x28] sm:$0xf]
    %v749 = vld [vmem:[#allocation8 + $0x2c] sm:$0xf]
    %v750 = vld [vmem:[#allocation8 + $0x30] sm:$0xf]
    %v751 = vld [vmem:[#allocation8 + $0x34] sm:$0xf]
    %v752 = vld [vmem:[#allocation8 + $0x38] sm:$0xf]
    %v753 = vld [vmem:[#allocation8 + $0x3c] sm:$0xf]
    %v754 = vld [vmem:[#allocation8 + $0x40] sm:$0xf]
    %v755 = vld [vmem:[#allocation8 + $0x44] sm:$0xf]
    %v756 = vld [vmem:[#allocation8 + $0x48] sm:$0xf]
    %v757 = vld [vmem:[#allocation8 + $0x4c] sm:$0xf]
    %v758 = vld [vmem:[#allocation8 + $0x50] sm:$0xf]
    %v759 = vld [vmem:[#allocation8 + $0x54] sm:$0xf]
    %v760 = vld [vmem:[#allocation8 + $0x58] sm:$0xf]
    %v761 = vld [vmem:[#allocation8 + $0x5c] sm:$0xf]
    %v762 = vld [vmem:[#allocation8 + $0x60] sm:$0xf]
    %v763 = vld [vmem:[#allocation8 + $0x64] sm:$0xf]
    %v764 = vld [vmem:[#allocation8 + $0x68] sm:$0xf]
    %v765 = vld [vmem:[#allocation8 + $0x6c] sm:$0xf]
    %v766 = vld [vmem:[#allocation8 + $0x70] sm:$0xf]
    %v767 = vld [vmem:[#allocation8 + $0x74] sm:$0xf]
    %v768 = vld [vmem:[#allocation8 + $0x78] sm:$0xf]
    %v769 = vld [vmem:[#allocation8 + $0x7c] sm:$0xf]
    %v774 = vunpack.c.l.b16 %v734
    %v775 = vunpack.c.h.b16 %v734
    %v776 = vunpack.c.l.b16 %v735
    %v777 = vunpack.c.h.b16 %v735
    %v778 = vunpack.c.l.b16 %v736
    %v779 = vunpack.c.h.b16 %v736
    %v780 = vunpack.c.l.b16 %v737
    %v781 = vunpack.c.h.b16 %v737
    %v782 = vpack.c.b16 %v776, %v774
    %v783 = vpack.c.b16 %v777, %v775
    %v784 = vpack.c.b16 %v780, %v778
    %v785 = vpack.c.b16 %v781, %v779
    %v822 = vunpack.c.l.b16 %v738
    %v823 = vunpack.c.l.b16 %v739
    %v824 = vunpack.c.l.b16 %v740
    %v825 = vunpack.c.l.b16 %v741
    %v826 = vunpack.c.l.b16 %v742
    %v827 = vunpack.c.l.b16 %v743
    %v828 = vunpack.c.l.b16 %v744
    %v829 = vunpack.c.l.b16 %v745
    %v830 = vunpack.c.l.b16 %v746
    %v831 = vunpack.c.l.b16 %v747
    %v832 = vunpack.c.l.b16 %v748
    %v833 = vunpack.c.l.b16 %v749
    %v834 = vunpack.c.l.b16 %v750
    %v835 = vunpack.c.l.b16 %v751
    %v836 = vunpack.c.l.b16 %v752
    %v837 = vunpack.c.l.b16 %v753
    %v838 = vunpack.c.l.b16 %v754
    %v839 = vunpack.c.l.b16 %v755
    %v840 = vunpack.c.l.b16 %v756
    %v841 = vunpack.c.l.b16 %v757
    %v842 = vunpack.c.l.b16 %v758
    %v843 = vunpack.c.l.b16 %v759
    %v844 = vunpack.c.l.b16 %v760
    %v845 = vunpack.c.l.b16 %v761
    %v846 = vunpack.c.l.b16 %v762
    %v847 = vunpack.c.l.b16 %v763
    %v848 = vunpack.c.l.b16 %v764
    %v849 = vunpack.c.l.b16 %v765
    %v850 = vunpack.c.l.b16 %v766
    %v851 = vunpack.c.l.b16 %v767
    %v852 = vunpack.c.l.b16 %v768
    %v853 = vunpack.c.l.b16 %v769
    %v854 = vpack.c.b16 %v823, %v822
    %v855 = vpack.c.b16 %v825, %v824
    %v856 = vpack.c.b16 %v827, %v826
    %v857 = vpack.c.b16 %v829, %v828
    %v858 = vpack.c.b16 %v831, %v830
    %v859 = vpack.c.b16 %v833, %v832
    %v860 = vpack.c.b16 %v835, %v834
    %v861 = vpack.c.b16 %v837, %v836
    %v862 = vpack.c.b16 %v839, %v838
    %v863 = vpack.c.b16 %v841, %v840
    %v864 = vpack.c.b16 %v843, %v842
    %v865 = vpack.c.b16 %v845, %v844
    %v866 = vpack.c.b16 %v847, %v846
    %v867 = vpack.c.b16 %v849, %v848
    %v868 = vpack.c.b16 %v851, %v850
    %v869 = vpack.c.b16 %v853, %v852
    %886 = vmatprep.subr.bf16.mxu0 0
    %887 = vmatpush1.bf16.msra.mxu0 %v854
    %888 = vmatprep.subr.bf16.mxu0 0
    %889 = vmatpush1.bf16.msra.mxu0 %v855
    %890 = vmatprep.subr.bf16.mxu0 0
    %891 = vmatpush1.bf16.msra.mxu0 %v856
    %892 = vmatprep.subr.bf16.mxu0 0
    %893 = vmatpush1.bf16.msra.mxu0 %v857
    %894 = vmatprep.subr.bf16.mxu0 0
    %895 = vmatpush1.bf16.msra.mxu0 %v858
    %896 = vmatprep.subr.bf16.mxu0 0
    %897 = vmatpush1.bf16.msra.mxu0 %v859
    %898 = vmatprep.subr.bf16.mxu0 0
    %899 = vmatpush1.bf16.msra.mxu0 %v860
    %900 = vmatprep.subr.bf16.mxu0 0
    %901 = vmatpush1.bf16.msra.mxu0 %v861
    %902 = vmatprep.subr.bf16.mxu0 0
    %903 = vmatpush1.bf16.msra.mxu0 %v862
    %904 = vmatprep.subr.bf16.mxu0 0
    %905 = vmatpush1.bf16.msra.mxu0 %v863
    %906 = vmatprep.subr.bf16.mxu0 0
    %907 = vmatpush1.bf16.msra.mxu0 %v864
    %908 = vmatprep.subr.bf16.mxu0 0
    %909 = vmatpush1.bf16.msra.mxu0 %v865
    %910 = vmatprep.subr.bf16.mxu0 0
    %911 = vmatpush1.bf16.msra.mxu0 %v866
    %912 = vmatprep.subr.bf16.mxu0 0
    %913 = vmatpush1.bf16.msra.mxu0 %v867
    %914 = vmatprep.subr.bf16.mxu0 0
    %915 = vmatpush1.bf16.msra.mxu0 %v868
    %916 = vmatprep.subr.bf16.mxu0 0
    %917 = vmatpush1.bf16.msra.mxu0 %v869
    %918 = vmatprep.mubr.bf16.mxu0 %v783
    %919 = vmatmul.mubr.bf16.gmra.mrb[0].mxu0 %v782
    %v920 = vpop.f32.mrb[0].mxu0
    %v921 = vadd.f32 0.0, %v920
    %v922 = vpop.f32.mrb[0].mxu0
    %v923 = vpop.f32.mrb[0].mxu0
    %v924 = vadd.f32 0.0, %v923
    %v925 = vpop.f32.mrb[0].mxu0
    %926 = vmatprep.mubr.bf16.mxu0 %v785
    %927 = vmatmul.mubr.bf16.gmra.mrb[0].mxu0 %v784
    %v928 = vpop.f32.mrb[0].mxu0
    %v929 = vadd.f32 0.0, %v928
    %v930 = vpop.f32.mrb[0].mxu0
    %v931 = vpop.f32.mrb[0].mxu0
    %v932 = vadd.f32 0.0, %v931
    %v933 = vpop.f32.mrb[0].mxu0
    %934 = vdwg.mxu0
    %v935 = vadd.f32 %v730, %v921
    %v936 = vadd.f32 %v731, %v924
    %v937 = vadd.f32 %v732, %v929
    %v938 = vadd.f32 %v733, %v932
    %939 = vst [vmem:[#allocation2] sm:$0xff] %v935
    %940 = vst [vmem:[#allocation2 + $0x8] sm:$0xff] %v936
    %941 = vst [vmem:[#allocation2 + $0x10] sm:$0xff] %v937
    %942 = vst [vmem:[#allocation2 + $0x18] sm:$0xff] %v938
    // Predicated region
    $region14: #{discriminator_forward.19} parent=1 // pred_check
      %p943 = pneg %p722
    $region15: #{discriminator_forward.19} parent=1 // pred_check_branch
      %945 = sbr.rel (%p943) target = $region17
    $region16: #{discriminator_forward.19} parent=1 // pred_region
      %v946 = vld [vmem:[#allocation2] sm:$0xff]
      %v947 = vld [vmem:[#allocation2 + $0x8] sm:$0xff]
      %v948 = vld [vmem:[#allocation2 + $0x10] sm:$0xff]
      %v949 = vld [vmem:[#allocation2 + $0x18] sm:$0xff]
      %v950 = vadd.f32 %v946, %v947
      %v951 = vadd.f32 %v950, %v948
      %v952 = vadd.f32 %v951, %v949
      %v953 = vrot.slane %v952, 4
      %v954 = vadd.f32 %v952, %v953
      %v955 = vrot.slane %v954, 2
      %v956 = vadd.f32 %v954, %v955
      %v957 = vrot.slane %v956, 1
      %v958 = vadd.f32 %v956, %v957
      %v959 = vmul.f32 %v946, %v946
      %v960 = vmul.f32 %v947, %v947
      %v961 = vmul.f32 %v948, %v948
      %v962 = vmul.f32 %v949, %v949
      %v963 = vadd.f32 %v959, %v960
      %v964 = vadd.f32 %v963, %v961
      %v965 = vadd.f32 %v964, %v962
      %v966 = vrot.slane %v965, 4
      %v967 = vadd.f32 %v965, %v966
      %v968 = vrot.slane %v967, 2
      %v969 = vadd.f32 %v967, %v968
      %v970 = vrot.slane %v969, 1
      %v971 = vadd.f32 %v969, %v970
      %v972 = vlaneseq
      %v973 = vshrl.u32 %v972, 7
      %vm974 = vcmp.eq.s32.totalorder %v973, 0
      %vm975 = vcmp.eq.s32.totalorder %v973, 1
      %v976 = vsel %vm975, %v971, 0.0
      %v977 = vsel %vm974, %v958, %v976
      %978 = vst [vmem:[%s4] sm:$0xff] %v977
      %v979 = vpack.c.bf16 %v947, %v946
      %v980 = vpack.c.bf16 %v949, %v948
      %v983 = vunpack.c.l.b16 %v979
      %v984 = vunpack.c.h.b16 %v979
      %v985 = vunpack.c.l.b16 %v980
      %v986 = vunpack.c.h.b16 %v980
      %v987 = vpack.c.b16 %v983, %v983
      %v988 = vpack.c.b16 %v984, %v984
      %v989 = vpack.c.b16 %v985, %v985
      %v990 = vpack.c.b16 %v986, %v986
      %995 = vst [vmem:[%s3] sm:$0xf] %v987
      %996 = vst [vmem:[%s3 + $0x4] sm:$0xf] %v988
      %997 = vst [vmem:[%s3 + $0x8] sm:$0xf] %v989
      %998 = vst [vmem:[%s3 + $0xc] sm:$0xf] %v990
    $region17: #{discriminator_forward.19} parent=1 // pred_fallthru
      _
    // Predicated region
    $region18: #{discriminator_forward.19} parent=1 // pred_check
      _
    $region19: #{discriminator_forward.19} parent=1 // pred_check_branch
      %1000 = sbr.rel (0) target = $region21
    $region20: #{discriminator_forward.19} parent=1 // pred_region
      _
    $region21: #{discriminator_forward.19} parent=1 // pred_fallthru
      _
    // Predicated region
    $region22: #{discriminator_forward.19} parent=1 // pred_check
      _
    $region23: #{discriminator_forward.19} parent=1 // pred_check_branch
      %1002 = sbr.rel (0) target = $region25
    $region24: #{discriminator_forward.19} parent=1 // pred_region
      _
    $region25: #{discriminator_forward.19} parent=1 // pred_fallthru
      _
    // Predicated region
    $region26: #{discriminator_forward.19} parent=1 // pred_check
      _
    $region27: #{discriminator_forward.19} parent=1 // pred_check_branch
      %1004 = sbr.rel (0) target = $region29
    $region28: #{discriminator_forward.19} parent=1 // pred_region
      _
    $region29: #{discriminator_forward.19} parent=1 // pred_fallthru
      _
    // Predicated region
    $region30: #{discriminator_forward.19} parent=1 // pred_check
      _
    $region31: #{discriminator_forward.19} parent=1 // pred_check_branch
      %1006 = sbr.rel (0) target = $region33
    $region32: #{discriminator_forward.19} parent=1 // pred_region
      _
    $region33: #{discriminator_forward.19} parent=1 // pred_fallthru
      _

// kernel: discriminator_forward.14
$region0: #{discriminator_forward.14}
  #allocation0 [shape = 'u32[]', space=smem, size = 0x4, offset = 0x4, fixed_abs, tag = 'smem constant byte address 0x4 - core index']
  #allocation1 [shape = 'u32[144,128]{1,0:T(1,128)}', space=vmem, size = 0x12000, scoped, tag = 'internal scratch']
  %s0 = inlined_call_operand.vmem [shape: bf16[2,16,512], index: 0, kind: input, shape index: {}]
  %s1 = inlined_call_operand.vmem [shape: bf16[2,16,128], index: 1, kind: input, shape index: {}]
  %s2 = inlined_call_operand.vmem [shape: bf16[2,16,128], index: 2, kind: output, shape index: {}]
  %s3 = sld [smem:[#allocation0]]
  $region41: #{discriminator_forward.14} parent=0
    _
  %s5 = ssub.s32 1, %s3
  %s6 = scalar_select 0, %s5, %s3
  loop: start=0, step=1, limit=4
  $region2: #{discriminator_forward.14} parent=0 // loop_pre_header
    _
  $region3: #{discriminator_forward.14} parent=0 // loop_header
    %s8 = sphi 0, %s12
    %p9 = scmp.ge.s32.totalorder %s8, 4
    %s18 = sphi 0, %s20
    %s21 = sphi 0, %s18
    %s22 = sphi 0, %s21
    %s38 = sphi 0, %s22
    %s44 = sphi 0, %s46
    %s47 = sphi 0, %s44
    %s48 = sphi 0, %s47
    %s64 = sphi 0, %s48
    %s70 = sphi 0, %s72
    %s73 = sphi 0, %s70
    %s74 = sphi 0, %s73
    %s90 = sphi 0, %s74
  $region4: #{discriminator_forward.14} parent=0 // loop_header_branch
    %11 = sbr.rel (%p9) target = $region8
  $region5: #{discriminator_forward.14} parent=0 // loop_body
    %s13 = ssub.s32 %s8, 1
    %s14 = ssub.s32 %s8, 2
    %s15 = sadd.s32 %s8, 1
    %s16 = ssub.s32 %s8, %s15
    %p17 = scmp.eq.s32.totalorder %s16, 0
    %s19 = sadd.s32 %s18, 1
    %s20 = scalar_select %p17, %s18, %s19
    %p23 = pneg %p17
    %p24 = scmp.eq.s32.totalorder %s8, 1
    %p25 = por %p23, %p24
    %p26 = scmp.ne.s32.totalorder %s18, %s21
    %p27 = scmp.eq.s32.totalorder %s8, 0
    %p28 = por %p26, %p27
    %p29 = scmp.ne.s32.totalorder %s18, %s21
    %p30 = scmp.eq.s32.totalorder %s13, 1
    %p31 = por %p29, %p30
    %p32 = scmp.ne.s32.totalorder %s21, %s22
    %p33 = scmp.eq.s32.totalorder %s13, 0
    %p34 = por %p32, %p33
    %p35 = scmp.ne.s32.totalorder %s21, %s22
    %p36 = scmp.eq.s32.totalorder %s14, 1
    %p37 = por %p35, %p36
    %p39 = scmp.ne.s32.totalorder %s22, %s38
    %p40 = scmp.eq.s32.totalorder %s14, 0
    %p41 = por %p39, %p40
    %s42 = ssub.s32 %s8, %s15
    %p43 = scmp.eq.s32.totalorder %s42, 0
    %s45 = sadd.s32 %s44, 1
    %s46 = scalar_select %p43, %s44, %s45
    %p49 = pneg %p43
    %p50 = scmp.eq.s32.totalorder %s8, 1
    %p51 = por %p49, %p50
    %p52 = scmp.ne.s32.totalorder %s44, %s47
    %p53 = scmp.eq.s32.totalorder %s8, 0
    %p54 = por %p52, %p53
    %p55 = scmp.ne.s32.totalorder %s44, %s47
    %p56 = scmp.eq.s32.totalorder %s13, 1
    %p57 = por %p55, %p56
    %p58 = scmp.ne.s32.totalorder %s47, %s48
    %p59 = scmp.eq.s32.totalorder %s13, 0
    %p60 = por %p58, %p59
    %p61 = scmp.ne.s32.totalorder %s47, %s48
    %p62 = scmp.eq.s32.totalorder %s14, 1
    %p63 = por %p61, %p62
    %p65 = scmp.ne.s32.totalorder %s48, %s64
    %p66 = scmp.eq.s32.totalorder %s14, 0
    %p67 = por %p65, %p66
    %s68 = ssub.s32 %s8, %s15
    %p69 = scmp.eq.s32.totalorder %s68, 0
    %s71 = sadd.s32 %s70, 1
    %s72 = scalar_select %p69, %s70, %s71
    %p75 = pneg %p69
    %p76 = scmp.eq.s32.totalorder %s8, 1
    %p77 = por %p75, %p76
    %p78 = scmp.ne.s32.totalorder %s70, %s73
    %p79 = scmp.eq.s32.totalorder %s8, 0
    %p80 = por %p78, %p79
    %p81 = scmp.ne.s32.totalorder %s70, %s73
    %p82 = scmp.eq.s32.totalorder %s13, 1
    %p83 = por %p81, %p82
    %p84 = scmp.ne.s32.totalorder %s73, %s74
    %p85 = scmp.eq.s32.totalorder %s13, 0
    %p86 = por %p84, %p85
    %p87 = scmp.ne.s32.totalorder %s73, %s74
    %p88 = scmp.eq.s32.totalorder %s14, 1
    %p89 = por %p87, %p88
    %p91 = scmp.ne.s32.totalorder %s74, %s90
    %p92 = scmp.eq.s32.totalorder %s14, 0
    %p93 = por %p91, %p92
    %p94 = scmp.le.s32.totalorder 1, %s8
    %p95 = scmp.lt.s32.totalorder %s8, 3
    %p96 = pnand %p94, %p95
    %p97 = pneg %p96
    // Predicated region
    $region9: #{discriminator_forward.14} parent=5 // pred_check
      _
    $region10: #{discriminator_forward.14} parent=5 // pred_check_branch
      %99 = sbr.rel (%p96) target = $region12
    $region11: #{discriminator_forward.14} parent=5 // pred_region
      %s100 = ssub.s32 %s8, 1
    $region12: #{discriminator_forward.14} parent=5 // pred_fallthru
      _
    %p101 = scmp.lt.s32.totalorder %s8, 2
    // Predicated region
    $region13: #{discriminator_forward.14} parent=5 // pred_check
      %p102 = pneg %p101
    $region14: #{discriminator_forward.14} parent=5 // pred_check_branch
      %104 = sbr.rel (%p102) target = $region16
    $region15: #{discriminator_forward.14} parent=5 // pred_region
      // Predicated region
      $region17: #{discriminator_forward.14} parent=15 // pred_check
        %p105 = pneg %p28
      $region18: #{discriminator_forward.14} parent=15 // pred_check_branch
        %107 = sbr.rel (%p105) target = $region20
      $region19: #{discriminator_forward.14} parent=15 // pred_region
        %p108 = scmp.lt.s32.totalorder %s8, 1
        %s109 = scalar_select %p108, %s8, 1
        %s110 = smul.addr %s109, 8
        %s111 = smul.addr %s110, 4
        %s112 = scalar_lea.vmem %s0, %s111
      $region20: #{discriminator_forward.14} parent=15 // pred_fallthru
        _
      // Predicated region
      $region21: #{discriminator_forward.14} parent=15 // pred_check
        %p113 = pneg %p54
      $region22: #{discriminator_forward.14} parent=15 // pred_check_branch
        %115 = sbr.rel (%p113) target = $region24
      $region23: #{discriminator_forward.14} parent=15 // pred_region
        %p116 = scmp.lt.s32.totalorder %s8, 1
        %s117 = scalar_select %p116, %s8, 1
        %s118 = smul.addr %s117, 2
        %s119 = smul.addr %s118, 4
        %s120 = scalar_lea.vmem %s1, %s119
      $region24: #{discriminator_forward.14} parent=15 // pred_fallthru
        _
    $region16: #{discriminator_forward.14} parent=5 // pred_fallthru
      _
    %p121 = scmp.le.s32.totalorder 1, %s8
    %p122 = scmp.lt.s32.totalorder %s8, 3
    %p123 = pnand %p121, %p122
    %p124 = pneg %p123
    // Predicated region
    $region25: #{discriminator_forward.14} parent=5 // pred_check
      _
    $region26: #{discriminator_forward.14} parent=5 // pred_check_branch
      %126 = sbr.rel (%p123) target = $region28
    $region27: #{discriminator_forward.14} parent=5 // pred_region
      %s127 = ssub.s32 %s8, 1
      %p128 = scmp.lt.s32.totalorder %s13, 1
      %s129 = scalar_select %p128, %s13, 1
      %s130 = smul.addr %s129, 8
      %s131 = smul.addr %s130, 4
      %s132 = scalar_lea.vmem %s0, %s131
      %p133 = pneg %p34
      %p134 = pneg %p31
      %p135 = scmp.lt.s32.totalorder %s13, 1
      %s136 = scalar_select %p135, %s13, 1
      %s137 = smul.addr %s136, 2
      %s138 = smul.addr %s137, 4
      %s139 = scalar_lea.vmem %s1, %s138
      %p140 = pneg %p60
      %p141 = pneg %p57
      %p142 = pneg %p86
      %p143 = pneg %p83
      %p144 = scmp.lt.s32.totalorder %s13, 1
      %s145 = scalar_select %p144, %s13, 1
      %s146 = smul.addr %s145, 2
      %s147 = smul.addr %s146, 4
      %s148 = scalar_lea.vmem %s2, %s147
      %p149 = scmp.lt.s32.totalorder %s13, 1
      %s150 = scalar_select %p149, %s13, 1
      %s151 = smul.addr %s150, 8
      %s152 = smul.addr %s151, 4
      %s153 = scalar_lea.vmem %s0, %s152
      %p154 = scmp.lt.s32.totalorder %s13, 1
      %s155 = scalar_select %p154, %s13, 1
      %s156 = smul.addr %s155, 2
      %s157 = smul.addr %s156, 4
      %s158 = scalar_lea.vmem %s1, %s157
      %p159 = scmp.lt.s32.totalorder %s13, 1
      %s160 = scalar_select %p159, %s13, 1
      %s161 = smul.addr %s160, 2
      %s162 = smul.addr %s161, 4
      %s163 = scalar_lea.vmem %s2, %s162
      %v165 = vld [vmem:[%s153] sm:$0xff]
      %v166 = vld [vmem:[%s153 + $0x8] sm:$0xff]
      %v167 = vld [vmem:[%s153 + $0x10] sm:$0xff]
      %v168 = vld [vmem:[%s153 + $0x18] sm:$0xff]
      %v171 = vrot.slane %v165, 4
      %v172 = vrot.slane %v167, 4
      %v173 = vunpack.c.l.b16 %v165
      %v174 = vunpack.c.l.b16 %v167
      %v175 = vpack.c.b16 %v174, %v173
      %v177 = vunpack.c.l.b16 %v171
      %v178 = vunpack.c.l.b16 %v172
      %v179 = vpack.c.b16 %v178, %v177
      %181 = vmatprep.subr.bf16.mxu0 0
      %182 = vmatpush1.bf16.xpose.msra.mxu0 %v179
      %183 = vmatprep.subr.bf16.mxu0 0
      %184 = vmatpush1.bf16.xpose.msra.mxu0 0
      %185 = vmatprep.subr.bf16.mxu0 0
      %186 = vmatpush1.bf16.xpose.msra.mxu0 0
      %187 = vmatprep.subr.bf16.mxu0 0
      %188 = vmatpush1.bf16.xpose.msra.mxu0 0
      %189 = vmatprep.subr.bf16.mxu0 0
      %190 = vmatpush1.bf16.xpose.msra.mxu0 0
      %191 = vmatprep.subr.bf16.mxu0 0
      %192 = vmatpush1.bf16.xpose.msra.mxu0 0
      %193 = vmatprep.subr.bf16.mxu0 0
      %194 = vmatpush1.bf16.xpose.msra.mxu0 0
      %195 = vmatprep.subr.bf16.mxu0 0
      %196 = vmatpush1.bf16.xpose.msra.mxu0 0
      %197 = vmatprep.subr.bf16.mxu0 0
      %198 = vmatpush1.bf16.xpose.msra.mxu0 0
      %199 = vmatprep.subr.bf16.mxu0 0
      %200 = vmatpush1.bf16.xpose.msra.mxu0 0
      %201 = vmatprep.subr.bf16.mxu0 0
      %202 = vmatpush1.bf16.xpose.msra.mxu0 0
      %203 = vmatprep.subr.bf16.mxu0 0
      %204 = vmatpush1.bf16.xpose.msra.mxu0 0
      %205 = vmatprep.subr.bf16.mxu0 0
      %206 = vmatpush1.bf16.xpose.msra.mxu0 0
      %207 = vmatprep.subr.bf16.mxu0 0
      %208 = vmatpush1.bf16.xpose.msra.mxu0 0
      %209 = vmatprep.subr.bf16.mxu0 0
      %210 = vmatpush1.bf16.xpose.msra.mxu0 0
      %211 = vmatprep.subr.bf16.mxu0 0
      %212 = vmatpush1.bf16.xpose.msra.mxu0 0
      %213 = vmatprep.mubr.bf16.mxu0 0
      %214 = vmatmul.mubr.bf16.gmra.mrb[0].mxu0 %v175
      %v215 = vpop.f32.mrb[0].mxu0
      %v216 = vadd.f32 0.0, %v215
      %v217 = vpop.f32.mrb[0].mxu0
      %v218 = vpop.f32.mrb[0].mxu0
      %v219 = vadd.f32 0.0, %v218
      %v220 = vpop.f32.mrb[0].mxu0
      %221 = vdwg.mxu0
      %vm222 = vcmask 130048
      %v223 = vsel %vm222, %v216, -inf
      %224 = vmax.xlane.f32.xlu0 %v223
      %v225 = vpop.xlane.xlu0 %224
      %v226 = vsel %vm222, %v219, -inf
      %227 = vmax.xlane.f32.xlu0 %v226
      %v228 = vpop.xlane.xlu0 %227
      %v229 = vsub.f32 %v216, %v225
      %v230 = vsub.f32 %v219, %v228
      %v231 = vmul.f32 %v229, 1.442695
      %v232 = vpow.pop %v231
      %v233 = vmul.f32 %v230, 1.442695
      %v234 = vpow.pop %v233
      %v235 = vsel %vm222, %v232, 0.0
      %236 = vadd.xlane.f32.xlu0 %v235
      %v237 = vpop.xlane.xlu0 %236
      %v238 = vsel %vm222, %v234, 0.0
      %239 = vadd.xlane.f32.xlu0 %v238
      %v240 = vpop.xlane.xlu0 %239
      %v241 = vrcp.pop %v237
      %v242 = vmul.f32 %v232, %v241
      %v243 = vrcp.pop %v240
      %v244 = vmul.f32 %v234, %v243
      %v245 = vpack.c.bf16 %v244, %v242
      %v246 = vld [vmem:[%s158] sm:$0xf]
      %v247 = vld [vmem:[%s158 + $0x4] sm:$0xf]
      %v248 = vunpack.c.l.bf16 %v246
      %v249 = vunpack.c.l.bf16 %v247
      %v252 = vunpack.c.l.b16 %v166
      %v253 = vunpack.c.l.b16 %v168
      %v254 = vpack.c.b16 %v253, %v252
      %v257 = vsel %vm222, %v245, 0
      %259 = vmatprep.subr.bf16.mxu0 0
      %260 = vmatpush1.bf16.msra.mxu0 %v254
      %261 = vmatprep.subr.bf16.mxu0 0
      %262 = vmatpush1.bf16.msra.mxu0 0
      %263 = vmatprep.subr.bf16.mxu0 0
      %264 = vmatpush1.bf16.msra.mxu0 0
      %265 = vmatprep.subr.bf16.mxu0 0
      %266 = vmatpush1.bf16.msra.mxu0 0
      %267 = vmatprep.subr.bf16.mxu0 0
      %268 = vmatpush1.bf16.msra.mxu0 0
      %269 = vmatprep.subr.bf16.mxu0 0
      %270 = vmatpush1.bf16.msra.mxu0 0
      %271 = vmatprep.subr.bf16.mxu0 0
      %272 = vmatpush1.bf16.msra.mxu0 0
      %273 = vmatprep.subr.bf16.mxu0 0
      %274 = vmatpush1.bf16.msra.mxu0 0
      %275 = vmatprep.subr.bf16.mxu0 0
      %276 = vmatpush1.bf16.msra.mxu0 0
      %277 = vmatprep.subr.bf16.mxu0 0
      %278 = vmatpush1.bf16.msra.mxu0 0
      %279 = vmatprep.subr.bf16.mxu0 0
      %280 = vmatpush1.bf16.msra.mxu0 0
      %281 = vmatprep.subr.bf16.mxu0 0
      %282 = vmatpush1.bf16.msra.mxu0 0
      %283 = vmatprep.subr.bf16.mxu0 0
      %284 = vmatpush1.bf16.msra.mxu0 0
      %285 = vmatprep.subr.bf16.mxu0 0
      %286 = vmatpush1.bf16.msra.mxu0 0
      %287 = vmatprep.subr.bf16.mxu0 0
      %288 = vmatpush1.bf16.msra.mxu0 0
      %289 = vmatprep.subr.bf16.mxu0 0
      %290 = vmatpush1.bf16.msra.mxu0 0
      %291 = vmatprep.mubr.bf16.mxu0 0
      %292 = vmatmul.mubr.bf16.gmra.mrb[0].mxu0 %v257
      %v293 = vpop.f32.mrb[0].mxu0
      %v294 = vadd.f32 %v248, %v293
      %v295 = vpop.f32.mrb[0].mxu0
      %v296 = vpop.f32.mrb[0].mxu0
      %v297 = vadd.f32 %v249, %v296
      %v298 = vpop.f32.mrb[0].mxu0
      %299 = vdwg.mxu0
      %v300 = vpack.c.bf16 %v297, %v294
      %v302 = vunpack.c.l.b16 %v300
      %v303 = vunpack.c.h.b16 %v300
      %v304 = vpack.c.b16 %v302, %v302
      %v305 = vpack.c.b16 %v303, %v303
      %308 = vst [vmem:[%s163] sm:$0xf] %v304
      %309 = vst [vmem:[%s163 + $0x4] sm:$0xf] %v305
      %p310 = scmp.lt.s32.totalorder %s13, 1
      %s311 = scalar_select %p310, %s13, 1
      %s312 = smul.addr %s311, 2
      %s313 = smul.addr %s312, 4
      %s314 = scalar_lea.vmem %s2, %s313
      // Predicated region
      $region29: #{discriminator_forward.14} parent=27 // pred_check
        %p315 = pneg %p83
      $region30: #{discriminator_forward.14} parent=27 // pred_check_branch
        %317 = sbr.rel (%p315) target = $region32
      $region31: #{discriminator_forward.14} parent=27 // pred_region
        _
      $region32: #{discriminator_forward.14} parent=27 // pred_fallthru
        _
    $region28: #{discriminator_forward.14} parent=5 // pred_fallthru
      _
    %p318 = scmp.le.s32.totalorder 2, %s8
    // Predicated region
    $region33: #{discriminator_forward.14} parent=5 // pred_check
      %p319 = pneg %p318
    $region34: #{discriminator_forward.14} parent=5 // pred_check_branch
      %321 = sbr.rel (%p319) target = $region36
    $region35: #{discriminator_forward.14} parent=5 // pred_region
      %s322 = ssub.s32 %s8, 2
      // Predicated region
      $region37: #{discriminator_forward.14} parent=35 // pred_check
        %p323 = pneg %p89
      $region38: #{discriminator_forward.14} parent=35 // pred_check_branch
        %325 = sbr.rel (%p323) target = $region40
      $region39: #{discriminator_forward.14} parent=35 // pred_region
        %p326 = scmp.lt.s32.totalorder %s14, 1
        %s327 = scalar_select %p326, %s14, 1
        %s328 = smul.addr %s327, 2
        %s329 = smul.addr %s328, 4
        %s330 = scalar_lea.vmem %s2, %s329
      $region40: #{discriminator_forward.14} parent=35 // pred_fallthru
        _
    $region36: #{discriminator_forward.14} parent=5 // pred_fallthru
      _
  $region6: #{discriminator_forward.14} parent=0 // loop_footer
    %s12 = sadd.s32 1, %s8
  $region7: #{discriminator_forward.14} parent=0 // loop_footer_branch
    %7 = sbr.rel target = $region3
  $region8: #{discriminator_forward.14} parent=0 // loop_exit
    _

// kernel: discriminator_forward.18
$region0: #{discriminator_forward.18}
  #allocation0 [shape = 'u32[]', space=smem, size = 0x4, offset = 0x4, fixed_abs, tag = 'smem constant byte address 0x4 - core index']
  #allocation1 [shape = 'u32[144,128]{1,0:T(1,128)}', space=vmem, size = 0x12000, scoped, tag = 'internal scratch']
  #allocation2 [shape = 'f32[32,256]{1,0:T(8,128)}', space=vmem, size = 0x8000, scoped, tag = 'scratch operand']
  #allocation3 [shape = 'u32[2048]{0}', space=vmem, size = 0x2000, scoped, tag = 'scoped memory for discriminator_forward.18']
  #allocation4 [shape = 'u32[2048]{0}', space=vmem, size = 0x2000, scoped, tag = 'scoped memory for discriminator_forward.18']
  #allocation5 [shape = 'u32[2048]{0}', space=vmem, size = 0x2000, scoped, tag = 'scoped memory for discriminator_forward.18']
  #allocation6 [shape = 'u32[2048]{0}', space=vmem, size = 0x2000, scoped, tag = 'scoped memory for discriminator_forward.18']
  #allocation7 [shape = 'u32[2048]{0}', space=vmem, size = 0x2000, scoped, tag = 'scoped memory for discriminator_forward.18']
  #allocation8 [shape = 'u32[2048]{0}', space=vmem, size = 0x2000, scoped, tag = 'scoped memory for discriminator_forward.18']
  #allocation9 [shape = 'u32[2048]{0}', space=vmem, size = 0x2000, scoped, tag = 'scoped memory for discriminator_forward.18']
  #allocation10 [shape = 'u32[2048]{0}', space=vmem, size = 0x2000, scoped, tag = 'scoped memory for discriminator_forward.18']
  #allocation11 [shape = 'u32[2048]{0}', space=vmem, size = 0x2000, scoped, tag = 'scoped memory for discriminator_forward.18']
  #allocation12 [shape = 'u32[2048]{0}', space=vmem, size = 0x2000, scoped, tag = 'scoped memory for discriminator_forward.18']
  %s0 = inlined_call_operand.vmem [shape: f32[1,512], index: 0, kind: input, shape index: {}]
  %s1 = inlined_call_operand.vmem [shape: bf16[32,384], index: 1, kind: input, shape index: {}]
  %s2 = inlined_call_operand.<no memory space> [shape: bf16[], index: 2, kind: input, shape index: {}]
  %s3 = inlined_call_operand.vmem [shape: bf16[32,128], index: 3, kind: input, shape index: {}]
  %s4 = inlined_call_operand.vmem [shape: pred[128], index: 4, kind: input, shape index: {}]
  %s5 = inlined_call_operand.vmem [shape: f32[1,384], index: 5, kind: input, shape index: {}]
  %s6 = inlined_call_operand.<no memory space> [shape: f32[], index: 6, kind: input, shape index: {}]
  %s7 = inlined_call_operand.vmem [shape: bf16[32,512], index: 7, kind: output, shape index: {}]
  %s8 = sld [smem:[#allocation0]]
  $region95: #{discriminator_forward.18} parent=0
    _
  %s10 = ssub.s32 1, %s8
  %s11 = scalar_select 0, %s10, %s8
  %v12 = vstv %s2
  %v13 = vunpack.i.l.bf16 %v12
  %v15 = vunpack.i.h.bf16 %v12
  %v17 = vstv %s2
  %v18 = vunpack.i.l.bf16 %v17
  %v20 = vunpack.i.h.bf16 %v17
  %v22 = vstv %s6
  $region1: #{discriminator_forward.18} parent=0
    #allocation13 [shape = 'u8[32768]{0}', space=vmem, size = 0x8000, scoped, tag = 'output window, operand 0']
    loop: start=0, step=1, limit=4
    $region2: #{discriminator_forward.18} parent=1 // loop_pre_header
      _
    $region3: #{discriminator_forward.18} parent=1 // loop_header
      %s24 = sphi 0, %s28
      %p25 = scmp.ge.s32.totalorder %s24, 4
      %s31 = sphi 0, %s50
      %s32 = sphi 0, %s46
      %s33 = sphi 0, %s42
      %s34 = sphi 0, %s31
      %s35 = sphi 0, %s32
      %s36 = sphi 0, %s33
      %s37 = sphi 0, %s34
      %s38 = sphi 0, %s35
      %s39 = sphi 0, %s36
      %s55 = sphi 0, %s57
      %s58 = sphi 0, %s55
      %s59 = sphi 0, %s58
      %s75 = sphi 0, %s59
      %s85 = sphi 0, %s87
      %s88 = sphi 0, %s85
      %s89 = sphi 0, %s88
      %s105 = sphi 0, %s89
      %s113 = sphi 0, %s115
      %s116 = sphi 0, %s113
      %s117 = sphi 0, %s116
      %s133 = sphi 0, %s117
      %s139 = sphi 0, %s141
      %s142 = sphi 0, %s139
      %s143 = sphi 0, %s142
      %s159 = sphi 0, %s143
      %s165 = sphi 0, %s167
      %s168 = sphi 0, %s165
      %s169 = sphi 0, %s168
      %s185 = sphi 0, %s169
      %s193 = sphi 0, %s195
      %s196 = sphi 0, %s193
      %s197 = sphi 0, %s196
      %s213 = sphi 0, %s197
    $region4: #{discriminator_forward.18} parent=1 // loop_header_branch
      %27 = sbr.rel (%p25) target = $region8
    $region5: #{discriminator_forward.18} parent=1 // loop_body
      %s29 = ssub.s32 %s24, 1
      %s30 = ssub.s32 %s24, 2
      %s40 = sadd.s32 1, %s33
      %p41 = scmp.ge.s32.totalorder %s40, 1
      %s42 = scalar_select %p41, 0, %s40
      %s43 = sadd.s32 1, %s32
      %s44 = scalar_select %p41, %s43, %s32
      %p45 = scmp.ge.s32.totalorder %s44, 2
      %s46 = scalar_select %p45, 0, %s44
      %s47 = sadd.s32 1, %s31
      %s48 = scalar_select %p45, %s47, %s31
      %p49 = scmp.ge.s32.totalorder %s48, 1
      %s50 = scalar_select %p49, 0, %s48
      %s51 = ssub.s32 %s31, %s50
      %s52 = ssub.s32 %s33, %s42
      %s53 = sor.u32 %s51, %s52
      %p54 = scmp.eq.s32.totalorder %s53, 0
      %s56 = sadd.s32 %s55, 1
      %s57 = scalar_select %p54, %s55, %s56
      %p60 = pneg %p54
      %p61 = scmp.eq.s32.totalorder %s24, 1
      %p62 = por %p60, %p61
      %p63 = scmp.ne.s32.totalorder %s55, %s58
      %p64 = scmp.eq.s32.totalorder %s24, 0
      %p65 = por %p63, %p64
      %p66 = scmp.ne.s32.totalorder %s55, %s58
      %p67 = scmp.eq.s32.totalorder %s29, 1
      %p68 = por %p66, %p67
      %p69 = scmp.ne.s32.totalorder %s58, %s59
      %p70 = scmp.eq.s32.totalorder %s29, 0
      %p71 = por %p69, %p70
      %p72 = scmp.ne.s32.totalorder %s58, %s59
      %p73 = scmp.eq.s32.totalorder %s30, 1
      %p74 = por %p72, %p73
      %p76 = scmp.ne.s32.totalorder %s59, %s75
      %p77 = scmp.eq.s32.totalorder %s30, 0
      %p78 = por %p76, %p77
      %s79 = smul.addr %s33, 128
      %s80 = sshrl.u32 %s79, 9
      %s81 = smul.addr %s42, 128
      %s82 = sshrl.u32 %s81, 9
      %s83 = ssub.s32 %s80, %s82
      %p84 = scmp.eq.s32.totalorder %s83, 0
      %s86 = sadd.s32 %s85, 1
      %s87 = scalar_select %p84, %s85, %s86
      %p90 = pneg %p84
      %p91 = scmp.eq.s32.totalorder %s24, 1
      %p92 = por %p90, %p91
      %p93 = scmp.ne.s32.totalorder %s85, %s88
      %p94 = scmp.eq.s32.totalorder %s24, 0
      %p95 = por %p93, %p94
      %p96 = scmp.ne.s32.totalorder %s85, %s88
      %p97 = scmp.eq.s32.totalorder %s29, 1
      %p98 = por %p96, %p97
      %p99 = scmp.ne.s32.totalorder %s88, %s89
      %p100 = scmp.eq.s32.totalorder %s29, 0
      %p101 = por %p99, %p100
      %p102 = scmp.ne.s32.totalorder %s88, %s89
      %p103 = scmp.eq.s32.totalorder %s30, 1
      %p104 = por %p102, %p103
      %p106 = scmp.ne.s32.totalorder %s89, %s105
      %p107 = scmp.eq.s32.totalorder %s30, 0
      %p108 = por %p106, %p107
      %s109 = ssub.s32 %s33, %s42
      %s110 = ssub.s32 %s32, %s46
      %s111 = sor.u32 %s109, %s110
      %p112 = scmp.eq.s32.totalorder %s111, 0
      %s114 = sadd.s32 %s113, 1
      %s115 = scalar_select %p112, %s113, %s114
      %p118 = pneg %p112
      %p119 = scmp.eq.s32.totalorder %s24, 1
      %p120 = por %p118, %p119
      %p121 = scmp.ne.s32.totalorder %s113, %s116
      %p122 = scmp.eq.s32.totalorder %s24, 0
      %p123 = por %p121, %p122
      %p124 = scmp.ne.s32.totalorder %s113, %s116
      %p125 = scmp.eq.s32.totalorder %s29, 1
      %p126 = por %p124, %p125
      %p127 = scmp.ne.s32.totalorder %s116, %s117
      %p128 = scmp.eq.s32.totalorder %s29, 0
      %p129 = por %p127, %p128
      %p130 = scmp.ne.s32.totalorder %s116, %s117
      %p131 = scmp.eq.s32.totalorder %s30, 1
      %p132 = por %p130, %p131
      %p134 = scmp.ne.s32.totalorder %s117, %s133
      %p135 = scmp.eq.s32.totalorder %s30, 0
      %p136 = por %p134, %p135
      %s137 = ssub.s32 %s32, %s46
      %p138 = scmp.eq.s32.totalorder %s137, 0
      %s140 = sadd.s32 %s139, 1
      %s141 = scalar_select %p138, %s139, %s140
      %p144 = pneg %p138
      %p145 = scmp.eq.s32.totalorder %s24, 1
      %p146 = por %p144, %p145
      %p147 = scmp.ne.s32.totalorder %s139, %s142
      %p148 = scmp.eq.s32.totalorder %s24, 0
      %p149 = por %p147, %p148
      %p150 = scmp.ne.s32.totalorder %s139, %s142
      %p151 = scmp.eq.s32.totalorder %s29, 1
      %p152 = por %p150, %p151
      %p153 = scmp.ne.s32.totalorder %s142, %s143
      %p154 = scmp.eq.s32.totalorder %s29, 0
      %p155 = por %p153, %p154
      %p156 = scmp.ne.s32.totalorder %s142, %s143
      %p157 = scmp.eq.s32.totalorder %s30, 1
      %p158 = por %p156, %p157
      %p160 = scmp.ne.s32.totalorder %s143, %s159
      %p161 = scmp.eq.s32.totalorder %s30, 0
      %p162 = por %p160, %p161
      %s163 = ssub.s32 %s32, %s46
      %p164 = scmp.eq.s32.totalorder %s163, 0
      %s166 = sadd.s32 %s165, 1
      %s167 = scalar_select %p164, %s165, %s166
      %p170 = pneg %p164
      %p171 = scmp.eq.s32.totalorder %s24, 1
      %p172 = por %p170, %p171
      %p173 = scmp.ne.s32.totalorder %s165, %s168
      %p174 = scmp.eq.s32.totalorder %s24, 0
      %p175 = por %p173, %p174
      %p176 = scmp.ne.s32.totalorder %s165, %s168
      %p177 = scmp.eq.s32.totalorder %s29, 1
      %p178 = por %p176, %p177
      %p179 = scmp.ne.s32.totalorder %s168, %s169
      %p180 = scmp.eq.s32.totalorder %s29, 0
      %p181 = por %p179, %p180
      %p182 = scmp.ne.s32.totalorder %s168, %s169
      %p183 = scmp.eq.s32.totalorder %s30, 1
      %p184 = por %p182, %p183
      %p186 = scmp.ne.s32.totalorder %s169, %s185
      %p187 = scmp.eq.s32.totalorder %s30, 0
      %p188 = por %p186, %p187
      %s189 = ssub.s32 %s31, %s50
      %s190 = ssub.s32 %s32, %s46
      %s191 = sor.u32 %s189, %s190
      %p192 = scmp.eq.s32.totalorder %s191, 0
      %s194 = sadd.s32 %s193, 1
      %s195 = scalar_select %p192, %s193, %s194
      %p198 = pneg %p192
      %p199 = scmp.eq.s32.totalorder %s24, 1
      %p200 = por %p198, %p199
      %p201 = scmp.ne.s32.totalorder %s193, %s196
      %p202 = scmp.eq.s32.totalorder %s24, 0
      %p203 = por %p201, %p202
      %p204 = scmp.ne.s32.totalorder %s193, %s196
      %p205 = scmp.eq.s32.totalorder %s29, 1
      %p206 = por %p204, %p205
      %p207 = scmp.ne.s32.totalorder %s196, %s197
      %p208 = scmp.eq.s32.totalorder %s29, 0
      %p209 = por %p207, %p208
      %p210 = scmp.ne.s32.totalorder %s196, %s197
      %p211 = scmp.eq.s32.totalorder %s30, 1
      %p212 = por %p210, %p211
      %p214 = scmp.ne.s32.totalorder %s197, %s213
      %p215 = scmp.eq.s32.totalorder %s30, 0
      %p216 = por %p214, %p215
      %p217 = scmp.le.s32.totalorder 1, %s24
      %p218 = scmp.lt.s32.totalorder %s24, 3
      %p219 = pnand %p217, %p218
      %p220 = pneg %p219
      // Predicated region
      $region9: #{discriminator_forward.18} parent=5 // pred_check
        _
      $region10: #{discriminator_forward.18} parent=5 // pred_check_branch
        %222 = sbr.rel (%p219) target = $region12
      $region11: #{discriminator_forward.18} parent=5 // pred_region
        %s223 = ssub.s32 %s24, 1
        // Predicated region
        $region13: #{discriminator_forward.18} parent=11 // pred_check
          %p224 = pneg %p71
        $region14: #{discriminator_forward.18} parent=11 // pred_check_branch
          %226 = sbr.rel (%p224) target = $region16
        $region15: #{discriminator_forward.18} parent=11 // pred_region
          %s227 = smul.u32 4, %s34
          %p228 = scmp.lt.s32.totalorder %s227, 3
          %s229 = scalar_select %p228, %s227, 3
          %p230 = scmp.lt.s32.totalorder %s36, 0
          %s231 = scalar_select %p230, %s36, 0
          %s232 = sadd.s32 %s231, %s229
          %s233 = smul.addr %s232, 4
          %s234 = scalar_lea.vmem %s3, %s233
          %s235 = smul.u32 4, %s34
        $region16: #{discriminator_forward.18} parent=11 // pred_fallthru
          _
        // Predicated region
        $region17: #{discriminator_forward.18} parent=11 // pred_check
          %p236 = pneg %p101
        $region18: #{discriminator_forward.18} parent=11 // pred_check_branch
          %238 = sbr.rel (%p236) target = $region20
        $region19: #{discriminator_forward.18} parent=11 // pred_region
          %s239 = smul.addr %s36, 128
          %s240 = sshrl.u32 %s239, 9
          %s241 = ssub.s32 1, %s240
          %s242 = smul.u32 16, %s241
          %p243 = scmp.lt.s32.totalorder %s240, 0
          %s244 = scalar_select %p243, %s240, 0
          %s245 = scalar_lea.vmem %s4, %s244
          %s246 = smul.addr %s36, 128
          %s247 = sshrl.u32 %s246, 9
          %s248 = ssub.s32 1, %s247
          %s249 = smul.u32 16, %s248
        $region20: #{discriminator_forward.18} parent=11 // pred_fallthru
          _
      $region12: #{discriminator_forward.18} parent=5 // pred_fallthru
        _
      %p250 = scmp.lt.s32.totalorder %s24, 2
      // Predicated region
      $region21: #{discriminator_forward.18} parent=5 // pred_check
        %p251 = pneg %p250
      $region22: #{discriminator_forward.18} parent=5 // pred_check_branch
        %253 = sbr.rel (%p251) target = $region24
      $region23: #{discriminator_forward.18} parent=5 // pred_region
        // Predicated region
        $region25: #{discriminator_forward.18} parent=23 // pred_check
          %p254 = pneg %p123
        $region26: #{discriminator_forward.18} parent=23 // pred_check_branch
          %256 = sbr.rel (%p254) target = $region28
        $region27: #{discriminator_forward.18} parent=23 // pred_region
          %s257 = smul.u32 16, %s33
          %s258 = smul.u32 2, %s32
          %s259 = ssub.s32 4, %s257
          %p260 = scmp.gt.s32.totalorder %s259, 0
          %s261 = scalar_select %p260, %s259, 0
          %s262 = smul.u32 64, %s261
          %s263 = ssub.s32 3, %s258
          %p264 = scmp.lt.s32.totalorder %s263, 2
          %s265 = scalar_select %p264, %s263, 2
          %s266 = smul.u32 %s262, %s265
          %p267 = scmp.lt.s32.totalorder %s257, 3
          %s268 = scalar_select %p267, %s257, 3
          %p269 = scmp.lt.s32.totalorder %s258, 2
          %s270 = scalar_select %p269, %s258, 2
          %s271 = smul.addr %s268, 3
          %s272 = sadd.s32 %s270, %s271
          %s273 = smul.addr %s272, 4
          %s274 = scalar_lea.vmem %s1, %s273
          %s275 = smul.u32 16, %s33
          %s276 = smul.u32 2, %s32
          %s277 = ssub.s32 4, %s275
          %p278 = scmp.gt.s32.totalorder %s277, 0
          %s279 = scalar_select %p278, %s277, 0
          %s280 = smul.u32 64, %s279
          %s281 = ssub.s32 3, %s276
          %p282 = scmp.lt.s32.totalorder %s281, 2
          %s283 = scalar_select %p282, %s281, 2
          %s284 = smul.u32 %s280, %s283
        $region28: #{discriminator_forward.18} parent=23 // pred_fallthru
          _
        // Predicated region
        $region29: #{discriminator_forward.18} parent=23 // pred_check
          %p285 = pneg %p149
        $region30: #{discriminator_forward.18} parent=23 // pred_check_branch
          %287 = sbr.rel (%p285) target = $region32
        $region31: #{discriminator_forward.18} parent=23 // pred_region
          %s288 = smul.u32 2, %s32
          %p289 = scmp.lt.s32.totalorder %s288, 3
          %s290 = scalar_select %p289, %s288, 3
          %s291 = scalar_lea.vmem %s0, %s290
          %s292 = smul.u32 2, %s32
        $region32: #{discriminator_forward.18} parent=23 // pred_fallthru
          _
        // Predicated region
        $region33: #{discriminator_forward.18} parent=23 // pred_check
          %p293 = pneg %p175
        $region34: #{discriminator_forward.18} parent=23 // pred_check_branch
          %295 = sbr.rel (%p293) target = $region36
        $region35: #{discriminator_forward.18} parent=23 // pred_region
          %s296 = smul.u32 2, %s32
          %s297 = ssub.s32 3, %s296
          %p298 = scmp.lt.s32.totalorder %s297, 2
          %s299 = scalar_select %p298, %s297, 2
          %s300 = smul.u32 16, %s299
          %p301 = scmp.lt.s32.totalorder %s296, 2
          %s302 = scalar_select %p301, %s296, 2
          %s303 = scalar_lea.vmem %s5, %s302
          %s304 = smul.u32 2, %s32
          %s305 = ssub.s32 3, %s304
          %p306 = scmp.lt.s32.totalorder %s305, 2
          %s307 = scalar_select %p306, %s305, 2
          %s308 = smul.u32 16, %s307
        $region36: #{discriminator_forward.18} parent=23 // pred_fallthru
          _
      $region24: #{discriminator_forward.18} parent=5 // pred_fallthru
        _
      %p309 = scmp.le.s32.totalorder 1, %s24
      %p310 = scmp.lt.s32.totalorder %s24, 3
      %p311 = pnand %p309, %p310
      %p312 = pneg %p311
      // Predicated region
      $region37: #{discriminator_forward.18} parent=5 // pred_check
        _
      $region38: #{discriminator_forward.18} parent=5 // pred_check_branch
        %314 = sbr.rel (%p311) target = $region40
      $region39: #{discriminator_forward.18} parent=5 // pred_region
        #allocation14 [shape = 'u8[8192]{0}', space=vmem, size = 0x2000, dematerialized = true, scoped, tag = 'FusionAdapter Buffer %fusion.39 = bf16[32,128]{1,0:T(8,128)(2,1)} fusion(%param_3.77, %param_4.50, %param_2.113), kind=kLoop, calls=%fused_computation.46.clone, metadata={op_name="jit(discriminator_forward)/jit(_pad)/pad" stack_frame_id=82}']
        #allocation15 [shape = 'u8[65536]{0}', space=vmem, size = 0x10000, dematerialized = true, scoped, tag = 'FusionAdapter Buffer %fusion.11 = bf16[128,512]{1,0:T(8,128)(2,1)} fusion(%param_1.141, %param_2.113), kind=kLoop, calls=%fused_computation.13.clone, metadata={op_name="jit(discriminator_forward)/jit(_pad)/pad" stack_frame_id=86}']
        #allocation16 [shape = 'u8[1024]{0}', space=vmem, size = 0x400, dematerialized = true, scoped, tag = 'FusionAdapter Buffer %fusion.48 = f32[1,512]{1,0:T(1,128)} fusion(%param_5.46, %param_6.36), kind=kLoop, calls=%fused_computation.65.clone, metadata={op_name="jit(discriminator_forward)/jit(_pad)/pad" stack_frame_id=91}']
        %s315 = ssub.s32 %s24, 1
        %s316 = smul.u32 4, %s34
        %p317 = scmp.lt.s32.totalorder %s316, 3
        %s318 = scalar_select %p317, %s316, 3
        %p319 = scmp.lt.s32.totalorder %s36, 0
        %s320 = scalar_select %p319, %s36, 0
        %s321 = sadd.s32 %s320, %s318
        %s322 = smul.addr %s321, 4
        %s323 = scalar_lea.vmem %s3, %s322
        %p324 = pneg %p71
        %p325 = pneg %p68
        %s326 = smul.addr %s36, 128
        %s327 = sshrl.u32 %s326, 9
        %s328 = ssub.s32 1, %s327
        %s329 = smul.u32 16, %s328
        %p330 = scmp.lt.s32.totalorder %s327, 0
        %s331 = scalar_select %p330, %s327, 0
        %s332 = scalar_lea.vmem %s4, %s331
        %p333 = pneg %p101
        %p334 = pneg %p98
        %s335 = smul.u32 16, %s36
        %s336 = smul.u32 2, %s35
        %s337 = ssub.s32 4, %s335
        %p338 = scmp.gt.s32.totalorder %s337, 0
        %s339 = scalar_select %p338, %s337, 0
        %s340 = smul.u32 64, %s339
        %s341 = ssub.s32 3, %s336
        %p342 = scmp.lt.s32.totalorder %s341, 2
        %s343 = scalar_select %p342, %s341, 2
        %s344 = smul.u32 %s340, %s343
        %p345 = scmp.lt.s32.totalorder %s335, 3
        %s346 = scalar_select %p345, %s335, 3
        %p347 = scmp.lt.s32.totalorder %s336, 2
        %s348 = scalar_select %p347, %s336, 2
        %s349 = smul.addr %s346, 3
        %s350 = sadd.s32 %s348, %s349
        %s351 = smul.addr %s350, 4
        %s352 = scalar_lea.vmem %s1, %s351
        %p353 = pneg %p129
        %p354 = pneg %p126
        %s355 = smul.u32 2, %s35
        %p356 = scmp.lt.s32.totalorder %s355, 3
        %s357 = scalar_select %p356, %s355, 3
        %s358 = scalar_lea.vmem %s0, %s357
        %p359 = pneg %p155
        %p360 = pneg %p152
        %s361 = smul.u32 2, %s35
        %s362 = ssub.s32 3, %s361
        %p363 = scmp.lt.s32.totalorder %s362, 2
        %s364 = scalar_select %p363, %s362, 2
        %s365 = smul.u32 16, %s364
        %p366 = scmp.lt.s32.totalorder %s361, 2
        %s367 = scalar_select %p366, %s361, 2
        %s368 = scalar_lea.vmem %s5, %s367
        %p369 = pneg %p181
        %p370 = pneg %p178
        %p371 = pneg %p209
        %p372 = pneg %p206
        %s373 = sand.u32 %s196, 1
        %s374 = sand.u32 %s196, 1
        %s375 = smul.addr %s374, 32
        %s376 = scalar_lea.vmem [#allocation13], %s375
        %s377 = smul.u32 4, %s34
        %p378 = scmp.lt.s32.totalorder %s377, 3
        %s379 = scalar_select %p378, %s377, 3
        %p380 = scmp.lt.s32.totalorder %s36, 0
        %s381 = scalar_select %p380, %s36, 0
        %s382 = sadd.s32 %s381, %s379
        %s383 = smul.addr %s382, 4
        %s384 = scalar_lea.vmem %s3, %s383
        %s385 = smul.u32 4, %s34
        %s386 = smul.addr %s36, 128
        %s387 = sshrl.u32 %s386, 9
        %s388 = ssub.s32 1, %s387
        %s389 = smul.u32 16, %s388
        %p390 = scmp.lt.s32.totalorder %s387, 0
        %s391 = scalar_select %p390, %s387, 0
        %s392 = scalar_lea.vmem %s4, %s391
        %s393 = smul.addr %s36, 128
        %s394 = sshrl.u32 %s393, 9
        %s395 = ssub.s32 1, %s394
        %s396 = smul.u32 16, %s395
        %s397 = smul.u32 4, %s34
        %s398 = smul.u32 16, %s36
        %s399 = smul.u32 2, %s35
        %s400 = ssub.s32 4, %s398
        %p401 = scmp.gt.s32.totalorder %s400, 0
        %s402 = scalar_select %p401, %s400, 0
        %s403 = smul.u32 64, %s402
        %s404 = ssub.s32 3, %s399
        %p405 = scmp.lt.s32.totalorder %s404, 2
        %s406 = scalar_select %p405, %s404, 2
        %s407 = smul.u32 %s403, %s406
        %p408 = scmp.lt.s32.totalorder %s398, 3
        %s409 = scalar_select %p408, %s398, 3
        %p410 = scmp.lt.s32.totalorder %s399, 2
        %s411 = scalar_select %p410, %s399, 2
        %s412 = smul.addr %s409, 3
        %s413 = sadd.s32 %s411, %s412
        %s414 = smul.addr %s413, 4
        %s415 = scalar_lea.vmem %s1, %s414
        %s416 = smul.u32 16, %s36
        %s417 = smul.u32 2, %s35
        %s418 = ssub.s32 4, %s416
        %p419 = scmp.gt.s32.totalorder %s418, 0
        %s420 = scalar_select %p419, %s418, 0
        %s421 = smul.u32 64, %s420
        %s422 = ssub.s32 3, %s417
        %p423 = scmp.lt.s32.totalorder %s422, 2
        %s424 = scalar_select %p423, %s422, 2
        %s425 = smul.u32 %s421, %s424
        %s426 = smul.u32 2, %s35
        %p427 = scmp.lt.s32.totalorder %s426, 3
        %s428 = scalar_select %p427, %s426, 3
        %s429 = scalar_lea.vmem %s0, %s428
        %s430 = smul.u32 2, %s35
        %s431 = smul.u32 2, %s35
        %s432 = ssub.s32 3, %s431
        %p433 = scmp.lt.s32.totalorder %s432, 2
        %s434 = scalar_select %p433, %s432, 2
        %s435 = smul.u32 16, %s434
        %p436 = scmp.lt.s32.totalorder %s431, 2
        %s437 = scalar_select %p436, %s431, 2
        %s438 = scalar_lea.vmem %s5, %s437
        %s439 = smul.u32 2, %s35
        %s440 = ssub.s32 3, %s439
        %p441 = scmp.lt.s32.totalorder %s440, 2
        %s442 = scalar_select %p441, %s440, 2
        %s443 = smul.u32 16, %s442
        %s444 = smul.u32 4, %s34
        %s445 = smul.u32 2, %s35
        %s446 = smul.addr %s34, 4
        %s447 = smul.addr %s446, 8
        %s448 = smul.addr %s36, 128
        %v449 = vld [vmem:[%s384] sm:$0xf]
        %v450 = vunpack.c.l.bf16 %v449
        %v451 = vunpack.c.h.bf16 %v449
        %s452 = sshrl.u32 %s448, 9
        %p453 = scmp.lt.s32.totalorder 0, %s452
        %s454 = scalar_select %p453, 0, %s452
        %s455 = sand.u32 %s448, 511
        %s456 = sshrl.u32 %s455, 7
        %s457 = sand.u32 %s455, 127
        %s458 = scalar_lea.vmem %s4, %s454
        %s459 = sshrl.u32 %s456, 2
        %s460 = sand.u32 %s456, 3
        %s461 = scalar_lea.vmem %s458, %s459
        %v462 = vld [vmem:[%s461] ss:$0 sm:$0xff]
        %v463 = vstv %s460
        %v464 = vshll.u32 %v463, 3
        %v465 = vshra.s32 %v462, %v464
        %v466 = vand.u32 %v465, 255
        %s467 = scalar_lea.vmem %s384, 4
        %v468 = vld [vmem:[%s467] sm:$0xf]
        %v469 = vunpack.c.l.bf16 %v468
        %v470 = vunpack.c.h.bf16 %v468
        %v471 = vpack.c.bf16 %v469, %v450
        %473 = xla_tuple %v466, %v466
        %v474 = vpack.c.bf16 %v13, %v13
        %v476 = vcvt.s32.f32 %v466
        %v477 = vcvt.s32.f32 %v466
        %v478 = vpack.c.bf16 %v477, %v476
        %480 = xla_tuple %v478, %v471, %v474
        %481 = xla_tuple %480
        %vm482 = vcmp.ne.s16.totalorder %v478, 0
        %v483 = vsel %vm482, %v471, %v474
        %484 = xla_tuple %v483
        %v485 = vunpack.c.l.bf16 %v483
        %v486 = vunpack.c.h.bf16 %v483
        %v487 = vpack.c.bf16 0.0, %v485
        %489 = vst [vmem:[#allocation14] sm:$0xf] %v487
        %s490 = scalar_lea.vmem [#allocation14], 4
        %v491 = vpack.c.bf16 0.0, %v486
        %493 = vst [vmem:[%s490] sm:$0xf] %v491
        %s494 = scalar_lea.vmem %s384, 8
        %v495 = vld [vmem:[%s494] sm:$0xf]
        %v496 = vunpack.c.l.bf16 %v495
        %v497 = vunpack.c.h.bf16 %v495
        %s498 = scalar_lea.vmem %s384, 12
        %v499 = vld [vmem:[%s498] sm:$0xf]
        %v500 = vunpack.c.l.bf16 %v499
        %v501 = vunpack.c.h.bf16 %v499
        %v502 = vpack.c.bf16 %v500, %v496
        %504 = xla_tuple %v466, %v466
        %v505 = vpack.c.bf16 %v13, %v13
        %v507 = vcvt.s32.f32 %v466
        %v508 = vcvt.s32.f32 %v466
        %v509 = vpack.c.bf16 %v508, %v507
        %511 = xla_tuple %v509, %v502, %v505
        %512 = xla_tuple %511
        %vm513 = vcmp.ne.s16.totalorder %v509, 0
        %v514 = vsel %vm513, %v502, %v505
        %515 = xla_tuple %v514
        %v516 = vunpack.c.l.bf16 %v514
        %v517 = vunpack.c.h.bf16 %v514
        %s518 = scalar_lea.vmem [#allocation14], 8
        %v519 = vpack.c.bf16 0.0, %v516
        %521 = vst [vmem:[%s518] sm:$0xf] %v519
        %s522 = scalar_lea.vmem [#allocation14], 12
        %v523 = vpack.c.bf16 0.0, %v517
        %525 = vst [vmem:[%s522] sm:$0xf] %v523
        %s526 = ssub.s32 3, %s416
        %p527 = scmp.lt.s32.totalorder %s526, 0
        %s528 = scalar_select %p527, 0, 255
        %s529 = sshrl.u32 %s528, 1
        %s530 = sor.u32 %s528, %s529
        %s531 = sand.u32 %s530, 85
        %s532 = sshrl.u32 %s531, 1
        %s533 = sor.u32 %s531, %s532
        %s534 = sand.u32 51, %s533
        %s535 = sshrl.u32 %s534, 2
        %s536 = sor.u32 %s534, %s535
        %s537 = sand.u32 15, %s536
        %v538 = vld [vmem:[%s415] sm:%s537]
        %v539 = vunpack.c.l.bf16 %v538
        %v540 = vunpack.c.h.bf16 %v538
        %s541 = ssub.s32 3, %s416
        %v542 = vstv %s541
        %vm543 = vcmp.lt.s32.totalorder %v542, 0
        %v544 = vsel %vm543, %v18, %v539
        %v545 = vpack.c.bf16 0.0, %v544
        %547 = vst [vmem:[#allocation15] sm:$0xf] %v545
        %s548 = scalar_lea.vmem %s415, 4
        %s549 = sadd.s32 %s417, 1
        %s550 = ssub.s32 3, %s416
        %s551 = ssub.s32 2, %s549
        %s552 = sor.u32 %s550, %s551
        %p553 = scmp.lt.s32.totalorder %s552, 0
        %s554 = scalar_select %p553, 0, 255
        %s555 = sshrl.u32 %s554, 1
        %s556 = sor.u32 %s554, %s555
        %s557 = sand.u32 %s556, 85
        %s558 = sshrl.u32 %s557, 1
        %s559 = sor.u32 %s557, %s558
        %s560 = sand.u32 51, %s559
        %s561 = sshrl.u32 %s560, 2
        %s562 = sor.u32 %s560, %s561
        %s563 = sand.u32 15, %s562
        %v564 = vld [vmem:[%s548] sm:%s563]
        %v565 = vunpack.c.l.bf16 %v564
        %v566 = vunpack.c.h.bf16 %v564
        %s567 = sadd.s32 %s417, 1
        %s568 = ssub.s32 3, %s416
        %s569 = ssub.s32 2, %s567
        %s570 = sor.u32 %s568, %s569
        %v571 = vstv %s570
        %vm572 = vcmp.lt.s32.totalorder %v571, 0
        %v573 = vsel %vm572, %v18, %v565
        %s574 = scalar_lea.vmem [#allocation15], 4
        %v575 = vpack.c.bf16 0.0, %v573
        %577 = vst [vmem:[%s574] sm:$0xf] %v575
        %s578 = scalar_lea.vmem %s415, 12
        %s579 = sadd.s32 %s416, 1
        %s580 = ssub.s32 3, %s579
        %p581 = scmp.lt.s32.totalorder %s580, 0
        %s582 = scalar_select %p581, 0, 255
        %s583 = sshrl.u32 %s582, 1
        %s584 = sor.u32 %s582, %s583
        %s585 = sand.u32 %s584, 85
        %s586 = sshrl.u32 %s585, 1
        %s587 = sor.u32 %s585, %s586
        %s588 = sand.u32 51, %s587
        %s589 = sshrl.u32 %s588, 2
        %s590 = sor.u32 %s588, %s589
        %s591 = sand.u32 15, %s590
        %v592 = vld [vmem:[%s578] sm:%s591]
        %v593 = vunpack.c.l.bf16 %v592
        %v594 = vunpack.c.h.bf16 %v592
        %s595 = sadd.s32 %s416, 1
        %s596 = ssub.s32 3, %s595
        %v597 = vstv %s596
        %vm598 = vcmp.lt.s32.totalorder %v597, 0
        %v599 = vsel %vm598, %v18, %v593
        %s600 = scalar_lea.vmem [#allocation15], 8
        %v601 = vpack.c.bf16 0.0, %v599
        %603 = vst [vmem:[%s600] sm:$0xf] %v601
        %s604 = scalar_lea.vmem %s415, 16
        %s605 = sadd.s32 %s416, 1
        %s606 = sadd.s32 %s417, 1
        %s607 = ssub.s32 3, %s605
        %s608 = ssub.s32 2, %s606
        %s609 = sor.u32 %s607, %s608
        %p610 = scmp.lt.s32.totalorder %s609, 0
        %s611 = scalar_select %p610, 0, 255
        %s612 = sshrl.u32 %s611, 1
        %s613 = sor.u32 %s611, %s612
        %s614 = sand.u32 %s613, 85
        %s615 = sshrl.u32 %s614, 1
        %s616 = sor.u32 %s614, %s615
        %s617 = sand.u32 51, %s616
        %s618 = sshrl.u32 %s617, 2
        %s619 = sor.u32 %s617, %s618
        %s620 = sand.u32 15, %s619
        %v621 = vld [vmem:[%s604] sm:%s620]
        %v622 = vunpack.c.l.bf16 %v621
        %v623 = vunpack.c.h.bf16 %v621
        %s624 = sadd.s32 %s416, 1
        %s625 = sadd.s32 %s417, 1
        %s626 = ssub.s32 3, %s624
        %s627 = ssub.s32 2, %s625
        %s628 = sor.u32 %s626, %s627
        %v629 = vstv %s628
        %vm630 = vcmp.lt.s32.totalorder %v629, 0
        %v631 = vsel %vm630, %v18, %v622
        %s632 = scalar_lea.vmem [#allocation15], 12
        %v633 = vpack.c.bf16 0.0, %v631
        %635 = vst [vmem:[%s632] sm:$0xf] %v633
        %s636 = scalar_lea.vmem %s415, 24
        %s637 = sadd.s32 %s416, 2
        %s638 = ssub.s32 3, %s637
        %p639 = scmp.lt.s32.totalorder %s638, 0
        %s640 = scalar_select %p639, 0, 255
        %s641 = sshrl.u32 %s640, 1
        %s642 = sor.u32 %s640, %s641
        %s643 = sand.u32 %s642, 85
        %s644 = sshrl.u32 %s643, 1
        %s645 = sor.u32 %s643, %s644
        %s646 = sand.u32 51, %s645
        %s647 = sshrl.u32 %s646, 2
        %s648 = sor.u32 %s646, %s647
        %s649 = sand.u32 15, %s648
        %v650 = vld [vmem:[%s636] sm:%s649]
        %v651 = vunpack.c.l.bf16 %v650
        %v652 = vunpack.c.h.bf16 %v650
        %s653 = sadd.s32 %s416, 2
        %s654 = ssub.s32 3, %s653
        %v655 = vstv %s654
        %vm656 = vcmp.lt.s32.totalorder %v655, 0
        %v657 = vsel %vm656, %v18, %v651
        %s658 = scalar_lea.vmem [#allocation15], 16
        %v659 = vpack.c.bf16 0.0, %v657
        %661 = vst [vmem:[%s658] sm:$0xf] %v659
        %s662 = scalar_lea.vmem %s415, 28
        %s663 = sadd.s32 %s416, 2
        %s664 = sadd.s32 %s417, 1
        %s665 = ssub.s32 3, %s663
        %s666 = ssub.s32 2, %s664
        %s667 = sor.u32 %s665, %s666
        %p668 = scmp.lt.s32.totalorder %s667, 0
        %s669 = scalar_select %p668, 0, 255
        %s670 = sshrl.u32 %s669, 1
        %s671 = sor.u32 %s669, %s670
        %s672 = sand.u32 %s671, 85
        %s673 = sshrl.u32 %s672, 1
        %s674 = sor.u32 %s672, %s673
        %s675 = sand.u32 51, %s674
        %s676 = sshrl.u32 %s675, 2
        %s677 = sor.u32 %s675, %s676
        %s678 = sand.u32 15, %s677
        %v679 = vld [vmem:[%s662] sm:%s678]
        %v680 = vunpack.c.l.bf16 %v679
        %v681 = vunpack.c.h.bf16 %v679
        %s682 = sadd.s32 %s416, 2
        %s683 = sadd.s32 %s417, 1
        %s684 = ssub.s32 3, %s682
        %s685 = ssub.s32 2, %s683
        %s686 = sor.u32 %s684, %s685
        %v687 = vstv %s686
        %vm688 = vcmp.lt.s32.totalorder %v687, 0
        %v689 = vsel %vm688, %v18, %v680
        %s690 = scalar_lea.vmem [#allocation15], 20
        %v691 = vpack.c.bf16 0.0, %v689
        %693 = vst [vmem:[%s690] sm:$0xf] %v691
        %s694 = scalar_lea.vmem %s415, 36
        %s695 = sadd.s32 %s416, 3
        %s696 = ssub.s32 3, %s695
        %p697 = scmp.lt.s32.totalorder %s696, 0
        %s698 = scalar_select %p697, 0, 255
        %s699 = sshrl.u32 %s698, 1
        %s700 = sor.u32 %s698, %s699
        %s701 = sand.u32 %s700, 85
        %s702 = sshrl.u32 %s701, 1
        %s703 = sor.u32 %s701, %s702
        %s704 = sand.u32 51, %s703
        %s705 = sshrl.u32 %s704, 2
        %s706 = sor.u32 %s704, %s705
        %s707 = sand.u32 15, %s706
        %v708 = vld [vmem:[%s694] sm:%s707]
        %v709 = vunpack.c.l.bf16 %v708
        %v710 = vunpack.c.h.bf16 %v708
        %s711 = sadd.s32 %s416, 3
        %s712 = ssub.s32 3, %s711
        %v713 = vstv %s712
        %vm714 = vcmp.lt.s32.totalorder %v713, 0
        %v715 = vsel %vm714, %v18, %v709
        %s716 = scalar_lea.vmem [#allocation15], 24
        %v717 = vpack.c.bf16 0.0, %v715
        %719 = vst [vmem:[%s716] sm:$0xf] %v717
        %s720 = scalar_lea.vmem %s415, 40
        %s721 = sadd.s32 %s416, 3
        %s722 = sadd.s32 %s417, 1
        %s723 = ssub.s32 3, %s721
        %s724 = ssub.s32 2, %s722
        %s725 = sor.u32 %s723, %s724
        %p726 = scmp.lt.s32.totalorder %s725, 0
        %s727 = scalar_select %p726, 0, 255
        %s728 = sshrl.u32 %s727, 1
        %s729 = sor.u32 %s727, %s728
        %s730 = sand.u32 %s729, 85
        %s731 = sshrl.u32 %s730, 1
        %s732 = sor.u32 %s730, %s731
        %s733 = sand.u32 51, %s732
        %s734 = sshrl.u32 %s733, 2
        %s735 = sor.u32 %s733, %s734
        %s736 = sand.u32 15, %s735
        %v737 = vld [vmem:[%s720] sm:%s736]
        %v738 = vunpack.c.l.bf16 %v737
        %v739 = vunpack.c.h.bf16 %v737
        %s740 = sadd.s32 %s416, 3
        %s741 = sadd.s32 %s417, 1
        %s742 = ssub.s32 3, %s740
        %s743 = ssub.s32 2, %s741
        %s744 = sor.u32 %s742, %s743
        %v745 = vstv %s744
        %vm746 = vcmp.lt.s32.totalorder %v745, 0
        %v747 = vsel %vm746, %v18, %v738
        %s748 = scalar_lea.vmem [#allocation15], 28
        %v749 = vpack.c.bf16 0.0, %v747
        %751 = vst [vmem:[%s748] sm:$0xf] %v749
        %s752 = scalar_lea.vmem [#allocation15], 32
        %v753 = vpack.c.bf16 0.0, %v18
        %755 = vst [vmem:[%s752] sm:$0xf] %v753
        %s756 = scalar_lea.vmem [#allocation15], 36
        %v757 = vpack.c.bf16 0.0, %v18
        %759 = vst [vmem:[%s756] sm:$0xf] %v757
        %s760 = scalar_lea.vmem [#allocation15], 40
        %v761 = vpack.c.bf16 0.0, %v18
        %763 = vst [vmem:[%s760] sm:$0xf] %v761
        %s764 = scalar_lea.vmem [#allocation15], 44
        %v765 = vpack.c.bf16 0.0, %v18
        %767 = vst [vmem:[%s764] sm:$0xf] %v765
        %s768 = scalar_lea.vmem [#allocation15], 48
        %v769 = vpack.c.bf16 0.0, %v18
        %771 = vst [vmem:[%s768] sm:$0xf] %v769
        %s772 = scalar_lea.vmem [#allocation15], 52
        %v773 = vpack.c.bf16 0.0, %v18
        %775 = vst [vmem:[%s772] sm:$0xf] %v773
        %s776 = scalar_lea.vmem [#allocation15], 56
        %v777 = vpack.c.bf16 0.0, %v18
        %779 = vst [vmem:[%s776] sm:$0xf] %v777
        %s780 = scalar_lea.vmem [#allocation15], 60
        %v781 = vpack.c.bf16 0.0, %v18
        %783 = vst [vmem:[%s780] sm:$0xf] %v781
        %s784 = scalar_lea.vmem [#allocation15], 64
        %v785 = vpack.c.bf16 0.0, %v18
        %787 = vst [vmem:[%s784] sm:$0xf] %v785
        %s788 = scalar_lea.vmem [#allocation15], 68
        %v789 = vpack.c.bf16 0.0, %v18
        %791 = vst [vmem:[%s788] sm:$0xf] %v789
        %s792 = scalar_lea.vmem [#allocation15], 72
        %v793 = vpack.c.bf16 0.0, %v18
        %795 = vst [vmem:[%s792] sm:$0xf] %v793
        %s796 = scalar_lea.vmem [#allocation15], 76
        %v797 = vpack.c.bf16 0.0, %v18
        %799 = vst [vmem:[%s796] sm:$0xf] %v797
        %s800 = scalar_lea.vmem [#allocation15], 80
        %v801 = vpack.c.bf16 0.0, %v18
        %803 = vst [vmem:[%s800] sm:$0xf] %v801
        %s804 = scalar_lea.vmem [#allocation15], 84
        %v805 = vpack.c.bf16 0.0, %v18
        %807 = vst [vmem:[%s804] sm:$0xf] %v805
        %s808 = scalar_lea.vmem [#allocation15], 88
        %v809 = vpack.c.bf16 0.0, %v18
        %811 = vst [vmem:[%s808] sm:$0xf] %v809
        %s812 = scalar_lea.vmem [#allocation15], 92
        %v813 = vpack.c.bf16 0.0, %v18
        %815 = vst [vmem:[%s812] sm:$0xf] %v813
        %s816 = scalar_lea.vmem [#allocation15], 96
        %v817 = vpack.c.bf16 0.0, %v18
        %819 = vst [vmem:[%s816] sm:$0xf] %v817
        %s820 = scalar_lea.vmem [#allocation15], 100
        %v821 = vpack.c.bf16 0.0, %v18
        %823 = vst [vmem:[%s820] sm:$0xf] %v821
        %s824 = scalar_lea.vmem [#allocation15], 104
        %v825 = vpack.c.bf16 0.0, %v18
        %827 = vst [vmem:[%s824] sm:$0xf] %v825
        %s828 = scalar_lea.vmem [#allocation15], 108
        %v829 = vpack.c.bf16 0.0, %v18
        %831 = vst [vmem:[%s828] sm:$0xf] %v829
        %s832 = scalar_lea.vmem [#allocation15], 112
        %v833 = vpack.c.bf16 0.0, %v18
        %835 = vst [vmem:[%s832] sm:$0xf] %v833
        %s836 = scalar_lea.vmem [#allocation15], 116
        %v837 = vpack.c.bf16 0.0, %v18
        %839 = vst [vmem:[%s836] sm:$0xf] %v837
        %s840 = scalar_lea.vmem [#allocation15], 120
        %v841 = vpack.c.bf16 0.0, %v18
        %843 = vst [vmem:[%s840] sm:$0xf] %v841
        %s844 = scalar_lea.vmem [#allocation15], 124
        %v845 = vpack.c.bf16 0.0, %v18
        %847 = vst [vmem:[%s844] sm:$0xf] %v845
        %v848 = vld [vmem:[%s438] sm:$0x1]
        %v849 = vlaneseq
        %v850 = vshrl.u32 %v849, 7
        %vm852 = vcmp.lt.s32.totalorder %v850, 1
        %v853 = vsel %vm852, %v848, %v22
        %855 = vst [vmem:[#allocation16] sm:$0x1] %v853
        %s856 = scalar_lea.vmem %s438, 1
        %s857 = sadd.s32 %s439, 1
        %s858 = ssub.s32 2, %s857
        %p859 = scmp.lt.s32.totalorder %s858, 0
        %s860 = scalar_select %p859, 0, 255
        %s861 = sand.u32 1, %s860
        %s862 = sand.u32 1, %s861
        %v863 = vld [vmem:[%s856] sm:%s862]
        %s864 = sadd.s32 %s439, 1
        %s865 = ssub.s32 2, %s864
        %v866 = vstv %s865
        %vm867 = vcmp.lt.s32.totalorder %v866, 0
        %v868 = vsel %vm867, %v22, %v863
        %v869 = vlaneseq
        %v870 = vshrl.u32 %v869, 7
        %vm872 = vcmp.lt.s32.totalorder %v870, 1
        %v873 = vsel %vm872, %v868, %v22
        %s874 = scalar_lea.vmem [#allocation16], 1
        %876 = vst [vmem:[%s874] sm:$0x1] %v873
        %p878 = scmp.eq.s32.totalorder %s36, 0
        // Predicated region
        $region41: #{discriminator_forward.18} parent=39 // pred_check
          %p879 = pneg %p878
        $region42: #{discriminator_forward.18} parent=39 // pred_check_branch
          %881 = sbr.rel (%p879) target = $region44
        $region43: #{discriminator_forward.18} parent=39 // pred_region
          %882 = vst [vmem:[#allocation2] sm:$0xff] 0.0
          %883 = vst [vmem:[#allocation2 + $0x8] sm:$0xff] 0.0
          %884 = vst [vmem:[#allocation2 + $0x10] sm:$0xff] 0.0
          %885 = vst [vmem:[#allocation2 + $0x18] sm:$0xff] 0.0
          %886 = vst [vmem:[#allocation2 + $0x20] sm:$0xff] 0.0
          %887 = vst [vmem:[#allocation2 + $0x28] sm:$0xff] 0.0
          %888 = vst [vmem:[#allocation2 + $0x30] sm:$0xff] 0.0
          %889 = vst [vmem:[#allocation2 + $0x38] sm:$0xff] 0.0
        $region44: #{discriminator_forward.18} parent=39 // pred_fallthru
          _
        %v890 = vld [vmem:[#allocation2] sm:$0xff]
        %v891 = vld [vmem:[#allocation2 + $0x8] sm:$0xff]
        %v892 = vld [vmem:[#allocation2 + $0x10] sm:$0xff]
        %v893 = vld [vmem:[#allocation2 + $0x18] sm:$0xff]
        %v894 = vld [vmem:[#allocation2 + $0x20] sm:$0xff]
        %v895 = vld [vmem:[#allocation2 + $0x28] sm:$0xff]
        %v896 = vld [vmem:[#allocation2 + $0x30] sm:$0xff]
        %v897 = vld [vmem:[#allocation2 + $0x38] sm:$0xff]
        %v898 = vld [vmem:[#allocation14] sm:$0xf]
        %v899 = vld [vmem:[#allocation14 + $0x4] sm:$0xf]
        %v900 = vld [vmem:[#allocation14 + $0x8] sm:$0xf]
        %v901 = vld [vmem:[#allocation14 + $0xc] sm:$0xf]
        %v902 = vld [vmem:[#allocation15] sm:$0xff]
        %v903 = vld [vmem:[#allocation15 + $0x8] sm:$0xff]
        %v904 = vld [vmem:[#allocation15 + $0x10] sm:$0xff]
        %v905 = vld [vmem:[#allocation15 + $0x18] sm:$0xff]
        %v906 = vld [vmem:[#allocation15 + $0x20] sm:$0xff]
        %v907 = vld [vmem:[#allocation15 + $0x28] sm:$0xff]
        %v908 = vld [vmem:[#allocation15 + $0x30] sm:$0xff]
        %v909 = vld [vmem:[#allocation15 + $0x38] sm:$0xff]
        %v910 = vld [vmem:[#allocation15 + $0x40] sm:$0xff]
        %v911 = vld [vmem:[#allocation15 + $0x48] sm:$0xff]
        %v912 = vld [vmem:[#allocation15 + $0x50] sm:$0xff]
        %v913 = vld [vmem:[#allocation15 + $0x58] sm:$0xff]
        %v914 = vld [vmem:[#allocation15 + $0x60] sm:$0xff]
        %v915 = vld [vmem:[#allocation15 + $0x68] sm:$0xff]
        %v916 = vld [vmem:[#allocation15 + $0x70] sm:$0xff]
        %v917 = vld [vmem:[#allocation15 + $0x78] sm:$0xff]
        %v922 = vunpack.c.l.b16 %v898
        %v923 = vunpack.c.l.b16 %v899
        %v924 = vunpack.c.l.b16 %v900
        %v925 = vunpack.c.l.b16 %v901
        %v926 = vpack.c.b16 %v923, %v922
        %v927 = vpack.c.b16 %v925, %v924
        %v946 = vunpack.c.l.b16 %v902
        %v947 = vunpack.c.h.b16 %v902
        %v948 = vunpack.c.l.b16 %v903
        %v949 = vunpack.c.h.b16 %v903
        %v950 = vunpack.c.l.b16 %v904
        %v951 = vunpack.c.h.b16 %v904
        %v952 = vunpack.c.l.b16 %v905
        %v953 = vunpack.c.h.b16 %v905
        %v954 = vunpack.c.l.b16 %v906
        %v955 = vunpack.c.h.b16 %v906
        %v956 = vunpack.c.l.b16 %v907
        %v957 = vunpack.c.h.b16 %v907
        %v958 = vunpack.c.l.b16 %v908
        %v959 = vunpack.c.h.b16 %v908
        %v960 = vunpack.c.l.b16 %v909
        %v961 = vunpack.c.h.b16 %v909
        %v962 = vunpack.c.l.b16 %v910
        %v963 = vunpack.c.h.b16 %v910
        %v964 = vunpack.c.l.b16 %v911
        %v965 = vunpack.c.h.b16 %v911
        %v966 = vunpack.c.l.b16 %v912
        %v967 = vunpack.c.h.b16 %v912
        %v968 = vunpack.c.l.b16 %v913
        %v969 = vunpack.c.h.b16 %v913
        %v970 = vunpack.c.l.b16 %v914
        %v971 = vunpack.c.h.b16 %v914
        %v972 = vunpack.c.l.b16 %v915
        %v973 = vunpack.c.h.b16 %v915
        %v974 = vunpack.c.l.b16 %v916
        %v975 = vunpack.c.h.b16 %v916
        %v976 = vunpack.c.l.b16 %v917
        %v977 = vunpack.c.h.b16 %v917
        %v978 = vpack.c.b16 %v948, %v946
        %v979 = vpack.c.b16 %v949, %v947
        %v980 = vpack.c.b16 %v952, %v950
        %v981 = vpack.c.b16 %v953, %v951
        %v982 = vpack.c.b16 %v956, %v954
        %v983 = vpack.c.b16 %v957, %v955
        %v984 = vpack.c.b16 %v960, %v958
        %v985 = vpack.c.b16 %v961, %v959
        %v986 = vpack.c.b16 %v964, %v962
        %v987 = vpack.c.b16 %v965, %v963
        %v988 = vpack.c.b16 %v968, %v966
        %v989 = vpack.c.b16 %v969, %v967
        %v990 = vpack.c.b16 %v972, %v970
        %v991 = vpack.c.b16 %v973, %v971
        %v992 = vpack.c.b16 %v976, %v974
        %v993 = vpack.c.b16 %v977, %v975
        %1010 = vmatprep.subr.bf16.mxu0 %v979
        %1011 = vmatpush1.bf16.msra.mxu0 %v978
        %1012 = vmatprep.subr.bf16.mxu0 %v981
        %1013 = vmatpush1.bf16.msra.mxu0 %v980
        %1014 = vmatprep.subr.bf16.mxu0 %v983
        %1015 = vmatpush1.bf16.msra.mxu0 %v982
        %1016 = vmatprep.subr.bf16.mxu0 %v985
        %1017 = vmatpush1.bf16.msra.mxu0 %v984
        %1018 = vmatprep.subr.bf16.mxu0 %v987
        %1019 = vmatpush1.bf16.msra.mxu0 %v986
        %1020 = vmatprep.subr.bf16.mxu0 %v989
        %1021 = vmatpush1.bf16.msra.mxu0 %v988
        %1022 = vmatprep.subr.bf16.mxu0 %v991
        %1023 = vmatpush1.bf16.msra.mxu0 %v990
        %1024 = vmatprep.subr.bf16.mxu0 %v993
        %1025 = vmatpush1.bf16.msra.mxu0 %v992
        %1026 = vmatprep.subr.bf16.mxu0 0
        %1027 = vmatpush1.bf16.msra.mxu0 0
        %1028 = vmatprep.subr.bf16.mxu0 0
        %1029 = vmatpush1.bf16.msra.mxu0 0
        %1030 = vmatprep.subr.bf16.mxu0 0
        %1031 = vmatpush1.bf16.msra.mxu0 0
        %1032 = vmatprep.subr.bf16.mxu0 0
        %1033 = vmatpush1.bf16.msra.mxu0 0
        %1034 = vmatprep.subr.bf16.mxu0 0
        %1035 = vmatpush1.bf16.msra.mxu0 0
        %1036 = vmatprep.subr.bf16.mxu0 0
        %1037 = vmatpush1.bf16.msra.mxu0 0
        %1038 = vmatprep.subr.bf16.mxu0 0
        %1039 = vmatpush1.bf16.msra.mxu0 0
        %1040 = vmatprep.subr.bf16.mxu0 0
        %1041 = vmatpush1.bf16.msra.mxu0 0
        %1042 = vmatprep.mubr.bf16.mxu0 0
        %1043 = vmatmul.mubr.bf16.gmra.mrb[0].mxu0 %v926
        %v1044 = vpop.f32.mrb[0].mxu0
        %v1045 = vadd.f32 0.0, %v1044
        %v1046 = vpop.f32.mrb[0].mxu0
        %v1047 = vadd.f32 0.0, %v1046
        %v1048 = vpop.f32.mrb[0].mxu0
        %v1049 = vadd.f32 0.0, %v1048
        %v1050 = vpop.f32.mrb[0].mxu0
        %v1051 = vadd.f32 0.0, %v1050
        %1052 = vmatprep.mubr.bf16.mxu0 0
        %1053 = vmatmul.mubr.bf16.gmra.mrb[0].mxu0 %v927
        %v1054 = vpop.f32.mrb[0].mxu0
        %v1055 = vadd.f32 0.0, %v1054
        %v1056 = vpop.f32.mrb[0].mxu0
        %v1057 = vadd.f32 0.0, %v1056
        %v1058 = vpop.f32.mrb[0].mxu0
        %v1059 = vadd.f32 0.0, %v1058
        %v1060 = vpop.f32.mrb[0].mxu0
        %v1061 = vadd.f32 0.0, %v1060
        %1062 = vdwg.mxu0
        %v1063 = vadd.f32 %v890, %v1045
        %v1064 = vadd.f32 %v891, %v1047
        %v1065 = vadd.f32 %v892, %v1049
        %v1066 = vadd.f32 %v893, %v1051
        %v1067 = vadd.f32 %v894, %v1055
        %v1068 = vadd.f32 %v895, %v1057
        %v1069 = vadd.f32 %v896, %v1059
        %v1070 = vadd.f32 %v897, %v1061
        %1071 = vst [vmem:[#allocation2] sm:$0xff] %v1063
        %1072 = vst [vmem:[#allocation2 + $0x8] sm:$0xff] %v1064
        %1073 = vst [vmem:[#allocation2 + $0x10] sm:$0xff] %v1065
        %1074 = vst [vmem:[#allocation2 + $0x18] sm:$0xff] %v1066
        %1075 = vst [vmem:[#allocation2 + $0x20] sm:$0xff] %v1067
        %1076 = vst [vmem:[#allocation2 + $0x28] sm:$0xff] %v1068
        %1077 = vst [vmem:[#allocation2 + $0x30] sm:$0xff] %v1069
        %1078 = vst [vmem:[#allocation2 + $0x38] sm:$0xff] %v1070
        // Predicated region
        $region45: #{discriminator_forward.18} parent=39 // pred_check
          %p1079 = pneg %p878
        $region46: #{discriminator_forward.18} parent=39 // pred_check_branch
          %1081 = sbr.rel (%p1079) target = $region48
        $region47: #{discriminator_forward.18} parent=39 // pred_region
          %v1082 = vld [vmem:[#allocation2] sm:$0xff]
          %v1083 = vld [vmem:[#allocation2 + $0x8] sm:$0xff]
          %v1084 = vld [vmem:[#allocation2 + $0x10] sm:$0xff]
          %v1085 = vld [vmem:[#allocation2 + $0x18] sm:$0xff]
          %v1086 = vld [vmem:[#allocation2 + $0x20] sm:$0xff]
          %v1087 = vld [vmem:[#allocation2 + $0x28] sm:$0xff]
          %v1088 = vld [vmem:[#allocation2 + $0x30] sm:$0xff]
          %v1089 = vld [vmem:[#allocation2 + $0x38] sm:$0xff]
          %v1090 = vld [vmem:[%s429] sm:$0x3]
          %v1092 = vlaneseq
          %v1093 = vshrl.u32 %v1092, 7
          %v1094 = vsub.s32 0, %v1093
          %v1095 = vrot.slane %v1090, %v1094
          %v1096 = vlaneseq
          %v1097 = vshrl.u32 %v1096, 7
          %v1098 = vsub.s32 1, %v1097
          %v1099 = vrot.slane %v1090, %v1098
          %v1102 = vmul.f32 %v1082, %v1095
          %v1103 = vmul.f32 %v1083, %v1099
          %v1104 = vmul.f32 %v1084, %v1095
          %v1105 = vmul.f32 %v1085, %v1099
          %v1106 = vmul.f32 %v1086, %v1095
          %v1107 = vmul.f32 %v1087, %v1099
          %v1108 = vmul.f32 %v1088, %v1095
          %v1109 = vmul.f32 %v1089, %v1099
          %v1110 = vld [vmem:[#allocation16] sm:$0x3]
          %v1112 = vlaneseq
          %v1113 = vshrl.u32 %v1112, 7
          %v1114 = vsub.s32 0, %v1113
          %v1115 = vrot.slane %v1110, %v1114
          %v1116 = vlaneseq
          %v1117 = vshrl.u32 %v1116, 7
          %v1118 = vsub.s32 1, %v1117
          %v1119 = vrot.slane %v1110, %v1118
          %v1122 = vadd.f32 %v1102, %v1115
          %v1123 = vadd.f32 %v1103, %v1119
          %v1124 = vadd.f32 %v1104, %v1115
          %v1125 = vadd.f32 %v1105, %v1119
          %v1126 = vadd.f32 %v1106, %v1115
          %v1127 = vadd.f32 %v1107, %v1119
          %v1128 = vadd.f32 %v1108, %v1115
          %v1129 = vadd.f32 %v1109, %v1119
          %v1130 = vpack.c.bf16 %v1124, %v1122
          %v1131 = vpack.c.bf16 %v1125, %v1123
          %v1132 = vpack.c.bf16 %v1128, %v1126
          %v1133 = vpack.c.bf16 %v1129, %v1127
          %v1138 = vunpack.c.l.b16 %v1130
          %v1139 = vunpack.c.l.b16 %v1131
          %v1140 = vunpack.c.h.b16 %v1130
          %v1141 = vunpack.c.h.b16 %v1131
          %v1142 = vunpack.c.l.b16 %v1132
          %v1143 = vunpack.c.l.b16 %v1133
          %v1144 = vunpack.c.h.b16 %v1132
          %v1145 = vunpack.c.h.b16 %v1133
          %v1146 = vpack.c.b16 %v1139, %v1138
          %v1147 = vpack.c.b16 %v1141, %v1140
          %v1148 = vpack.c.b16 %v1143, %v1142
          %v1149 = vpack.c.b16 %v1145, %v1144
          %1154 = vst [vmem:[%s376] sm:$0xff] %v1146
          %1155 = vst [vmem:[%s376 + $0x8] sm:$0xff] %v1147
          %1156 = vst [vmem:[%s376 + $0x10] sm:$0xff] %v1148
          %1157 = vst [vmem:[%s376 + $0x18] sm:$0xff] %v1149
        $region48: #{discriminator_forward.18} parent=39 // pred_fallthru
          _
        %s1158 = sand.u32 %s196, 1
        %s1159 = sand.u32 %s196, 1
        %s1160 = smul.addr %s1159, 32
        %s1161 = scalar_lea.vmem [#allocation13], %s1160
        // Predicated region
        $region49: #{discriminator_forward.18} parent=39 // pred_check
          %p1162 = pneg %p206
        $region50: #{discriminator_forward.18} parent=39 // pred_check_branch
          %1164 = sbr.rel (%p1162) target = $region52
        $region51: #{discriminator_forward.18} parent=39 // pred_region
          %s1165 = smul.u32 4, %s34
          %s1166 = smul.u32 2, %s35
          %s1167 = smul.addr %s1165, 4
          %s1168 = sadd.s32 %s1166, %s1167
          %s1169 = smul.addr %s1168, 4
          %s1170 = scalar_lea.vmem %s7, %s1169
          // Predicated region
          $region53: #{discriminator_forward.18} parent=51 // pred_check
            _
          $region54: #{discriminator_forward.18} parent=51 // pred_check_branch
            %1172 = sbr.rel (0) target = $region56
          $region55: #{discriminator_forward.18} parent=51 // pred_region
            // Predicated region
            $region57: #{discriminator_forward.18} parent=55 // pred_check
              _
            $region58: #{discriminator_forward.18} parent=55 // pred_check_branch
              %1174 = sbr.rel (0) target = $region60
            $region59: #{discriminator_forward.18} parent=55 // pred_region
              // Predicated region
              $region72: #{discriminator_forward.18} parent=59 // pred_check
                _
              $region73: #{discriminator_forward.18} parent=59 // pred_check_branch
                %1195 = sbr.rel (0) target = $region75
              $region74: #{discriminator_forward.18} parent=59 // pred_region
                loop: start=0, step=1, limit=1
                $region76: #{discriminator_forward.18} parent=74 // loop_pre_header
                  _
                $region77: #{discriminator_forward.18} parent=74 // loop_header
                  %s1197 = sphi 0, %s1201
                  %p1198 = scmp.ge.s32.totalorder %s1197, 1
                  %s1202 = sphi %s1161, %s1161
                  %s1203 = sphi %s1170, %s1170
                $region78: #{discriminator_forward.18} parent=74 // loop_header_branch
                  %1200 = sbr.rel (%p1198) target = $region82
                $region79: #{discriminator_forward.18} parent=74 // loop_body
                  %v1204 = vld [vmem:[%s1202] sm:$0xff]
                  %1205 = vst [vmem:[%s1203] sm:$0xff] %v1204
                  %v1206 = vld [vmem:[%s1202 + $0x8] sm:$0xff]
                  %1207 = vst [vmem:[%s1203 + $0x10] sm:$0xff] %v1206
                  %v1208 = vld [vmem:[%s1202 + $0x10] sm:$0xff]
                  %1209 = vst [vmem:[%s1203 + $0x20] sm:$0xff] %v1208
                  %v1210 = vld [vmem:[%s1202 + $0x18] sm:$0xff]
                  %1211 = vst [vmem:[%s1203 + $0x30] sm:$0xff] %v1210
                $region80: #{discriminator_forward.18} parent=74 // loop_footer
                  %s1201 = sadd.s32 1, %s1197
                $region81: #{discriminator_forward.18} parent=74 // loop_footer_branch
                  %1196 = sbr.rel target = $region77
                $region82: #{discriminator_forward.18} parent=74 // loop_exit
                  _
              $region75: #{discriminator_forward.18} parent=59 // pred_fallthru
                _
              // Predicated region
              $region83: #{discriminator_forward.18} parent=59 // pred_check
                _
              $region84: #{discriminator_forward.18} parent=59 // pred_check_branch
                %1213 = sbr.rel target = $region86
              $region85: #{discriminator_forward.18} parent=59 // pred_region
                _
              $region86: #{discriminator_forward.18} parent=59 // pred_fallthru
                _
            $region60: #{discriminator_forward.18} parent=55 // pred_fallthru
              _
            // Predicated region
            $region61: #{discriminator_forward.18} parent=55 // pred_check
              _
            $region62: #{discriminator_forward.18} parent=55 // pred_check_branch
              %1176 = sbr.rel target = $region64
            $region63: #{discriminator_forward.18} parent=55 // pred_region
              loop: start=0, step=1, limit=1
              $region65: #{discriminator_forward.18} parent=63 // loop_pre_header
                _
              $region66: #{discriminator_forward.18} parent=63 // loop_header
                %s1179 = sphi 0, %s1183
                %p1180 = scmp.ge.s32.totalorder %s1179, 1
                %s1184 = sphi %s1161, %s1161
                %s1185 = sphi %s1170, %s1170
              $region67: #{discriminator_forward.18} parent=63 // loop_header_branch
                %1182 = sbr.rel (%p1180) target = $region71
              $region68: #{discriminator_forward.18} parent=63 // loop_body
                %v1186 = vld [vmem:[%s1184] sm:$0xff]
                %1187 = vst [vmem:[%s1185] sm:$0xff] %v1186
                %v1188 = vld [vmem:[%s1184 + $0x8] sm:$0xff]
                %1189 = vst [vmem:[%s1185 + $0x10] sm:$0xff] %v1188
                %v1190 = vld [vmem:[%s1184 + $0x10] sm:$0xff]
                %1191 = vst [vmem:[%s1185 + $0x20] sm:$0xff] %v1190
                %v1192 = vld [vmem:[%s1184 + $0x18] sm:$0xff]
                %1193 = vst [vmem:[%s1185 + $0x30] sm:$0xff] %v1192
              $region69: #{discriminator_forward.18} parent=63 // loop_footer
                %s1183 = sadd.s32 1, %s1179
              $region70: #{discriminator_forward.18} parent=63 // loop_footer_branch
                %1178 = sbr.rel target = $region66
              $region71: #{discriminator_forward.18} parent=63 // loop_exit
                _
            $region64: #{discriminator_forward.18} parent=55 // pred_fallthru
              _
          $region56: #{discriminator_forward.18} parent=51 // pred_fallthru
            _
          %1214 = vnop
        $region52: #{discriminator_forward.18} parent=39 // pred_fallthru
          _
      $region40: #{discriminator_forward.18} parent=5 // pred_fallthru
        _
      %p1215 = scmp.le.s32.totalorder 2, %s24
      // Predicated region
      $region87: #{discriminator_forward.18} parent=5 // pred_check
        %p1216 = pneg %p1215
      $region88: #{discriminator_forward.18} parent=5 // pred_check_branch
        %1218 = sbr.rel (%p1216) target = $region90
      $region89: #{discriminator_forward.18} parent=5 // pred_region
        %s1219 = ssub.s32 %s24, 2
        // Predicated region
        $region91: #{discriminator_forward.18} parent=89 // pred_check
          %p1220 = pneg %p212
        $region92: #{discriminator_forward.18} parent=89 // pred_check_branch
          %1222 = sbr.rel (%p1220) target = $region94
        $region93: #{discriminator_forward.18} parent=89 // pred_region
          %s1223 = sand.u32 %s197, 1
          %s1224 = sand.u32 %s197, 1
          %s1225 = smul.addr %s1224, 32
          %s1226 = scalar_lea.vmem [#allocation13], %s1225
        $region94: #{discriminator_forward.18} parent=89 // pred_fallthru
          _
      $region90: #{discriminator_forward.18} parent=5 // pred_fallthru
        _
    $region6: #{discriminator_forward.18} parent=1 // loop_footer
      %s28 = sadd.s32 1, %s24
    $region7: #{discriminator_forward.18} parent=1 // loop_footer_branch
      %23 = sbr.rel target = $region3
    $region8: #{discriminator_forward.18} parent=1 // loop_exit
      _

// kernel: discriminator_forward.17
$region0: #{discriminator_forward.17}
  #allocation0 [shape = 'u32[]', space=smem, size = 0x4, offset = 0x4, fixed_abs, tag = 'smem constant byte address 0x4 - core index']
  #allocation1 [shape = 'u32[144,128]{1,0:T(1,128)}', space=vmem, size = 0x12000, scoped, tag = 'internal scratch']
  #allocation2 [shape = 'f32[32,256]{1,0:T(8,128)}', space=vmem, size = 0x8000, scoped, tag = 'scratch operand']
  #allocation3 [shape = 'u32[2048]{0}', space=vmem, size = 0x2000, scoped, tag = 'scoped memory for discriminator_forward.17']
  #allocation4 [shape = 'u32[2048]{0}', space=vmem, size = 0x2000, scoped, tag = 'scoped memory for discriminator_forward.17']
  #allocation5 [shape = 'u32[2048]{0}', space=vmem, size = 0x2000, scoped, tag = 'scoped memory for discriminator_forward.17']
  #allocation6 [shape = 'u32[2048]{0}', space=vmem, size = 0x2000, scoped, tag = 'scoped memory for discriminator_forward.17']
  #allocation7 [shape = 'u32[2048]{0}', space=vmem, size = 0x2000, scoped, tag = 'scoped memory for discriminator_forward.17']
  #allocation8 [shape = 'u32[2048]{0}', space=vmem, size = 0x2000, scoped, tag = 'scoped memory for discriminator_forward.17']
  #allocation9 [shape = 'u32[2048]{0}', space=vmem, size = 0x2000, scoped, tag = 'scoped memory for discriminator_forward.17']
  #allocation10 [shape = 'u32[2048]{0}', space=vmem, size = 0x2000, scoped, tag = 'scoped memory for discriminator_forward.17']
  #allocation11 [shape = 'u32[2048]{0}', space=vmem, size = 0x2000, scoped, tag = 'scoped memory for discriminator_forward.17']
  #allocation12 [shape = 'u32[2048]{0}', space=vmem, size = 0x2000, scoped, tag = 'scoped memory for discriminator_forward.17']
  #allocation13 [shape = 'u32[2048]{0}', space=vmem, size = 0x2000, scoped, tag = 'scoped memory for discriminator_forward.17']
  #allocation14 [shape = 'u32[2048]{0}', space=vmem, size = 0x2000, scoped, tag = 'scoped memory for discriminator_forward.17']
  #allocation15 [shape = 'u32[2048]{0}', space=vmem, size = 0x2000, scoped, tag = 'scoped memory for discriminator_forward.17']
  #allocation16 [shape = 'u32[2048]{0}', space=vmem, size = 0x2000, scoped, tag = 'scoped memory for discriminator_forward.17']
  #allocation17 [shape = 'u32[2048]{0}', space=vmem, size = 0x2000, scoped, tag = 'scoped memory for discriminator_forward.17']
  %s0 = inlined_call_operand.vmem [shape: f32[1,512], index: 0, kind: input, shape index: {}]
  %s1 = inlined_call_operand.vmem [shape: bf16[32,384], index: 1, kind: input, shape index: {}]
  %s2 = inlined_call_operand.<no memory space> [shape: bf16[], index: 2, kind: input, shape index: {}]
  %s3 = inlined_call_operand.vmem [shape: bf16[32,32], index: 3, kind: input, shape index: {}]
  %s4 = inlined_call_operand.vmem [shape: f32[1,384], index: 4, kind: input, shape index: {}]
  %s5 = inlined_call_operand.<no memory space> [shape: f32[], index: 5, kind: input, shape index: {}]
  %s6 = inlined_call_operand.vmem [shape: bf16[32,512], index: 6, kind: output, shape index: {}]
  %s7 = sld [smem:[#allocation0]]
  $region91: #{discriminator_forward.17} parent=0
    _
  %s9 = ssub.s32 1, %s7
  %s10 = scalar_select 0, %s9, %s7
  %v11 = vstv %s2
  %v12 = vunpack.i.l.bf16 %v11
  %v14 = vunpack.i.h.bf16 %v11
  %v16 = vstv %s2
  %v17 = vunpack.i.l.bf16 %v16
  %v19 = vunpack.i.h.bf16 %v16
  %v21 = vstv %s5
  $region1: #{discriminator_forward.17} parent=0
    #allocation18 [shape = 'u8[32768]{0}', space=vmem, size = 0x8000, scoped, tag = 'output window, operand 0']
    loop: start=0, step=1, limit=4
    $region2: #{discriminator_forward.17} parent=1 // loop_pre_header
      _
    $region3: #{discriminator_forward.17} parent=1 // loop_header
      %s23 = sphi 0, %s27
      %p24 = scmp.ge.s32.totalorder %s23, 4
      %s30 = sphi 0, %s49
      %s31 = sphi 0, %s45
      %s32 = sphi 0, %s41
      %s33 = sphi 0, %s30
      %s34 = sphi 0, %s31
      %s35 = sphi 0, %s32
      %s36 = sphi 0, %s33
      %s37 = sphi 0, %s34
      %s38 = sphi 0, %s35
      %s54 = sphi 0, %s56
      %s57 = sphi 0, %s54
      %s58 = sphi 0, %s57
      %s74 = sphi 0, %s58
      %s82 = sphi 0, %s84
      %s85 = sphi 0, %s82
      %s86 = sphi 0, %s85
      %s102 = sphi 0, %s86
      %s108 = sphi 0, %s110
      %s111 = sphi 0, %s108
      %s112 = sphi 0, %s111
      %s128 = sphi 0, %s112
      %s134 = sphi 0, %s136
      %s137 = sphi 0, %s134
      %s138 = sphi 0, %s137
      %s154 = sphi 0, %s138
      %s162 = sphi 0, %s164
      %s165 = sphi 0, %s162
      %s166 = sphi 0, %s165
      %s182 = sphi 0, %s166
    $region4: #{discriminator_forward.17} parent=1 // loop_header_branch
      %26 = sbr.rel (%p24) target = $region8
    $region5: #{discriminator_forward.17} parent=1 // loop_body
      %s28 = ssub.s32 %s23, 1
      %s29 = ssub.s32 %s23, 2
      %s39 = sadd.s32 1, %s32
      %p40 = scmp.ge.s32.totalorder %s39, 1
      %s41 = scalar_select %p40, 0, %s39
      %s42 = sadd.s32 1, %s31
      %s43 = scalar_select %p40, %s42, %s31
      %p44 = scmp.ge.s32.totalorder %s43, 2
      %s45 = scalar_select %p44, 0, %s43
      %s46 = sadd.s32 1, %s30
      %s47 = scalar_select %p44, %s46, %s30
      %p48 = scmp.ge.s32.totalorder %s47, 1
      %s49 = scalar_select %p48, 0, %s47
      %s50 = ssub.s32 %s30, %s49
      %s51 = ssub.s32 %s32, %s41
      %s52 = sor.u32 %s50, %s51
      %p53 = scmp.eq.s32.totalorder %s52, 0
      %s55 = sadd.s32 %s54, 1
      %s56 = scalar_select %p53, %s54, %s55
      %p59 = pneg %p53
      %p60 = scmp.eq.s32.totalorder %s23, 1
      %p61 = por %p59, %p60
      %p62 = scmp.ne.s32.totalorder %s54, %s57
      %p63 = scmp.eq.s32.totalorder %s23, 0
      %p64 = por %p62, %p63
      %p65 = scmp.ne.s32.totalorder %s54, %s57
      %p66 = scmp.eq.s32.totalorder %s28, 1
      %p67 = por %p65, %p66
      %p68 = scmp.ne.s32.totalorder %s57, %s58
      %p69 = scmp.eq.s32.totalorder %s28, 0
      %p70 = por %p68, %p69
      %p71 = scmp.ne.s32.totalorder %s57, %s58
      %p72 = scmp.eq.s32.totalorder %s29, 1
      %p73 = por %p71, %p72
      %p75 = scmp.ne.s32.totalorder %s58, %s74
      %p76 = scmp.eq.s32.totalorder %s29, 0
      %p77 = por %p75, %p76
      %s78 = ssub.s32 %s32, %s41
      %s79 = ssub.s32 %s31, %s45
      %s80 = sor.u32 %s78, %s79
      %p81 = scmp.eq.s32.totalorder %s80, 0
      %s83 = sadd.s32 %s82, 1
      %s84 = scalar_select %p81, %s82, %s83
      %p87 = pneg %p81
      %p88 = scmp.eq.s32.totalorder %s23, 1
      %p89 = por %p87, %p88
      %p90 = scmp.ne.s32.totalorder %s82, %s85
      %p91 = scmp.eq.s32.totalorder %s23, 0
      %p92 = por %p90, %p91
      %p93 = scmp.ne.s32.totalorder %s82, %s85
      %p94 = scmp.eq.s32.totalorder %s28, 1
      %p95 = por %p93, %p94
      %p96 = scmp.ne.s32.totalorder %s85, %s86
      %p97 = scmp.eq.s32.totalorder %s28, 0
      %p98 = por %p96, %p97
      %p99 = scmp.ne.s32.totalorder %s85, %s86
      %p100 = scmp.eq.s32.totalorder %s29, 1
      %p101 = por %p99, %p100
      %p103 = scmp.ne.s32.totalorder %s86, %s102
      %p104 = scmp.eq.s32.totalorder %s29, 0
      %p105 = por %p103, %p104
      %s106 = ssub.s32 %s31, %s45
      %p107 = scmp.eq.s32.totalorder %s106, 0
      %s109 = sadd.s32 %s108, 1
      %s110 = scalar_select %p107, %s108, %s109
      %p113 = pneg %p107
      %p114 = scmp.eq.s32.totalorder %s23, 1
      %p115 = por %p113, %p114
      %p116 = scmp.ne.s32.totalorder %s108, %s111
      %p117 = scmp.eq.s32.totalorder %s23, 0
      %p118 = por %p116, %p117
      %p119 = scmp.ne.s32.totalorder %s108, %s111
      %p120 = scmp.eq.s32.totalorder %s28, 1
      %p121 = por %p119, %p120
      %p122 = scmp.ne.s32.totalorder %s111, %s112
      %p123 = scmp.eq.s32.totalorder %s28, 0
      %p124 = por %p122, %p123
      %p125 = scmp.ne.s32.totalorder %s111, %s112
      %p126 = scmp.eq.s32.totalorder %s29, 1
      %p127 = por %p125, %p126
      %p129 = scmp.ne.s32.totalorder %s112, %s128
      %p130 = scmp.eq.s32.totalorder %s29, 0
      %p131 = por %p129, %p130
      %s132 = ssub.s32 %s31, %s45
      %p133 = scmp.eq.s32.totalorder %s132, 0
      %s135 = sadd.s32 %s134, 1
      %s136 = scalar_select %p133, %s134, %s135
      %p139 = pneg %p133
      %p140 = scmp.eq.s32.totalorder %s23, 1
      %p141 = por %p139, %p140
      %p142 = scmp.ne.s32.totalorder %s134, %s137
      %p143 = scmp.eq.s32.totalorder %s23, 0
      %p144 = por %p142, %p143
      %p145 = scmp.ne.s32.totalorder %s134, %s137
      %p146 = scmp.eq.s32.totalorder %s28, 1
      %p147 = por %p145, %p146
      %p148 = scmp.ne.s32.totalorder %s137, %s138
      %p149 = scmp.eq.s32.totalorder %s28, 0
      %p150 = por %p148, %p149
      %p151 = scmp.ne.s32.totalorder %s137, %s138
      %p152 = scmp.eq.s32.totalorder %s29, 1
      %p153 = por %p151, %p152
      %p155 = scmp.ne.s32.totalorder %s138, %s154
      %p156 = scmp.eq.s32.totalorder %s29, 0
      %p157 = por %p155, %p156
      %s158 = ssub.s32 %s30, %s49
      %s159 = ssub.s32 %s31, %s45
      %s160 = sor.u32 %s158, %s159
      %p161 = scmp.eq.s32.totalorder %s160, 0
      %s163 = sadd.s32 %s162, 1
      %s164 = scalar_select %p161, %s162, %s163
      %p167 = pneg %p161
      %p168 = scmp.eq.s32.totalorder %s23, 1
      %p169 = por %p167, %p168
      %p170 = scmp.ne.s32.totalorder %s162, %s165
      %p171 = scmp.eq.s32.totalorder %s23, 0
      %p172 = por %p170, %p171
      %p173 = scmp.ne.s32.totalorder %s162, %s165
      %p174 = scmp.eq.s32.totalorder %s28, 1
      %p175 = por %p173, %p174
      %p176 = scmp.ne.s32.totalorder %s165, %s166
      %p177 = scmp.eq.s32.totalorder %s28, 0
      %p178 = por %p176, %p177
      %p179 = scmp.ne.s32.totalorder %s165, %s166
      %p180 = scmp.eq.s32.totalorder %s29, 1
      %p181 = por %p179, %p180
      %p183 = scmp.ne.s32.totalorder %s166, %s182
      %p184 = scmp.eq.s32.totalorder %s29, 0
      %p185 = por %p183, %p184
      %p186 = scmp.le.s32.totalorder 1, %s23
      %p187 = scmp.lt.s32.totalorder %s23, 3
      %p188 = pnand %p186, %p187
      %p189 = pneg %p188
      // Predicated region
      $region9: #{discriminator_forward.17} parent=5 // pred_check
        _
      $region10: #{discriminator_forward.17} parent=5 // pred_check_branch
        %191 = sbr.rel (%p188) target = $region12
      $region11: #{discriminator_forward.17} parent=5 // pred_region
        %s192 = ssub.s32 %s23, 1
        // Predicated region
        $region13: #{discriminator_forward.17} parent=11 // pred_check
          %p193 = pneg %p70
        $region14: #{discriminator_forward.17} parent=11 // pred_check_branch
          %195 = sbr.rel (%p193) target = $region16
        $region15: #{discriminator_forward.17} parent=11 // pred_region
          %s196 = smul.u32 4, %s33
          %s197 = ssub.s32 1, %s35
          %s198 = smul.u32 256, %s197
          %p199 = scmp.lt.s32.totalorder %s196, 3
          %s200 = scalar_select %p199, %s196, 3
          %p201 = scmp.lt.s32.totalorder %s35, 0
          %s202 = scalar_select %p201, %s35, 0
          %s203 = sadd.s32 %s202, %s200
          %s204 = smul.addr %s203, 4
          %s205 = scalar_lea.vmem %s3, %s204
          %s206 = smul.u32 4, %s33
          %s207 = ssub.s32 1, %s35
          %s208 = smul.u32 256, %s207
        $region16: #{discriminator_forward.17} parent=11 // pred_fallthru
          _
      $region12: #{discriminator_forward.17} parent=5 // pred_fallthru
        _
      %p209 = scmp.lt.s32.totalorder %s23, 2
      // Predicated region
      $region17: #{discriminator_forward.17} parent=5 // pred_check
        %p210 = pneg %p209
      $region18: #{discriminator_forward.17} parent=5 // pred_check_branch
        %212 = sbr.rel (%p210) target = $region20
      $region19: #{discriminator_forward.17} parent=5 // pred_region
        // Predicated region
        $region21: #{discriminator_forward.17} parent=19 // pred_check
          %p213 = pneg %p92
        $region22: #{discriminator_forward.17} parent=19 // pred_check_branch
          %215 = sbr.rel (%p213) target = $region24
        $region23: #{discriminator_forward.17} parent=19 // pred_region
          %s216 = smul.u32 16, %s32
          %s217 = smul.u32 2, %s31
          %s218 = ssub.s32 4, %s216
          %p219 = scmp.gt.s32.totalorder %s218, 0
          %s220 = scalar_select %p219, %s218, 0
          %s221 = smul.u32 64, %s220
          %s222 = ssub.s32 3, %s217
          %p223 = scmp.lt.s32.totalorder %s222, 2
          %s224 = scalar_select %p223, %s222, 2
          %s225 = smul.u32 %s221, %s224
          %p226 = scmp.lt.s32.totalorder %s216, 3
          %s227 = scalar_select %p226, %s216, 3
          %p228 = scmp.lt.s32.totalorder %s217, 2
          %s229 = scalar_select %p228, %s217, 2
          %s230 = smul.addr %s227, 3
          %s231 = sadd.s32 %s229, %s230
          %s232 = smul.addr %s231, 4
          %s233 = scalar_lea.vmem %s1, %s232
          %s234 = smul.u32 16, %s32
          %s235 = smul.u32 2, %s31
          %s236 = ssub.s32 4, %s234
          %p237 = scmp.gt.s32.totalorder %s236, 0
          %s238 = scalar_select %p237, %s236, 0
          %s239 = smul.u32 64, %s238
          %s240 = ssub.s32 3, %s235
          %p241 = scmp.lt.s32.totalorder %s240, 2
          %s242 = scalar_select %p241, %s240, 2
          %s243 = smul.u32 %s239, %s242
        $region24: #{discriminator_forward.17} parent=19 // pred_fallthru
          _
        // Predicated region
        $region25: #{discriminator_forward.17} parent=19 // pred_check
          %p244 = pneg %p118
        $region26: #{discriminator_forward.17} parent=19 // pred_check_branch
          %246 = sbr.rel (%p244) target = $region28
        $region27: #{discriminator_forward.17} parent=19 // pred_region
          %s247 = smul.u32 2, %s31
          %p248 = scmp.lt.s32.totalorder %s247, 3
          %s249 = scalar_select %p248, %s247, 3
          %s250 = scalar_lea.vmem %s0, %s249
          %s251 = smul.u32 2, %s31
        $region28: #{discriminator_forward.17} parent=19 // pred_fallthru
          _
        // Predicated region
        $region29: #{discriminator_forward.17} parent=19 // pred_check
          %p252 = pneg %p144
        $region30: #{discriminator_forward.17} parent=19 // pred_check_branch
          %254 = sbr.rel (%p252) target = $region32
        $region31: #{discriminator_forward.17} parent=19 // pred_region
          %s255 = smul.u32 2, %s31
          %s256 = ssub.s32 3, %s255
          %p257 = scmp.lt.s32.totalorder %s256, 2
          %s258 = scalar_select %p257, %s256, 2
          %s259 = smul.u32 16, %s258
          %p260 = scmp.lt.s32.totalorder %s255, 2
          %s261 = scalar_select %p260, %s255, 2
          %s262 = scalar_lea.vmem %s4, %s261
          %s263 = smul.u32 2, %s31
          %s264 = ssub.s32 3, %s263
          %p265 = scmp.lt.s32.totalorder %s264, 2
          %s266 = scalar_select %p265, %s264, 2
          %s267 = smul.u32 16, %s266
        $region32: #{discriminator_forward.17} parent=19 // pred_fallthru
          _
      $region20: #{discriminator_forward.17} parent=5 // pred_fallthru
        _
      %p268 = scmp.le.s32.totalorder 1, %s23
      %p269 = scmp.lt.s32.totalorder %s23, 3
      %p270 = pnand %p268, %p269
      %p271 = pneg %p270
      // Predicated region
      $region33: #{discriminator_forward.17} parent=5 // pred_check
        _
      $region34: #{discriminator_forward.17} parent=5 // pred_check_branch
        %273 = sbr.rel (%p270) target = $region36
      $region35: #{discriminator_forward.17} parent=5 // pred_region
        #allocation19 [shape = 'u8[8192]{0}', space=vmem, size = 0x2000, dematerialized = true, scoped, tag = 'FusionAdapter Buffer %fusion.43 = bf16[32,128]{1,0:T(8,128)(2,1)} fusion(%param_3.76, %param_2.112), kind=kLoop, calls=%fused_computation.51.clone, metadata={op_name="jit(discriminator_forward)/jit(_pad)/pad" stack_frame_id=82}']
        #allocation20 [shape = 'u8[65536]{0}', space=vmem, size = 0x10000, dematerialized = true, scoped, tag = 'FusionAdapter Buffer %fusion.9 = bf16[128,512]{1,0:T(8,128)(2,1)} fusion(%param_1.139, %param_2.112), kind=kLoop, calls=%fused_computation.11.clone, metadata={op_name="jit(discriminator_forward)/jit(_pad)/pad" stack_frame_id=86}']
        #allocation21 [shape = 'u8[1024]{0}', space=vmem, size = 0x400, dematerialized = true, scoped, tag = 'FusionAdapter Buffer %fusion.47 = f32[1,512]{1,0:T(1,128)} fusion(%param_4.49, %param_5.45), kind=kLoop, calls=%fused_computation.64.clone, metadata={op_name="jit(discriminator_forward)/jit(_pad)/pad" stack_frame_id=91}']
        %s274 = ssub.s32 %s23, 1
        %s275 = smul.u32 4, %s33
        %s276 = ssub.s32 1, %s35
        %s277 = smul.u32 256, %s276
        %p278 = scmp.lt.s32.totalorder %s275, 3
        %s279 = scalar_select %p278, %s275, 3
        %p280 = scmp.lt.s32.totalorder %s35, 0
        %s281 = scalar_select %p280, %s35, 0
        %s282 = sadd.s32 %s281, %s279
        %s283 = smul.addr %s282, 4
        %s284 = scalar_lea.vmem %s3, %s283
        %p285 = pneg %p70
        %p286 = pneg %p67
        %s287 = smul.u32 16, %s35
        %s288 = smul.u32 2, %s34
        %s289 = ssub.s32 4, %s287
        %p290 = scmp.gt.s32.totalorder %s289, 0
        %s291 = scalar_select %p290, %s289, 0
        %s292 = smul.u32 64, %s291
        %s293 = ssub.s32 3, %s288
        %p294 = scmp.lt.s32.totalorder %s293, 2
        %s295 = scalar_select %p294, %s293, 2
        %s296 = smul.u32 %s292, %s295
        %p297 = scmp.lt.s32.totalorder %s287, 3
        %s298 = scalar_select %p297, %s287, 3
        %p299 = scmp.lt.s32.totalorder %s288, 2
        %s300 = scalar_select %p299, %s288, 2
        %s301 = smul.addr %s298, 3
        %s302 = sadd.s32 %s300, %s301
        %s303 = smul.addr %s302, 4
        %s304 = scalar_lea.vmem %s1, %s303
        %p305 = pneg %p98
        %p306 = pneg %p95
        %s307 = smul.u32 2, %s34
        %p308 = scmp.lt.s32.totalorder %s307, 3
        %s309 = scalar_select %p308, %s307, 3
        %s310 = scalar_lea.vmem %s0, %s309
        %p311 = pneg %p124
        %p312 = pneg %p121
        %s313 = smul.u32 2, %s34
        %s314 = ssub.s32 3, %s313
        %p315 = scmp.lt.s32.totalorder %s314, 2
        %s316 = scalar_select %p315, %s314, 2
        %s317 = smul.u32 16, %s316
        %p318 = scmp.lt.s32.totalorder %s313, 2
        %s319 = scalar_select %p318, %s313, 2
        %s320 = scalar_lea.vmem %s4, %s319
        %p321 = pneg %p150
        %p322 = pneg %p147
        %p323 = pneg %p178
        %p324 = pneg %p175
        %s325 = sand.u32 %s165, 1
        %s326 = sand.u32 %s165, 1
        %s327 = smul.addr %s326, 32
        %s328 = scalar_lea.vmem [#allocation18], %s327
        %s329 = smul.u32 4, %s33
        %s330 = ssub.s32 1, %s35
        %s331 = smul.u32 256, %s330
        %p332 = scmp.lt.s32.totalorder %s329, 3
        %s333 = scalar_select %p332, %s329, 3
        %p334 = scmp.lt.s32.totalorder %s35, 0
        %s335 = scalar_select %p334, %s35, 0
        %s336 = sadd.s32 %s335, %s333
        %s337 = smul.addr %s336, 4
        %s338 = scalar_lea.vmem %s3, %s337
        %s339 = smul.u32 4, %s33
        %s340 = ssub.s32 1, %s35
        %s341 = smul.u32 256, %s340
        %s342 = smul.u32 16, %s35
        %s343 = smul.u32 2, %s34
        %s344 = ssub.s32 4, %s342
        %p345 = scmp.gt.s32.totalorder %s344, 0
        %s346 = scalar_select %p345, %s344, 0
        %s347 = smul.u32 64, %s346
        %s348 = ssub.s32 3, %s343
        %p349 = scmp.lt.s32.totalorder %s348, 2
        %s350 = scalar_select %p349, %s348, 2
        %s351 = smul.u32 %s347, %s350
        %p352 = scmp.lt.s32.totalorder %s342, 3
        %s353 = scalar_select %p352, %s342, 3
        %p354 = scmp.lt.s32.totalorder %s343, 2
        %s355 = scalar_select %p354, %s343, 2
        %s356 = smul.addr %s353, 3
        %s357 = sadd.s32 %s355, %s356
        %s358 = smul.addr %s357, 4
        %s359 = scalar_lea.vmem %s1, %s358
        %s360 = smul.u32 16, %s35
        %s361 = smul.u32 2, %s34
        %s362 = ssub.s32 4, %s360
        %p363 = scmp.gt.s32.totalorder %s362, 0
        %s364 = scalar_select %p363, %s362, 0
        %s365 = smul.u32 64, %s364
        %s366 = ssub.s32 3, %s361
        %p367 = scmp.lt.s32.totalorder %s366, 2
        %s368 = scalar_select %p367, %s366, 2
        %s369 = smul.u32 %s365, %s368
        %s370 = smul.u32 2, %s34
        %p371 = scmp.lt.s32.totalorder %s370, 3
        %s372 = scalar_select %p371, %s370, 3
        %s373 = scalar_lea.vmem %s0, %s372
        %s374 = smul.u32 2, %s34
        %s375 = smul.u32 2, %s34
        %s376 = ssub.s32 3, %s375
        %p377 = scmp.lt.s32.totalorder %s376, 2
        %s378 = scalar_select %p377, %s376, 2
        %s379 = smul.u32 16, %s378
        %p380 = scmp.lt.s32.totalorder %s375, 2
        %s381 = scalar_select %p380, %s375, 2
        %s382 = scalar_lea.vmem %s4, %s381
        %s383 = smul.u32 2, %s34
        %s384 = ssub.s32 3, %s383
        %p385 = scmp.lt.s32.totalorder %s384, 2
        %s386 = scalar_select %p385, %s384, 2
        %s387 = smul.u32 16, %s386
        %s388 = smul.u32 4, %s33
        %s389 = smul.u32 2, %s34
        %s390 = ssub.s32 0, %s35
        %p391 = scmp.lt.s32.totalorder %s390, 0
        %s392 = scalar_select %p391, 0, 255
        %s393 = sshrl.u32 %s392, 1
        %s394 = sor.u32 %s392, %s393
        %s395 = sand.u32 %s394, 85
        %s396 = sshrl.u32 %s395, 1
        %s397 = sor.u32 %s395, %s396
        %s398 = sand.u32 51, %s397
        %s399 = sshrl.u32 %s398, 2
        %s400 = sor.u32 %s398, %s399
        %s401 = sand.u32 15, %s400
        %v402 = vld [vmem:[%s338] sm:%s401]
        %v403 = vunpack.c.l.bf16 %v402
        %v404 = vunpack.c.h.bf16 %v402
        %s405 = ssub.s32 0, %s35
        %v406 = vstv %s405
        %vm407 = vcmp.lt.s32.totalorder %v406, 0
        %v408 = vsel %vm407, %v12, %v403
        %s409 = smul.addr %s35, 128
        %v410 = vlaneseq
        %v411 = vand.u32 %v410, 127
        %v412 = vstv %s409
        %v413 = vadd.s32 %v411, %v412
        %vm414 = vcmp.lt.s32.totalorder %v413, 32
        %v415 = vsel %vm414, %v408, %v12
        %v416 = vpack.c.bf16 0.0, %v415
        %418 = vst [vmem:[#allocation19] sm:$0xf] %v416
        %s419 = scalar_lea.vmem %s338, 4
        %s420 = ssub.s32 0, %s35
        %p421 = scmp.lt.s32.totalorder %s420, 0
        %s422 = scalar_select %p421, 0, 255
        %s423 = sshrl.u32 %s422, 1
        %s424 = sor.u32 %s422, %s423
        %s425 = sand.u32 %s424, 85
        %s426 = sshrl.u32 %s425, 1
        %s427 = sor.u32 %s425, %s426
        %s428 = sand.u32 51, %s427
        %s429 = sshrl.u32 %s428, 2
        %s430 = sor.u32 %s428, %s429
        %s431 = sand.u32 15, %s430
        %v432 = vld [vmem:[%s419] sm:%s431]
        %v433 = vunpack.c.l.bf16 %v432
        %v434 = vunpack.c.h.bf16 %v432
        %s435 = ssub.s32 0, %s35
        %v436 = vstv %s435
        %vm437 = vcmp.lt.s32.totalorder %v436, 0
        %v438 = vsel %vm437, %v12, %v433
        %s439 = smul.addr %s35, 128
        %v440 = vlaneseq
        %v441 = vand.u32 %v440, 127
        %v442 = vstv %s439
        %v443 = vadd.s32 %v441, %v442
        %vm444 = vcmp.lt.s32.totalorder %v443, 32
        %v445 = vsel %vm444, %v438, %v12
        %s446 = scalar_lea.vmem [#allocation19], 4
        %v447 = vpack.c.bf16 0.0, %v445
        %449 = vst [vmem:[%s446] sm:$0xf] %v447
        %s450 = scalar_lea.vmem %s338, 8
        %s451 = ssub.s32 0, %s35
        %p452 = scmp.lt.s32.totalorder %s451, 0
        %s453 = scalar_select %p452, 0, 255
        %s454 = sshrl.u32 %s453, 1
        %s455 = sor.u32 %s453, %s454
        %s456 = sand.u32 %s455, 85
        %s457 = sshrl.u32 %s456, 1
        %s458 = sor.u32 %s456, %s457
        %s459 = sand.u32 51, %s458
        %s460 = sshrl.u32 %s459, 2
        %s461 = sor.u32 %s459, %s460
        %s462 = sand.u32 15, %s461
        %v463 = vld [vmem:[%s450] sm:%s462]
        %v464 = vunpack.c.l.bf16 %v463
        %v465 = vunpack.c.h.bf16 %v463
        %s466 = ssub.s32 0, %s35
        %v467 = vstv %s466
        %vm468 = vcmp.lt.s32.totalorder %v467, 0
        %v469 = vsel %vm468, %v12, %v464
        %s470 = smul.addr %s35, 128
        %v471 = vlaneseq
        %v472 = vand.u32 %v471, 127
        %v473 = vstv %s470
        %v474 = vadd.s32 %v472, %v473
        %vm475 = vcmp.lt.s32.totalorder %v474, 32
        %v476 = vsel %vm475, %v469, %v12
        %s477 = scalar_lea.vmem [#allocation19], 8
        %v478 = vpack.c.bf16 0.0, %v476
        %480 = vst [vmem:[%s477] sm:$0xf] %v478
        %s481 = scalar_lea.vmem %s338, 12
        %s482 = ssub.s32 0, %s35
        %p483 = scmp.lt.s32.totalorder %s482, 0
        %s484 = scalar_select %p483, 0, 255
        %s485 = sshrl.u32 %s484, 1
        %s486 = sor.u32 %s484, %s485
        %s487 = sand.u32 %s486, 85
        %s488 = sshrl.u32 %s487, 1
        %s489 = sor.u32 %s487, %s488
        %s490 = sand.u32 51, %s489
        %s491 = sshrl.u32 %s490, 2
        %s492 = sor.u32 %s490, %s491
        %s493 = sand.u32 15, %s492
        %v494 = vld [vmem:[%s481] sm:%s493]
        %v495 = vunpack.c.l.bf16 %v494
        %v496 = vunpack.c.h.bf16 %v494
        %s497 = ssub.s32 0, %s35
        %v498 = vstv %s497
        %vm499 = vcmp.lt.s32.totalorder %v498, 0
        %v500 = vsel %vm499, %v12, %v495
        %s501 = smul.addr %s35, 128
        %v502 = vlaneseq
        %v503 = vand.u32 %v502, 127
        %v504 = vstv %s501
        %v505 = vadd.s32 %v503, %v504
        %vm506 = vcmp.lt.s32.totalorder %v505, 32
        %v507 = vsel %vm506, %v500, %v12
        %s508 = scalar_lea.vmem [#allocation19], 12
        %v509 = vpack.c.bf16 0.0, %v507
        %511 = vst [vmem:[%s508] sm:$0xf] %v509
        %s512 = ssub.s32 3, %s360
        %p513 = scmp.lt.s32.totalorder %s512, 0
        %s514 = scalar_select %p513, 0, 255
        %s515 = sshrl.u32 %s514, 1
        %s516 = sor.u32 %s514, %s515
        %s517 = sand.u32 %s516, 85
        %s518 = sshrl.u32 %s517, 1
        %s519 = sor.u32 %s517, %s518
        %s520 = sand.u32 51, %s519
        %s521 = sshrl.u32 %s520, 2
        %s522 = sor.u32 %s520, %s521
        %s523 = sand.u32 15, %s522
        %v524 = vld [vmem:[%s359] sm:%s523]
        %v525 = vunpack.c.l.bf16 %v524
        %v526 = vunpack.c.h.bf16 %v524
        %s527 = ssub.s32 3, %s360
        %v528 = vstv %s527
        %vm529 = vcmp.lt.s32.totalorder %v528, 0
        %v530 = vsel %vm529, %v17, %v525
        %v531 = vpack.c.bf16 0.0, %v530
        %533 = vst [vmem:[#allocation20] sm:$0xf] %v531
        %s534 = scalar_lea.vmem %s359, 4
        %s535 = sadd.s32 %s361, 1
        %s536 = ssub.s32 3, %s360
        %s537 = ssub.s32 2, %s535
        %s538 = sor.u32 %s536, %s537
        %p539 = scmp.lt.s32.totalorder %s538, 0
        %s540 = scalar_select %p539, 0, 255
        %s541 = sshrl.u32 %s540, 1
        %s542 = sor.u32 %s540, %s541
        %s543 = sand.u32 %s542, 85
        %s544 = sshrl.u32 %s543, 1
        %s545 = sor.u32 %s543, %s544
        %s546 = sand.u32 51, %s545
        %s547 = sshrl.u32 %s546, 2
        %s548 = sor.u32 %s546, %s547
        %s549 = sand.u32 15, %s548
        %v550 = vld [vmem:[%s534] sm:%s549]
        %v551 = vunpack.c.l.bf16 %v550
        %v552 = vunpack.c.h.bf16 %v550
        %s553 = sadd.s32 %s361, 1
        %s554 = ssub.s32 3, %s360
        %s555 = ssub.s32 2, %s553
        %s556 = sor.u32 %s554, %s555
        %v557 = vstv %s556
        %vm558 = vcmp.lt.s32.totalorder %v557, 0
        %v559 = vsel %vm558, %v17, %v551
        %s560 = scalar_lea.vmem [#allocation20], 4
        %v561 = vpack.c.bf16 0.0, %v559
        %563 = vst [vmem:[%s560] sm:$0xf] %v561
        %s564 = scalar_lea.vmem %s359, 12
        %s565 = sadd.s32 %s360, 1
        %s566 = ssub.s32 3, %s565
        %p567 = scmp.lt.s32.totalorder %s566, 0
        %s568 = scalar_select %p567, 0, 255
        %s569 = sshrl.u32 %s568, 1
        %s570 = sor.u32 %s568, %s569
        %s571 = sand.u32 %s570, 85
        %s572 = sshrl.u32 %s571, 1
        %s573 = sor.u32 %s571, %s572
        %s574 = sand.u32 51, %s573
        %s575 = sshrl.u32 %s574, 2
        %s576 = sor.u32 %s574, %s575
        %s577 = sand.u32 15, %s576
        %v578 = vld [vmem:[%s564] sm:%s577]
        %v579 = vunpack.c.l.bf16 %v578
        %v580 = vunpack.c.h.bf16 %v578
        %s581 = sadd.s32 %s360, 1
        %s582 = ssub.s32 3, %s581
        %v583 = vstv %s582
        %vm584 = vcmp.lt.s32.totalorder %v583, 0
        %v585 = vsel %vm584, %v17, %v579
        %s586 = scalar_lea.vmem [#allocation20], 8
        %v587 = vpack.c.bf16 0.0, %v585
        %589 = vst [vmem:[%s586] sm:$0xf] %v587
        %s590 = scalar_lea.vmem %s359, 16
        %s591 = sadd.s32 %s360, 1
        %s592 = sadd.s32 %s361, 1
        %s593 = ssub.s32 3, %s591
        %s594 = ssub.s32 2, %s592
        %s595 = sor.u32 %s593, %s594
        %p596 = scmp.lt.s32.totalorder %s595, 0
        %s597 = scalar_select %p596, 0, 255
        %s598 = sshrl.u32 %s597, 1
        %s599 = sor.u32 %s597, %s598
        %s600 = sand.u32 %s599, 85
        %s601 = sshrl.u32 %s600, 1
        %s602 = sor.u32 %s600, %s601
        %s603 = sand.u32 51, %s602
        %s604 = sshrl.u32 %s603, 2
        %s605 = sor.u32 %s603, %s604
        %s606 = sand.u32 15, %s605
        %v607 = vld [vmem:[%s590] sm:%s606]
        %v608 = vunpack.c.l.bf16 %v607
        %v609 = vunpack.c.h.bf16 %v607
        %s610 = sadd.s32 %s360, 1
        %s611 = sadd.s32 %s361, 1
        %s612 = ssub.s32 3, %s610
        %s613 = ssub.s32 2, %s611
        %s614 = sor.u32 %s612, %s613
        %v615 = vstv %s614
        %vm616 = vcmp.lt.s32.totalorder %v615, 0
        %v617 = vsel %vm616, %v17, %v608
        %s618 = scalar_lea.vmem [#allocation20], 12
        %v619 = vpack.c.bf16 0.0, %v617
        %621 = vst [vmem:[%s618] sm:$0xf] %v619
        %s622 = scalar_lea.vmem %s359, 24
        %s623 = sadd.s32 %s360, 2
        %s624 = ssub.s32 3, %s623
        %p625 = scmp.lt.s32.totalorder %s624, 0
        %s626 = scalar_select %p625, 0, 255
        %s627 = sshrl.u32 %s626, 1
        %s628 = sor.u32 %s626, %s627
        %s629 = sand.u32 %s628, 85
        %s630 = sshrl.u32 %s629, 1
        %s631 = sor.u32 %s629, %s630
        %s632 = sand.u32 51, %s631
        %s633 = sshrl.u32 %s632, 2
        %s634 = sor.u32 %s632, %s633
        %s635 = sand.u32 15, %s634
        %v636 = vld [vmem:[%s622] sm:%s635]
        %v637 = vunpack.c.l.bf16 %v636
        %v638 = vunpack.c.h.bf16 %v636
        %s639 = sadd.s32 %s360, 2
        %s640 = ssub.s32 3, %s639
        %v641 = vstv %s640
        %vm642 = vcmp.lt.s32.totalorder %v641, 0
        %v643 = vsel %vm642, %v17, %v637
        %s644 = scalar_lea.vmem [#allocation20], 16
        %v645 = vpack.c.bf16 0.0, %v643
        %647 = vst [vmem:[%s644] sm:$0xf] %v645
        %s648 = scalar_lea.vmem %s359, 28
        %s649 = sadd.s32 %s360, 2
        %s650 = sadd.s32 %s361, 1
        %s651 = ssub.s32 3, %s649
        %s652 = ssub.s32 2, %s650
        %s653 = sor.u32 %s651, %s652
        %p654 = scmp.lt.s32.totalorder %s653, 0
        %s655 = scalar_select %p654, 0, 255
        %s656 = sshrl.u32 %s655, 1
        %s657 = sor.u32 %s655, %s656
        %s658 = sand.u32 %s657, 85
        %s659 = sshrl.u32 %s658, 1
        %s660 = sor.u32 %s658, %s659
        %s661 = sand.u32 51, %s660
        %s662 = sshrl.u32 %s661, 2
        %s663 = sor.u32 %s661, %s662
        %s664 = sand.u32 15, %s663
        %v665 = vld [vmem:[%s648] sm:%s664]
        %v666 = vunpack.c.l.bf16 %v665
        %v667 = vunpack.c.h.bf16 %v665
        %s668 = sadd.s32 %s360, 2
        %s669 = sadd.s32 %s361, 1
        %s670 = ssub.s32 3, %s668
        %s671 = ssub.s32 2, %s669
        %s672 = sor.u32 %s670, %s671
        %v673 = vstv %s672
        %vm674 = vcmp.lt.s32.totalorder %v673, 0
        %v675 = vsel %vm674, %v17, %v666
        %s676 = scalar_lea.vmem [#allocation20], 20
        %v677 = vpack.c.bf16 0.0, %v675
        %679 = vst [vmem:[%s676] sm:$0xf] %v677
        %s680 = scalar_lea.vmem %s359, 36
        %s681 = sadd.s32 %s360, 3
        %s682 = ssub.s32 3, %s681
        %p683 = scmp.lt.s32.totalorder %s682, 0
        %s684 = scalar_select %p683, 0, 255
        %s685 = sshrl.u32 %s684, 1
        %s686 = sor.u32 %s684, %s685
        %s687 = sand.u32 %s686, 85
        %s688 = sshrl.u32 %s687, 1
        %s689 = sor.u32 %s687, %s688
        %s690 = sand.u32 51, %s689
        %s691 = sshrl.u32 %s690, 2
        %s692 = sor.u32 %s690, %s691
        %s693 = sand.u32 15, %s692
        %v694 = vld [vmem:[%s680] sm:%s693]
        %v695 = vunpack.c.l.bf16 %v694
        %v696 = vunpack.c.h.bf16 %v694
        %s697 = sadd.s32 %s360, 3
        %s698 = ssub.s32 3, %s697
        %v699 = vstv %s698
        %vm700 = vcmp.lt.s32.totalorder %v699, 0
        %v701 = vsel %vm700, %v17, %v695
        %s702 = scalar_lea.vmem [#allocation20], 24
        %v703 = vpack.c.bf16 0.0, %v701
        %705 = vst [vmem:[%s702] sm:$0xf] %v703
        %s706 = scalar_lea.vmem %s359, 40
        %s707 = sadd.s32 %s360, 3
        %s708 = sadd.s32 %s361, 1
        %s709 = ssub.s32 3, %s707
        %s710 = ssub.s32 2, %s708
        %s711 = sor.u32 %s709, %s710
        %p712 = scmp.lt.s32.totalorder %s711, 0
        %s713 = scalar_select %p712, 0, 255
        %s714 = sshrl.u32 %s713, 1
        %s715 = sor.u32 %s713, %s714
        %s716 = sand.u32 %s715, 85
        %s717 = sshrl.u32 %s716, 1
        %s718 = sor.u32 %s716, %s717
        %s719 = sand.u32 51, %s718
        %s720 = sshrl.u32 %s719, 2
        %s721 = sor.u32 %s719, %s720
        %s722 = sand.u32 15, %s721
        %v723 = vld [vmem:[%s706] sm:%s722]
        %v724 = vunpack.c.l.bf16 %v723
        %v725 = vunpack.c.h.bf16 %v723
        %s726 = sadd.s32 %s360, 3
        %s727 = sadd.s32 %s361, 1
        %s728 = ssub.s32 3, %s726
        %s729 = ssub.s32 2, %s727
        %s730 = sor.u32 %s728, %s729
        %v731 = vstv %s730
        %vm732 = vcmp.lt.s32.totalorder %v731, 0
        %v733 = vsel %vm732, %v17, %v724
        %s734 = scalar_lea.vmem [#allocation20], 28
        %v735 = vpack.c.bf16 0.0, %v733
        %737 = vst [vmem:[%s734] sm:$0xf] %v735
        %s738 = scalar_lea.vmem [#allocation20], 32
        %v739 = vpack.c.bf16 0.0, %v17
        %741 = vst [vmem:[%s738] sm:$0xf] %v739
        %s742 = scalar_lea.vmem [#allocation20], 36
        %v743 = vpack.c.bf16 0.0, %v17
        %745 = vst [vmem:[%s742] sm:$0xf] %v743
        %s746 = scalar_lea.vmem [#allocation20], 40
        %v747 = vpack.c.bf16 0.0, %v17
        %749 = vst [vmem:[%s746] sm:$0xf] %v747
        %s750 = scalar_lea.vmem [#allocation20], 44
        %v751 = vpack.c.bf16 0.0, %v17
        %753 = vst [vmem:[%s750] sm:$0xf] %v751
        %s754 = scalar_lea.vmem [#allocation20], 48
        %v755 = vpack.c.bf16 0.0, %v17
        %757 = vst [vmem:[%s754] sm:$0xf] %v755
        %s758 = scalar_lea.vmem [#allocation20], 52
        %v759 = vpack.c.bf16 0.0, %v17
        %761 = vst [vmem:[%s758] sm:$0xf] %v759
        %s762 = scalar_lea.vmem [#allocation20], 56
        %v763 = vpack.c.bf16 0.0, %v17
        %765 = vst [vmem:[%s762] sm:$0xf] %v763
        %s766 = scalar_lea.vmem [#allocation20], 60
        %v767 = vpack.c.bf16 0.0, %v17
        %769 = vst [vmem:[%s766] sm:$0xf] %v767
        %s770 = scalar_lea.vmem [#allocation20], 64
        %v771 = vpack.c.bf16 0.0, %v17
        %773 = vst [vmem:[%s770] sm:$0xf] %v771
        %s774 = scalar_lea.vmem [#allocation20], 68
        %v775 = vpack.c.bf16 0.0, %v17
        %777 = vst [vmem:[%s774] sm:$0xf] %v775
        %s778 = scalar_lea.vmem [#allocation20], 72
        %v779 = vpack.c.bf16 0.0, %v17
        %781 = vst [vmem:[%s778] sm:$0xf] %v779
        %s782 = scalar_lea.vmem [#allocation20], 76
        %v783 = vpack.c.bf16 0.0, %v17
        %785 = vst [vmem:[%s782] sm:$0xf] %v783
        %s786 = scalar_lea.vmem [#allocation20], 80
        %v787 = vpack.c.bf16 0.0, %v17
        %789 = vst [vmem:[%s786] sm:$0xf] %v787
        %s790 = scalar_lea.vmem [#allocation20], 84
        %v791 = vpack.c.bf16 0.0, %v17
        %793 = vst [vmem:[%s790] sm:$0xf] %v791
        %s794 = scalar_lea.vmem [#allocation20], 88
        %v795 = vpack.c.bf16 0.0, %v17
        %797 = vst [vmem:[%s794] sm:$0xf] %v795
        %s798 = scalar_lea.vmem [#allocation20], 92
        %v799 = vpack.c.bf16 0.0, %v17
        %801 = vst [vmem:[%s798] sm:$0xf] %v799
        %s802 = scalar_lea.vmem [#allocation20], 96
        %v803 = vpack.c.bf16 0.0, %v17
        %805 = vst [vmem:[%s802] sm:$0xf] %v803
        %s806 = scalar_lea.vmem [#allocation20], 100
        %v807 = vpack.c.bf16 0.0, %v17
        %809 = vst [vmem:[%s806] sm:$0xf] %v807
        %s810 = scalar_lea.vmem [#allocation20], 104
        %v811 = vpack.c.bf16 0.0, %v17
        %813 = vst [vmem:[%s810] sm:$0xf] %v811
        %s814 = scalar_lea.vmem [#allocation20], 108
        %v815 = vpack.c.bf16 0.0, %v17
        %817 = vst [vmem:[%s814] sm:$0xf] %v815
        %s818 = scalar_lea.vmem [#allocation20], 112
        %v819 = vpack.c.bf16 0.0, %v17
        %821 = vst [vmem:[%s818] sm:$0xf] %v819
        %s822 = scalar_lea.vmem [#allocation20], 116
        %v823 = vpack.c.bf16 0.0, %v17
        %825 = vst [vmem:[%s822] sm:$0xf] %v823
        %s826 = scalar_lea.vmem [#allocation20], 120
        %v827 = vpack.c.bf16 0.0, %v17
        %829 = vst [vmem:[%s826] sm:$0xf] %v827
        %s830 = scalar_lea.vmem [#allocation20], 124
        %v831 = vpack.c.bf16 0.0, %v17
        %833 = vst [vmem:[%s830] sm:$0xf] %v831
        %v834 = vld [vmem:[%s382] sm:$0x1]
        %v835 = vlaneseq
        %v836 = vshrl.u32 %v835, 7
        %vm838 = vcmp.lt.s32.totalorder %v836, 1
        %v839 = vsel %vm838, %v834, %v21
        %841 = vst [vmem:[#allocation21] sm:$0x1] %v839
        %s842 = scalar_lea.vmem %s382, 1
        %s843 = sadd.s32 %s383, 1
        %s844 = ssub.s32 2, %s843
        %p845 = scmp.lt.s32.totalorder %s844, 0
        %s846 = scalar_select %p845, 0, 255
        %s847 = sand.u32 1, %s846
        %s848 = sand.u32 1, %s847
        %v849 = vld [vmem:[%s842] sm:%s848]
        %s850 = sadd.s32 %s383, 1
        %s851 = ssub.s32 2, %s850
        %v852 = vstv %s851
        %vm853 = vcmp.lt.s32.totalorder %v852, 0
        %v854 = vsel %vm853, %v21, %v849
        %v855 = vlaneseq
        %v856 = vshrl.u32 %v855, 7
        %vm858 = vcmp.lt.s32.totalorder %v856, 1
        %v859 = vsel %vm858, %v854, %v21
        %s860 = scalar_lea.vmem [#allocation21], 1
        %862 = vst [vmem:[%s860] sm:$0x1] %v859
        %p864 = scmp.eq.s32.totalorder %s35, 0
        // Predicated region
        $region37: #{discriminator_forward.17} parent=35 // pred_check
          %p865 = pneg %p864
        $region38: #{discriminator_forward.17} parent=35 // pred_check_branch
          %867 = sbr.rel (%p865) target = $region40
        $region39: #{discriminator_forward.17} parent=35 // pred_region
          %868 = vst [vmem:[#allocation2] sm:$0xff] 0.0
          %869 = vst [vmem:[#allocation2 + $0x8] sm:$0xff] 0.0
          %870 = vst [vmem:[#allocation2 + $0x10] sm:$0xff] 0.0
          %871 = vst [vmem:[#allocation2 + $0x18] sm:$0xff] 0.0
          %872 = vst [vmem:[#allocation2 + $0x20] sm:$0xff] 0.0
          %873 = vst [vmem:[#allocation2 + $0x28] sm:$0xff] 0.0
          %874 = vst [vmem:[#allocation2 + $0x30] sm:$0xff] 0.0
          %875 = vst [vmem:[#allocation2 + $0x38] sm:$0xff] 0.0
        $region40: #{discriminator_forward.17} parent=35 // pred_fallthru
          _
        %v876 = vld [vmem:[#allocation2] sm:$0xff]
        %v877 = vld [vmem:[#allocation2 + $0x8] sm:$0xff]
        %v878 = vld [vmem:[#allocation2 + $0x10] sm:$0xff]
        %v879 = vld [vmem:[#allocation2 + $0x18] sm:$0xff]
        %v880 = vld [vmem:[#allocation2 + $0x20] sm:$0xff]
        %v881 = vld [vmem:[#allocation2 + $0x28] sm:$0xff]
        %v882 = vld [vmem:[#allocation2 + $0x30] sm:$0xff]
        %v883 = vld [vmem:[#allocation2 + $0x38] sm:$0xff]
        %v884 = vld [vmem:[#allocation19] sm:$0xf]
        %v885 = vld [vmem:[#allocation19 + $0x4] sm:$0xf]
        %v886 = vld [vmem:[#allocation19 + $0x8] sm:$0xf]
        %v887 = vld [vmem:[#allocation19 + $0xc] sm:$0xf]
        %v888 = vld [vmem:[#allocation20] sm:$0xff]
        %v889 = vld [vmem:[#allocation20 + $0x8] sm:$0xff]
        %v890 = vld [vmem:[#allocation20 + $0x10] sm:$0xff]
        %v891 = vld [vmem:[#allocation20 + $0x18] sm:$0xff]
        %v892 = vld [vmem:[#allocation20 + $0x20] sm:$0xff]
        %v893 = vld [vmem:[#allocation20 + $0x28] sm:$0xff]
        %v894 = vld [vmem:[#allocation20 + $0x30] sm:$0xff]
        %v895 = vld [vmem:[#allocation20 + $0x38] sm:$0xff]
        %v896 = vld [vmem:[#allocation20 + $0x40] sm:$0xff]
        %v897 = vld [vmem:[#allocation20 + $0x48] sm:$0xff]
        %v898 = vld [vmem:[#allocation20 + $0x50] sm:$0xff]
        %v899 = vld [vmem:[#allocation20 + $0x58] sm:$0xff]
        %v900 = vld [vmem:[#allocation20 + $0x60] sm:$0xff]
        %v901 = vld [vmem:[#allocation20 + $0x68] sm:$0xff]
        %v902 = vld [vmem:[#allocation20 + $0x70] sm:$0xff]
        %v903 = vld [vmem:[#allocation20 + $0x78] sm:$0xff]
        %v908 = vunpack.c.l.b16 %v884
        %v909 = vunpack.c.l.b16 %v885
        %v910 = vunpack.c.l.b16 %v886
        %v911 = vunpack.c.l.b16 %v887
        %v912 = vpack.c.b16 %v909, %v908
        %v913 = vpack.c.b16 %v911, %v910
        %v932 = vunpack.c.l.b16 %v888
        %v933 = vunpack.c.h.b16 %v888
        %v934 = vunpack.c.l.b16 %v889
        %v935 = vunpack.c.h.b16 %v889
        %v936 = vunpack.c.l.b16 %v890
        %v937 = vunpack.c.h.b16 %v890
        %v938 = vunpack.c.l.b16 %v891
        %v939 = vunpack.c.h.b16 %v891
        %v940 = vunpack.c.l.b16 %v892
        %v941 = vunpack.c.h.b16 %v892
        %v942 = vunpack.c.l.b16 %v893
        %v943 = vunpack.c.h.b16 %v893
        %v944 = vunpack.c.l.b16 %v894
        %v945 = vunpack.c.h.b16 %v894
        %v946 = vunpack.c.l.b16 %v895
        %v947 = vunpack.c.h.b16 %v895
        %v948 = vunpack.c.l.b16 %v896
        %v949 = vunpack.c.h.b16 %v896
        %v950 = vunpack.c.l.b16 %v897
        %v951 = vunpack.c.h.b16 %v897
        %v952 = vunpack.c.l.b16 %v898
        %v953 = vunpack.c.h.b16 %v898
        %v954 = vunpack.c.l.b16 %v899
        %v955 = vunpack.c.h.b16 %v899
        %v956 = vunpack.c.l.b16 %v900
        %v957 = vunpack.c.h.b16 %v900
        %v958 = vunpack.c.l.b16 %v901
        %v959 = vunpack.c.h.b16 %v901
        %v960 = vunpack.c.l.b16 %v902
        %v961 = vunpack.c.h.b16 %v902
        %v962 = vunpack.c.l.b16 %v903
        %v963 = vunpack.c.h.b16 %v903
        %v964 = vpack.c.b16 %v934, %v932
        %v965 = vpack.c.b16 %v935, %v933
        %v966 = vpack.c.b16 %v938, %v936
        %v967 = vpack.c.b16 %v939, %v937
        %v968 = vpack.c.b16 %v942, %v940
        %v969 = vpack.c.b16 %v943, %v941
        %v970 = vpack.c.b16 %v946, %v944
        %v971 = vpack.c.b16 %v947, %v945
        %v972 = vpack.c.b16 %v950, %v948
        %v973 = vpack.c.b16 %v951, %v949
        %v974 = vpack.c.b16 %v954, %v952
        %v975 = vpack.c.b16 %v955, %v953
        %v976 = vpack.c.b16 %v958, %v956
        %v977 = vpack.c.b16 %v959, %v957
        %v978 = vpack.c.b16 %v962, %v960
        %v979 = vpack.c.b16 %v963, %v961
        %996 = vmatprep.subr.bf16.mxu0 %v965
        %997 = vmatpush1.bf16.msra.mxu0 %v964
        %998 = vmatprep.subr.bf16.mxu0 %v967
        %999 = vmatpush1.bf16.msra.mxu0 %v966
        %1000 = vmatprep.subr.bf16.mxu0 %v969
        %1001 = vmatpush1.bf16.msra.mxu0 %v968
        %1002 = vmatprep.subr.bf16.mxu0 %v971
        %1003 = vmatpush1.bf16.msra.mxu0 %v970
        %1004 = vmatprep.subr.bf16.mxu0 %v973
        %1005 = vmatpush1.bf16.msra.mxu0 %v972
        %1006 = vmatprep.subr.bf16.mxu0 %v975
        %1007 = vmatpush1.bf16.msra.mxu0 %v974
        %1008 = vmatprep.subr.bf16.mxu0 %v977
        %1009 = vmatpush1.bf16.msra.mxu0 %v976
        %1010 = vmatprep.subr.bf16.mxu0 %v979
        %1011 = vmatpush1.bf16.msra.mxu0 %v978
        %1012 = vmatprep.subr.bf16.mxu0 0
        %1013 = vmatpush1.bf16.msra.mxu0 0
        %1014 = vmatprep.subr.bf16.mxu0 0
        %1015 = vmatpush1.bf16.msra.mxu0 0
        %1016 = vmatprep.subr.bf16.mxu0 0
        %1017 = vmatpush1.bf16.msra.mxu0 0
        %1018 = vmatprep.subr.bf16.mxu0 0
        %1019 = vmatpush1.bf16.msra.mxu0 0
        %1020 = vmatprep.subr.bf16.mxu0 0
        %1021 = vmatpush1.bf16.msra.mxu0 0
        %1022 = vmatprep.subr.bf16.mxu0 0
        %1023 = vmatpush1.bf16.msra.mxu0 0
        %1024 = vmatprep.subr.bf16.mxu0 0
        %1025 = vmatpush1.bf16.msra.mxu0 0
        %1026 = vmatprep.subr.bf16.mxu0 0
        %1027 = vmatpush1.bf16.msra.mxu0 0
        %1028 = vmatprep.mubr.bf16.mxu0 0
        %1029 = vmatmul.mubr.bf16.gmra.mrb[0].mxu0 %v912
        %v1030 = vpop.f32.mrb[0].mxu0
        %v1031 = vadd.f32 0.0, %v1030
        %v1032 = vpop.f32.mrb[0].mxu0
        %v1033 = vadd.f32 0.0, %v1032
        %v1034 = vpop.f32.mrb[0].mxu0
        %v1035 = vadd.f32 0.0, %v1034
        %v1036 = vpop.f32.mrb[0].mxu0
        %v1037 = vadd.f32 0.0, %v1036
        %1038 = vmatprep.mubr.bf16.mxu0 0
        %1039 = vmatmul.mubr.bf16.gmra.mrb[0].mxu0 %v913
        %v1040 = vpop.f32.mrb[0].mxu0
        %v1041 = vadd.f32 0.0, %v1040
        %v1042 = vpop.f32.mrb[0].mxu0
        %v1043 = vadd.f32 0.0, %v1042
        %v1044 = vpop.f32.mrb[0].mxu0
        %v1045 = vadd.f32 0.0, %v1044
        %v1046 = vpop.f32.mrb[0].mxu0
        %v1047 = vadd.f32 0.0, %v1046
        %1048 = vdwg.mxu0
        %v1049 = vadd.f32 %v876, %v1031
        %v1050 = vadd.f32 %v877, %v1033
        %v1051 = vadd.f32 %v878, %v1035
        %v1052 = vadd.f32 %v879, %v1037
        %v1053 = vadd.f32 %v880, %v1041
        %v1054 = vadd.f32 %v881, %v1043
        %v1055 = vadd.f32 %v882, %v1045
        %v1056 = vadd.f32 %v883, %v1047
        %1057 = vst [vmem:[#allocation2] sm:$0xff] %v1049
        %1058 = vst [vmem:[#allocation2 + $0x8] sm:$0xff] %v1050
        %1059 = vst [vmem:[#allocation2 + $0x10] sm:$0xff] %v1051
        %1060 = vst [vmem:[#allocation2 + $0x18] sm:$0xff] %v1052
        %1061 = vst [vmem:[#allocation2 + $0x20] sm:$0xff] %v1053
        %1062 = vst [vmem:[#allocation2 + $0x28] sm:$0xff] %v1054
        %1063 = vst [vmem:[#allocation2 + $0x30] sm:$0xff] %v1055
        %1064 = vst [vmem:[#allocation2 + $0x38] sm:$0xff] %v1056
        // Predicated region
        $region41: #{discriminator_forward.17} parent=35 // pred_check
          %p1065 = pneg %p864
        $region42: #{discriminator_forward.17} parent=35 // pred_check_branch
          %1067 = sbr.rel (%p1065) target = $region44
        $region43: #{discriminator_forward.17} parent=35 // pred_region
          %v1068 = vld [vmem:[#allocation2] sm:$0xff]
          %v1069 = vld [vmem:[#allocation2 + $0x8] sm:$0xff]
          %v1070 = vld [vmem:[#allocation2 + $0x10] sm:$0xff]
          %v1071 = vld [vmem:[#allocation2 + $0x18] sm:$0xff]
          %v1072 = vld [vmem:[#allocation2 + $0x20] sm:$0xff]
          %v1073 = vld [vmem:[#allocation2 + $0x28] sm:$0xff]
          %v1074 = vld [vmem:[#allocation2 + $0x30] sm:$0xff]
          %v1075 = vld [vmem:[#allocation2 + $0x38] sm:$0xff]
          %v1076 = vld [vmem:[%s373] sm:$0x3]
          %v1078 = vlaneseq
          %v1079 = vshrl.u32 %v1078, 7
          %v1080 = vsub.s32 0, %v1079
          %v1081 = vrot.slane %v1076, %v1080
          %v1082 = vlaneseq
          %v1083 = vshrl.u32 %v1082, 7
          %v1084 = vsub.s32 1, %v1083
          %v1085 = vrot.slane %v1076, %v1084
          %v1088 = vmul.f32 %v1068, %v1081
          %v1089 = vmul.f32 %v1069, %v1085
          %v1090 = vmul.f32 %v1070, %v1081
          %v1091 = vmul.f32 %v1071, %v1085
          %v1092 = vmul.f32 %v1072, %v1081
          %v1093 = vmul.f32 %v1073, %v1085
          %v1094 = vmul.f32 %v1074, %v1081
          %v1095 = vmul.f32 %v1075, %v1085
          %v1096 = vld [vmem:[#allocation21] sm:$0x3]
          %v1098 = vlaneseq
          %v1099 = vshrl.u32 %v1098, 7
          %v1100 = vsub.s32 0, %v1099
          %v1101 = vrot.slane %v1096, %v1100
          %v1102 = vlaneseq
          %v1103 = vshrl.u32 %v1102, 7
          %v1104 = vsub.s32 1, %v1103
          %v1105 = vrot.slane %v1096, %v1104
          %v1108 = vadd.f32 %v1088, %v1101
          %v1109 = vadd.f32 %v1089, %v1105
          %v1110 = vadd.f32 %v1090, %v1101
          %v1111 = vadd.f32 %v1091, %v1105
          %v1112 = vadd.f32 %v1092, %v1101
          %v1113 = vadd.f32 %v1093, %v1105
          %v1114 = vadd.f32 %v1094, %v1101
          %v1115 = vadd.f32 %v1095, %v1105
          %v1116 = vpack.c.bf16 %v1110, %v1108
          %v1117 = vpack.c.bf16 %v1111, %v1109
          %v1118 = vpack.c.bf16 %v1114, %v1112
          %v1119 = vpack.c.bf16 %v1115, %v1113
          %v1124 = vunpack.c.l.b16 %v1116
          %v1125 = vunpack.c.l.b16 %v1117
          %v1126 = vunpack.c.h.b16 %v1116
          %v1127 = vunpack.c.h.b16 %v1117
          %v1128 = vunpack.c.l.b16 %v1118
          %v1129 = vunpack.c.l.b16 %v1119
          %v1130 = vunpack.c.h.b16 %v1118
          %v1131 = vunpack.c.h.b16 %v1119
          %v1132 = vpack.c.b16 %v1125, %v1124
          %v1133 = vpack.c.b16 %v1127, %v1126
          %v1134 = vpack.c.b16 %v1129, %v1128
          %v1135 = vpack.c.b16 %v1131, %v1130
          %1140 = vst [vmem:[%s328] sm:$0xff] %v1132
          %1141 = vst [vmem:[%s328 + $0x8] sm:$0xff] %v1133
          %1142 = vst [vmem:[%s328 + $0x10] sm:$0xff] %v1134
          %1143 = vst [vmem:[%s328 + $0x18] sm:$0xff] %v1135
        $region44: #{discriminator_forward.17} parent=35 // pred_fallthru
          _
        %s1144 = sand.u32 %s165, 1
        %s1145 = sand.u32 %s165, 1
        %s1146 = smul.addr %s1145, 32
        %s1147 = scalar_lea.vmem [#allocation18], %s1146
        // Predicated region
        $region45: #{discriminator_forward.17} parent=35 // pred_check
          %p1148 = pneg %p175
        $region46: #{discriminator_forward.17} parent=35 // pred_check_branch
          %1150 = sbr.rel (%p1148) target = $region48
        $region47: #{discriminator_forward.17} parent=35 // pred_region
          %s1151 = smul.u32 4, %s33
          %s1152 = smul.u32 2, %s34
          %s1153 = smul.addr %s1151, 4
          %s1154 = sadd.s32 %s1152, %s1153
          %s1155 = smul.addr %s1154, 4
          %s1156 = scalar_lea.vmem %s6, %s1155
          // Predicated region
          $region49: #{discriminator_forward.17} parent=47 // pred_check
            _
          $region50: #{discriminator_forward.17} parent=47 // pred_check_branch
            %1158 = sbr.rel (0) target = $region52
          $region51: #{discriminator_forward.17} parent=47 // pred_region
            // Predicated region
            $region53: #{discriminator_forward.17} parent=51 // pred_check
              _
            $region54: #{discriminator_forward.17} parent=51 // pred_check_branch
              %1160 = sbr.rel (0) target = $region56
            $region55: #{discriminator_forward.17} parent=51 // pred_region
              // Predicated region
              $region68: #{discriminator_forward.17} parent=55 // pred_check
                _
              $region69: #{discriminator_forward.17} parent=55 // pred_check_branch
                %1181 = sbr.rel (0) target = $region71
              $region70: #{discriminator_forward.17} parent=55 // pred_region
                loop: start=0, step=1, limit=1
                $region72: #{discriminator_forward.17} parent=70 // loop_pre_header
                  _
                $region73: #{discriminator_forward.17} parent=70 // loop_header
                  %s1183 = sphi 0, %s1187
                  %p1184 = scmp.ge.s32.totalorder %s1183, 1
                  %s1188 = sphi %s1147, %s1147
                  %s1189 = sphi %s1156, %s1156
                $region74: #{discriminator_forward.17} parent=70 // loop_header_branch
                  %1186 = sbr.rel (%p1184) target = $region78
                $region75: #{discriminator_forward.17} parent=70 // loop_body
                  %v1190 = vld [vmem:[%s1188] sm:$0xff]
                  %1191 = vst [vmem:[%s1189] sm:$0xff] %v1190
                  %v1192 = vld [vmem:[%s1188 + $0x8] sm:$0xff]
                  %1193 = vst [vmem:[%s1189 + $0x10] sm:$0xff] %v1192
                  %v1194 = vld [vmem:[%s1188 + $0x10] sm:$0xff]
                  %1195 = vst [vmem:[%s1189 + $0x20] sm:$0xff] %v1194
                  %v1196 = vld [vmem:[%s1188 + $0x18] sm:$0xff]
                  %1197 = vst [vmem:[%s1189 + $0x30] sm:$0xff] %v1196
                $region76: #{discriminator_forward.17} parent=70 // loop_footer
                  %s1187 = sadd.s32 1, %s1183
                $region77: #{discriminator_forward.17} parent=70 // loop_footer_branch
                  %1182 = sbr.rel target = $region73
                $region78: #{discriminator_forward.17} parent=70 // loop_exit
                  _
              $region71: #{discriminator_forward.17} parent=55 // pred_fallthru
                _
              // Predicated region
              $region79: #{discriminator_forward.17} parent=55 // pred_check
                _
              $region80: #{discriminator_forward.17} parent=55 // pred_check_branch
                %1199 = sbr.rel target = $region82
              $region81: #{discriminator_forward.17} parent=55 // pred_region
                _
              $region82: #{discriminator_forward.17} parent=55 // pred_fallthru
                _
            $region56: #{discriminator_forward.17} parent=51 // pred_fallthru
              _
            // Predicated region
            $region57: #{discriminator_forward.17} parent=51 // pred_check
              _
            $region58: #{discriminator_forward.17} parent=51 // pred_check_branch
              %1162 = sbr.rel target = $region60
            $region59: #{discriminator_forward.17} parent=51 // pred_region
              loop: start=0, step=1, limit=1
              $region61: #{discriminator_forward.17} parent=59 // loop_pre_header
                _
              $region62: #{discriminator_forward.17} parent=59 // loop_header
                %s1165 = sphi 0, %s1169
                %p1166 = scmp.ge.s32.totalorder %s1165, 1
                %s1170 = sphi %s1147, %s1147
                %s1171 = sphi %s1156, %s1156
              $region63: #{discriminator_forward.17} parent=59 // loop_header_branch
                %1168 = sbr.rel (%p1166) target = $region67
              $region64: #{discriminator_forward.17} parent=59 // loop_body
                %v1172 = vld [vmem:[%s1170] sm:$0xff]
                %1173 = vst [vmem:[%s1171] sm:$0xff] %v1172
                %v1174 = vld [vmem:[%s1170 + $0x8] sm:$0xff]
                %1175 = vst [vmem:[%s1171 + $0x10] sm:$0xff] %v1174
                %v1176 = vld [vmem:[%s1170 + $0x10] sm:$0xff]
                %1177 = vst [vmem:[%s1171 + $0x20] sm:$0xff] %v1176
                %v1178 = vld [vmem:[%s1170 + $0x18] sm:$0xff]
                %1179 = vst [vmem:[%s1171 + $0x30] sm:$0xff] %v1178
              $region65: #{discriminator_forward.17} parent=59 // loop_footer
                %s1169 = sadd.s32 1, %s1165
              $region66: #{discriminator_forward.17} parent=59 // loop_footer_branch
                %1164 = sbr.rel target = $region62
              $region67: #{discriminator_forward.17} parent=59 // loop_exit
                _
            $region60: #{discriminator_forward.17} parent=51 // pred_fallthru
              _
          $region52: #{discriminator_forward.17} parent=47 // pred_fallthru
            _
          %1200 = vnop
        $region48: #{discriminator_forward.17} parent=35 // pred_fallthru
          _
      $region36: #{discriminator_forward.17} parent=5 // pred_fallthru
        _
      %p1201 = scmp.le.s32.totalorder 2, %s23
      // Predicated region
      $region83: #{discriminator_forward.17} parent=5 // pred_check
        %p1202 = pneg %p1201
      $region84: #{discriminator_forward.17} parent=5 // pred_check_branch
        %1204 = sbr.rel (%p1202) target = $region86
      $region85: #{discriminator_forward.17} parent=5 // pred_region
        %s1205 = ssub.s32 %s23, 2
        // Predicated region
        $region87: #{discriminator_forward.17} parent=85 // pred_check
          %p1206 = pneg %p181
        $region88: #{discriminator_forward.17} parent=85 // pred_check_branch
          %1208 = sbr.rel (%p1206) target = $region90
        $region89: #{discriminator_forward.17} parent=85 // pred_region
          %s1209 = sand.u32 %s166, 1
          %s1210 = sand.u32 %s166, 1
          %s1211 = smul.addr %s1210, 32
          %s1212 = scalar_lea.vmem [#allocation18], %s1211
        $region90: #{discriminator_forward.17} parent=85 // pred_fallthru
          _
      $region86: #{discriminator_forward.17} parent=5 // pred_fallthru
        _
    $region6: #{discriminator_forward.17} parent=1 // loop_footer
      %s27 = sadd.s32 1, %s23
    $region7: #{discriminator_forward.17} parent=1 // loop_footer_branch
      %22 = sbr.rel target = $region3
    $region8: #{discriminator_forward.17} parent=1 // loop_exit
      _

// kernel: discriminator_forward.16
$region0: #{discriminator_forward.16}
  #allocation0 [shape = 'u32[]', space=smem, size = 0x4, offset = 0x4, fixed_abs, tag = 'smem constant byte address 0x4 - core index']
  #allocation1 [shape = 'u32[144,128]{1,0:T(1,128)}', space=vmem, size = 0x12000, scoped, tag = 'internal scratch']
  #allocation2 [shape = 'f32[8,128]{1,0:T(8,128)}', space=vmem, size = 0x1000, scoped, tag = 'scratch operand']
  #allocation3 [shape = 'u32[2048]{0}', space=vmem, size = 0x2000, scoped, tag = 'scoped memory for discriminator_forward.16']
  #allocation4 [shape = 'u32[2048]{0}', space=vmem, size = 0x2000, scoped, tag = 'scoped memory for discriminator_forward.16']
  #allocation5 [shape = 'u32[2048]{0}', space=vmem, size = 0x2000, scoped, tag = 'scoped memory for discriminator_forward.16']
  #allocation6 [shape = 'u32[2048]{0}', space=vmem, size = 0x2000, scoped, tag = 'scoped memory for discriminator_forward.16']
  #allocation7 [shape = 'u32[2048]{0}', space=vmem, size = 0x2000, scoped, tag = 'scoped memory for discriminator_forward.16']
  #allocation8 [shape = 'u32[2048]{0}', space=vmem, size = 0x2000, scoped, tag = 'scoped memory for discriminator_forward.16']
  #allocation9 [shape = 'u32[2048]{0}', space=vmem, size = 0x2000, scoped, tag = 'scoped memory for discriminator_forward.16']
  #allocation10 [shape = 'u32[2048]{0}', space=vmem, size = 0x2000, scoped, tag = 'scoped memory for discriminator_forward.16']
  #allocation11 [shape = 'u32[2048]{0}', space=vmem, size = 0x2000, scoped, tag = 'scoped memory for discriminator_forward.16']
  #allocation12 [shape = 'u32[2048]{0}', space=vmem, size = 0x2000, scoped, tag = 'scoped memory for discriminator_forward.16']
  %s0 = inlined_call_operand.vmem [shape: bf16[512,1], index: 0, kind: input, shape index: {}]
  %s1 = inlined_call_operand.<no memory space> [shape: bf16[], index: 1, kind: input, shape index: {}]
  %s2 = inlined_call_operand.vmem [shape: bf16[2,512], index: 2, kind: input, shape index: {}]
  %s3 = inlined_call_operand.vmem [shape: f32[8,128], index: 3, kind: output, shape index: {}]
  %s4 = sld [smem:[#allocation0]]
  $region26: #{discriminator_forward.16} parent=0
    _
  %s6 = ssub.s32 1, %s4
  %s7 = scalar_select 0, %s6, %s4
  %v8 = vstv %s1
  %v9 = vunpack.i.l.bf16 %v8
  %v11 = vunpack.i.h.bf16 %v8
  %v13 = vstv %s1
  %v14 = vunpack.i.l.bf16 %v13
  %v16 = vunpack.i.h.bf16 %v13
  $region1: #{discriminator_forward.16} parent=0
    #allocation13 [shape = 'u8[8192]{0}', space=vmem, size = 0x2000, dematerialized = true, scoped, tag = 'FusionAdapter Buffer %fusion.42 = bf16[8,512]{1,0:T(8,128)(2,1)} fusion(%param_2.93, %param_1.110), kind=kLoop, calls=%fused_computation.50.clone, metadata={op_name="jit(discriminator_forward)/jit(_pad)/pad" stack_frame_id=107}']
    #allocation14 [shape = 'u8[131072]{0}', space=vmem, size = 0x20000, dematerialized = true, scoped, tag = 'FusionAdapter Buffer %fusion.7 = bf16[512,128]{1,0:T(8,128)(2,1)} fusion(%param_0.123, %param_1.110), kind=kLoop, calls=%fused_computation.9.clone, metadata={op_name="jit(discriminator_forward)/jit(_pad)/pad" stack_frame_id=111}']
    // Predicated region
    $region2: #{discriminator_forward.16} parent=1 // pred_check
      _
    $region3: #{discriminator_forward.16} parent=1 // pred_check_branch
      %19 = sbr.rel (0) target = $region5
    $region4: #{discriminator_forward.16} parent=1 // pred_region
      _
    $region5: #{discriminator_forward.16} parent=1 // pred_fallthru
      _
    // Predicated region
    $region6: #{discriminator_forward.16} parent=1 // pred_check
      _
    $region7: #{discriminator_forward.16} parent=1 // pred_check_branch
      %21 = sbr.rel (0) target = $region9
    $region8: #{discriminator_forward.16} parent=1 // pred_region
      _
    $region9: #{discriminator_forward.16} parent=1 // pred_fallthru
      _
    %s23 = sor.u32 3, 1
    %s24 = sand.u32 %s23, 1
    %v25 = vld [vmem:[%s2] sm:%s24]
    %v26 = vunpack.c.l.bf16 %v25
    %v27 = vunpack.c.h.bf16 %v25
    %v28 = vlaneseq
    %v29 = vshrl.u32 %v28, 7
    %vm31 = vcmp.lt.s32.totalorder %v29, 2
    %v32 = vsel %vm31, %v26, %v9
    %v33 = vpack.c.bf16 0.0, %v32
    %35 = vst [vmem:[#allocation13] sm:$0xf] %v33
    %s36 = scalar_lea.vmem %s2, 1
    %s38 = sor.u32 3, 1
    %s39 = sand.u32 %s38, 1
    %v40 = vld [vmem:[%s36] sm:%s39]
    %v41 = vunpack.c.l.bf16 %v40
    %v42 = vunpack.c.h.bf16 %v40
    %v43 = vlaneseq
    %v44 = vshrl.u32 %v43, 7
    %vm46 = vcmp.lt.s32.totalorder %v44, 2
    %v47 = vsel %vm46, %v41, %v9
    %s48 = scalar_lea.vmem [#allocation13], 4
    %v49 = vpack.c.bf16 0.0, %v47
    %51 = vst [vmem:[%s48] sm:$0xf] %v49
    %s52 = scalar_lea.vmem %s2, 2
    %s54 = sor.u32 3, 1
    %s55 = sand.u32 %s54, 1
    %v56 = vld [vmem:[%s52] sm:%s55]
    %v57 = vunpack.c.l.bf16 %v56
    %v58 = vunpack.c.h.bf16 %v56
    %v59 = vlaneseq
    %v60 = vshrl.u32 %v59, 7
    %vm62 = vcmp.lt.s32.totalorder %v60, 2
    %v63 = vsel %vm62, %v57, %v9
    %s64 = scalar_lea.vmem [#allocation13], 8
    %v65 = vpack.c.bf16 0.0, %v63
    %67 = vst [vmem:[%s64] sm:$0xf] %v65
    %s68 = scalar_lea.vmem %s2, 3
    %s70 = sor.u32 3, 1
    %s71 = sand.u32 %s70, 1
    %v72 = vld [vmem:[%s68] sm:%s71]
    %v73 = vunpack.c.l.bf16 %v72
    %v74 = vunpack.c.h.bf16 %v72
    %v75 = vlaneseq
    %v76 = vshrl.u32 %v75, 7
    %vm78 = vcmp.lt.s32.totalorder %v76, 2
    %v79 = vsel %vm78, %v73, %v9
    %s80 = scalar_lea.vmem [#allocation13], 12
    %v81 = vpack.c.bf16 0.0, %v79
    %83 = vst [vmem:[%s80] sm:$0xf] %v81
    %s85 = sor.u32 255, 127
    %s86 = sand.u32 %s85, 85
    %s87 = sshrl.u32 %s86, 1
    %s88 = sor.u32 %s86, %s87
    %s89 = sand.u32 51, %s88
    %s90 = sshrl.u32 %s89, 2
    %s91 = sor.u32 %s89, %s90
    %s92 = sand.u32 15, %s91
    %v93 = vld [vmem:[%s0] sm:%s92]
    %v94 = vunpack.c.l.bf16 %v93
    %v95 = vunpack.c.h.bf16 %v93
    %v96 = vlaneseq
    %v97 = vand.u32 %v96, 127
    %vm99 = vcmp.lt.s32.totalorder %v97, 1
    %v100 = vsel %vm99, %v94, %v14
    %v101 = vpack.c.bf16 0.0, %v100
    %103 = vst [vmem:[#allocation14] sm:$0xf] %v101
    %s104 = scalar_lea.vmem %s0, 4
    %s106 = sor.u32 255, 127
    %s107 = sand.u32 %s106, 85
    %s108 = sshrl.u32 %s107, 1
    %s109 = sor.u32 %s107, %s108
    %s110 = sand.u32 51, %s109
    %s111 = sshrl.u32 %s110, 2
    %s112 = sor.u32 %s110, %s111
    %s113 = sand.u32 15, %s112
    %v114 = vld [vmem:[%s104] sm:%s113]
    %v115 = vunpack.c.l.bf16 %v114
    %v116 = vunpack.c.h.bf16 %v114
    %v117 = vlaneseq
    %v118 = vand.u32 %v117, 127
    %vm120 = vcmp.lt.s32.totalorder %v118, 1
    %v121 = vsel %vm120, %v115, %v14
    %s122 = scalar_lea.vmem [#allocation14], 4
    %v123 = vpack.c.bf16 0.0, %v121
    %125 = vst [vmem:[%s122] sm:$0xf] %v123
    %s126 = scalar_lea.vmem %s0, 8
    %s128 = sor.u32 255, 127
    %s129 = sand.u32 %s128, 85
    %s130 = sshrl.u32 %s129, 1
    %s131 = sor.u32 %s129, %s130
    %s132 = sand.u32 51, %s131
    %s133 = sshrl.u32 %s132, 2
    %s134 = sor.u32 %s132, %s133
    %s135 = sand.u32 15, %s134
    %v136 = vld [vmem:[%s126] sm:%s135]
    %v137 = vunpack.c.l.bf16 %v136
    %v138 = vunpack.c.h.bf16 %v136
    %v139 = vlaneseq
    %v140 = vand.u32 %v139, 127
    %vm142 = vcmp.lt.s32.totalorder %v140, 1
    %v143 = vsel %vm142, %v137, %v14
    %s144 = scalar_lea.vmem [#allocation14], 8
    %v145 = vpack.c.bf16 0.0, %v143
    %147 = vst [vmem:[%s144] sm:$0xf] %v145
    %s148 = scalar_lea.vmem %s0, 12
    %s150 = sor.u32 255, 127
    %s151 = sand.u32 %s150, 85
    %s152 = sshrl.u32 %s151, 1
    %s153 = sor.u32 %s151, %s152
    %s154 = sand.u32 51, %s153
    %s155 = sshrl.u32 %s154, 2
    %s156 = sor.u32 %s154, %s155
    %s157 = sand.u32 15, %s156
    %v158 = vld [vmem:[%s148] sm:%s157]
    %v159 = vunpack.c.l.bf16 %v158
    %v160 = vunpack.c.h.bf16 %v158
    %v161 = vlaneseq
    %v162 = vand.u32 %v161, 127
    %vm164 = vcmp.lt.s32.totalorder %v162, 1
    %v165 = vsel %vm164, %v159, %v14
    %s166 = scalar_lea.vmem [#allocation14], 12
    %v167 = vpack.c.bf16 0.0, %v165
    %169 = vst [vmem:[%s166] sm:$0xf] %v167
    %s170 = scalar_lea.vmem %s0, 16
    %s172 = sor.u32 255, 127
    %s173 = sand.u32 %s172, 85
    %s174 = sshrl.u32 %s173, 1
    %s175 = sor.u32 %s173, %s174
    %s176 = sand.u32 51, %s175
    %s177 = sshrl.u32 %s176, 2
    %s178 = sor.u32 %s176, %s177
    %s179 = sand.u32 15, %s178
    %v180 = vld [vmem:[%s170] sm:%s179]
    %v181 = vunpack.c.l.bf16 %v180
    %v182 = vunpack.c.h.bf16 %v180
    %v183 = vlaneseq
    %v184 = vand.u32 %v183, 127
    %vm186 = vcmp.lt.s32.totalorder %v184, 1
    %v187 = vsel %vm186, %v181, %v14
    %s188 = scalar_lea.vmem [#allocation14], 16
    %v189 = vpack.c.bf16 0.0, %v187
    %191 = vst [vmem:[%s188] sm:$0xf] %v189
    %s192 = scalar_lea.vmem %s0, 20
    %s194 = sor.u32 255, 127
    %s195 = sand.u32 %s194, 85
    %s196 = sshrl.u32 %s195, 1
    %s197 = sor.u32 %s195, %s196
    %s198 = sand.u32 51, %s197
    %s199 = sshrl.u32 %s198, 2
    %s200 = sor.u32 %s198, %s199
    %s201 = sand.u32 15, %s200
    %v202 = vld [vmem:[%s192] sm:%s201]
    %v203 = vunpack.c.l.bf16 %v202
    %v204 = vunpack.c.h.bf16 %v202
    %v205 = vlaneseq
    %v206 = vand.u32 %v205, 127
    %vm208 = vcmp.lt.s32.totalorder %v206, 1
    %v209 = vsel %vm208, %v203, %v14
    %s210 = scalar_lea.vmem [#allocation14], 20
    %v211 = vpack.c.bf16 0.0, %v209
    %213 = vst [vmem:[%s210] sm:$0xf] %v211
    %s214 = scalar_lea.vmem %s0, 24
    %s216 = sor.u32 255, 127
    %s217 = sand.u32 %s216, 85
    %s218 = sshrl.u32 %s217, 1
    %s219 = sor.u32 %s217, %s218
    %s220 = sand.u32 51, %s219
    %s221 = sshrl.u32 %s220, 2
    %s222 = sor.u32 %s220, %s221
    %s223 = sand.u32 15, %s222
    %v224 = vld [vmem:[%s214] sm:%s223]
    %v225 = vunpack.c.l.bf16 %v224
    %v226 = vunpack.c.h.bf16 %v224
    %v227 = vlaneseq
    %v228 = vand.u32 %v227, 127
    %vm230 = vcmp.lt.s32.totalorder %v228, 1
    %v231 = vsel %vm230, %v225, %v14
    %s232 = scalar_lea.vmem [#allocation14], 24
    %v233 = vpack.c.bf16 0.0, %v231
    %235 = vst [vmem:[%s232] sm:$0xf] %v233
    %s236 = scalar_lea.vmem %s0, 28
    %s238 = sor.u32 255, 127
    %s239 = sand.u32 %s238, 85
    %s240 = sshrl.u32 %s239, 1
    %s241 = sor.u32 %s239, %s240
    %s242 = sand.u32 51, %s241
    %s243 = sshrl.u32 %s242, 2
    %s244 = sor.u32 %s242, %s243
    %s245 = sand.u32 15, %s244
    %v246 = vld [vmem:[%s236] sm:%s245]
    %v247 = vunpack.c.l.bf16 %v246
    %v248 = vunpack.c.h.bf16 %v246
    %v249 = vlaneseq
    %v250 = vand.u32 %v249, 127
    %vm252 = vcmp.lt.s32.totalorder %v250, 1
    %v253 = vsel %vm252, %v247, %v14
    %s254 = scalar_lea.vmem [#allocation14], 28
    %v255 = vpack.c.bf16 0.0, %v253
    %257 = vst [vmem:[%s254] sm:$0xf] %v255
    %s258 = scalar_lea.vmem %s0, 32
    %s260 = sor.u32 255, 127
    %s261 = sand.u32 %s260, 85
    %s262 = sshrl.u32 %s261, 1
    %s263 = sor.u32 %s261, %s262
    %s264 = sand.u32 51, %s263
    %s265 = sshrl.u32 %s264, 2
    %s266 = sor.u32 %s264, %s265
    %s267 = sand.u32 15, %s266
    %v268 = vld [vmem:[%s258] sm:%s267]
    %v269 = vunpack.c.l.bf16 %v268
    %v270 = vunpack.c.h.bf16 %v268
    %v271 = vlaneseq
    %v272 = vand.u32 %v271, 127
    %vm274 = vcmp.lt.s32.totalorder %v272, 1
    %v275 = vsel %vm274, %v269, %v14
    %s276 = scalar_lea.vmem [#allocation14], 32
    %v277 = vpack.c.bf16 0.0, %v275
    %279 = vst [vmem:[%s276] sm:$0xf] %v277
    %s280 = scalar_lea.vmem %s0, 36
    %s282 = sor.u32 255, 127
    %s283 = sand.u32 %s282, 85
    %s284 = sshrl.u32 %s283, 1
    %s285 = sor.u32 %s283, %s284
    %s286 = sand.u32 51, %s285
    %s287 = sshrl.u32 %s286, 2
    %s288 = sor.u32 %s286, %s287
    %s289 = sand.u32 15, %s288
    %v290 = vld [vmem:[%s280] sm:%s289]
    %v291 = vunpack.c.l.bf16 %v290
    %v292 = vunpack.c.h.bf16 %v290
    %v293 = vlaneseq
    %v294 = vand.u32 %v293, 127
    %vm296 = vcmp.lt.s32.totalorder %v294, 1
    %v297 = vsel %vm296, %v291, %v14
    %s298 = scalar_lea.vmem [#allocation14], 36
    %v299 = vpack.c.bf16 0.0, %v297
    %301 = vst [vmem:[%s298] sm:$0xf] %v299
    %s302 = scalar_lea.vmem %s0, 40
    %s304 = sor.u32 255, 127
    %s305 = sand.u32 %s304, 85
    %s306 = sshrl.u32 %s305, 1
    %s307 = sor.u32 %s305, %s306
    %s308 = sand.u32 51, %s307
    %s309 = sshrl.u32 %s308, 2
    %s310 = sor.u32 %s308, %s309
    %s311 = sand.u32 15, %s310
    %v312 = vld [vmem:[%s302] sm:%s311]
    %v313 = vunpack.c.l.bf16 %v312
    %v314 = vunpack.c.h.bf16 %v312
    %v315 = vlaneseq
    %v316 = vand.u32 %v315, 127
    %vm318 = vcmp.lt.s32.totalorder %v316, 1
    %v319 = vsel %vm318, %v313, %v14
    %s320 = scalar_lea.vmem [#allocation14], 40
    %v321 = vpack.c.bf16 0.0, %v319
    %323 = vst [vmem:[%s320] sm:$0xf] %v321
    %s324 = scalar_lea.vmem %s0, 44
    %s326 = sor.u32 255, 127
    %s327 = sand.u32 %s326, 85
    %s328 = sshrl.u32 %s327, 1
    %s329 = sor.u32 %s327, %s328
    %s330 = sand.u32 51, %s329
    %s331 = sshrl.u32 %s330, 2
    %s332 = sor.u32 %s330, %s331
    %s333 = sand.u32 15, %s332
    %v334 = vld [vmem:[%s324] sm:%s333]
    %v335 = vunpack.c.l.bf16 %v334
    %v336 = vunpack.c.h.bf16 %v334
    %v337 = vlaneseq
    %v338 = vand.u32 %v337, 127
    %vm340 = vcmp.lt.s32.totalorder %v338, 1
    %v341 = vsel %vm340, %v335, %v14
    %s342 = scalar_lea.vmem [#allocation14], 44
    %v343 = vpack.c.bf16 0.0, %v341
    %345 = vst [vmem:[%s342] sm:$0xf] %v343
    %s346 = scalar_lea.vmem %s0, 48
    %s348 = sor.u32 255, 127
    %s349 = sand.u32 %s348, 85
    %s350 = sshrl.u32 %s349, 1
    %s351 = sor.u32 %s349, %s350
    %s352 = sand.u32 51, %s351
    %s353 = sshrl.u32 %s352, 2
    %s354 = sor.u32 %s352, %s353
    %s355 = sand.u32 15, %s354
    %v356 = vld [vmem:[%s346] sm:%s355]
    %v357 = vunpack.c.l.bf16 %v356
    %v358 = vunpack.c.h.bf16 %v356
    %v359 = vlaneseq
    %v360 = vand.u32 %v359, 127
    %vm362 = vcmp.lt.s32.totalorder %v360, 1
    %v363 = vsel %vm362, %v357, %v14
    %s364 = scalar_lea.vmem [#allocation14], 48
    %v365 = vpack.c.bf16 0.0, %v363
    %367 = vst [vmem:[%s364] sm:$0xf] %v365
    %s368 = scalar_lea.vmem %s0, 52
    %s370 = sor.u32 255, 127
    %s371 = sand.u32 %s370, 85
    %s372 = sshrl.u32 %s371, 1
    %s373 = sor.u32 %s371, %s372
    %s374 = sand.u32 51, %s373
    %s375 = sshrl.u32 %s374, 2
    %s376 = sor.u32 %s374, %s375
    %s377 = sand.u32 15, %s376
    %v378 = vld [vmem:[%s368] sm:%s377]
    %v379 = vunpack.c.l.bf16 %v378
    %v380 = vunpack.c.h.bf16 %v378
    %v381 = vlaneseq
    %v382 = vand.u32 %v381, 127
    %vm384 = vcmp.lt.s32.totalorder %v382, 1
    %v385 = vsel %vm384, %v379, %v14
    %s386 = scalar_lea.vmem [#allocation14], 52
    %v387 = vpack.c.bf16 0.0, %v385
    %389 = vst [vmem:[%s386] sm:$0xf] %v387
    %s390 = scalar_lea.vmem %s0, 56
    %s392 = sor.u32 255, 127
    %s393 = sand.u32 %s392, 85
    %s394 = sshrl.u32 %s393, 1
    %s395 = sor.u32 %s393, %s394
    %s396 = sand.u32 51, %s395
    %s397 = sshrl.u32 %s396, 2
    %s398 = sor.u32 %s396, %s397
    %s399 = sand.u32 15, %s398
    %v400 = vld [vmem:[%s390] sm:%s399]
    %v401 = vunpack.c.l.bf16 %v400
    %v402 = vunpack.c.h.bf16 %v400
    %v403 = vlaneseq
    %v404 = vand.u32 %v403, 127
    %vm406 = vcmp.lt.s32.totalorder %v404, 1
    %v407 = vsel %vm406, %v401, %v14
    %s408 = scalar_lea.vmem [#allocation14], 56
    %v409 = vpack.c.bf16 0.0, %v407
    %411 = vst [vmem:[%s408] sm:$0xf] %v409
    %s412 = scalar_lea.vmem %s0, 60
    %s414 = sor.u32 255, 127
    %s415 = sand.u32 %s414, 85
    %s416 = sshrl.u32 %s415, 1
    %s417 = sor.u32 %s415, %s416
    %s418 = sand.u32 51, %s417
    %s419 = sshrl.u32 %s418, 2
    %s420 = sor.u32 %s418, %s419
    %s421 = sand.u32 15, %s420
    %v422 = vld [vmem:[%s412] sm:%s421]
    %v423 = vunpack.c.l.bf16 %v422
    %v424 = vunpack.c.h.bf16 %v422
    %v425 = vlaneseq
    %v426 = vand.u32 %v425, 127
    %vm428 = vcmp.lt.s32.totalorder %v426, 1
    %v429 = vsel %vm428, %v423, %v14
    %s430 = scalar_lea.vmem [#allocation14], 60
    %v431 = vpack.c.bf16 0.0, %v429
    %433 = vst [vmem:[%s430] sm:$0xf] %v431
    %s434 = scalar_lea.vmem %s0, 64
    %s436 = sor.u32 255, 127
    %s437 = sand.u32 %s436, 85
    %s438 = sshrl.u32 %s437, 1
    %s439 = sor.u32 %s437, %s438
    %s440 = sand.u32 51, %s439
    %s441 = sshrl.u32 %s440, 2
    %s442 = sor.u32 %s440, %s441
    %s443 = sand.u32 15, %s442
    %v444 = vld [vmem:[%s434] sm:%s443]
    %v445 = vunpack.c.l.bf16 %v444
    %v446 = vunpack.c.h.bf16 %v444
    %v447 = vlaneseq
    %v448 = vand.u32 %v447, 127
    %vm450 = vcmp.lt.s32.totalorder %v448, 1
    %v451 = vsel %vm450, %v445, %v14
    %s452 = scalar_lea.vmem [#allocation14], 64
    %v453 = vpack.c.bf16 0.0, %v451
    %455 = vst [vmem:[%s452] sm:$0xf] %v453
    %s456 = scalar_lea.vmem %s0, 68
    %s458 = sor.u32 255, 127
    %s459 = sand.u32 %s458, 85
    %s460 = sshrl.u32 %s459, 1
    %s461 = sor.u32 %s459, %s460
    %s462 = sand.u32 51, %s461
    %s463 = sshrl.u32 %s462, 2
    %s464 = sor.u32 %s462, %s463
    %s465 = sand.u32 15, %s464
    %v466 = vld [vmem:[%s456] sm:%s465]
    %v467 = vunpack.c.l.bf16 %v466
    %v468 = vunpack.c.h.bf16 %v466
    %v469 = vlaneseq
    %v470 = vand.u32 %v469, 127
    %vm472 = vcmp.lt.s32.totalorder %v470, 1
    %v473 = vsel %vm472, %v467, %v14
    %s474 = scalar_lea.vmem [#allocation14], 68
    %v475 = vpack.c.bf16 0.0, %v473
    %477 = vst [vmem:[%s474] sm:$0xf] %v475
    %s478 = scalar_lea.vmem %s0, 72
    %s480 = sor.u32 255, 127
    %s481 = sand.u32 %s480, 85
    %s482 = sshrl.u32 %s481, 1
    %s483 = sor.u32 %s481, %s482
    %s484 = sand.u32 51, %s483
    %s485 = sshrl.u32 %s484, 2
    %s486 = sor.u32 %s484, %s485
    %s487 = sand.u32 15, %s486
    %v488 = vld [vmem:[%s478] sm:%s487]
    %v489 = vunpack.c.l.bf16 %v488
    %v490 = vunpack.c.h.bf16 %v488
    %v491 = vlaneseq
    %v492 = vand.u32 %v491, 127
    %vm494 = vcmp.lt.s32.totalorder %v492, 1
    %v495 = vsel %vm494, %v489, %v14
    %s496 = scalar_lea.vmem [#allocation14], 72
    %v497 = vpack.c.bf16 0.0, %v495
    %499 = vst [vmem:[%s496] sm:$0xf] %v497
    %s500 = scalar_lea.vmem %s0, 76
    %s502 = sor.u32 255, 127
    %s503 = sand.u32 %s502, 85
    %s504 = sshrl.u32 %s503, 1
    %s505 = sor.u32 %s503, %s504
    %s506 = sand.u32 51, %s505
    %s507 = sshrl.u32 %s506, 2
    %s508 = sor.u32 %s506, %s507
    %s509 = sand.u32 15, %s508
    %v510 = vld [vmem:[%s500] sm:%s509]
    %v511 = vunpack.c.l.bf16 %v510
    %v512 = vunpack.c.h.bf16 %v510
    %v513 = vlaneseq
    %v514 = vand.u32 %v513, 127
    %vm516 = vcmp.lt.s32.totalorder %v514, 1
    %v517 = vsel %vm516, %v511, %v14
    %s518 = scalar_lea.vmem [#allocation14], 76
    %v519 = vpack.c.bf16 0.0, %v517
    %521 = vst [vmem:[%s518] sm:$0xf] %v519
    %s522 = scalar_lea.vmem %s0, 80
    %s524 = sor.u32 255, 127
    %s525 = sand.u32 %s524, 85
    %s526 = sshrl.u32 %s525, 1
    %s527 = sor.u32 %s525, %s526
    %s528 = sand.u32 51, %s527
    %s529 = sshrl.u32 %s528, 2
    %s530 = sor.u32 %s528, %s529
    %s531 = sand.u32 15, %s530
    %v532 = vld [vmem:[%s522] sm:%s531]
    %v533 = vunpack.c.l.bf16 %v532
    %v534 = vunpack.c.h.bf16 %v532
    %v535 = vlaneseq
    %v536 = vand.u32 %v535, 127
    %vm538 = vcmp.lt.s32.totalorder %v536, 1
    %v539 = vsel %vm538, %v533, %v14
    %s540 = scalar_lea.vmem [#allocation14], 80
    %v541 = vpack.c.bf16 0.0, %v539
    %543 = vst [vmem:[%s540] sm:$0xf] %v541
    %s544 = scalar_lea.vmem %s0, 84
    %s546 = sor.u32 255, 127
    %s547 = sand.u32 %s546, 85
    %s548 = sshrl.u32 %s547, 1
    %s549 = sor.u32 %s547, %s548
    %s550 = sand.u32 51, %s549
    %s551 = sshrl.u32 %s550, 2
    %s552 = sor.u32 %s550, %s551
    %s553 = sand.u32 15, %s552
    %v554 = vld [vmem:[%s544] sm:%s553]
    %v555 = vunpack.c.l.bf16 %v554
    %v556 = vunpack.c.h.bf16 %v554
    %v557 = vlaneseq
    %v558 = vand.u32 %v557, 127
    %vm560 = vcmp.lt.s32.totalorder %v558, 1
    %v561 = vsel %vm560, %v555, %v14
    %s562 = scalar_lea.vmem [#allocation14], 84
    %v563 = vpack.c.bf16 0.0, %v561
    %565 = vst [vmem:[%s562] sm:$0xf] %v563
    %s566 = scalar_lea.vmem %s0, 88
    %s568 = sor.u32 255, 127
    %s569 = sand.u32 %s568, 85
    %s570 = sshrl.u32 %s569, 1
    %s571 = sor.u32 %s569, %s570
    %s572 = sand.u32 51, %s571
    %s573 = sshrl.u32 %s572, 2
    %s574 = sor.u32 %s572, %s573
    %s575 = sand.u32 15, %s574
    %v576 = vld [vmem:[%s566] sm:%s575]
    %v577 = vunpack.c.l.bf16 %v576
    %v578 = vunpack.c.h.bf16 %v576
    %v579 = vlaneseq
    %v580 = vand.u32 %v579, 127
    %vm582 = vcmp.lt.s32.totalorder %v580, 1
    %v583 = vsel %vm582, %v577, %v14
    %s584 = scalar_lea.vmem [#allocation14], 88
    %v585 = vpack.c.bf16 0.0, %v583
    %587 = vst [vmem:[%s584] sm:$0xf] %v585
    %s588 = scalar_lea.vmem %s0, 92
    %s590 = sor.u32 255, 127
    %s591 = sand.u32 %s590, 85
    %s592 = sshrl.u32 %s591, 1
    %s593 = sor.u32 %s591, %s592
    %s594 = sand.u32 51, %s593
    %s595 = sshrl.u32 %s594, 2
    %s596 = sor.u32 %s594, %s595
    %s597 = sand.u32 15, %s596
    %v598 = vld [vmem:[%s588] sm:%s597]
    %v599 = vunpack.c.l.bf16 %v598
    %v600 = vunpack.c.h.bf16 %v598
    %v601 = vlaneseq
    %v602 = vand.u32 %v601, 127
    %vm604 = vcmp.lt.s32.totalorder %v602, 1
    %v605 = vsel %vm604, %v599, %v14
    %s606 = scalar_lea.vmem [#allocation14], 92
    %v607 = vpack.c.bf16 0.0, %v605
    %609 = vst [vmem:[%s606] sm:$0xf] %v607
    %s610 = scalar_lea.vmem %s0, 96
    %s612 = sor.u32 255, 127
    %s613 = sand.u32 %s612, 85
    %s614 = sshrl.u32 %s613, 1
    %s615 = sor.u32 %s613, %s614
    %s616 = sand.u32 51, %s615
    %s617 = sshrl.u32 %s616, 2
    %s618 = sor.u32 %s616, %s617
    %s619 = sand.u32 15, %s618
    %v620 = vld [vmem:[%s610] sm:%s619]
    %v621 = vunpack.c.l.bf16 %v620
    %v622 = vunpack.c.h.bf16 %v620
    %v623 = vlaneseq
    %v624 = vand.u32 %v623, 127
    %vm626 = vcmp.lt.s32.totalorder %v624, 1
    %v627 = vsel %vm626, %v621, %v14
    %s628 = scalar_lea.vmem [#allocation14], 96
    %v629 = vpack.c.bf16 0.0, %v627
    %631 = vst [vmem:[%s628] sm:$0xf] %v629
    %s632 = scalar_lea.vmem %s0, 100
    %s634 = sor.u32 255, 127
    %s635 = sand.u32 %s634, 85
    %s636 = sshrl.u32 %s635, 1
    %s637 = sor.u32 %s635, %s636
    %s638 = sand.u32 51, %s637
    %s639 = sshrl.u32 %s638, 2
    %s640 = sor.u32 %s638, %s639
    %s641 = sand.u32 15, %s640
    %v642 = vld [vmem:[%s632] sm:%s641]
    %v643 = vunpack.c.l.bf16 %v642
    %v644 = vunpack.c.h.bf16 %v642
    %v645 = vlaneseq
    %v646 = vand.u32 %v645, 127
    %vm648 = vcmp.lt.s32.totalorder %v646, 1
    %v649 = vsel %vm648, %v643, %v14
    %s650 = scalar_lea.vmem [#allocation14], 100
    %v651 = vpack.c.bf16 0.0, %v649
    %653 = vst [vmem:[%s650] sm:$0xf] %v651
    %s654 = scalar_lea.vmem %s0, 104
    %s656 = sor.u32 255, 127
    %s657 = sand.u32 %s656, 85
    %s658 = sshrl.u32 %s657, 1
    %s659 = sor.u32 %s657, %s658
    %s660 = sand.u32 51, %s659
    %s661 = sshrl.u32 %s660, 2
    %s662 = sor.u32 %s660, %s661
    %s663 = sand.u32 15, %s662
    %v664 = vld [vmem:[%s654] sm:%s663]
    %v665 = vunpack.c.l.bf16 %v664
    %v666 = vunpack.c.h.bf16 %v664
    %v667 = vlaneseq
    %v668 = vand.u32 %v667, 127
    %vm670 = vcmp.lt.s32.totalorder %v668, 1
    %v671 = vsel %vm670, %v665, %v14
    %s672 = scalar_lea.vmem [#allocation14], 104
    %v673 = vpack.c.bf16 0.0, %v671
    %675 = vst [vmem:[%s672] sm:$0xf] %v673
    %s676 = scalar_lea.vmem %s0, 108
    %s678 = sor.u32 255, 127
    %s679 = sand.u32 %s678, 85
    %s680 = sshrl.u32 %s679, 1
    %s681 = sor.u32 %s679, %s680
    %s682 = sand.u32 51, %s681
    %s683 = sshrl.u32 %s682, 2
    %s684 = sor.u32 %s682, %s683
    %s685 = sand.u32 15, %s684
    %v686 = vld [vmem:[%s676] sm:%s685]
    %v687 = vunpack.c.l.bf16 %v686
    %v688 = vunpack.c.h.bf16 %v686
    %v689 = vlaneseq
    %v690 = vand.u32 %v689, 127
    %vm692 = vcmp.lt.s32.totalorder %v690, 1
    %v693 = vsel %vm692, %v687, %v14
    %s694 = scalar_lea.vmem [#allocation14], 108
    %v695 = vpack.c.bf16 0.0, %v693
    %697 = vst [vmem:[%s694] sm:$0xf] %v695
    %s698 = scalar_lea.vmem %s0, 112
    %s700 = sor.u32 255, 127
    %s701 = sand.u32 %s700, 85
    %s702 = sshrl.u32 %s701, 1
    %s703 = sor.u32 %s701, %s702
    %s704 = sand.u32 51, %s703
    %s705 = sshrl.u32 %s704, 2
    %s706 = sor.u32 %s704, %s705
    %s707 = sand.u32 15, %s706
    %v708 = vld [vmem:[%s698] sm:%s707]
    %v709 = vunpack.c.l.bf16 %v708
    %v710 = vunpack.c.h.bf16 %v708
    %v711 = vlaneseq
    %v712 = vand.u32 %v711, 127
    %vm714 = vcmp.lt.s32.totalorder %v712, 1
    %v715 = vsel %vm714, %v709, %v14
    %s716 = scalar_lea.vmem [#allocation14], 112
    %v717 = vpack.c.bf16 0.0, %v715
    %719 = vst [vmem:[%s716] sm:$0xf] %v717
    %s720 = scalar_lea.vmem %s0, 116
    %s722 = sor.u32 255, 127
    %s723 = sand.u32 %s722, 85
    %s724 = sshrl.u32 %s723, 1
    %s725 = sor.u32 %s723, %s724
    %s726 = sand.u32 51, %s725
    %s727 = sshrl.u32 %s726, 2
    %s728 = sor.u32 %s726, %s727
    %s729 = sand.u32 15, %s728
    %v730 = vld [vmem:[%s720] sm:%s729]
    %v731 = vunpack.c.l.bf16 %v730
    %v732 = vunpack.c.h.bf16 %v730
    %v733 = vlaneseq
    %v734 = vand.u32 %v733, 127
    %vm736 = vcmp.lt.s32.totalorder %v734, 1
    %v737 = vsel %vm736, %v731, %v14
    %s738 = scalar_lea.vmem [#allocation14], 116
    %v739 = vpack.c.bf16 0.0, %v737
    %741 = vst [vmem:[%s738] sm:$0xf] %v739
    %s742 = scalar_lea.vmem %s0, 120
    %s744 = sor.u32 255, 127
    %s745 = sand.u32 %s744, 85
    %s746 = sshrl.u32 %s745, 1
    %s747 = sor.u32 %s745, %s746
    %s748 = sand.u32 51, %s747
    %s749 = sshrl.u32 %s748, 2
    %s750 = sor.u32 %s748, %s749
    %s751 = sand.u32 15, %s750
    %v752 = vld [vmem:[%s742] sm:%s751]
    %v753 = vunpack.c.l.bf16 %v752
    %v754 = vunpack.c.h.bf16 %v752
    %v755 = vlaneseq
    %v756 = vand.u32 %v755, 127
    %vm758 = vcmp.lt.s32.totalorder %v756, 1
    %v759 = vsel %vm758, %v753, %v14
    %s760 = scalar_lea.vmem [#allocation14], 120
    %v761 = vpack.c.bf16 0.0, %v759
    %763 = vst [vmem:[%s760] sm:$0xf] %v761
    %s764 = scalar_lea.vmem %s0, 124
    %s766 = sor.u32 255, 127
    %s767 = sand.u32 %s766, 85
    %s768 = sshrl.u32 %s767, 1
    %s769 = sor.u32 %s767, %s768
    %s770 = sand.u32 51, %s769
    %s771 = sshrl.u32 %s770, 2
    %s772 = sor.u32 %s770, %s771
    %s773 = sand.u32 15, %s772
    %v774 = vld [vmem:[%s764] sm:%s773]
    %v775 = vunpack.c.l.bf16 %v774
    %v776 = vunpack.c.h.bf16 %v774
    %v777 = vlaneseq
    %v778 = vand.u32 %v777, 127
    %vm780 = vcmp.lt.s32.totalorder %v778, 1
    %v781 = vsel %vm780, %v775, %v14
    %s782 = scalar_lea.vmem [#allocation14], 124
    %v783 = vpack.c.bf16 0.0, %v781
    %785 = vst [vmem:[%s782] sm:$0xf] %v783
    %s786 = scalar_lea.vmem %s0, 128
    %s788 = sor.u32 255, 127
    %s789 = sand.u32 %s788, 85
    %s790 = sshrl.u32 %s789, 1
    %s791 = sor.u32 %s789, %s790
    %s792 = sand.u32 51, %s791
    %s793 = sshrl.u32 %s792, 2
    %s794 = sor.u32 %s792, %s793
    %s795 = sand.u32 15, %s794
    %v796 = vld [vmem:[%s786] sm:%s795]
    %v797 = vunpack.c.l.bf16 %v796
    %v798 = vunpack.c.h.bf16 %v796
    %v799 = vlaneseq
    %v800 = vand.u32 %v799, 127
    %vm802 = vcmp.lt.s32.totalorder %v800, 1
    %v803 = vsel %vm802, %v797, %v14
    %s804 = scalar_lea.vmem [#allocation14], 128
    %v805 = vpack.c.bf16 0.0, %v803
    %807 = vst [vmem:[%s804] sm:$0xf] %v805
    %s808 = scalar_lea.vmem %s0, 132
    %s810 = sor.u32 255, 127
    %s811 = sand.u32 %s810, 85
    %s812 = sshrl.u32 %s811, 1
    %s813 = sor.u32 %s811, %s812
    %s814 = sand.u32 51, %s813
    %s815 = sshrl.u32 %s814, 2
    %s816 = sor.u32 %s814, %s815
    %s817 = sand.u32 15, %s816
    %v818 = vld [vmem:[%s808] sm:%s817]
    %v819 = vunpack.c.l.bf16 %v818
    %v820 = vunpack.c.h.bf16 %v818
    %v821 = vlaneseq
    %v822 = vand.u32 %v821, 127
    %vm824 = vcmp.lt.s32.totalorder %v822, 1
    %v825 = vsel %vm824, %v819, %v14
    %s826 = scalar_lea.vmem [#allocation14], 132
    %v827 = vpack.c.bf16 0.0, %v825
    %829 = vst [vmem:[%s826] sm:$0xf] %v827
    %s830 = scalar_lea.vmem %s0, 136
    %s832 = sor.u32 255, 127
    %s833 = sand.u32 %s832, 85
    %s834 = sshrl.u32 %s833, 1
    %s835 = sor.u32 %s833, %s834
    %s836 = sand.u32 51, %s835
    %s837 = sshrl.u32 %s836, 2
    %s838 = sor.u32 %s836, %s837
    %s839 = sand.u32 15, %s838
    %v840 = vld [vmem:[%s830] sm:%s839]
    %v841 = vunpack.c.l.bf16 %v840
    %v842 = vunpack.c.h.bf16 %v840
    %v843 = vlaneseq
    %v844 = vand.u32 %v843, 127
    %vm846 = vcmp.lt.s32.totalorder %v844, 1
    %v847 = vsel %vm846, %v841, %v14
    %s848 = scalar_lea.vmem [#allocation14], 136
    %v849 = vpack.c.bf16 0.0, %v847
    %851 = vst [vmem:[%s848] sm:$0xf] %v849
    %s852 = scalar_lea.vmem %s0, 140
    %s854 = sor.u32 255, 127
    %s855 = sand.u32 %s854, 85
    %s856 = sshrl.u32 %s855, 1
    %s857 = sor.u32 %s855, %s856
    %s858 = sand.u32 51, %s857
    %s859 = sshrl.u32 %s858, 2
    %s860 = sor.u32 %s858, %s859
    %s861 = sand.u32 15, %s860
    %v862 = vld [vmem:[%s852] sm:%s861]
    %v863 = vunpack.c.l.bf16 %v862
    %v864 = vunpack.c.h.bf16 %v862
    %v865 = vlaneseq
    %v866 = vand.u32 %v865, 127
    %vm868 = vcmp.lt.s32.totalorder %v866, 1
    %v869 = vsel %vm868, %v863, %v14
    %s870 = scalar_lea.vmem [#allocation14], 140
    %v871 = vpack.c.bf16 0.0, %v869
    %873 = vst [vmem:[%s870] sm:$0xf] %v871
    %s874 = scalar_lea.vmem %s0, 144
    %s876 = sor.u32 255, 127
    %s877 = sand.u32 %s876, 85
    %s878 = sshrl.u32 %s877, 1
    %s879 = sor.u32 %s877, %s878
    %s880 = sand.u32 51, %s879
    %s881 = sshrl.u32 %s880, 2
    %s882 = sor.u32 %s880, %s881
    %s883 = sand.u32 15, %s882
    %v884 = vld [vmem:[%s874] sm:%s883]
    %v885 = vunpack.c.l.bf16 %v884
    %v886 = vunpack.c.h.bf16 %v884
    %v887 = vlaneseq
    %v888 = vand.u32 %v887, 127
    %vm890 = vcmp.lt.s32.totalorder %v888, 1
    %v891 = vsel %vm890, %v885, %v14
    %s892 = scalar_lea.vmem [#allocation14], 144
    %v893 = vpack.c.bf16 0.0, %v891
    %895 = vst [vmem:[%s892] sm:$0xf] %v893
    %s896 = scalar_lea.vmem %s0, 148
    %s898 = sor.u32 255, 127
    %s899 = sand.u32 %s898, 85
    %s900 = sshrl.u32 %s899, 1
    %s901 = sor.u32 %s899, %s900
    %s902 = sand.u32 51, %s901
    %s903 = sshrl.u32 %s902, 2
    %s904 = sor.u32 %s902, %s903
    %s905 = sand.u32 15, %s904
    %v906 = vld [vmem:[%s896] sm:%s905]
    %v907 = vunpack.c.l.bf16 %v906
    %v908 = vunpack.c.h.bf16 %v906
    %v909 = vlaneseq
    %v910 = vand.u32 %v909, 127
    %vm912 = vcmp.lt.s32.totalorder %v910, 1
    %v913 = vsel %vm912, %v907, %v14
    %s914 = scalar_lea.vmem [#allocation14], 148
    %v915 = vpack.c.bf16 0.0, %v913
    %917 = vst [vmem:[%s914] sm:$0xf] %v915
    %s918 = scalar_lea.vmem %s0, 152
    %s920 = sor.u32 255, 127
    %s921 = sand.u32 %s920, 85
    %s922 = sshrl.u32 %s921, 1
    %s923 = sor.u32 %s921, %s922
    %s924 = sand.u32 51, %s923
    %s925 = sshrl.u32 %s924, 2
    %s926 = sor.u32 %s924, %s925
    %s927 = sand.u32 15, %s926
    %v928 = vld [vmem:[%s918] sm:%s927]
    %v929 = vunpack.c.l.bf16 %v928
    %v930 = vunpack.c.h.bf16 %v928
    %v931 = vlaneseq
    %v932 = vand.u32 %v931, 127
    %vm934 = vcmp.lt.s32.totalorder %v932, 1
    %v935 = vsel %vm934, %v929, %v14
    %s936 = scalar_lea.vmem [#allocation14], 152
    %v937 = vpack.c.bf16 0.0, %v935
    %939 = vst [vmem:[%s936] sm:$0xf] %v937
    %s940 = scalar_lea.vmem %s0, 156
    %s942 = sor.u32 255, 127
    %s943 = sand.u32 %s942, 85
    %s944 = sshrl.u32 %s943, 1
    %s945 = sor.u32 %s943, %s944
    %s946 = sand.u32 51, %s945
    %s947 = sshrl.u32 %s946, 2
    %s948 = sor.u32 %s946, %s947
    %s949 = sand.u32 15, %s948
    %v950 = vld [vmem:[%s940] sm:%s949]
    %v951 = vunpack.c.l.bf16 %v950
    %v952 = vunpack.c.h.bf16 %v950
    %v953 = vlaneseq
    %v954 = vand.u32 %v953, 127
    %vm956 = vcmp.lt.s32.totalorder %v954, 1
    %v957 = vsel %vm956, %v951, %v14
    %s958 = scalar_lea.vmem [#allocation14], 156
    %v959 = vpack.c.bf16 0.0, %v957
    %961 = vst [vmem:[%s958] sm:$0xf] %v959
    %s962 = scalar_lea.vmem %s0, 160
    %s964 = sor.u32 255, 127
    %s965 = sand.u32 %s964, 85
    %s966 = sshrl.u32 %s965, 1
    %s967 = sor.u32 %s965, %s966
    %s968 = sand.u32 51, %s967
    %s969 = sshrl.u32 %s968, 2
    %s970 = sor.u32 %s968, %s969
    %s971 = sand.u32 15, %s970
    %v972 = vld [vmem:[%s962] sm:%s971]
    %v973 = vunpack.c.l.bf16 %v972
    %v974 = vunpack.c.h.bf16 %v972
    %v975 = vlaneseq
    %v976 = vand.u32 %v975, 127
    %vm978 = vcmp.lt.s32.totalorder %v976, 1
    %v979 = vsel %vm978, %v973, %v14
    %s980 = scalar_lea.vmem [#allocation14], 160
    %v981 = vpack.c.bf16 0.0, %v979
    %983 = vst [vmem:[%s980] sm:$0xf] %v981
    %s984 = scalar_lea.vmem %s0, 164
    %s986 = sor.u32 255, 127
    %s987 = sand.u32 %s986, 85
    %s988 = sshrl.u32 %s987, 1
    %s989 = sor.u32 %s987, %s988
    %s990 = sand.u32 51, %s989
    %s991 = sshrl.u32 %s990, 2
    %s992 = sor.u32 %s990, %s991
    %s993 = sand.u32 15, %s992
    %v994 = vld [vmem:[%s984] sm:%s993]
    %v995 = vunpack.c.l.bf16 %v994
    %v996 = vunpack.c.h.bf16 %v994
    %v997 = vlaneseq
    %v998 = vand.u32 %v997, 127
    %vm1000 = vcmp.lt.s32.totalorder %v998, 1
    %v1001 = vsel %vm1000, %v995, %v14
    %s1002 = scalar_lea.vmem [#allocation14], 164
    %v1003 = vpack.c.bf16 0.0, %v1001
    %1005 = vst [vmem:[%s1002] sm:$0xf] %v1003
    %s1006 = scalar_lea.vmem %s0, 168
    %s1008 = sor.u32 255, 127
    %s1009 = sand.u32 %s1008, 85
    %s1010 = sshrl.u32 %s1009, 1
    %s1011 = sor.u32 %s1009, %s1010
    %s1012 = sand.u32 51, %s1011
    %s1013 = sshrl.u32 %s1012, 2
    %s1014 = sor.u32 %s1012, %s1013
    %s1015 = sand.u32 15, %s1014
    %v1016 = vld [vmem:[%s1006] sm:%s1015]
    %v1017 = vunpack.c.l.bf16 %v1016
    %v1018 = vunpack.c.h.bf16 %v1016
    %v1019 = vlaneseq
    %v1020 = vand.u32 %v1019, 127
    %vm1022 = vcmp.lt.s32.totalorder %v1020, 1
    %v1023 = vsel %vm1022, %v1017, %v14
    %s1024 = scalar_lea.vmem [#allocation14], 168
    %v1025 = vpack.c.bf16 0.0, %v1023
    %1027 = vst [vmem:[%s1024] sm:$0xf] %v1025
    %s1028 = scalar_lea.vmem %s0, 172
    %s1030 = sor.u32 255, 127
    %s1031 = sand.u32 %s1030, 85
    %s1032 = sshrl.u32 %s1031, 1
    %s1033 = sor.u32 %s1031, %s1032
    %s1034 = sand.u32 51, %s1033
    %s1035 = sshrl.u32 %s1034, 2
    %s1036 = sor.u32 %s1034, %s1035
    %s1037 = sand.u32 15, %s1036
    %v1038 = vld [vmem:[%s1028] sm:%s1037]
    %v1039 = vunpack.c.l.bf16 %v1038
    %v1040 = vunpack.c.h.bf16 %v1038
    %v1041 = vlaneseq
    %v1042 = vand.u32 %v1041, 127
    %vm1044 = vcmp.lt.s32.totalorder %v1042, 1
    %v1045 = vsel %vm1044, %v1039, %v14
    %s1046 = scalar_lea.vmem [#allocation14], 172
    %v1047 = vpack.c.bf16 0.0, %v1045
    %1049 = vst [vmem:[%s1046] sm:$0xf] %v1047
    %s1050 = scalar_lea.vmem %s0, 176
    %s1052 = sor.u32 255, 127
    %s1053 = sand.u32 %s1052, 85
    %s1054 = sshrl.u32 %s1053, 1
    %s1055 = sor.u32 %s1053, %s1054
    %s1056 = sand.u32 51, %s1055
    %s1057 = sshrl.u32 %s1056, 2
    %s1058 = sor.u32 %s1056, %s1057
    %s1059 = sand.u32 15, %s1058
    %v1060 = vld [vmem:[%s1050] sm:%s1059]
    %v1061 = vunpack.c.l.bf16 %v1060
    %v1062 = vunpack.c.h.bf16 %v1060
    %v1063 = vlaneseq
    %v1064 = vand.u32 %v1063, 127
    %vm1066 = vcmp.lt.s32.totalorder %v1064, 1
    %v1067 = vsel %vm1066, %v1061, %v14
    %s1068 = scalar_lea.vmem [#allocation14], 176
    %v1069 = vpack.c.bf16 0.0, %v1067
    %1071 = vst [vmem:[%s1068] sm:$0xf] %v1069
    %s1072 = scalar_lea.vmem %s0, 180
    %s1074 = sor.u32 255, 127
    %s1075 = sand.u32 %s1074, 85
    %s1076 = sshrl.u32 %s1075, 1
    %s1077 = sor.u32 %s1075, %s1076
    %s1078 = sand.u32 51, %s1077
    %s1079 = sshrl.u32 %s1078, 2
    %s1080 = sor.u32 %s1078, %s1079
    %s1081 = sand.u32 15, %s1080
    %v1082 = vld [vmem:[%s1072] sm:%s1081]
    %v1083 = vunpack.c.l.bf16 %v1082
    %v1084 = vunpack.c.h.bf16 %v1082
    %v1085 = vlaneseq
    %v1086 = vand.u32 %v1085, 127
    %vm1088 = vcmp.lt.s32.totalorder %v1086, 1
    %v1089 = vsel %vm1088, %v1083, %v14
    %s1090 = scalar_lea.vmem [#allocation14], 180
    %v1091 = vpack.c.bf16 0.0, %v1089
    %1093 = vst [vmem:[%s1090] sm:$0xf] %v1091
    %s1094 = scalar_lea.vmem %s0, 184
    %s1096 = sor.u32 255, 127
    %s1097 = sand.u32 %s1096, 85
    %s1098 = sshrl.u32 %s1097, 1
    %s1099 = sor.u32 %s1097, %s1098
    %s1100 = sand.u32 51, %s1099
    %s1101 = sshrl.u32 %s1100, 2
    %s1102 = sor.u32 %s1100, %s1101
    %s1103 = sand.u32 15, %s1102
    %v1104 = vld [vmem:[%s1094] sm:%s1103]
    %v1105 = vunpack.c.l.bf16 %v1104
    %v1106 = vunpack.c.h.bf16 %v1104
    %v1107 = vlaneseq
    %v1108 = vand.u32 %v1107, 127
    %vm1110 = vcmp.lt.s32.totalorder %v1108, 1
    %v1111 = vsel %vm1110, %v1105, %v14
    %s1112 = scalar_lea.vmem [#allocation14], 184
    %v1113 = vpack.c.bf16 0.0, %v1111
    %1115 = vst [vmem:[%s1112] sm:$0xf] %v1113
    %s1116 = scalar_lea.vmem %s0, 188
    %s1118 = sor.u32 255, 127
    %s1119 = sand.u32 %s1118, 85
    %s1120 = sshrl.u32 %s1119, 1
    %s1121 = sor.u32 %s1119, %s1120
    %s1122 = sand.u32 51, %s1121
    %s1123 = sshrl.u32 %s1122, 2
    %s1124 = sor.u32 %s1122, %s1123
    %s1125 = sand.u32 15, %s1124
    %v1126 = vld [vmem:[%s1116] sm:%s1125]
    %v1127 = vunpack.c.l.bf16 %v1126
    %v1128 = vunpack.c.h.bf16 %v1126
    %v1129 = vlaneseq
    %v1130 = vand.u32 %v1129, 127
    %vm1132 = vcmp.lt.s32.totalorder %v1130, 1
    %v1133 = vsel %vm1132, %v1127, %v14
    %s1134 = scalar_lea.vmem [#allocation14], 188
    %v1135 = vpack.c.bf16 0.0, %v1133
    %1137 = vst [vmem:[%s1134] sm:$0xf] %v1135
    %s1138 = scalar_lea.vmem %s0, 192
    %s1140 = sor.u32 255, 127
    %s1141 = sand.u32 %s1140, 85
    %s1142 = sshrl.u32 %s1141, 1
    %s1143 = sor.u32 %s1141, %s1142
    %s1144 = sand.u32 51, %s1143
    %s1145 = sshrl.u32 %s1144, 2
    %s1146 = sor.u32 %s1144, %s1145
    %s1147 = sand.u32 15, %s1146
    %v1148 = vld [vmem:[%s1138] sm:%s1147]
    %v1149 = vunpack.c.l.bf16 %v1148
    %v1150 = vunpack.c.h.bf16 %v1148
    %v1151 = vlaneseq
    %v1152 = vand.u32 %v1151, 127
    %vm1154 = vcmp.lt.s32.totalorder %v1152, 1
    %v1155 = vsel %vm1154, %v1149, %v14
    %s1156 = scalar_lea.vmem [#allocation14], 192
    %v1157 = vpack.c.bf16 0.0, %v1155
    %1159 = vst [vmem:[%s1156] sm:$0xf] %v1157
    %s1160 = scalar_lea.vmem %s0, 196
    %s1162 = sor.u32 255, 127
    %s1163 = sand.u32 %s1162, 85
    %s1164 = sshrl.u32 %s1163, 1
    %s1165 = sor.u32 %s1163, %s1164
    %s1166 = sand.u32 51, %s1165
    %s1167 = sshrl.u32 %s1166, 2
    %s1168 = sor.u32 %s1166, %s1167
    %s1169 = sand.u32 15, %s1168
    %v1170 = vld [vmem:[%s1160] sm:%s1169]
    %v1171 = vunpack.c.l.bf16 %v1170
    %v1172 = vunpack.c.h.bf16 %v1170
    %v1173 = vlaneseq
    %v1174 = vand.u32 %v1173, 127
    %vm1176 = vcmp.lt.s32.totalorder %v1174, 1
    %v1177 = vsel %vm1176, %v1171, %v14
    %s1178 = scalar_lea.vmem [#allocation14], 196
    %v1179 = vpack.c.bf16 0.0, %v1177
    %1181 = vst [vmem:[%s1178] sm:$0xf] %v1179
    %s1182 = scalar_lea.vmem %s0, 200
    %s1184 = sor.u32 255, 127
    %s1185 = sand.u32 %s1184, 85
    %s1186 = sshrl.u32 %s1185, 1
    %s1187 = sor.u32 %s1185, %s1186
    %s1188 = sand.u32 51, %s1187
    %s1189 = sshrl.u32 %s1188, 2
    %s1190 = sor.u32 %s1188, %s1189
    %s1191 = sand.u32 15, %s1190
    %v1192 = vld [vmem:[%s1182] sm:%s1191]
    %v1193 = vunpack.c.l.bf16 %v1192
    %v1194 = vunpack.c.h.bf16 %v1192
    %v1195 = vlaneseq
    %v1196 = vand.u32 %v1195, 127
    %vm1198 = vcmp.lt.s32.totalorder %v1196, 1
    %v1199 = vsel %vm1198, %v1193, %v14
    %s1200 = scalar_lea.vmem [#allocation14], 200
    %v1201 = vpack.c.bf16 0.0, %v1199
    %1203 = vst [vmem:[%s1200] sm:$0xf] %v1201
    %s1204 = scalar_lea.vmem %s0, 204
    %s1206 = sor.u32 255, 127
    %s1207 = sand.u32 %s1206, 85
    %s1208 = sshrl.u32 %s1207, 1
    %s1209 = sor.u32 %s1207, %s1208
    %s1210 = sand.u32 51, %s1209
    %s1211 = sshrl.u32 %s1210, 2
    %s1212 = sor.u32 %s1210, %s1211
    %s1213 = sand.u32 15, %s1212
    %v1214 = vld [vmem:[%s1204] sm:%s1213]
    %v1215 = vunpack.c.l.bf16 %v1214
    %v1216 = vunpack.c.h.bf16 %v1214
    %v1217 = vlaneseq
    %v1218 = vand.u32 %v1217, 127
    %vm1220 = vcmp.lt.s32.totalorder %v1218, 1
    %v1221 = vsel %vm1220, %v1215, %v14
    %s1222 = scalar_lea.vmem [#allocation14], 204
    %v1223 = vpack.c.bf16 0.0, %v1221
    %1225 = vst [vmem:[%s1222] sm:$0xf] %v1223
    %s1226 = scalar_lea.vmem %s0, 208
    %s1228 = sor.u32 255, 127
    %s1229 = sand.u32 %s1228, 85
    %s1230 = sshrl.u32 %s1229, 1
    %s1231 = sor.u32 %s1229, %s1230
    %s1232 = sand.u32 51, %s1231
    %s1233 = sshrl.u32 %s1232, 2
    %s1234 = sor.u32 %s1232, %s1233
    %s1235 = sand.u32 15, %s1234
    %v1236 = vld [vmem:[%s1226] sm:%s1235]
    %v1237 = vunpack.c.l.bf16 %v1236
    %v1238 = vunpack.c.h.bf16 %v1236
    %v1239 = vlaneseq
    %v1240 = vand.u32 %v1239, 127
    %vm1242 = vcmp.lt.s32.totalorder %v1240, 1
    %v1243 = vsel %vm1242, %v1237, %v14
    %s1244 = scalar_lea.vmem [#allocation14], 208
    %v1245 = vpack.c.bf16 0.0, %v1243
    %1247 = vst [vmem:[%s1244] sm:$0xf] %v1245
    %s1248 = scalar_lea.vmem %s0, 212
    %s1250 = sor.u32 255, 127
    %s1251 = sand.u32 %s1250, 85
    %s1252 = sshrl.u32 %s1251, 1
    %s1253 = sor.u32 %s1251, %s1252
    %s1254 = sand.u32 51, %s1253
    %s1255 = sshrl.u32 %s1254, 2
    %s1256 = sor.u32 %s1254, %s1255
    %s1257 = sand.u32 15, %s1256
    %v1258 = vld [vmem:[%s1248] sm:%s1257]
    %v1259 = vunpack.c.l.bf16 %v1258
    %v1260 = vunpack.c.h.bf16 %v1258
    %v1261 = vlaneseq
    %v1262 = vand.u32 %v1261, 127
    %vm1264 = vcmp.lt.s32.totalorder %v1262, 1
    %v1265 = vsel %vm1264, %v1259, %v14
    %s1266 = scalar_lea.vmem [#allocation14], 212
    %v1267 = vpack.c.bf16 0.0, %v1265
    %1269 = vst [vmem:[%s1266] sm:$0xf] %v1267
    %s1270 = scalar_lea.vmem %s0, 216
    %s1272 = sor.u32 255, 127
    %s1273 = sand.u32 %s1272, 85
    %s1274 = sshrl.u32 %s1273, 1
    %s1275 = sor.u32 %s1273, %s1274
    %s1276 = sand.u32 51, %s1275
    %s1277 = sshrl.u32 %s1276, 2
    %s1278 = sor.u32 %s1276, %s1277
    %s1279 = sand.u32 15, %s1278
    %v1280 = vld [vmem:[%s1270] sm:%s1279]
    %v1281 = vunpack.c.l.bf16 %v1280
    %v1282 = vunpack.c.h.bf16 %v1280
    %v1283 = vlaneseq
    %v1284 = vand.u32 %v1283, 127
    %vm1286 = vcmp.lt.s32.totalorder %v1284, 1
    %v1287 = vsel %vm1286, %v1281, %v14
    %s1288 = scalar_lea.vmem [#allocation14], 216
    %v1289 = vpack.c.bf16 0.0, %v1287
    %1291 = vst [vmem:[%s1288] sm:$0xf] %v1289
    %s1292 = scalar_lea.vmem %s0, 220
    %s1294 = sor.u32 255, 127
    %s1295 = sand.u32 %s1294, 85
    %s1296 = sshrl.u32 %s1295, 1
    %s1297 = sor.u32 %s1295, %s1296
    %s1298 = sand.u32 51, %s1297
    %s1299 = sshrl.u32 %s1298, 2
    %s1300 = sor.u32 %s1298, %s1299
    %s1301 = sand.u32 15, %s1300
    %v1302 = vld [vmem:[%s1292] sm:%s1301]
    %v1303 = vunpack.c.l.bf16 %v1302
    %v1304 = vunpack.c.h.bf16 %v1302
    %v1305 = vlaneseq
    %v1306 = vand.u32 %v1305, 127
    %vm1308 = vcmp.lt.s32.totalorder %v1306, 1
    %v1309 = vsel %vm1308, %v1303, %v14
    %s1310 = scalar_lea.vmem [#allocation14], 220
    %v1311 = vpack.c.bf16 0.0, %v1309
    %1313 = vst [vmem:[%s1310] sm:$0xf] %v1311
    %s1314 = scalar_lea.vmem %s0, 224
    %s1316 = sor.u32 255, 127
    %s1317 = sand.u32 %s1316, 85
    %s1318 = sshrl.u32 %s1317, 1
    %s1319 = sor.u32 %s1317, %s1318
    %s1320 = sand.u32 51, %s1319
    %s1321 = sshrl.u32 %s1320, 2
    %s1322 = sor.u32 %s1320, %s1321
    %s1323 = sand.u32 15, %s1322
    %v1324 = vld [vmem:[%s1314] sm:%s1323]
    %v1325 = vunpack.c.l.bf16 %v1324
    %v1326 = vunpack.c.h.bf16 %v1324
    %v1327 = vlaneseq
    %v1328 = vand.u32 %v1327, 127
    %vm1330 = vcmp.lt.s32.totalorder %v1328, 1
    %v1331 = vsel %vm1330, %v1325, %v14
    %s1332 = scalar_lea.vmem [#allocation14], 224
    %v1333 = vpack.c.bf16 0.0, %v1331
    %1335 = vst [vmem:[%s1332] sm:$0xf] %v1333
    %s1336 = scalar_lea.vmem %s0, 228
    %s1338 = sor.u32 255, 127
    %s1339 = sand.u32 %s1338, 85
    %s1340 = sshrl.u32 %s1339, 1
    %s1341 = sor.u32 %s1339, %s1340
    %s1342 = sand.u32 51, %s1341
    %s1343 = sshrl.u32 %s1342, 2
    %s1344 = sor.u32 %s1342, %s1343
    %s1345 = sand.u32 15, %s1344
    %v1346 = vld [vmem:[%s1336] sm:%s1345]
    %v1347 = vunpack.c.l.bf16 %v1346
    %v1348 = vunpack.c.h.bf16 %v1346
    %v1349 = vlaneseq
    %v1350 = vand.u32 %v1349, 127
    %vm1352 = vcmp.lt.s32.totalorder %v1350, 1
    %v1353 = vsel %vm1352, %v1347, %v14
    %s1354 = scalar_lea.vmem [#allocation14], 228
    %v1355 = vpack.c.bf16 0.0, %v1353
    %1357 = vst [vmem:[%s1354] sm:$0xf] %v1355
    %s1358 = scalar_lea.vmem %s0, 232
    %s1360 = sor.u32 255, 127
    %s1361 = sand.u32 %s1360, 85
    %s1362 = sshrl.u32 %s1361, 1
    %s1363 = sor.u32 %s1361, %s1362
    %s1364 = sand.u32 51, %s1363
    %s1365 = sshrl.u32 %s1364, 2
    %s1366 = sor.u32 %s1364, %s1365
    %s1367 = sand.u32 15, %s1366
    %v1368 = vld [vmem:[%s1358] sm:%s1367]
    %v1369 = vunpack.c.l.bf16 %v1368
    %v1370 = vunpack.c.h.bf16 %v1368
    %v1371 = vlaneseq
    %v1372 = vand.u32 %v1371, 127
    %vm1374 = vcmp.lt.s32.totalorder %v1372, 1
    %v1375 = vsel %vm1374, %v1369, %v14
    %s1376 = scalar_lea.vmem [#allocation14], 232
    %v1377 = vpack.c.bf16 0.0, %v1375
    %1379 = vst [vmem:[%s1376] sm:$0xf] %v1377
    %s1380 = scalar_lea.vmem %s0, 236
    %s1382 = sor.u32 255, 127
    %s1383 = sand.u32 %s1382, 85
    %s1384 = sshrl.u32 %s1383, 1
    %s1385 = sor.u32 %s1383, %s1384
    %s1386 = sand.u32 51, %s1385
    %s1387 = sshrl.u32 %s1386, 2
    %s1388 = sor.u32 %s1386, %s1387
    %s1389 = sand.u32 15, %s1388
    %v1390 = vld [vmem:[%s1380] sm:%s1389]
    %v1391 = vunpack.c.l.bf16 %v1390
    %v1392 = vunpack.c.h.bf16 %v1390
    %v1393 = vlaneseq
    %v1394 = vand.u32 %v1393, 127
    %vm1396 = vcmp.lt.s32.totalorder %v1394, 1
    %v1397 = vsel %vm1396, %v1391, %v14
    %s1398 = scalar_lea.vmem [#allocation14], 236
    %v1399 = vpack.c.bf16 0.0, %v1397
    %1401 = vst [vmem:[%s1398] sm:$0xf] %v1399
    %s1402 = scalar_lea.vmem %s0, 240
    %s1404 = sor.u32 255, 127
    %s1405 = sand.u32 %s1404, 85
    %s1406 = sshrl.u32 %s1405, 1
    %s1407 = sor.u32 %s1405, %s1406
    %s1408 = sand.u32 51, %s1407
    %s1409 = sshrl.u32 %s1408, 2
    %s1410 = sor.u32 %s1408, %s1409
    %s1411 = sand.u32 15, %s1410
    %v1412 = vld [vmem:[%s1402] sm:%s1411]
    %v1413 = vunpack.c.l.bf16 %v1412
    %v1414 = vunpack.c.h.bf16 %v1412
    %v1415 = vlaneseq
    %v1416 = vand.u32 %v1415, 127
    %vm1418 = vcmp.lt.s32.totalorder %v1416, 1
    %v1419 = vsel %vm1418, %v1413, %v14
    %s1420 = scalar_lea.vmem [#allocation14], 240
    %v1421 = vpack.c.bf16 0.0, %v1419
    %1423 = vst [vmem:[%s1420] sm:$0xf] %v1421
    %s1424 = scalar_lea.vmem %s0, 244
    %s1426 = sor.u32 255, 127
    %s1427 = sand.u32 %s1426, 85
    %s1428 = sshrl.u32 %s1427, 1
    %s1429 = sor.u32 %s1427, %s1428
    %s1430 = sand.u32 51, %s1429
    %s1431 = sshrl.u32 %s1430, 2
    %s1432 = sor.u32 %s1430, %s1431
    %s1433 = sand.u32 15, %s1432
    %v1434 = vld [vmem:[%s1424] sm:%s1433]
    %v1435 = vunpack.c.l.bf16 %v1434
    %v1436 = vunpack.c.h.bf16 %v1434
    %v1437 = vlaneseq
    %v1438 = vand.u32 %v1437, 127
    %vm1440 = vcmp.lt.s32.totalorder %v1438, 1
    %v1441 = vsel %vm1440, %v1435, %v14
    %s1442 = scalar_lea.vmem [#allocation14], 244
    %v1443 = vpack.c.bf16 0.0, %v1441
    %1445 = vst [vmem:[%s1442] sm:$0xf] %v1443
    %s1446 = scalar_lea.vmem %s0, 248
    %s1448 = sor.u32 255, 127
    %s1449 = sand.u32 %s1448, 85
    %s1450 = sshrl.u32 %s1449, 1
    %s1451 = sor.u32 %s1449, %s1450
    %s1452 = sand.u32 51, %s1451
    %s1453 = sshrl.u32 %s1452, 2
    %s1454 = sor.u32 %s1452, %s1453
    %s1455 = sand.u32 15, %s1454
    %v1456 = vld [vmem:[%s1446] sm:%s1455]
    %v1457 = vunpack.c.l.bf16 %v1456
    %v1458 = vunpack.c.h.bf16 %v1456
    %v1459 = vlaneseq
    %v1460 = vand.u32 %v1459, 127
    %vm1462 = vcmp.lt.s32.totalorder %v1460, 1
    %v1463 = vsel %vm1462, %v1457, %v14
    %s1464 = scalar_lea.vmem [#allocation14], 248
    %v1465 = vpack.c.bf16 0.0, %v1463
    %1467 = vst [vmem:[%s1464] sm:$0xf] %v1465
    %s1468 = scalar_lea.vmem %s0, 252
    %s1470 = sor.u32 255, 127
    %s1471 = sand.u32 %s1470, 85
    %s1472 = sshrl.u32 %s1471, 1
    %s1473 = sor.u32 %s1471, %s1472
    %s1474 = sand.u32 51, %s1473
    %s1475 = sshrl.u32 %s1474, 2
    %s1476 = sor.u32 %s1474, %s1475
    %s1477 = sand.u32 15, %s1476
    %v1478 = vld [vmem:[%s1468] sm:%s1477]
    %v1479 = vunpack.c.l.bf16 %v1478
    %v1480 = vunpack.c.h.bf16 %v1478
    %v1481 = vlaneseq
    %v1482 = vand.u32 %v1481, 127
    %vm1484 = vcmp.lt.s32.totalorder %v1482, 1
    %v1485 = vsel %vm1484, %v1479, %v14
    %s1486 = scalar_lea.vmem [#allocation14], 252
    %v1487 = vpack.c.bf16 0.0, %v1485
    %1489 = vst [vmem:[%s1486] sm:$0xf] %v1487
    %p1491 = scmp.eq.s32.totalorder 0, 0
    // Predicated region
    $region10: #{discriminator_forward.16} parent=1 // pred_check
      %p1492 = pneg %p1491
    $region11: #{discriminator_forward.16} parent=1 // pred_check_branch
      %1494 = sbr.rel (%p1492) target = $region13
    $region12: #{discriminator_forward.16} parent=1 // pred_region
      %1495 = vst [vmem:[#allocation2] sm:$0xff] 0.0
    $region13: #{discriminator_forward.16} parent=1 // pred_fallthru
      _
    %v1496 = vld [vmem:[#allocation2] sm:$0xff]
    %v1497 = vld [vmem:[#allocation13] sm:$0xff]
    %v1498 = vld [vmem:[#allocation13 + $0x8] sm:$0xff]
    %v1499 = vld [vmem:[#allocation14] sm:$0xf]
    %v1500 = vld [vmem:[#allocation14 + $0x4] sm:$0xf]
    %v1501 = vld [vmem:[#allocation14 + $0x8] sm:$0xf]
    %v1502 = vld [vmem:[#allocation14 + $0xc] sm:$0xf]
    %v1503 = vld [vmem:[#allocation14 + $0x10] sm:$0xf]
    %v1504 = vld [vmem:[#allocation14 + $0x14] sm:$0xf]
    %v1505 = vld [vmem:[#allocation14 + $0x18] sm:$0xf]
    %v1506 = vld [vmem:[#allocation14 + $0x1c] sm:$0xf]
    %v1507 = vld [vmem:[#allocation14 + $0x20] sm:$0xf]
    %v1508 = vld [vmem:[#allocation14 + $0x24] sm:$0xf]
    %v1509 = vld [vmem:[#allocation14 + $0x28] sm:$0xf]
    %v1510 = vld [vmem:[#allocation14 + $0x2c] sm:$0xf]
    %v1511 = vld [vmem:[#allocation14 + $0x30] sm:$0xf]
    %v1512 = vld [vmem:[#allocation14 + $0x34] sm:$0xf]
    %v1513 = vld [vmem:[#allocation14 + $0x38] sm:$0xf]
    %v1514 = vld [vmem:[#allocation14 + $0x3c] sm:$0xf]
    %v1515 = vld [vmem:[#allocation14 + $0x40] sm:$0xf]
    %v1516 = vld [vmem:[#allocation14 + $0x44] sm:$0xf]
    %v1517 = vld [vmem:[#allocation14 + $0x48] sm:$0xf]
    %v1518 = vld [vmem:[#allocation14 + $0x4c] sm:$0xf]
    %v1519 = vld [vmem:[#allocation14 + $0x50] sm:$0xf]
    %v1520 = vld [vmem:[#allocation14 + $0x54] sm:$0xf]
    %v1521 = vld [vmem:[#allocation14 + $0x58] sm:$0xf]
    %v1522 = vld [vmem:[#allocation14 + $0x5c] sm:$0xf]
    %v1523 = vld [vmem:[#allocation14 + $0x60] sm:$0xf]
    %v1524 = vld [vmem:[#allocation14 + $0x64] sm:$0xf]
    %v1525 = vld [vmem:[#allocation14 + $0x68] sm:$0xf]
    %v1526 = vld [vmem:[#allocation14 + $0x6c] sm:$0xf]
    %v1527 = vld [vmem:[#allocation14 + $0x70] sm:$0xf]
    %v1528 = vld [vmem:[#allocation14 + $0x74] sm:$0xf]
    %v1529 = vld [vmem:[#allocation14 + $0x78] sm:$0xf]
    %v1530 = vld [vmem:[#allocation14 + $0x7c] sm:$0xf]
    %v1531 = vld [vmem:[#allocation14 + $0x80] sm:$0xf]
    %v1532 = vld [vmem:[#allocation14 + $0x84] sm:$0xf]
    %v1533 = vld [vmem:[#allocation14 + $0x88] sm:$0xf]
    %v1534 = vld [vmem:[#allocation14 + $0x8c] sm:$0xf]
    %v1535 = vld [vmem:[#allocation14 + $0x90] sm:$0xf]
    %v1536 = vld [vmem:[#allocation14 + $0x94] sm:$0xf]
    %v1537 = vld [vmem:[#allocation14 + $0x98] sm:$0xf]
    %v1538 = vld [vmem:[#allocation14 + $0x9c] sm:$0xf]
    %v1539 = vld [vmem:[#allocation14 + $0xa0] sm:$0xf]
    %v1540 = vld [vmem:[#allocation14 + $0xa4] sm:$0xf]
    %v1541 = vld [vmem:[#allocation14 + $0xa8] sm:$0xf]
    %v1542 = vld [vmem:[#allocation14 + $0xac] sm:$0xf]
    %v1543 = vld [vmem:[#allocation14 + $0xb0] sm:$0xf]
    %v1544 = vld [vmem:[#allocation14 + $0xb4] sm:$0xf]
    %v1545 = vld [vmem:[#allocation14 + $0xb8] sm:$0xf]
    %v1546 = vld [vmem:[#allocation14 + $0xbc] sm:$0xf]
    %v1547 = vld [vmem:[#allocation14 + $0xc0] sm:$0xf]
    %v1548 = vld [vmem:[#allocation14 + $0xc4] sm:$0xf]
    %v1549 = vld [vmem:[#allocation14 + $0xc8] sm:$0xf]
    %v1550 = vld [vmem:[#allocation14 + $0xcc] sm:$0xf]
    %v1551 = vld [vmem:[#allocation14 + $0xd0] sm:$0xf]
    %v1552 = vld [vmem:[#allocation14 + $0xd4] sm:$0xf]
    %v1553 = vld [vmem:[#allocation14 + $0xd8] sm:$0xf]
    %v1554 = vld [vmem:[#allocation14 + $0xdc] sm:$0xf]
    %v1555 = vld [vmem:[#allocation14 + $0xe0] sm:$0xf]
    %v1556 = vld [vmem:[#allocation14 + $0xe4] sm:$0xf]
    %v1557 = vld [vmem:[#allocation14 + $0xe8] sm:$0xf]
    %v1558 = vld [vmem:[#allocation14 + $0xec] sm:$0xf]
    %v1559 = vld [vmem:[#allocation14 + $0xf0] sm:$0xf]
    %v1560 = vld [vmem:[#allocation14 + $0xf4] sm:$0xf]
    %v1561 = vld [vmem:[#allocation14 + $0xf8] sm:$0xf]
    %v1562 = vld [vmem:[#allocation14 + $0xfc] sm:$0xf]
    %v1565 = vunpack.c.l.b16 %v1497
    %v1566 = vunpack.c.h.b16 %v1497
    %v1567 = vunpack.c.l.b16 %v1498
    %v1568 = vunpack.c.h.b16 %v1498
    %v1569 = vpack.c.b16 %v1565, %v1565
    %v1570 = vpack.c.b16 %v1566, %v1566
    %v1571 = vpack.c.b16 %v1567, %v1567
    %v1572 = vpack.c.b16 %v1568, %v1568
    %v1641 = vunpack.c.l.b16 %v1499
    %v1642 = vunpack.c.l.b16 %v1500
    %v1643 = vunpack.c.l.b16 %v1501
    %v1644 = vunpack.c.l.b16 %v1502
    %v1645 = vunpack.c.l.b16 %v1503
    %v1646 = vunpack.c.l.b16 %v1504
    %v1647 = vunpack.c.l.b16 %v1505
    %v1648 = vunpack.c.l.b16 %v1506
    %v1649 = vunpack.c.l.b16 %v1507
    %v1650 = vunpack.c.l.b16 %v1508
    %v1651 = vunpack.c.l.b16 %v1509
    %v1652 = vunpack.c.l.b16 %v1510
    %v1653 = vunpack.c.l.b16 %v1511
    %v1654 = vunpack.c.l.b16 %v1512
    %v1655 = vunpack.c.l.b16 %v1513
    %v1656 = vunpack.c.l.b16 %v1514
    %v1657 = vunpack.c.l.b16 %v1515
    %v1658 = vunpack.c.l.b16 %v1516
    %v1659 = vunpack.c.l.b16 %v1517
    %v1660 = vunpack.c.l.b16 %v1518
    %v1661 = vunpack.c.l.b16 %v1519
    %v1662 = vunpack.c.l.b16 %v1520
    %v1663 = vunpack.c.l.b16 %v1521
    %v1664 = vunpack.c.l.b16 %v1522
    %v1665 = vunpack.c.l.b16 %v1523
    %v1666 = vunpack.c.l.b16 %v1524
    %v1667 = vunpack.c.l.b16 %v1525
    %v1668 = vunpack.c.l.b16 %v1526
    %v1669 = vunpack.c.l.b16 %v1527
    %v1670 = vunpack.c.l.b16 %v1528
    %v1671 = vunpack.c.l.b16 %v1529
    %v1672 = vunpack.c.l.b16 %v1530
    %v1673 = vunpack.c.l.b16 %v1531
    %v1674 = vunpack.c.l.b16 %v1532
    %v1675 = vunpack.c.l.b16 %v1533
    %v1676 = vunpack.c.l.b16 %v1534
    %v1677 = vunpack.c.l.b16 %v1535
    %v1678 = vunpack.c.l.b16 %v1536
    %v1679 = vunpack.c.l.b16 %v1537
    %v1680 = vunpack.c.l.b16 %v1538
    %v1681 = vunpack.c.l.b16 %v1539
    %v1682 = vunpack.c.l.b16 %v1540
    %v1683 = vunpack.c.l.b16 %v1541
    %v1684 = vunpack.c.l.b16 %v1542
    %v1685 = vunpack.c.l.b16 %v1543
    %v1686 = vunpack.c.l.b16 %v1544
    %v1687 = vunpack.c.l.b16 %v1545
    %v1688 = vunpack.c.l.b16 %v1546
    %v1689 = vunpack.c.l.b16 %v1547
    %v1690 = vunpack.c.l.b16 %v1548
    %v1691 = vunpack.c.l.b16 %v1549
    %v1692 = vunpack.c.l.b16 %v1550
    %v1693 = vunpack.c.l.b16 %v1551
    %v1694 = vunpack.c.l.b16 %v1552
    %v1695 = vunpack.c.l.b16 %v1553
    %v1696 = vunpack.c.l.b16 %v1554
    %v1697 = vunpack.c.l.b16 %v1555
    %v1698 = vunpack.c.l.b16 %v1556
    %v1699 = vunpack.c.l.b16 %v1557
    %v1700 = vunpack.c.l.b16 %v1558
    %v1701 = vunpack.c.l.b16 %v1559
    %v1702 = vunpack.c.l.b16 %v1560
    %v1703 = vunpack.c.l.b16 %v1561
    %v1704 = vunpack.c.l.b16 %v1562
    %v1705 = vpack.c.b16 %v1642, %v1641
    %v1706 = vpack.c.b16 %v1644, %v1643
    %v1707 = vpack.c.b16 %v1646, %v1645
    %v1708 = vpack.c.b16 %v1648, %v1647
    %v1709 = vpack.c.b16 %v1650, %v1649
    %v1710 = vpack.c.b16 %v1652, %v1651
    %v1711 = vpack.c.b16 %v1654, %v1653
    %v1712 = vpack.c.b16 %v1656, %v1655
    %v1713 = vpack.c.b16 %v1658, %v1657
    %v1714 = vpack.c.b16 %v1660, %v1659
    %v1715 = vpack.c.b16 %v1662, %v1661
    %v1716 = vpack.c.b16 %v1664, %v1663
    %v1717 = vpack.c.b16 %v1666, %v1665
    %v1718 = vpack.c.b16 %v1668, %v1667
    %v1719 = vpack.c.b16 %v1670, %v1669
    %v1720 = vpack.c.b16 %v1672, %v1671
    %v1721 = vpack.c.b16 %v1674, %v1673
    %v1722 = vpack.c.b16 %v1676, %v1675
    %v1723 = vpack.c.b16 %v1678, %v1677
    %v1724 = vpack.c.b16 %v1680, %v1679
    %v1725 = vpack.c.b16 %v1682, %v1681
    %v1726 = vpack.c.b16 %v1684, %v1683
    %v1727 = vpack.c.b16 %v1686, %v1685
    %v1728 = vpack.c.b16 %v1688, %v1687
    %v1729 = vpack.c.b16 %v1690, %v1689
    %v1730 = vpack.c.b16 %v1692, %v1691
    %v1731 = vpack.c.b16 %v1694, %v1693
    %v1732 = vpack.c.b16 %v1696, %v1695
    %v1733 = vpack.c.b16 %v1698, %v1697
    %v1734 = vpack.c.b16 %v1700, %v1699
    %v1735 = vpack.c.b16 %v1702, %v1701
    %v1736 = vpack.c.b16 %v1704, %v1703
    %1769 = vmatprep.subr.bf16.mxu0 0
    %1770 = vmatpush1.bf16.msra.mxu0 %v1705
    %1771 = vmatprep.subr.bf16.mxu0 0
    %1772 = vmatpush1.bf16.msra.mxu0 %v1706
    %1773 = vmatprep.subr.bf16.mxu0 0
    %1774 = vmatpush1.bf16.msra.mxu0 %v1707
    %1775 = vmatprep.subr.bf16.mxu0 0
    %1776 = vmatpush1.bf16.msra.mxu0 %v1708
    %1777 = vmatprep.subr.bf16.mxu0 0
    %1778 = vmatpush1.bf16.msra.mxu0 %v1709
    %1779 = vmatprep.subr.bf16.mxu0 0
    %1780 = vmatpush1.bf16.msra.mxu0 %v1710
    %1781 = vmatprep.subr.bf16.mxu0 0
    %1782 = vmatpush1.bf16.msra.mxu0 %v1711
    %1783 = vmatprep.subr.bf16.mxu0 0
    %1784 = vmatpush1.bf16.msra.mxu0 %v1712
    %1785 = vmatprep.subr.bf16.mxu0 0
    %1786 = vmatpush1.bf16.msra.mxu0 %v1713
    %1787 = vmatprep.subr.bf16.mxu0 0
    %1788 = vmatpush1.bf16.msra.mxu0 %v1714
    %1789 = vmatprep.subr.bf16.mxu0 0
    %1790 = vmatpush1.bf16.msra.mxu0 %v1715
    %1791 = vmatprep.subr.bf16.mxu0 0
    %1792 = vmatpush1.bf16.msra.mxu0 %v1716
    %1793 = vmatprep.subr.bf16.mxu0 0
    %1794 = vmatpush1.bf16.msra.mxu0 %v1717
    %1795 = vmatprep.subr.bf16.mxu0 0
    %1796 = vmatpush1.bf16.msra.mxu0 %v1718
    %1797 = vmatprep.subr.bf16.mxu0 0
    %1798 = vmatpush1.bf16.msra.mxu0 %v1719
    %1799 = vmatprep.subr.bf16.mxu0 0
    %1800 = vmatpush1.bf16.msra.mxu0 %v1720
    %1801 = vmatprep.mubr.bf16.mxu0 %v1570
    %1802 = vmatmul.mubr.bf16.gmra.mrb[0].mxu0 %v1569
    %v1803 = vpop.f32.mrb[0].mxu0
    %v1804 = vadd.f32 0.0, %v1803
    %v1805 = vpop.f32.mrb[0].mxu0
    %v1806 = vpop.f32.mrb[0].mxu0
    %v1807 = vpop.f32.mrb[0].mxu0
    %1808 = vdwg.mxu0
    %1809 = vmatprep.subr.bf16.mxu0 0
    %1810 = vmatpush1.bf16.msra.mxu0 %v1721
    %1811 = vmatprep.subr.bf16.mxu0 0
    %1812 = vmatpush1.bf16.msra.mxu0 %v1722
    %1813 = vmatprep.subr.bf16.mxu0 0
    %1814 = vmatpush1.bf16.msra.mxu0 %v1723
    %1815 = vmatprep.subr.bf16.mxu0 0
    %1816 = vmatpush1.bf16.msra.mxu0 %v1724
    %1817 = vmatprep.subr.bf16.mxu0 0
    %1818 = vmatpush1.bf16.msra.mxu0 %v1725
    %1819 = vmatprep.subr.bf16.mxu0 0
    %1820 = vmatpush1.bf16.msra.mxu0 %v1726
    %1821 = vmatprep.subr.bf16.mxu0 0
    %1822 = vmatpush1.bf16.msra.mxu0 %v1727
    %1823 = vmatprep.subr.bf16.mxu0 0
    %1824 = vmatpush1.bf16.msra.mxu0 %v1728
    %1825 = vmatprep.subr.bf16.mxu0 0
    %1826 = vmatpush1.bf16.msra.mxu0 %v1729
    %1827 = vmatprep.subr.bf16.mxu0 0
    %1828 = vmatpush1.bf16.msra.mxu0 %v1730
    %1829 = vmatprep.subr.bf16.mxu0 0
    %1830 = vmatpush1.bf16.msra.mxu0 %v1731
    %1831 = vmatprep.subr.bf16.mxu0 0
    %1832 = vmatpush1.bf16.msra.mxu0 %v1732
    %1833 = vmatprep.subr.bf16.mxu0 0
    %1834 = vmatpush1.bf16.msra.mxu0 %v1733
    %1835 = vmatprep.subr.bf16.mxu0 0
    %1836 = vmatpush1.bf16.msra.mxu0 %v1734
    %1837 = vmatprep.subr.bf16.mxu0 0
    %1838 = vmatpush1.bf16.msra.mxu0 %v1735
    %1839 = vmatprep.subr.bf16.mxu0 0
    %1840 = vmatpush1.bf16.msra.mxu0 %v1736
    %1841 = vmatprep.mubr.bf16.mxu0 %v1572
    %1842 = vmatmul.mubr.bf16.gmra.mrb[0].mxu0 %v1571
    %v1843 = vpop.f32.mrb[0].mxu0
    %v1844 = vadd.f32 %v1804, %v1843
    %v1845 = vpop.f32.mrb[0].mxu0
    %v1846 = vpop.f32.mrb[0].mxu0
    %v1847 = vpop.f32.mrb[0].mxu0
    %1848 = vdwg.mxu0
    %v1849 = vadd.f32 %v1496, %v1844
    %1850 = vst [vmem:[#allocation2] sm:$0xff] %v1849
    // Predicated region
    $region14: #{discriminator_forward.16} parent=1 // pred_check
      %p1851 = pneg %p1491
    $region15: #{discriminator_forward.16} parent=1 // pred_check_branch
      %1853 = sbr.rel (%p1851) target = $region17
    $region16: #{discriminator_forward.16} parent=1 // pred_region
      %v1854 = vld [vmem:[#allocation2] sm:$0xff]
      %v1855 = vsub.f32 0.0, %v1854
      %v1856 = vmul.f32 %v1855, 1.442695
      %v1857 = vpow.pop %v1856
      %v1858 = vadd.f32 %v1857, 1.0
      %v1859 = vrcp.pop %v1858
      %v1860 = vmul.f32 1.0, %v1859
      %1861 = vst [vmem:[%s3] sm:$0xff] %v1860
    $region17: #{discriminator_forward.16} parent=1 // pred_fallthru
      _
    // Predicated region
    $region18: #{discriminator_forward.16} parent=1 // pred_check
      _
    $region19: #{discriminator_forward.16} parent=1 // pred_check_branch
      %1863 = sbr.rel (0) target = $region21
    $region20: #{discriminator_forward.16} parent=1 // pred_region
      _
    $region21: #{discriminator_forward.16} parent=1 // pred_fallthru
      _
    // Predicated region
    $region22: #{discriminator_forward.16} parent=1 // pred_check
      _
    $region23: #{discriminator_forward.16} parent=1 // pred_check_branch
      %1865 = sbr.rel (0) target = $region25
    $region24: #{discriminator_forward.16} parent=1 // pred_region
      _
    $region25: #{discriminator_forward.16} parent=1 // pred_fallthru
      _

</llo_original>
